<compile_context>
chip_gen: v5e
topology: v5e:2x2
jax: 0.10.0
libtpu: 0.0.40
codegen_flags: <defaults>
</compile_context>

<pallas_src>
import functools

import jax
import jax.numpy as jnp
import numpy as np
from jax import lax
from jax.experimental import pallas as pl
from jax.experimental.pallas import tpu as pltpu

_EPS = 1e-5

# Geometry implied by the module (28x28 single-channel input -> 800 features).
_K = 5                       # conv kernel size
_H_IN, _W_IN = 28, 28
_C_IN, _C1, _C2 = 1, 20, 50
_HO1, _WO1 = 24, 24          # conv1 output
_HP1, _WP1 = 12, 12          # after first 2x2 maxpool
_HO2, _WO2 = 8, 8            # conv2 output
_HP2, _WP2 = 4, 4            # after second 2x2 maxpool
_HALF = 256                  # lane-padded width of one wo-parity half
_WID = 2 * _HALF             # 512 = padded conv-output lane width (both stages)
_K1 = _K * _W_IN             # 140  = fused conv1 contraction depth
_K2 = _K * _HALF             # 1280 = fused conv2 contraction depth
_KF = _HP2 * _HALF           # 1024 = flatten contraction depth
_OUT = _C2 * _HP2 * _WP2     # 800
_OUT_PAD = 896               # 7*128 lane-dense kernel output width


# ----------------------------------------------------------------------------
# Kernel: whole Feature forward for one batch tile.
# ----------------------------------------------------------------------------
def _feature_kernel(x_ref, w1_ref, s1_ref, b1_ref, w2_ref, s2_ref, b2_ref,
                    p_ref, o_ref):
    nb = o_ref.shape[0]

    # -------- stage 1: single K-fused conv1 matmul + folded BN + ReLU + pool -
    y1 = jnp.maximum(
        jnp.dot(x_ref[...], w1_ref[...], preferred_element_type=jnp.float32)
        * s1_ref[...] + b1_ref[...], 0.0)                        # (nb*24, 512) f32
    a1 = jnp.maximum(y1[:, :_HALF], y1[:, _HALF:])               # pool W (lane halves)
    a1 = a1.reshape(nb, _HP1, 2, _HALF)
    h1 = jnp.maximum(a1[:, :, 0, :], a1[:, :, 1, :])             # pool H (row pairs)
    h1 = h1.astype(w2_ref.dtype)                                 # (nb, 12, 256)

    # -------- stage 2: kh views concatenated along K -> single matmul --------
    lhs2 = jnp.concatenate(
        [h1[:, kh:kh + _HO2, :] for kh in range(_K)],
        axis=-1).reshape(nb * _HO2, _K2)                         # (nb*8, 1280)
    y2 = jnp.maximum(
        jnp.dot(lhs2, w2_ref[...], preferred_element_type=jnp.float32)
        * s2_ref[...] + b2_ref[...], 0.0)                        # (nb*8, 512) f32
    a2 = jnp.maximum(y2[:, :_HALF], y2[:, _HALF:])
    a2 = a2.reshape(nb, _HP2, 2, _HALF)
    h2 = jnp.maximum(a2[:, :, 0, :], a2[:, :, 1, :])             # (nb, 4, 256) f32

    # -------- torch NCHW flatten (c*16 + h*4 + w): one permutation matmul ----
    h2f = jnp.concatenate([h2[:, h, :] for h in range(_HP2)],
                          axis=-1).astype(p_ref.dtype)           # (nb, 1024)
    o_ref[...] = jnp.dot(h2f, p_ref[...],
                         preferred_element_type=jnp.float32).astype(o_ref.dtype)


def _feature_pallas(x_col, w1t, s1, b1, w2t, s2, b2, perm, nb):
    n_pad = x_col.shape[0] // _HO1
    return pl.pallas_call(
        _feature_kernel,
        out_shape=jax.ShapeDtypeStruct((n_pad, _OUT_PAD), jnp.float32),
        grid=(n_pad // nb,),
        in_specs=[
            pl.BlockSpec((nb * _HO1, _K1), lambda i: (i, 0)),    # im2col x tile
            pl.BlockSpec((_K1, _WID), lambda i: (0, 0)),         # fused conv1 weight
            pl.BlockSpec((1, _WID), lambda i: (0, 0)),           # BN1 scale
            pl.BlockSpec((1, _WID), lambda i: (0, 0)),           # BN1 bias
            pl.BlockSpec((_K2, _WID), lambda i: (0, 0)),         # fused conv2 weight
            pl.BlockSpec((1, _WID), lambda i: (0, 0)),           # BN2 scale
            pl.BlockSpec((1, _WID), lambda i: (0, 0)),           # BN2 bias
            pl.BlockSpec((_KF, _OUT_PAD), lambda i: (0, 0)),     # flatten perm
        ],
        out_specs=pl.BlockSpec((nb, _OUT_PAD), lambda i: (i, 0)),
        compiler_params=pltpu.CompilerParams(
            dimension_semantics=("parallel",),
            vmem_limit_bytes=48 * 1024 * 1024),                  # safe on v7x (64 MiB/TC)
    )(x_col, w1t, s1, b1, w2t, s2, b2, perm)


@functools.partial(jax.jit, static_argnames=("batch_tile", "compute_dtype"))
def feature_forward(x_nchw, kp, *, batch_tile=128, compute_dtype=jnp.bfloat16):
    """Feature forward. x_nchw: (N, 1, 28, 28) f32 -> (N, 800) f32."""
    n = x_nchw.shape[0]
    assert x_nchw.shape[1:] == (_C_IN, _H_IN, _W_IN), x_nchw.shape
    assert batch_tile >= 8 and batch_tile % 8 == 0

    # Batch tile: multiple of 8, <= batch_tile, and chosen so the grid has at
    # least 2 steps whenever possible (keeps both v7x TensorCores busy) while
    # minimizing padded-row waste on the last step.
    half_up = max(8, -(-((n + 1) // 2) // 8) * 8)
    nb = min(batch_tile, half_up)
    n_pad = -(-n // nb) * nb

    x = x_nchw[:, 0, :, :].astype(compute_dtype)                 # (N, 28, 28)
    if n_pad != n:
        x = jnp.pad(x, ((0, n_pad - n), (0, 0), (0, 0)))

    # kh-im2col (lane-dense, kh-major columns): (n_pad*24, 140)
    x_col = jnp.concatenate([x[:, kh:kh + _HO1, :] for kh in range(_K)], axis=-1)
    x_col = x_col.reshape(n_pad * _HO1, _K1)

    out = _feature_pallas(
        x_col,
        kp["w1t"].astype(compute_dtype), kp["s1"], kp["b1"],
        kp["w2t"].astype(compute_dtype), kp["s2"], kp["b2"],
        kp["perm"].astype(compute_dtype), nb)
    return out[:n, :_OUT]


# ----------------------------------------------------------------------------
# One-time parameter packing (done in the wrapper, never in the kernel).
# ----------------------------------------------------------------------------
def _build_fused_weight(w_oihw, w_in, row_block):
    """K-fused banded ("Toeplitz") weight: one matmul per conv stage.

    Rows index (kh*row_block + wi*c_in + cin); columns index the padded output
    lanes (wo%2)*_HALF + (wo//2)*c_out + cout (parity-split so the 2x2 W-pool
    becomes a lane-half max).
    """
    c_out, c_in, kh_n, kw_n = np.asarray(w_oihw).shape
    wo_n = w_in - kw_n + 1
    t = np.zeros((kh_n * row_block, _WID), np.float32)
    w = np.asarray(w_oihw, np.float32)
    for kh in range(kh_n):
        for o in range(wo_n):
            col0 = (o % 2) * _HALF + (o // 2) * c_out
            for kw in range(kw_n):
                r0 = kh * row_block + (o + kw) * c_in
                t[r0:r0 + c_in, col0:col0 + c_out] = w[:, :, kh, kw].T
    return jnp.asarray(t)


def _tile_affine(scale, bias, wo_half, c_out):
    """Broadcast per-channel BN scale/bias onto the padded (wo, cout) lane layout."""
    s = np.zeros((1, _WID), np.float32)
    b = np.zeros((1, _WID), np.float32)
    half = wo_half * c_out
    s[0, :half] = np.tile(np.asarray(scale, np.float32), wo_half)
    s[0, _HALF:_HALF + half] = s[0, :half]
    b[0, :half] = np.tile(np.asarray(bias, np.float32), wo_half)
    b[0, _HALF:_HALF + half] = b[0, :half]
    return jnp.asarray(s), jnp.asarray(b)


def _build_flatten_perm():
    """Maps pooled lane (h*256 + w*C2 + c) to torch flatten index c*16 + h*4 + w."""
    p = np.zeros((_KF, _OUT_PAD), np.float32)
    for h in range(_HP2):
        for w in range(_WP2):
            for c in range(_C2):
                p[h * _HALF + w * _C2 + c, c * _HP2 * _WP2 + h * _WP2 + w] = 1.0
    return jnp.asarray(p)


def pack_params(p):
    scale1 = np.asarray(p["g1"]) / np.sqrt(np.asarray(p["v1"]) + _EPS)
    bias1 = np.asarray(p["be1"]) + (np.asarray(p["b1"]) - np.asarray(p["m1"])) * scale1
    scale2 = np.asarray(p["g2"]) / np.sqrt(np.asarray(p["v2"]) + _EPS)
    bias2 = np.asarray(p["be2"]) + (np.asarray(p["b2"]) - np.asarray(p["m2"])) * scale2
    s1, b1 = _tile_affine(scale1, bias1, _WP1, _C1)
    s2, b2 = _tile_affine(scale2, bias2, _WP2, _C2)
    return {
        "w1t": _build_fused_weight(p["w1"], _W_IN, _W_IN),    # (140, 512)
        "w2t": _build_fused_weight(p["w2"], _WP1, _HALF),     # (1280, 512)
        "s1": s1, "b1": b1, "s2": s2, "b2": b2,
        "perm": _build_flatten_perm(),                        # (1024, 896)
    }


def init_params(key):
    ks = jax.random.split(key, 12)
    p = {}
    # conv1: PyTorch layout OIHW (20, 1, 5, 5) + bias (20,)
    p["w1"] = 0.1 * jax.random.normal(ks[0], (20, 1, 5, 5), jnp.float32)
    p["b1"] = 0.1 * jax.random.normal(ks[1], (20,), jnp.float32)
    p["g1"] = 1.0 + 0.1 * jax.random.normal(ks[2], (20,), jnp.float32)
    p["be1"] = 0.1 * jax.random.normal(ks[3], (20,), jnp.float32)
    p["m1"] = 0.1 * jax.random.normal(ks[4], (20,), jnp.float32)
    p["v1"] = jnp.abs(jax.random.normal(ks[5], (20,), jnp.float32)) + 0.5
    # conv2: OIHW (50, 20, 5, 5) + bias (50,)
    p["w2"] = 0.05 * jax.random.normal(ks[6], (50, 20, 5, 5), jnp.float32)
    p["b2"] = 0.1 * jax.random.normal(ks[7], (50,), jnp.float32)
    p["g2"] = 1.0 + 0.1 * jax.random.normal(ks[8], (50,), jnp.float32)
    p["be2"] = 0.1 * jax.random.normal(ks[9], (50,), jnp.float32)
    p["m2"] = 0.1 * jax.random.normal(ks[10], (50,), jnp.float32)
    p["v2"] = jnp.abs(jax.random.normal(ks[11], (50,), jnp.float32)) + 0.5
    return p


# ----------------------------------------------------------------------------
# Pure-JAX reference (lax.conv / reduce_window) for correctness checking.
# ----------------------------------------------------------------------------
def reference_forward(x_nchw, p):
    def block(x, w_oihw, b, gamma, beta, mean, var):
        y = lax.conv_general_dilated(x, w_oihw, (1, 1), "VALID",
                                     dimension_numbers=("NCHW", "OIHW", "NCHW"))
        y = y + b[None, :, None, None]
        scale = (gamma / jnp.sqrt(var + _EPS))[None, :, None, None]
        y = (y - mean[None, :, None, None]) * scale + beta[None, :, None, None]
        y = jnp.maximum(y, 0.0)
        y = lax.reduce_window(y, -jnp.inf, lax.max,
                              (1, 1, 2, 2), (1, 1, 2, 2), "VALID")
        return y

    y = block(x_nchw, p["w1"], p["b1"], p["g1"], p["be1"], p["m1"], p["v1"])
    y = block(y, p["w2"], p["b2"], p["g2"], p["be2"], p["m2"], p["v2"])
    return y.reshape(y.shape[0], -1)


if __name__ == "__main__":
    key = jax.random.PRNGKey(0)
    kx, kparam = jax.random.split(key)
    raw = init_params(kparam)
    kp = pack_params(raw)

    # Small shape implied by the module: (N, 1, 28, 28) so that .view(N, 800) works.
    # f32 operands -> exact (tight tolerance) check against the lax reference.
    x = jax.random.normal(kx, (2, 1, 28, 28), jnp.float32)
    out = jax.block_until_ready(feature_forward(x, kp, compute_dtype=jnp.float32))
    assert out.shape == (2, 800), out.shape
    ref = jax.block_until_ready(reference_forward(x, raw))
    np.testing.assert_allclose(np.asarray(out), np.asarray(ref),
                               rtol=1e-4, atol=1e-4)

    # Bigger batch with the default bf16 MXU operands (multi-step "parallel"
    # grid, exercises batch padding + tiling heuristic; accumulation stays f32).
    x_big = jax.random.normal(jax.random.PRNGKey(1), (130, 1, 28, 28), jnp.float32)
    out_big = jax.block_until_ready(feature_forward(x_big, kp))
    ref_big = jax.block_until_ready(reference_forward(x_big, raw))
    np.testing.assert_allclose(np.asarray(out_big), np.asarray(ref_big),
                               rtol=5e-2, atol=5e-2)

    print("KERNEL_OK")
</pallas_src>

<mosaic_0001>
module attributes {stable_mosaic.version = 11 : i64} {
  func.func @_feature_kernel(%arg0: i32, %arg1: memref<192x140xf32, #tpu.memory_space<vmem>>, %arg2: memref<140x512xf32, #tpu.memory_space<vmem>>, %arg3: memref<1x512xf32, #tpu.memory_space<vmem>>, %arg4: memref<1x512xf32, #tpu.memory_space<vmem>>, %arg5: memref<1280x512xf32, #tpu.memory_space<vmem>>, %arg6: memref<1x512xf32, #tpu.memory_space<vmem>>, %arg7: memref<1x512xf32, #tpu.memory_space<vmem>>, %arg8: memref<1024x896xf32, #tpu.memory_space<vmem>>, %arg9: memref<8x896xf32, #tpu.memory_space<vmem>>) attributes {dimension_semantics = [#tpu.dimension_semantics<parallel>], iteration_bounds = array<i64: 1>, scalar_prefetch = 0 : i64, scratch_operands = 0 : i64, tpu.core_type = #tpu.core_type<tc>, window_params = [{transform_indices = @transform_0, window_bounds = array<i64: 192, 140>}, {pipeline_mode = #tpu.pipeline_mode<synchronous>, transform_indices = @transform_1, window_bounds = array<i64: 140, 512>}, {pipeline_mode = #tpu.pipeline_mode<synchronous>, transform_indices = @transform_2, window_bounds = array<i64: 1, 512>}, {pipeline_mode = #tpu.pipeline_mode<synchronous>, transform_indices = @transform_3, window_bounds = array<i64: 1, 512>}, {pipeline_mode = #tpu.pipeline_mode<synchronous>, transform_indices = @transform_4, window_bounds = array<i64: 1280, 512>}, {pipeline_mode = #tpu.pipeline_mode<synchronous>, transform_indices = @transform_5, window_bounds = array<i64: 1, 512>}, {pipeline_mode = #tpu.pipeline_mode<synchronous>, transform_indices = @transform_6, window_bounds = array<i64: 1, 512>}, {pipeline_mode = #tpu.pipeline_mode<synchronous>, transform_indices = @transform_7, window_bounds = array<i64: 1024, 896>}, {transform_indices = @transform_8, window_bounds = array<i64: 8, 896>}]} {
    %c0 = arith.constant 0 : index
    %c0_0 = arith.constant 0 : index
    %0 = vector.load %arg1[%c0, %c0_0] : memref<192x140xf32, #tpu.memory_space<vmem>>, vector<192x140xf32>
    %c0_1 = arith.constant 0 : index
    %c0_2 = arith.constant 0 : index
    %1 = vector.load %arg2[%c0_1, %c0_2] : memref<140x512xf32, #tpu.memory_space<vmem>>, vector<140x512xf32>
    %cst = arith.constant dense<0.000000e+00> : vector<192x512xf32>
    %2 = tpu.matmul %0, %1, %cst {dimension_numbers = #tpu.dot_dimension_numbers<[1], [0], [0], [1], [0, 0, 1, 1], [], []>} : vector<192x140xf32>, vector<140x512xf32>, vector<192x512xf32> -> vector<192x512xf32>
    %c0_3 = arith.constant 0 : index
    %c0_4 = arith.constant 0 : index
    %3 = vector.load %arg3[%c0_3, %c0_4] : memref<1x512xf32, #tpu.memory_space<vmem>>, vector<1x512xf32>
    %4 = vector.broadcast %3 : vector<1x512xf32> to vector<192x512xf32>
    %5 = arith.mulf %2, %4 : vector<192x512xf32>
    %c0_5 = arith.constant 0 : index
    %c0_6 = arith.constant 0 : index
    %6 = vector.load %arg4[%c0_5, %c0_6] : memref<1x512xf32, #tpu.memory_space<vmem>>, vector<1x512xf32>
    %7 = vector.broadcast %6 : vector<1x512xf32> to vector<192x512xf32>
    %8 = arith.addf %5, %7 : vector<192x512xf32>
    %cst_7 = arith.constant 0.000000e+00 : f32
    %9 = vector.broadcast %cst_7 : f32 to vector<192x512xf32>
    %10 = arith.maximumf %8, %9 : vector<192x512xf32>
    %11 = vector.extract_strided_slice %10 {offsets = [0, 0], sizes = [192, 256], strides = [1, 1]} : vector<192x512xf32> to vector<192x256xf32>
    %12 = vector.extract_strided_slice %10 {offsets = [0, 256], sizes = [192, 256], strides = [1, 1]} : vector<192x512xf32> to vector<192x256xf32>
    %13 = arith.maximumf %11, %12 : vector<192x256xf32>
    %14 = vector.shape_cast %13 : vector<192x256xf32> to vector<8x12x2x256xf32>
    %15 = vector.extract_strided_slice %14 {offsets = [0, 0, 0, 0], sizes = [8, 12, 1, 256], strides = [1, 1, 1, 1]} : vector<8x12x2x256xf32> to vector<8x12x1x256xf32>
    %16 = vector.shape_cast %15 : vector<8x12x1x256xf32> to vector<8x12x256xf32>
    %17 = vector.extract_strided_slice %14 {offsets = [0, 0, 1, 0], sizes = [8, 12, 1, 256], strides = [1, 1, 1, 1]} : vector<8x12x2x256xf32> to vector<8x12x1x256xf32>
    %18 = vector.shape_cast %17 : vector<8x12x1x256xf32> to vector<8x12x256xf32>
    %19 = arith.maximumf %16, %18 : vector<8x12x256xf32>
    %20 = vector.extract_strided_slice %19 {offsets = [0, 0, 0], sizes = [8, 8, 256], strides = [1, 1, 1]} : vector<8x12x256xf32> to vector<8x8x256xf32>
    %21 = vector.extract_strided_slice %19 {offsets = [0, 1, 0], sizes = [8, 8, 256], strides = [1, 1, 1]} : vector<8x12x256xf32> to vector<8x8x256xf32>
    %22 = vector.extract_strided_slice %19 {offsets = [0, 2, 0], sizes = [8, 8, 256], strides = [1, 1, 1]} : vector<8x12x256xf32> to vector<8x8x256xf32>
    %23 = vector.extract_strided_slice %19 {offsets = [0, 3, 0], sizes = [8, 8, 256], strides = [1, 1, 1]} : vector<8x12x256xf32> to vector<8x8x256xf32>
    %24 = vector.extract_strided_slice %19 {offsets = [0, 4, 0], sizes = [8, 8, 256], strides = [1, 1, 1]} : vector<8x12x256xf32> to vector<8x8x256xf32>
    %25 = tpu.concatenate %20, %21, %22, %23, %24 in 2 : vector<8x8x256xf32>, vector<8x8x256xf32>, vector<8x8x256xf32>, vector<8x8x256xf32>, vector<8x8x256xf32> -> vector<8x8x1280xf32>
    %26 = vector.shape_cast %25 : vector<8x8x1280xf32> to vector<64x1280xf32>
    %c0_8 = arith.constant 0 : index
    %c0_9 = arith.constant 0 : index
    %27 = vector.load %arg5[%c0_8, %c0_9] : memref<1280x512xf32, #tpu.memory_space<vmem>>, vector<1280x512xf32>
    %cst_10 = arith.constant dense<0.000000e+00> : vector<64x512xf32>
    %28 = tpu.matmul %26, %27, %cst_10 {dimension_numbers = #tpu.dot_dimension_numbers<[1], [0], [0], [1], [0, 0, 1, 1], [], []>} : vector<64x1280xf32>, vector<1280x512xf32>, vector<64x512xf32> -> vector<64x512xf32>
    %c0_11 = arith.constant 0 : index
    %c0_12 = arith.constant 0 : index
    %29 = vector.load %arg6[%c0_11, %c0_12] : memref<1x512xf32, #tpu.memory_space<vmem>>, vector<1x512xf32>
    %30 = vector.broadcast %29 : vector<1x512xf32> to vector<64x512xf32>
    %31 = arith.mulf %28, %30 : vector<64x512xf32>
    %c0_13 = arith.constant 0 : index
    %c0_14 = arith.constant 0 : index
    %32 = vector.load %arg7[%c0_13, %c0_14] : memref<1x512xf32, #tpu.memory_space<vmem>>, vector<1x512xf32>
    %33 = vector.broadcast %32 : vector<1x512xf32> to vector<64x512xf32>
    %34 = arith.addf %31, %33 : vector<64x512xf32>
    %cst_15 = arith.constant 0.000000e+00 : f32
    %35 = vector.broadcast %cst_15 : f32 to vector<64x512xf32>
    %36 = arith.maximumf %34, %35 : vector<64x512xf32>
    %37 = vector.extract_strided_slice %36 {offsets = [0, 0], sizes = [64, 256], strides = [1, 1]} : vector<64x512xf32> to vector<64x256xf32>
    %38 = vector.extract_strided_slice %36 {offsets = [0, 256], sizes = [64, 256], strides = [1, 1]} : vector<64x512xf32> to vector<64x256xf32>
    %39 = arith.maximumf %37, %38 : vector<64x256xf32>
    %40 = vector.shape_cast %39 : vector<64x256xf32> to vector<8x4x2x256xf32>
    %41 = vector.extract_strided_slice %40 {offsets = [0, 0, 0, 0], sizes = [8, 4, 1, 256], strides = [1, 1, 1, 1]} : vector<8x4x2x256xf32> to vector<8x4x1x256xf32>
    %42 = vector.shape_cast %41 : vector<8x4x1x256xf32> to vector<8x4x256xf32>
    %43 = vector.extract_strided_slice %40 {offsets = [0, 0, 1, 0], sizes = [8, 4, 1, 256], strides = [1, 1, 1, 1]} : vector<8x4x2x256xf32> to vector<8x4x1x256xf32>
    %44 = vector.shape_cast %43 : vector<8x4x1x256xf32> to vector<8x4x256xf32>
    %45 = arith.maximumf %42, %44 : vector<8x4x256xf32>
    %46 = vector.extract_strided_slice %45 {offsets = [0, 0, 0], sizes = [8, 1, 256], strides = [1, 1, 1]} : vector<8x4x256xf32> to vector<8x1x256xf32>
    %47 = vector.shape_cast %46 : vector<8x1x256xf32> to vector<8x256xf32>
    %48 = vector.extract_strided_slice %45 {offsets = [0, 1, 0], sizes = [8, 1, 256], strides = [1, 1, 1]} : vector<8x4x256xf32> to vector<8x1x256xf32>
    %49 = vector.shape_cast %48 : vector<8x1x256xf32> to vector<8x256xf32>
    %50 = vector.extract_strided_slice %45 {offsets = [0, 2, 0], sizes = [8, 1, 256], strides = [1, 1, 1]} : vector<8x4x256xf32> to vector<8x1x256xf32>
    %51 = vector.shape_cast %50 : vector<8x1x256xf32> to vector<8x256xf32>
    %52 = vector.extract_strided_slice %45 {offsets = [0, 3, 0], sizes = [8, 1, 256], strides = [1, 1, 1]} : vector<8x4x256xf32> to vector<8x1x256xf32>
    %53 = vector.shape_cast %52 : vector<8x1x256xf32> to vector<8x256xf32>
    %54 = tpu.concatenate %47, %49, %51, %53 in 1 : vector<8x256xf32>, vector<8x256xf32>, vector<8x256xf32>, vector<8x256xf32> -> vector<8x1024xf32>
    %c0_16 = arith.constant 0 : index
    %c0_17 = arith.constant 0 : index
    %55 = vector.load %arg8[%c0_16, %c0_17] : memref<1024x896xf32, #tpu.memory_space<vmem>>, vector<1024x896xf32>
    %cst_18 = arith.constant dense<0.000000e+00> : vector<8x896xf32>
    %56 = tpu.matmul %54, %55, %cst_18 {dimension_numbers = #tpu.dot_dimension_numbers<[1], [0], [0], [1], [0, 0, 1, 1], [], []>} : vector<8x1024xf32>, vector<1024x896xf32>, vector<8x896xf32> -> vector<8x896xf32>
    %c0_19 = arith.constant 0 : index
    %c0_20 = arith.constant 0 : index
    %57 = vector.load %arg9[%c0_19, %c0_20] : memref<8x896xf32, #tpu.memory_space<vmem>>, vector<8x896xf32>
    tpu.vector_store %arg9[%c0_19, %c0_20], %56 {strides = array<i32>} : memref<8x896xf32, #tpu.memory_space<vmem>>, vector<8x896xf32>,
    return
  }
  func.func @transform_0(%arg0: i32) -> (i32, i32) {
    %c0_i32 = arith.constant 0 : i32
    %c0_i32_0 = arith.constant 0 : i32
    return %arg0, %c0_i32 : i32, i32
  }
  func.func @transform_1(%arg0: i32) -> (i32, i32) {
    %c0_i32 = arith.constant 0 : i32
    %c0_i32_0 = arith.constant 0 : i32
    %c0_i32_1 = arith.constant 0 : i32
    return %c0_i32, %c0_i32_0 : i32, i32
  }
  func.func @transform_2(%arg0: i32) -> (i32, i32) {
    %c0_i32 = arith.constant 0 : i32
    %c0_i32_0 = arith.constant 0 : i32
    %c0_i32_1 = arith.constant 0 : i32
    return %c0_i32, %c0_i32_0 : i32, i32
  }
  func.func @transform_3(%arg0: i32) -> (i32, i32) {
    %c0_i32 = arith.constant 0 : i32
    %c0_i32_0 = arith.constant 0 : i32
    %c0_i32_1 = arith.constant 0 : i32
    return %c0_i32, %c0_i32_0 : i32, i32
  }
  func.func @transform_4(%arg0: i32) -> (i32, i32) {
    %c0_i32 = arith.constant 0 : i32
    %c0_i32_0 = arith.constant 0 : i32
    %c0_i32_1 = arith.constant 0 : i32
    return %c0_i32, %c0_i32_0 : i32, i32
  }
  func.func @transform_5(%arg0: i32) -> (i32, i32) {
    %c0_i32 = arith.constant 0 : i32
    %c0_i32_0 = arith.constant 0 : i32
    %c0_i32_1 = arith.constant 0 : i32
    return %c0_i32, %c0_i32_0 : i32, i32
  }
  func.func @transform_6(%arg0: i32) -> (i32, i32) {
    %c0_i32 = arith.constant 0 : i32
    %c0_i32_0 = arith.constant 0 : i32
    %c0_i32_1 = arith.constant 0 : i32
    return %c0_i32, %c0_i32_0 : i32, i32
  }
  func.func @transform_7(%arg0: i32) -> (i32, i32) {
    %c0_i32 = arith.constant 0 : i32
    %c0_i32_0 = arith.constant 0 : i32
    %c0_i32_1 = arith.constant 0 : i32
    return %c0_i32, %c0_i32_0 : i32, i32
  }
  func.func @transform_8(%arg0: i32) -> (i32, i32) {
    %c0_i32 = arith.constant 0 : i32
    %c0_i32_0 = arith.constant 0 : i32
    return %arg0, %c0_i32 : i32, i32
  }
}

</mosaic_0001>

<llo_original>
// kernel: feature_forward.1
$region0: #{feature_forward.1}
  #allocation0 [shape = 'u32[]', space=smem, size = 0x4, offset = 0x4, fixed_abs, tag = 'smem constant byte address 0x4 - core index']
  #allocation1 [shape = 'u32[72,128]{1,0:T(1,128)}', space=vmem, size = 0x9000, scoped, tag = 'internal scratch']
  %s0 = inlined_call_operand.vmem [shape: f32[192,140], index: 0, kind: input, shape index: {}]
  %s1 = inlined_call_operand.hbm [shape: f32[140,512], index: 1, kind: input, shape index: {}]
  %s2 = inlined_call_operand.hbm [shape: f32[1,512], index: 2, kind: input, shape index: {}]
  %s3 = inlined_call_operand.hbm [shape: f32[1,512], index: 3, kind: input, shape index: {}]
  %s4 = inlined_call_operand.hbm [shape: f32[1280,512], index: 4, kind: input, shape index: {}]
  %s5 = inlined_call_operand.hbm [shape: f32[1,512], index: 5, kind: input, shape index: {}]
  %s6 = inlined_call_operand.hbm [shape: f32[1,512], index: 6, kind: input, shape index: {}]
  %s7 = inlined_call_operand.hbm [shape: f32[1024,896], index: 7, kind: input, shape index: {}]
  %s8 = inlined_call_operand.vmem [shape: f32[8,896], index: 8, kind: output, shape index: {}]
  %s9 = sld [smem:[#allocation0]]
  $region70: #{feature_forward.1} parent=0
    _
  %s11 = ssub.s32 1, %s9
  %s12 = scalar_select 0, %s11, %s9
  $region1: #{feature_forward.1} parent=0
    #allocation2 [shape = 'u8[294912]{0}', space=vmem, size = 0x48000, scoped, tag = 'input window, operand 1, single buffered']
    #allocation3 [shape = 's32[1]{0}', space=sflag, size = 0x4, scoped, tag = 'scoped memory for feature_forward.1']
    #allocation4 [shape = 'u8[2048]{0}', space=vmem, size = 0x800, scoped, tag = 'input window, operand 2, single buffered']
    #allocation5 [shape = 's32[1]{0}', space=sflag, size = 0x4, scoped, tag = 'scoped memory for feature_forward.1']
    #allocation6 [shape = 'u8[2048]{0}', space=vmem, size = 0x800, scoped, tag = 'input window, operand 3, single buffered']
    #allocation7 [shape = 'u8[2621440]{0}', space=vmem, size = 0x280000, scoped, tag = 'input window, operand 4, single buffered']
    #allocation8 [shape = 's32[1]{0}', space=sflag, size = 0x4, scoped, tag = 'scoped memory for feature_forward.1']
    #allocation9 [shape = 'u8[2048]{0}', space=vmem, size = 0x800, scoped, tag = 'input window, operand 5, single buffered']
    #allocation10 [shape = 'u8[2048]{0}', space=vmem, size = 0x800, scoped, tag = 'input window, operand 6, single buffered']
    #allocation11 [shape = 's32[1]{0}', space=sflag, size = 0x4, scoped, tag = 'scoped memory for feature_forward.1']
    #allocation12 [shape = 'u8[3670016]{0}', space=vmem, size = 0x380000, scoped, tag = 'input window, operand 7, single buffered']
    %13 = vsyncpa [#allocation3], 0
    %14 = vsyncpa [#allocation5], 0
    %15 = vsyncpa [#allocation8], 0
    %16 = vsyncpa [#allocation11], 0
    // Predicated region
    $region2: #{feature_forward.1} parent=1 // pred_check
      _
    $region3: #{feature_forward.1} parent=1 // pred_check_branch
      %18 = sbr.rel (0) target = $region5
    $region4: #{feature_forward.1} parent=1 // pred_region
      _
    $region5: #{feature_forward.1} parent=1 // pred_fallthru
      _
    // Predicated region
    $region6: #{feature_forward.1} parent=1 // pred_check
      _
    $region7: #{feature_forward.1} parent=1 // pred_check_branch
      %20 = sbr.rel (0) target = $region9
    $region8: #{feature_forward.1} parent=1 // pred_region
      %22 = vsyncadd [#allocation3], 0
      %s23 = sshll.u32 %s1, 4
      %s24 = int_to_ptr.hbm [resolvable:$true] %s23
      %s25 = sshll.u32 [#allocation2], 4
      %s26 = int_to_ptr.vmem [resolvable:$true] %s25
      %31 = dma.hbm_to_vmem [thread:$0]  %s24, 9216, %s26, [#allocation3], 512, 512, 32
    $region9: #{feature_forward.1} parent=1 // pred_fallthru
      _
    // Predicated region
    $region10: #{feature_forward.1} parent=1 // pred_check
      _
    $region11: #{feature_forward.1} parent=1 // pred_check_branch
      %33 = sbr.rel (0) target = $region13
    $region12: #{feature_forward.1} parent=1 // pred_region
      %35 = vsyncadd [#allocation5], 0
      %s37 = sshll.u32 %s2, 4
      %s38 = int_to_ptr.hbm [resolvable:$true] %s37
      %s39 = sshll.u32 [#allocation4], 4
      %s40 = int_to_ptr.vmem [resolvable:$true] %s39
      %42 = dma.hbm_to_vmem [thread:$0]  %s38, 64, %s40, [#allocation5]
    $region13: #{feature_forward.1} parent=1 // pred_fallthru
      _
    // Predicated region
    $region14: #{feature_forward.1} parent=1 // pred_check
      _
    $region15: #{feature_forward.1} parent=1 // pred_check_branch
      %44 = sbr.rel (0) target = $region17
    $region16: #{feature_forward.1} parent=1 // pred_region
      %46 = vsyncadd [#allocation5], 0
      %s48 = sshll.u32 %s3, 4
      %s49 = int_to_ptr.hbm [resolvable:$true] %s48
      %s50 = sshll.u32 [#allocation6], 4
      %s51 = int_to_ptr.vmem [resolvable:$true] %s50
      %53 = dma.hbm_to_vmem [thread:$0]  %s49, 64, %s51, [#allocation5]
    $region17: #{feature_forward.1} parent=1 // pred_fallthru
      _
    // Predicated region
    $region18: #{feature_forward.1} parent=1 // pred_check
      _
    $region19: #{feature_forward.1} parent=1 // pred_check_branch
      %55 = sbr.rel (0) target = $region21
    $region20: #{feature_forward.1} parent=1 // pred_region
      %57 = vsyncadd [#allocation8], 0
      %s58 = sshll.u32 %s4, 4
      %s59 = int_to_ptr.hbm [resolvable:$true] %s58
      %s60 = sshll.u32 [#allocation7], 4
      %s61 = int_to_ptr.vmem [resolvable:$true] %s60
      %66 = dma.hbm_to_vmem [thread:$0]  %s59, 81920, %s61, [#allocation8], 512, 512, 32
    $region21: #{feature_forward.1} parent=1 // pred_fallthru
      _
    // Predicated region
    $region22: #{feature_forward.1} parent=1 // pred_check
      _
    $region23: #{feature_forward.1} parent=1 // pred_check_branch
      %68 = sbr.rel (0) target = $region25
    $region24: #{feature_forward.1} parent=1 // pred_region
      %70 = vsyncadd [#allocation8], 0
      %s72 = sshll.u32 %s5, 4
      %s73 = int_to_ptr.hbm [resolvable:$true] %s72
      %s74 = sshll.u32 [#allocation9], 4
      %s75 = int_to_ptr.vmem [resolvable:$true] %s74
      %77 = dma.hbm_to_vmem [thread:$0]  %s73, 64, %s75, [#allocation8]
    $region25: #{feature_forward.1} parent=1 // pred_fallthru
      _
    // Predicated region
    $region26: #{feature_forward.1} parent=1 // pred_check
      _
    $region27: #{feature_forward.1} parent=1 // pred_check_branch
      %79 = sbr.rel (0) target = $region29
    $region28: #{feature_forward.1} parent=1 // pred_region
      %81 = vsyncadd [#allocation11], 0
      %s83 = sshll.u32 %s6, 4
      %s84 = int_to_ptr.hbm [resolvable:$true] %s83
      %s85 = sshll.u32 [#allocation10], 4
      %s86 = int_to_ptr.vmem [resolvable:$true] %s85
      %88 = dma.hbm_to_vmem [thread:$0]  %s84, 64, %s86, [#allocation11]
    $region29: #{feature_forward.1} parent=1 // pred_fallthru
      _
    // Predicated region
    $region30: #{feature_forward.1} parent=1 // pred_check
      _
    $region31: #{feature_forward.1} parent=1 // pred_check_branch
      %90 = sbr.rel (0) target = $region33
    $region32: #{feature_forward.1} parent=1 // pred_region
      %92 = vsyncadd [#allocation11], 0
      %s93 = sshll.u32 %s7, 4
      %s94 = int_to_ptr.hbm [resolvable:$true] %s93
      %s95 = sshll.u32 [#allocation12], 4
      %s96 = int_to_ptr.vmem [resolvable:$true] %s95
      %101 = dma.hbm_to_vmem [thread:$0]  %s94, 114688, %s96, [#allocation11], 896, 896, 56
    $region33: #{feature_forward.1} parent=1 // pred_fallthru
      _
    // Predicated region
    $region34: #{feature_forward.1} parent=1 // pred_check
      _
    $region35: #{feature_forward.1} parent=1 // pred_check_branch
      %103 = sbr.rel (0) target = $region37
    $region36: #{feature_forward.1} parent=1 // pred_region
      %105 = dma.done [#allocation3], 9216
    $region37: #{feature_forward.1} parent=1 // pred_fallthru
      _
    // Predicated region
    $region38: #{feature_forward.1} parent=1 // pred_check
      _
    $region39: #{feature_forward.1} parent=1 // pred_check_branch
      %107 = sbr.rel (0) target = $region41
    $region40: #{feature_forward.1} parent=1 // pred_region
      %109 = dma.done [#allocation5], 64
    $region41: #{feature_forward.1} parent=1 // pred_fallthru
      _
    // Predicated region
    $region42: #{feature_forward.1} parent=1 // pred_check
      _
    $region43: #{feature_forward.1} parent=1 // pred_check_branch
      %111 = sbr.rel (0) target = $region45
    $region44: #{feature_forward.1} parent=1 // pred_region
      %113 = dma.done [#allocation5], 64
    $region45: #{feature_forward.1} parent=1 // pred_fallthru
      _
    // Predicated region
    $region46: #{feature_forward.1} parent=1 // pred_check
      _
    $region47: #{feature_forward.1} parent=1 // pred_check_branch
      %115 = sbr.rel (0) target = $region49
    $region48: #{feature_forward.1} parent=1 // pred_region
      %117 = dma.done [#allocation8], 81920
    $region49: #{feature_forward.1} parent=1 // pred_fallthru
      _
    // Predicated region
    $region50: #{feature_forward.1} parent=1 // pred_check
      _
    $region51: #{feature_forward.1} parent=1 // pred_check_branch
      %119 = sbr.rel (0) target = $region53
    $region52: #{feature_forward.1} parent=1 // pred_region
      %121 = dma.done [#allocation8], 64
    $region53: #{feature_forward.1} parent=1 // pred_fallthru
      _
    // Predicated region
    $region54: #{feature_forward.1} parent=1 // pred_check
      _
    $region55: #{feature_forward.1} parent=1 // pred_check_branch
      %123 = sbr.rel (0) target = $region57
    $region56: #{feature_forward.1} parent=1 // pred_region
      %125 = dma.done [#allocation11], 64
    $region57: #{feature_forward.1} parent=1 // pred_fallthru
      _
    // Predicated region
    $region58: #{feature_forward.1} parent=1 // pred_check
      _
    $region59: #{feature_forward.1} parent=1 // pred_check_branch
      %127 = sbr.rel (0) target = $region61
    $region60: #{feature_forward.1} parent=1 // pred_region
      %129 = dma.done [#allocation11], 114688
    $region61: #{feature_forward.1} parent=1 // pred_fallthru
      _
    %v130 = vld [vmem:[%s0] sm:$0xff]
    %v131 = vld [vmem:[%s0 + $0x8] sm:$0xff]
    %v132 = vld [vmem:[%s0 + $0x10] sm:$0xff]
    %v133 = vld [vmem:[%s0 + $0x18] sm:$0xff]
    %v134 = vld [vmem:[%s0 + $0x20] sm:$0xff]
    %v135 = vld [vmem:[%s0 + $0x28] sm:$0xff]
    %v136 = vld [vmem:[%s0 + $0x30] sm:$0xff]
    %v137 = vld [vmem:[%s0 + $0x38] sm:$0xff]
    %v138 = vld [vmem:[%s0 + $0x40] sm:$0xff]
    %v139 = vld [vmem:[%s0 + $0x48] sm:$0xff]
    %v140 = vld [vmem:[%s0 + $0x50] sm:$0xff]
    %v141 = vld [vmem:[%s0 + $0x58] sm:$0xff]
    %v142 = vld [vmem:[%s0 + $0x60] sm:$0xff]
    %v143 = vld [vmem:[%s0 + $0x68] sm:$0xff]
    %v144 = vld [vmem:[%s0 + $0x70] sm:$0xff]
    %v145 = vld [vmem:[%s0 + $0x78] sm:$0xff]
    %v146 = vld [vmem:[%s0 + $0x80] sm:$0xff]
    %v147 = vld [vmem:[%s0 + $0x88] sm:$0xff]
    %v148 = vld [vmem:[%s0 + $0x90] sm:$0xff]
    %v149 = vld [vmem:[%s0 + $0x98] sm:$0xff]
    %v150 = vld [vmem:[%s0 + $0xa0] sm:$0xff]
    %v151 = vld [vmem:[%s0 + $0xa8] sm:$0xff]
    %v152 = vld [vmem:[%s0 + $0xb0] sm:$0xff]
    %v153 = vld [vmem:[%s0 + $0xb8] sm:$0xff]
    %v154 = vld [vmem:[%s0 + $0xc0] sm:$0xff]
    %v155 = vld [vmem:[%s0 + $0xc8] sm:$0xff]
    %v156 = vld [vmem:[%s0 + $0xd0] sm:$0xff]
    %v157 = vld [vmem:[%s0 + $0xd8] sm:$0xff]
    %v158 = vld [vmem:[%s0 + $0xe0] sm:$0xff]
    %v159 = vld [vmem:[%s0 + $0xe8] sm:$0xff]
    %v160 = vld [vmem:[%s0 + $0xf0] sm:$0xff]
    %v161 = vld [vmem:[%s0 + $0xf8] sm:$0xff]
    %v162 = vld [vmem:[%s0 + $0x100] sm:$0xff]
    %v163 = vld [vmem:[%s0 + $0x108] sm:$0xff]
    %v164 = vld [vmem:[%s0 + $0x110] sm:$0xff]
    %v165 = vld [vmem:[%s0 + $0x118] sm:$0xff]
    %v166 = vld [vmem:[%s0 + $0x120] sm:$0xff]
    %v167 = vld [vmem:[%s0 + $0x128] sm:$0xff]
    %v168 = vld [vmem:[%s0 + $0x130] sm:$0xff]
    %v169 = vld [vmem:[%s0 + $0x138] sm:$0xff]
    %v170 = vld [vmem:[%s0 + $0x140] sm:$0xff]
    %v171 = vld [vmem:[%s0 + $0x148] sm:$0xff]
    %v172 = vld [vmem:[%s0 + $0x150] sm:$0xff]
    %v173 = vld [vmem:[%s0 + $0x158] sm:$0xff]
    %v174 = vld [vmem:[%s0 + $0x160] sm:$0xff]
    %v175 = vld [vmem:[%s0 + $0x168] sm:$0xff]
    %v176 = vld [vmem:[%s0 + $0x170] sm:$0xff]
    %v177 = vld [vmem:[%s0 + $0x178] sm:$0xff]
    %v178 = vld [vmem:[#allocation2] sm:$0xff]
    %v179 = vld [vmem:[#allocation2 + $0x8] sm:$0xff]
    %v180 = vld [vmem:[#allocation2 + $0x10] sm:$0xff]
    %v181 = vld [vmem:[#allocation2 + $0x18] sm:$0xff]
    %v182 = vld [vmem:[#allocation2 + $0x20] sm:$0xff]
    %v183 = vld [vmem:[#allocation2 + $0x28] sm:$0xff]
    %v184 = vld [vmem:[#allocation2 + $0x30] sm:$0xff]
    %v185 = vld [vmem:[#allocation2 + $0x38] sm:$0xff]
    %v186 = vld [vmem:[#allocation2 + $0x40] sm:$0xff]
    %v187 = vld [vmem:[#allocation2 + $0x48] sm:$0xff]
    %v188 = vld [vmem:[#allocation2 + $0x50] sm:$0xff]
    %v189 = vld [vmem:[#allocation2 + $0x58] sm:$0xff]
    %v190 = vld [vmem:[#allocation2 + $0x60] sm:$0xff]
    %v191 = vld [vmem:[#allocation2 + $0x68] sm:$0xff]
    %v192 = vld [vmem:[#allocation2 + $0x70] sm:$0xff]
    %v193 = vld [vmem:[#allocation2 + $0x78] sm:$0xff]
    %v194 = vld [vmem:[#allocation2 + $0x80] sm:$0xff]
    %v195 = vld [vmem:[#allocation2 + $0x88] sm:$0xff]
    %v196 = vld [vmem:[#allocation2 + $0x90] sm:$0xff]
    %v197 = vld [vmem:[#allocation2 + $0x98] sm:$0xff]
    %v198 = vld [vmem:[#allocation2 + $0xa0] sm:$0xff]
    %v199 = vld [vmem:[#allocation2 + $0xa8] sm:$0xff]
    %v200 = vld [vmem:[#allocation2 + $0xb0] sm:$0xff]
    %v201 = vld [vmem:[#allocation2 + $0xb8] sm:$0xff]
    %v202 = vld [vmem:[#allocation2 + $0xc0] sm:$0xff]
    %v203 = vld [vmem:[#allocation2 + $0xc8] sm:$0xff]
    %v204 = vld [vmem:[#allocation2 + $0xd0] sm:$0xff]
    %v205 = vld [vmem:[#allocation2 + $0xd8] sm:$0xff]
    %v206 = vld [vmem:[#allocation2 + $0xe0] sm:$0xff]
    %v207 = vld [vmem:[#allocation2 + $0xe8] sm:$0xff]
    %v208 = vld [vmem:[#allocation2 + $0xf0] sm:$0xff]
    %v209 = vld [vmem:[#allocation2 + $0xf8] sm:$0xff]
    %v210 = vld [vmem:[#allocation2 + $0x100] sm:$0xff]
    %v211 = vld [vmem:[#allocation2 + $0x108] sm:$0xff]
    %v212 = vld [vmem:[#allocation2 + $0x110] sm:$0xff]
    %v213 = vld [vmem:[#allocation2 + $0x118] sm:$0xff]
    %v214 = vld [vmem:[#allocation2 + $0x120] sm:$0xff]
    %v215 = vld [vmem:[#allocation2 + $0x128] sm:$0xff]
    %v216 = vld [vmem:[#allocation2 + $0x130] sm:$0xff]
    %v217 = vld [vmem:[#allocation2 + $0x138] sm:$0xff]
    %v218 = vld [vmem:[#allocation2 + $0x140] sm:$0xff]
    %v219 = vld [vmem:[#allocation2 + $0x148] sm:$0xff]
    %v220 = vld [vmem:[#allocation2 + $0x150] sm:$0xff]
    %v221 = vld [vmem:[#allocation2 + $0x158] sm:$0xff]
    %v222 = vld [vmem:[#allocation2 + $0x160] sm:$0xff]
    %v223 = vld [vmem:[#allocation2 + $0x168] sm:$0xff]
    %v224 = vld [vmem:[#allocation2 + $0x170] sm:$0xff]
    %v225 = vld [vmem:[#allocation2 + $0x178] sm:$0xff]
    %v226 = vld [vmem:[#allocation2 + $0x180] sm:$0xff]
    %v227 = vld [vmem:[#allocation2 + $0x188] sm:$0xff]
    %v228 = vld [vmem:[#allocation2 + $0x190] sm:$0xff]
    %v229 = vld [vmem:[#allocation2 + $0x198] sm:$0xff]
    %v230 = vld [vmem:[#allocation2 + $0x1a0] sm:$0xff]
    %v231 = vld [vmem:[#allocation2 + $0x1a8] sm:$0xff]
    %v232 = vld [vmem:[#allocation2 + $0x1b0] sm:$0xff]
    %v233 = vld [vmem:[#allocation2 + $0x1b8] sm:$0xff]
    %v234 = vld [vmem:[#allocation2 + $0x1c0] sm:$0xff]
    %v235 = vld [vmem:[#allocation2 + $0x1c8] sm:$0xff]
    %v236 = vld [vmem:[#allocation2 + $0x1d0] sm:$0xff]
    %v237 = vld [vmem:[#allocation2 + $0x1d8] sm:$0xff]
    %v238 = vld [vmem:[#allocation2 + $0x1e0] sm:$0xff]
    %v239 = vld [vmem:[#allocation2 + $0x1e8] sm:$0xff]
    %v240 = vld [vmem:[#allocation2 + $0x1f0] sm:$0xff]
    %v241 = vld [vmem:[#allocation2 + $0x1f8] sm:$0xff]
    %v242 = vld [vmem:[#allocation2 + $0x200] sm:$0xff]
    %v243 = vld [vmem:[#allocation2 + $0x208] sm:$0xff]
    %v244 = vld [vmem:[#allocation2 + $0x210] sm:$0xff]
    %v245 = vld [vmem:[#allocation2 + $0x218] sm:$0xff]
    %v246 = vld [vmem:[#allocation2 + $0x220] sm:$0xf]
    %v247 = vld [vmem:[#allocation2 + $0x228] sm:$0xf]
    %v248 = vld [vmem:[#allocation2 + $0x230] sm:$0xf]
    %v249 = vld [vmem:[#allocation2 + $0x238] sm:$0xf]
    %vm250 = vcmask 97280
    %v252 = vsel %vm250, %v131, 0
    %v255 = vsel %vm250, %v133, 0
    %v258 = vsel %vm250, %v135, 0
    %v261 = vsel %vm250, %v137, 0
    %v264 = vsel %vm250, %v139, 0
    %v267 = vsel %vm250, %v141, 0
    %v270 = vsel %vm250, %v143, 0
    %v273 = vsel %vm250, %v145, 0
    %v276 = vsel %vm250, %v147, 0
    %v279 = vsel %vm250, %v149, 0
    %v282 = vsel %vm250, %v151, 0
    %v285 = vsel %vm250, %v153, 0
    %v288 = vsel %vm250, %v155, 0
    %v291 = vsel %vm250, %v157, 0
    %v294 = vsel %vm250, %v159, 0
    %v297 = vsel %vm250, %v161, 0
    %v300 = vsel %vm250, %v163, 0
    %v303 = vsel %vm250, %v165, 0
    %v306 = vsel %vm250, %v167, 0
    %v309 = vsel %vm250, %v169, 0
    %v312 = vsel %vm250, %v171, 0
    %v315 = vsel %vm250, %v173, 0
    %v318 = vsel %vm250, %v175, 0
    %v321 = vsel %vm250, %v177, 0
    %vm323 = vcmask 1043456
    %v325 = vsel %vm323, %v246, 0
    %v328 = vsel %vm323, %v247, 0
    %v331 = vsel %vm323, %v248, 0
    %v334 = vsel %vm323, %v249, 0
    %336 = vmatpush.msra.mxu0 %v238
    %337 = vmatpush.msra.mxu0 %v234
    %338 = vmatpush.msra.mxu0 %v230
    %339 = vmatpush.msra.mxu0 %v226
    %340 = vmatpush.msra.mxu0 %v222
    %341 = vmatpush.msra.mxu0 %v218
    %342 = vmatpush.msra.mxu0 %v214
    %343 = vmatpush.msra.mxu0 %v210
    %344 = vmatpush.msra.mxu0 %v206
    %345 = vmatpush.msra.mxu0 %v202
    %346 = vmatpush.msra.mxu0 %v198
    %347 = vmatpush.msra.mxu0 %v194
    %348 = vmatpush.msra.mxu0 %v190
    %349 = vmatpush.msra.mxu0 %v186
    %350 = vmatpush.msra.mxu0 %v182
    %351 = vmatpush.msra.mxu0 %v178
    %352 = vmatmul.f32.gmra.mxu0 %v130
    %v353 = vpop.f32.mrf.mxu0
    %v354 = vadd.f32 0.0, %v353
    %355 = vmatmul.f32.gmra.mxu0 %v132
    %v356 = vpop.f32.mrf.mxu0
    %v357 = vadd.f32 0.0, %v356
    %358 = vmatmul.f32.gmra.mxu0 %v134
    %v359 = vpop.f32.mrf.mxu0
    %v360 = vadd.f32 0.0, %v359
    %361 = vmatmul.f32.gmra.mxu0 %v136
    %v362 = vpop.f32.mrf.mxu0
    %v363 = vadd.f32 0.0, %v362
    %364 = vmatmul.f32.gmra.mxu0 %v138
    %v365 = vpop.f32.mrf.mxu0
    %v366 = vadd.f32 0.0, %v365
    %367 = vmatmul.f32.gmra.mxu0 %v140
    %v368 = vpop.f32.mrf.mxu0
    %v369 = vadd.f32 0.0, %v368
    %370 = vmatmul.f32.gmra.mxu0 %v142
    %v371 = vpop.f32.mrf.mxu0
    %v372 = vadd.f32 0.0, %v371
    %373 = vmatmul.f32.gmra.mxu0 %v144
    %v374 = vpop.f32.mrf.mxu0
    %v375 = vadd.f32 0.0, %v374
    %376 = vmatmul.f32.gmra.mxu0 %v146
    %v377 = vpop.f32.mrf.mxu0
    %v378 = vadd.f32 0.0, %v377
    %379 = vmatmul.f32.gmra.mxu0 %v148
    %v380 = vpop.f32.mrf.mxu0
    %v381 = vadd.f32 0.0, %v380
    %382 = vmatmul.f32.gmra.mxu0 %v150
    %v383 = vpop.f32.mrf.mxu0
    %v384 = vadd.f32 0.0, %v383
    %385 = vmatmul.f32.gmra.mxu0 %v152
    %v386 = vpop.f32.mrf.mxu0
    %v387 = vadd.f32 0.0, %v386
    %388 = vmatmul.f32.gmra.mxu0 %v154
    %v389 = vpop.f32.mrf.mxu0
    %v390 = vadd.f32 0.0, %v389
    %391 = vmatmul.f32.gmra.mxu0 %v156
    %v392 = vpop.f32.mrf.mxu0
    %v393 = vadd.f32 0.0, %v392
    %394 = vmatmul.f32.gmra.mxu0 %v158
    %v395 = vpop.f32.mrf.mxu0
    %v396 = vadd.f32 0.0, %v395
    %397 = vmatmul.f32.gmra.mxu0 %v160
    %v398 = vpop.f32.mrf.mxu0
    %v399 = vadd.f32 0.0, %v398
    %400 = vmatmul.f32.gmra.mxu0 %v162
    %v401 = vpop.f32.mrf.mxu0
    %v402 = vadd.f32 0.0, %v401
    %403 = vmatmul.f32.gmra.mxu0 %v164
    %v404 = vpop.f32.mrf.mxu0
    %v405 = vadd.f32 0.0, %v404
    %406 = vmatmul.f32.gmra.mxu0 %v166
    %v407 = vpop.f32.mrf.mxu0
    %v408 = vadd.f32 0.0, %v407
    %409 = vmatmul.f32.gmra.mxu0 %v168
    %v410 = vpop.f32.mrf.mxu0
    %v411 = vadd.f32 0.0, %v410
    %412 = vmatmul.f32.gmra.mxu0 %v170
    %v413 = vpop.f32.mrf.mxu0
    %v414 = vadd.f32 0.0, %v413
    %415 = vmatmul.f32.gmra.mxu0 %v172
    %v416 = vpop.f32.mrf.mxu0
    %v417 = vadd.f32 0.0, %v416
    %418 = vmatmul.f32.gmra.mxu0 %v174
    %v419 = vpop.f32.mrf.mxu0
    %v420 = vadd.f32 0.0, %v419
    %421 = vmatmul.f32.gmra.mxu0 %v176
    %v422 = vpop.f32.mrf.mxu0
    %v423 = vadd.f32 0.0, %v422
    %424 = vdwg.mxu0
    %425 = vmatpush.msra.mxu0 0.0
    %426 = vmatpush.msra.mxu0 0.0
    %427 = vmatpush.msra.mxu0 0.0
    %428 = vmatpush.msra.mxu0 0.0
    %429 = vmatpush.msra.mxu0 0.0
    %430 = vmatpush.msra.mxu0 0.0
    %431 = vmatpush.msra.mxu0 0.0
    %432 = vmatpush.msra.mxu0 0.0
    %433 = vmatpush.msra.mxu0 0.0
    %434 = vmatpush.msra.mxu0 0.0
    %435 = vmatpush.msra.mxu0 0.0
    %436 = vmatpush.msra.mxu0 0.0
    %437 = vmatpush.msra.mxu0 0.0
    %438 = vmatpush.msra.mxu0 0.0
    %439 = vmatpush.msra.mxu0 %v325
    %440 = vmatpush.msra.mxu0 %v242
    %441 = vmatmul.f32.gmra.mxu0 %v252
    %v442 = vpop.f32.mrf.mxu0
    %v443 = vadd.f32 %v354, %v442
    %444 = vmatmul.f32.gmra.mxu0 %v255
    %v445 = vpop.f32.mrf.mxu0
    %v446 = vadd.f32 %v357, %v445
    %447 = vmatmul.f32.gmra.mxu0 %v258
    %v448 = vpop.f32.mrf.mxu0
    %v449 = vadd.f32 %v360, %v448
    %450 = vmatmul.f32.gmra.mxu0 %v261
    %v451 = vpop.f32.mrf.mxu0
    %v452 = vadd.f32 %v363, %v451
    %453 = vmatmul.f32.gmra.mxu0 %v264
    %v454 = vpop.f32.mrf.mxu0
    %v455 = vadd.f32 %v366, %v454
    %456 = vmatmul.f32.gmra.mxu0 %v267
    %v457 = vpop.f32.mrf.mxu0
    %v458 = vadd.f32 %v369, %v457
    %459 = vmatmul.f32.gmra.mxu0 %v270
    %v460 = vpop.f32.mrf.mxu0
    %v461 = vadd.f32 %v372, %v460
    %462 = vmatmul.f32.gmra.mxu0 %v273
    %v463 = vpop.f32.mrf.mxu0
    %v464 = vadd.f32 %v375, %v463
    %465 = vmatmul.f32.gmra.mxu0 %v276
    %v466 = vpop.f32.mrf.mxu0
    %v467 = vadd.f32 %v378, %v466
    %468 = vmatmul.f32.gmra.mxu0 %v279
    %v469 = vpop.f32.mrf.mxu0
    %v470 = vadd.f32 %v381, %v469
    %471 = vmatmul.f32.gmra.mxu0 %v282
    %v472 = vpop.f32.mrf.mxu0
    %v473 = vadd.f32 %v384, %v472
    %474 = vmatmul.f32.gmra.mxu0 %v285
    %v475 = vpop.f32.mrf.mxu0
    %v476 = vadd.f32 %v387, %v475
    %477 = vmatmul.f32.gmra.mxu0 %v288
    %v478 = vpop.f32.mrf.mxu0
    %v479 = vadd.f32 %v390, %v478
    %480 = vmatmul.f32.gmra.mxu0 %v291
    %v481 = vpop.f32.mrf.mxu0
    %v482 = vadd.f32 %v393, %v481
    %483 = vmatmul.f32.gmra.mxu0 %v294
    %v484 = vpop.f32.mrf.mxu0
    %v485 = vadd.f32 %v396, %v484
    %486 = vmatmul.f32.gmra.mxu0 %v297
    %v487 = vpop.f32.mrf.mxu0
    %v488 = vadd.f32 %v399, %v487
    %489 = vmatmul.f32.gmra.mxu0 %v300
    %v490 = vpop.f32.mrf.mxu0
    %v491 = vadd.f32 %v402, %v490
    %492 = vmatmul.f32.gmra.mxu0 %v303
    %v493 = vpop.f32.mrf.mxu0
    %v494 = vadd.f32 %v405, %v493
    %495 = vmatmul.f32.gmra.mxu0 %v306
    %v496 = vpop.f32.mrf.mxu0
    %v497 = vadd.f32 %v408, %v496
    %498 = vmatmul.f32.gmra.mxu0 %v309
    %v499 = vpop.f32.mrf.mxu0
    %v500 = vadd.f32 %v411, %v499
    %501 = vmatmul.f32.gmra.mxu0 %v312
    %v502 = vpop.f32.mrf.mxu0
    %v503 = vadd.f32 %v414, %v502
    %504 = vmatmul.f32.gmra.mxu0 %v315
    %v505 = vpop.f32.mrf.mxu0
    %v506 = vadd.f32 %v417, %v505
    %507 = vmatmul.f32.gmra.mxu0 %v318
    %v508 = vpop.f32.mrf.mxu0
    %v509 = vadd.f32 %v420, %v508
    %510 = vmatmul.f32.gmra.mxu0 %v321
    %v511 = vpop.f32.mrf.mxu0
    %v512 = vadd.f32 %v423, %v511
    %513 = vdwg.mxu0
    %514 = vmatpush.msra.mxu0 %v239
    %515 = vmatpush.msra.mxu0 %v235
    %516 = vmatpush.msra.mxu0 %v231
    %517 = vmatpush.msra.mxu0 %v227
    %518 = vmatpush.msra.mxu0 %v223
    %519 = vmatpush.msra.mxu0 %v219
    %520 = vmatpush.msra.mxu0 %v215
    %521 = vmatpush.msra.mxu0 %v211
    %522 = vmatpush.msra.mxu0 %v207
    %523 = vmatpush.msra.mxu0 %v203
    %524 = vmatpush.msra.mxu0 %v199
    %525 = vmatpush.msra.mxu0 %v195
    %526 = vmatpush.msra.mxu0 %v191
    %527 = vmatpush.msra.mxu0 %v187
    %528 = vmatpush.msra.mxu0 %v183
    %529 = vmatpush.msra.mxu0 %v179
    %530 = vmatmul.f32.gmra.mxu0 %v130
    %v531 = vpop.f32.mrf.mxu0
    %v532 = vadd.f32 0.0, %v531
    %533 = vmatmul.f32.gmra.mxu0 %v132
    %v534 = vpop.f32.mrf.mxu0
    %v535 = vadd.f32 0.0, %v534
    %536 = vmatmul.f32.gmra.mxu0 %v134
    %v537 = vpop.f32.mrf.mxu0
    %v538 = vadd.f32 0.0, %v537
    %539 = vmatmul.f32.gmra.mxu0 %v136
    %v540 = vpop.f32.mrf.mxu0
    %v541 = vadd.f32 0.0, %v540
    %542 = vmatmul.f32.gmra.mxu0 %v138
    %v543 = vpop.f32.mrf.mxu0
    %v544 = vadd.f32 0.0, %v543
    %545 = vmatmul.f32.gmra.mxu0 %v140
    %v546 = vpop.f32.mrf.mxu0
    %v547 = vadd.f32 0.0, %v546
    %548 = vmatmul.f32.gmra.mxu0 %v142
    %v549 = vpop.f32.mrf.mxu0
    %v550 = vadd.f32 0.0, %v549
    %551 = vmatmul.f32.gmra.mxu0 %v144
    %v552 = vpop.f32.mrf.mxu0
    %v553 = vadd.f32 0.0, %v552
    %554 = vmatmul.f32.gmra.mxu0 %v146
    %v555 = vpop.f32.mrf.mxu0
    %v556 = vadd.f32 0.0, %v555
    %557 = vmatmul.f32.gmra.mxu0 %v148
    %v558 = vpop.f32.mrf.mxu0
    %v559 = vadd.f32 0.0, %v558
    %560 = vmatmul.f32.gmra.mxu0 %v150
    %v561 = vpop.f32.mrf.mxu0
    %v562 = vadd.f32 0.0, %v561
    %563 = vmatmul.f32.gmra.mxu0 %v152
    %v564 = vpop.f32.mrf.mxu0
    %v565 = vadd.f32 0.0, %v564
    %566 = vmatmul.f32.gmra.mxu0 %v154
    %v567 = vpop.f32.mrf.mxu0
    %v568 = vadd.f32 0.0, %v567
    %569 = vmatmul.f32.gmra.mxu0 %v156
    %v570 = vpop.f32.mrf.mxu0
    %v571 = vadd.f32 0.0, %v570
    %572 = vmatmul.f32.gmra.mxu0 %v158
    %v573 = vpop.f32.mrf.mxu0
    %v574 = vadd.f32 0.0, %v573
    %575 = vmatmul.f32.gmra.mxu0 %v160
    %v576 = vpop.f32.mrf.mxu0
    %v577 = vadd.f32 0.0, %v576
    %578 = vmatmul.f32.gmra.mxu0 %v162
    %v579 = vpop.f32.mrf.mxu0
    %v580 = vadd.f32 0.0, %v579
    %581 = vmatmul.f32.gmra.mxu0 %v164
    %v582 = vpop.f32.mrf.mxu0
    %v583 = vadd.f32 0.0, %v582
    %584 = vmatmul.f32.gmra.mxu0 %v166
    %v585 = vpop.f32.mrf.mxu0
    %v586 = vadd.f32 0.0, %v585
    %587 = vmatmul.f32.gmra.mxu0 %v168
    %v588 = vpop.f32.mrf.mxu0
    %v589 = vadd.f32 0.0, %v588
    %590 = vmatmul.f32.gmra.mxu0 %v170
    %v591 = vpop.f32.mrf.mxu0
    %v592 = vadd.f32 0.0, %v591
    %593 = vmatmul.f32.gmra.mxu0 %v172
    %v594 = vpop.f32.mrf.mxu0
    %v595 = vadd.f32 0.0, %v594
    %596 = vmatmul.f32.gmra.mxu0 %v174
    %v597 = vpop.f32.mrf.mxu0
    %v598 = vadd.f32 0.0, %v597
    %599 = vmatmul.f32.gmra.mxu0 %v176
    %v600 = vpop.f32.mrf.mxu0
    %v601 = vadd.f32 0.0, %v600
    %602 = vdwg.mxu0
    %603 = vmatpush.msra.mxu0 0.0
    %604 = vmatpush.msra.mxu0 0.0
    %605 = vmatpush.msra.mxu0 0.0
    %606 = vmatpush.msra.mxu0 0.0
    %607 = vmatpush.msra.mxu0 0.0
    %608 = vmatpush.msra.mxu0 0.0
    %609 = vmatpush.msra.mxu0 0.0
    %610 = vmatpush.msra.mxu0 0.0
    %611 = vmatpush.msra.mxu0 0.0
    %612 = vmatpush.msra.mxu0 0.0
    %613 = vmatpush.msra.mxu0 0.0
    %614 = vmatpush.msra.mxu0 0.0
    %615 = vmatpush.msra.mxu0 0.0
    %616 = vmatpush.msra.mxu0 0.0
    %617 = vmatpush.msra.mxu0 %v328
    %618 = vmatpush.msra.mxu0 %v243
    %619 = vmatmul.f32.gmra.mxu0 %v252
    %v620 = vpop.f32.mrf.mxu0
    %v621 = vadd.f32 %v532, %v620
    %622 = vmatmul.f32.gmra.mxu0 %v255
    %v623 = vpop.f32.mrf.mxu0
    %v624 = vadd.f32 %v535, %v623
    %625 = vmatmul.f32.gmra.mxu0 %v258
    %v626 = vpop.f32.mrf.mxu0
    %v627 = vadd.f32 %v538, %v626
    %628 = vmatmul.f32.gmra.mxu0 %v261
    %v629 = vpop.f32.mrf.mxu0
    %v630 = vadd.f32 %v541, %v629
    %631 = vmatmul.f32.gmra.mxu0 %v264
    %v632 = vpop.f32.mrf.mxu0
    %v633 = vadd.f32 %v544, %v632
    %634 = vmatmul.f32.gmra.mxu0 %v267
    %v635 = vpop.f32.mrf.mxu0
    %v636 = vadd.f32 %v547, %v635
    %637 = vmatmul.f32.gmra.mxu0 %v270
    %v638 = vpop.f32.mrf.mxu0
    %v639 = vadd.f32 %v550, %v638
    %640 = vmatmul.f32.gmra.mxu0 %v273
    %v641 = vpop.f32.mrf.mxu0
    %v642 = vadd.f32 %v553, %v641
    %643 = vmatmul.f32.gmra.mxu0 %v276
    %v644 = vpop.f32.mrf.mxu0
    %v645 = vadd.f32 %v556, %v644
    %646 = vmatmul.f32.gmra.mxu0 %v279
    %v647 = vpop.f32.mrf.mxu0
    %v648 = vadd.f32 %v559, %v647
    %649 = vmatmul.f32.gmra.mxu0 %v282
    %v650 = vpop.f32.mrf.mxu0
    %v651 = vadd.f32 %v562, %v650
    %652 = vmatmul.f32.gmra.mxu0 %v285
    %v653 = vpop.f32.mrf.mxu0
    %v654 = vadd.f32 %v565, %v653
    %655 = vmatmul.f32.gmra.mxu0 %v288
    %v656 = vpop.f32.mrf.mxu0
    %v657 = vadd.f32 %v568, %v656
    %658 = vmatmul.f32.gmra.mxu0 %v291
    %v659 = vpop.f32.mrf.mxu0
    %v660 = vadd.f32 %v571, %v659
    %661 = vmatmul.f32.gmra.mxu0 %v294
    %v662 = vpop.f32.mrf.mxu0
    %v663 = vadd.f32 %v574, %v662
    %664 = vmatmul.f32.gmra.mxu0 %v297
    %v665 = vpop.f32.mrf.mxu0
    %v666 = vadd.f32 %v577, %v665
    %667 = vmatmul.f32.gmra.mxu0 %v300
    %v668 = vpop.f32.mrf.mxu0
    %v669 = vadd.f32 %v580, %v668
    %670 = vmatmul.f32.gmra.mxu0 %v303
    %v671 = vpop.f32.mrf.mxu0
    %v672 = vadd.f32 %v583, %v671
    %673 = vmatmul.f32.gmra.mxu0 %v306
    %v674 = vpop.f32.mrf.mxu0
    %v675 = vadd.f32 %v586, %v674
    %676 = vmatmul.f32.gmra.mxu0 %v309
    %v677 = vpop.f32.mrf.mxu0
    %v678 = vadd.f32 %v589, %v677
    %679 = vmatmul.f32.gmra.mxu0 %v312
    %v680 = vpop.f32.mrf.mxu0
    %v681 = vadd.f32 %v592, %v680
    %682 = vmatmul.f32.gmra.mxu0 %v315
    %v683 = vpop.f32.mrf.mxu0
    %v684 = vadd.f32 %v595, %v683
    %685 = vmatmul.f32.gmra.mxu0 %v318
    %v686 = vpop.f32.mrf.mxu0
    %v687 = vadd.f32 %v598, %v686
    %688 = vmatmul.f32.gmra.mxu0 %v321
    %v689 = vpop.f32.mrf.mxu0
    %v690 = vadd.f32 %v601, %v689
    %691 = vdwg.mxu0
    %692 = vmatpush.msra.mxu0 %v240
    %693 = vmatpush.msra.mxu0 %v236
    %694 = vmatpush.msra.mxu0 %v232
    %695 = vmatpush.msra.mxu0 %v228
    %696 = vmatpush.msra.mxu0 %v224
    %697 = vmatpush.msra.mxu0 %v220
    %698 = vmatpush.msra.mxu0 %v216
    %699 = vmatpush.msra.mxu0 %v212
    %700 = vmatpush.msra.mxu0 %v208
    %701 = vmatpush.msra.mxu0 %v204
    %702 = vmatpush.msra.mxu0 %v200
    %703 = vmatpush.msra.mxu0 %v196
    %704 = vmatpush.msra.mxu0 %v192
    %705 = vmatpush.msra.mxu0 %v188
    %706 = vmatpush.msra.mxu0 %v184
    %707 = vmatpush.msra.mxu0 %v180
    %708 = vmatmul.f32.gmra.mxu0 %v130
    %v709 = vpop.f32.mrf.mxu0
    %v710 = vadd.f32 0.0, %v709
    %711 = vmatmul.f32.gmra.mxu0 %v132
    %v712 = vpop.f32.mrf.mxu0
    %v713 = vadd.f32 0.0, %v712
    %714 = vmatmul.f32.gmra.mxu0 %v134
    %v715 = vpop.f32.mrf.mxu0
    %v716 = vadd.f32 0.0, %v715
    %717 = vmatmul.f32.gmra.mxu0 %v136
    %v718 = vpop.f32.mrf.mxu0
    %v719 = vadd.f32 0.0, %v718
    %720 = vmatmul.f32.gmra.mxu0 %v138
    %v721 = vpop.f32.mrf.mxu0
    %v722 = vadd.f32 0.0, %v721
    %723 = vmatmul.f32.gmra.mxu0 %v140
    %v724 = vpop.f32.mrf.mxu0
    %v725 = vadd.f32 0.0, %v724
    %726 = vmatmul.f32.gmra.mxu0 %v142
    %v727 = vpop.f32.mrf.mxu0
    %v728 = vadd.f32 0.0, %v727
    %729 = vmatmul.f32.gmra.mxu0 %v144
    %v730 = vpop.f32.mrf.mxu0
    %v731 = vadd.f32 0.0, %v730
    %732 = vmatmul.f32.gmra.mxu0 %v146
    %v733 = vpop.f32.mrf.mxu0
    %v734 = vadd.f32 0.0, %v733
    %735 = vmatmul.f32.gmra.mxu0 %v148
    %v736 = vpop.f32.mrf.mxu0
    %v737 = vadd.f32 0.0, %v736
    %738 = vmatmul.f32.gmra.mxu0 %v150
    %v739 = vpop.f32.mrf.mxu0
    %v740 = vadd.f32 0.0, %v739
    %741 = vmatmul.f32.gmra.mxu0 %v152
    %v742 = vpop.f32.mrf.mxu0
    %v743 = vadd.f32 0.0, %v742
    %744 = vmatmul.f32.gmra.mxu0 %v154
    %v745 = vpop.f32.mrf.mxu0
    %v746 = vadd.f32 0.0, %v745
    %747 = vmatmul.f32.gmra.mxu0 %v156
    %v748 = vpop.f32.mrf.mxu0
    %v749 = vadd.f32 0.0, %v748
    %750 = vmatmul.f32.gmra.mxu0 %v158
    %v751 = vpop.f32.mrf.mxu0
    %v752 = vadd.f32 0.0, %v751
    %753 = vmatmul.f32.gmra.mxu0 %v160
    %v754 = vpop.f32.mrf.mxu0
    %v755 = vadd.f32 0.0, %v754
    %756 = vmatmul.f32.gmra.mxu0 %v162
    %v757 = vpop.f32.mrf.mxu0
    %v758 = vadd.f32 0.0, %v757
    %759 = vmatmul.f32.gmra.mxu0 %v164
    %v760 = vpop.f32.mrf.mxu0
    %v761 = vadd.f32 0.0, %v760
    %762 = vmatmul.f32.gmra.mxu0 %v166
    %v763 = vpop.f32.mrf.mxu0
    %v764 = vadd.f32 0.0, %v763
    %765 = vmatmul.f32.gmra.mxu0 %v168
    %v766 = vpop.f32.mrf.mxu0
    %v767 = vadd.f32 0.0, %v766
    %768 = vmatmul.f32.gmra.mxu0 %v170
    %v769 = vpop.f32.mrf.mxu0
    %v770 = vadd.f32 0.0, %v769
    %771 = vmatmul.f32.gmra.mxu0 %v172
    %v772 = vpop.f32.mrf.mxu0
    %v773 = vadd.f32 0.0, %v772
    %774 = vmatmul.f32.gmra.mxu0 %v174
    %v775 = vpop.f32.mrf.mxu0
    %v776 = vadd.f32 0.0, %v775
    %777 = vmatmul.f32.gmra.mxu0 %v176
    %v778 = vpop.f32.mrf.mxu0
    %v779 = vadd.f32 0.0, %v778
    %780 = vdwg.mxu0
    %781 = vmatpush.msra.mxu0 0.0
    %782 = vmatpush.msra.mxu0 0.0
    %783 = vmatpush.msra.mxu0 0.0
    %784 = vmatpush.msra.mxu0 0.0
    %785 = vmatpush.msra.mxu0 0.0
    %786 = vmatpush.msra.mxu0 0.0
    %787 = vmatpush.msra.mxu0 0.0
    %788 = vmatpush.msra.mxu0 0.0
    %789 = vmatpush.msra.mxu0 0.0
    %790 = vmatpush.msra.mxu0 0.0
    %791 = vmatpush.msra.mxu0 0.0
    %792 = vmatpush.msra.mxu0 0.0
    %793 = vmatpush.msra.mxu0 0.0
    %794 = vmatpush.msra.mxu0 0.0
    %795 = vmatpush.msra.mxu0 %v331
    %796 = vmatpush.msra.mxu0 %v244
    %797 = vmatmul.f32.gmra.mxu0 %v252
    %v798 = vpop.f32.mrf.mxu0
    %v799 = vadd.f32 %v710, %v798
    %800 = vmatmul.f32.gmra.mxu0 %v255
    %v801 = vpop.f32.mrf.mxu0
    %v802 = vadd.f32 %v713, %v801
    %803 = vmatmul.f32.gmra.mxu0 %v258
    %v804 = vpop.f32.mrf.mxu0
    %v805 = vadd.f32 %v716, %v804
    %806 = vmatmul.f32.gmra.mxu0 %v261
    %v807 = vpop.f32.mrf.mxu0
    %v808 = vadd.f32 %v719, %v807
    %809 = vmatmul.f32.gmra.mxu0 %v264
    %v810 = vpop.f32.mrf.mxu0
    %v811 = vadd.f32 %v722, %v810
    %812 = vmatmul.f32.gmra.mxu0 %v267
    %v813 = vpop.f32.mrf.mxu0
    %v814 = vadd.f32 %v725, %v813
    %815 = vmatmul.f32.gmra.mxu0 %v270
    %v816 = vpop.f32.mrf.mxu0
    %v817 = vadd.f32 %v728, %v816
    %818 = vmatmul.f32.gmra.mxu0 %v273
    %v819 = vpop.f32.mrf.mxu0
    %v820 = vadd.f32 %v731, %v819
    %821 = vmatmul.f32.gmra.mxu0 %v276
    %v822 = vpop.f32.mrf.mxu0
    %v823 = vadd.f32 %v734, %v822
    %824 = vmatmul.f32.gmra.mxu0 %v279
    %v825 = vpop.f32.mrf.mxu0
    %v826 = vadd.f32 %v737, %v825
    %827 = vmatmul.f32.gmra.mxu0 %v282
    %v828 = vpop.f32.mrf.mxu0
    %v829 = vadd.f32 %v740, %v828
    %830 = vmatmul.f32.gmra.mxu0 %v285
    %v831 = vpop.f32.mrf.mxu0
    %v832 = vadd.f32 %v743, %v831
    %833 = vmatmul.f32.gmra.mxu0 %v288
    %v834 = vpop.f32.mrf.mxu0
    %v835 = vadd.f32 %v746, %v834
    %836 = vmatmul.f32.gmra.mxu0 %v291
    %v837 = vpop.f32.mrf.mxu0
    %v838 = vadd.f32 %v749, %v837
    %839 = vmatmul.f32.gmra.mxu0 %v294
    %v840 = vpop.f32.mrf.mxu0
    %v841 = vadd.f32 %v752, %v840
    %842 = vmatmul.f32.gmra.mxu0 %v297
    %v843 = vpop.f32.mrf.mxu0
    %v844 = vadd.f32 %v755, %v843
    %845 = vmatmul.f32.gmra.mxu0 %v300
    %v846 = vpop.f32.mrf.mxu0
    %v847 = vadd.f32 %v758, %v846
    %848 = vmatmul.f32.gmra.mxu0 %v303
    %v849 = vpop.f32.mrf.mxu0
    %v850 = vadd.f32 %v761, %v849
    %851 = vmatmul.f32.gmra.mxu0 %v306
    %v852 = vpop.f32.mrf.mxu0
    %v853 = vadd.f32 %v764, %v852
    %854 = vmatmul.f32.gmra.mxu0 %v309
    %v855 = vpop.f32.mrf.mxu0
    %v856 = vadd.f32 %v767, %v855
    %857 = vmatmul.f32.gmra.mxu0 %v312
    %v858 = vpop.f32.mrf.mxu0
    %v859 = vadd.f32 %v770, %v858
    %860 = vmatmul.f32.gmra.mxu0 %v315
    %v861 = vpop.f32.mrf.mxu0
    %v862 = vadd.f32 %v773, %v861
    %863 = vmatmul.f32.gmra.mxu0 %v318
    %v864 = vpop.f32.mrf.mxu0
    %v865 = vadd.f32 %v776, %v864
    %866 = vmatmul.f32.gmra.mxu0 %v321
    %v867 = vpop.f32.mrf.mxu0
    %v868 = vadd.f32 %v779, %v867
    %869 = vdwg.mxu0
    %870 = vmatpush.msra.mxu0 %v241
    %871 = vmatpush.msra.mxu0 %v237
    %872 = vmatpush.msra.mxu0 %v233
    %873 = vmatpush.msra.mxu0 %v229
    %874 = vmatpush.msra.mxu0 %v225
    %875 = vmatpush.msra.mxu0 %v221
    %876 = vmatpush.msra.mxu0 %v217
    %877 = vmatpush.msra.mxu0 %v213
    %878 = vmatpush.msra.mxu0 %v209
    %879 = vmatpush.msra.mxu0 %v205
    %880 = vmatpush.msra.mxu0 %v201
    %881 = vmatpush.msra.mxu0 %v197
    %882 = vmatpush.msra.mxu0 %v193
    %883 = vmatpush.msra.mxu0 %v189
    %884 = vmatpush.msra.mxu0 %v185
    %885 = vmatpush.msra.mxu0 %v181
    %886 = vmatmul.f32.gmra.mxu0 %v130
    %v887 = vpop.f32.mrf.mxu0
    %v888 = vadd.f32 0.0, %v887
    %889 = vmatmul.f32.gmra.mxu0 %v132
    %v890 = vpop.f32.mrf.mxu0
    %v891 = vadd.f32 0.0, %v890
    %892 = vmatmul.f32.gmra.mxu0 %v134
    %v893 = vpop.f32.mrf.mxu0
    %v894 = vadd.f32 0.0, %v893
    %895 = vmatmul.f32.gmra.mxu0 %v136
    %v896 = vpop.f32.mrf.mxu0
    %v897 = vadd.f32 0.0, %v896
    %898 = vmatmul.f32.gmra.mxu0 %v138
    %v899 = vpop.f32.mrf.mxu0
    %v900 = vadd.f32 0.0, %v899
    %901 = vmatmul.f32.gmra.mxu0 %v140
    %v902 = vpop.f32.mrf.mxu0
    %v903 = vadd.f32 0.0, %v902
    %904 = vmatmul.f32.gmra.mxu0 %v142
    %v905 = vpop.f32.mrf.mxu0
    %v906 = vadd.f32 0.0, %v905
    %907 = vmatmul.f32.gmra.mxu0 %v144
    %v908 = vpop.f32.mrf.mxu0
    %v909 = vadd.f32 0.0, %v908
    %910 = vmatmul.f32.gmra.mxu0 %v146
    %v911 = vpop.f32.mrf.mxu0
    %v912 = vadd.f32 0.0, %v911
    %913 = vmatmul.f32.gmra.mxu0 %v148
    %v914 = vpop.f32.mrf.mxu0
    %v915 = vadd.f32 0.0, %v914
    %916 = vmatmul.f32.gmra.mxu0 %v150
    %v917 = vpop.f32.mrf.mxu0
    %v918 = vadd.f32 0.0, %v917
    %919 = vmatmul.f32.gmra.mxu0 %v152
    %v920 = vpop.f32.mrf.mxu0
    %v921 = vadd.f32 0.0, %v920
    %922 = vmatmul.f32.gmra.mxu0 %v154
    %v923 = vpop.f32.mrf.mxu0
    %v924 = vadd.f32 0.0, %v923
    %925 = vmatmul.f32.gmra.mxu0 %v156
    %v926 = vpop.f32.mrf.mxu0
    %v927 = vadd.f32 0.0, %v926
    %928 = vmatmul.f32.gmra.mxu0 %v158
    %v929 = vpop.f32.mrf.mxu0
    %v930 = vadd.f32 0.0, %v929
    %931 = vmatmul.f32.gmra.mxu0 %v160
    %v932 = vpop.f32.mrf.mxu0
    %v933 = vadd.f32 0.0, %v932
    %934 = vmatmul.f32.gmra.mxu0 %v162
    %v935 = vpop.f32.mrf.mxu0
    %v936 = vadd.f32 0.0, %v935
    %937 = vmatmul.f32.gmra.mxu0 %v164
    %v938 = vpop.f32.mrf.mxu0
    %v939 = vadd.f32 0.0, %v938
    %940 = vmatmul.f32.gmra.mxu0 %v166
    %v941 = vpop.f32.mrf.mxu0
    %v942 = vadd.f32 0.0, %v941
    %943 = vmatmul.f32.gmra.mxu0 %v168
    %v944 = vpop.f32.mrf.mxu0
    %v945 = vadd.f32 0.0, %v944
    %946 = vmatmul.f32.gmra.mxu0 %v170
    %v947 = vpop.f32.mrf.mxu0
    %v948 = vadd.f32 0.0, %v947
    %949 = vmatmul.f32.gmra.mxu0 %v172
    %v950 = vpop.f32.mrf.mxu0
    %v951 = vadd.f32 0.0, %v950
    %952 = vmatmul.f32.gmra.mxu0 %v174
    %v953 = vpop.f32.mrf.mxu0
    %v954 = vadd.f32 0.0, %v953
    %955 = vmatmul.f32.gmra.mxu0 %v176
    %v956 = vpop.f32.mrf.mxu0
    %v957 = vadd.f32 0.0, %v956
    %958 = vdwg.mxu0
    %959 = vmatpush.msra.mxu0 0.0
    %960 = vmatpush.msra.mxu0 0.0
    %961 = vmatpush.msra.mxu0 0.0
    %962 = vmatpush.msra.mxu0 0.0
    %963 = vmatpush.msra.mxu0 0.0
    %964 = vmatpush.msra.mxu0 0.0
    %965 = vmatpush.msra.mxu0 0.0
    %966 = vmatpush.msra.mxu0 0.0
    %967 = vmatpush.msra.mxu0 0.0
    %968 = vmatpush.msra.mxu0 0.0
    %969 = vmatpush.msra.mxu0 0.0
    %970 = vmatpush.msra.mxu0 0.0
    %971 = vmatpush.msra.mxu0 0.0
    %972 = vmatpush.msra.mxu0 0.0
    %973 = vmatpush.msra.mxu0 %v334
    %974 = vmatpush.msra.mxu0 %v245
    %975 = vmatmul.f32.gmra.mxu0 %v252
    %v976 = vpop.f32.mrf.mxu0
    %v977 = vadd.f32 %v888, %v976
    %978 = vmatmul.f32.gmra.mxu0 %v255
    %v979 = vpop.f32.mrf.mxu0
    %v980 = vadd.f32 %v891, %v979
    %981 = vmatmul.f32.gmra.mxu0 %v258
    %v982 = vpop.f32.mrf.mxu0
    %v983 = vadd.f32 %v894, %v982
    %984 = vmatmul.f32.gmra.mxu0 %v261
    %v985 = vpop.f32.mrf.mxu0
    %v986 = vadd.f32 %v897, %v985
    %987 = vmatmul.f32.gmra.mxu0 %v264
    %v988 = vpop.f32.mrf.mxu0
    %v989 = vadd.f32 %v900, %v988
    %990 = vmatmul.f32.gmra.mxu0 %v267
    %v991 = vpop.f32.mrf.mxu0
    %v992 = vadd.f32 %v903, %v991
    %993 = vmatmul.f32.gmra.mxu0 %v270
    %v994 = vpop.f32.mrf.mxu0
    %v995 = vadd.f32 %v906, %v994
    %996 = vmatmul.f32.gmra.mxu0 %v273
    %v997 = vpop.f32.mrf.mxu0
    %v998 = vadd.f32 %v909, %v997
    %999 = vmatmul.f32.gmra.mxu0 %v276
    %v1000 = vpop.f32.mrf.mxu0
    %v1001 = vadd.f32 %v912, %v1000
    %1002 = vmatmul.f32.gmra.mxu0 %v279
    %v1003 = vpop.f32.mrf.mxu0
    %v1004 = vadd.f32 %v915, %v1003
    %1005 = vmatmul.f32.gmra.mxu0 %v282
    %v1006 = vpop.f32.mrf.mxu0
    %v1007 = vadd.f32 %v918, %v1006
    %1008 = vmatmul.f32.gmra.mxu0 %v285
    %v1009 = vpop.f32.mrf.mxu0
    %v1010 = vadd.f32 %v921, %v1009
    %1011 = vmatmul.f32.gmra.mxu0 %v288
    %v1012 = vpop.f32.mrf.mxu0
    %v1013 = vadd.f32 %v924, %v1012
    %1014 = vmatmul.f32.gmra.mxu0 %v291
    %v1015 = vpop.f32.mrf.mxu0
    %v1016 = vadd.f32 %v927, %v1015
    %1017 = vmatmul.f32.gmra.mxu0 %v294
    %v1018 = vpop.f32.mrf.mxu0
    %v1019 = vadd.f32 %v930, %v1018
    %1020 = vmatmul.f32.gmra.mxu0 %v297
    %v1021 = vpop.f32.mrf.mxu0
    %v1022 = vadd.f32 %v933, %v1021
    %1023 = vmatmul.f32.gmra.mxu0 %v300
    %v1024 = vpop.f32.mrf.mxu0
    %v1025 = vadd.f32 %v936, %v1024
    %1026 = vmatmul.f32.gmra.mxu0 %v303
    %v1027 = vpop.f32.mrf.mxu0
    %v1028 = vadd.f32 %v939, %v1027
    %1029 = vmatmul.f32.gmra.mxu0 %v306
    %v1030 = vpop.f32.mrf.mxu0
    %v1031 = vadd.f32 %v942, %v1030
    %1032 = vmatmul.f32.gmra.mxu0 %v309
    %v1033 = vpop.f32.mrf.mxu0
    %v1034 = vadd.f32 %v945, %v1033
    %1035 = vmatmul.f32.gmra.mxu0 %v312
    %v1036 = vpop.f32.mrf.mxu0
    %v1037 = vadd.f32 %v948, %v1036
    %1038 = vmatmul.f32.gmra.mxu0 %v315
    %v1039 = vpop.f32.mrf.mxu0
    %v1040 = vadd.f32 %v951, %v1039
    %1041 = vmatmul.f32.gmra.mxu0 %v318
    %v1042 = vpop.f32.mrf.mxu0
    %v1043 = vadd.f32 %v954, %v1042
    %1044 = vmatmul.f32.gmra.mxu0 %v321
    %v1045 = vpop.f32.mrf.mxu0
    %v1046 = vadd.f32 %v957, %v1045
    %1047 = vdwg.mxu0
    %v1048 = vld [vmem:[#allocation4] sm:$0xf]
    %v1050 = vperm.slane %v1048, 0
    %v1051 = vperm.slane %v1048, 1
    %v1052 = vperm.slane %v1048, 2
    %v1053 = vperm.slane %v1048, 3
    %v1058 = vmul.f32 %v443, %v1050
    %v1059 = vmul.f32 %v621, %v1051
    %v1060 = vmul.f32 %v799, %v1052
    %v1061 = vmul.f32 %v977, %v1053
    %v1062 = vmul.f32 %v446, %v1050
    %v1063 = vmul.f32 %v624, %v1051
    %v1064 = vmul.f32 %v802, %v1052
    %v1065 = vmul.f32 %v980, %v1053
    %v1066 = vmul.f32 %v449, %v1050
    %v1067 = vmul.f32 %v627, %v1051
    %v1068 = vmul.f32 %v805, %v1052
    %v1069 = vmul.f32 %v983, %v1053
    %v1070 = vmul.f32 %v452, %v1050
    %v1071 = vmul.f32 %v630, %v1051
    %v1072 = vmul.f32 %v808, %v1052
    %v1073 = vmul.f32 %v986, %v1053
    %v1074 = vmul.f32 %v455, %v1050
    %v1075 = vmul.f32 %v633, %v1051
    %v1076 = vmul.f32 %v811, %v1052
    %v1077 = vmul.f32 %v989, %v1053
    %v1078 = vmul.f32 %v458, %v1050
    %v1079 = vmul.f32 %v636, %v1051
    %v1080 = vmul.f32 %v814, %v1052
    %v1081 = vmul.f32 %v992, %v1053
    %v1082 = vmul.f32 %v461, %v1050
    %v1083 = vmul.f32 %v639, %v1051
    %v1084 = vmul.f32 %v817, %v1052
    %v1085 = vmul.f32 %v995, %v1053
    %v1086 = vmul.f32 %v464, %v1050
    %v1087 = vmul.f32 %v642, %v1051
    %v1088 = vmul.f32 %v820, %v1052
    %v1089 = vmul.f32 %v998, %v1053
    %v1090 = vmul.f32 %v467, %v1050
    %v1091 = vmul.f32 %v645, %v1051
    %v1092 = vmul.f32 %v823, %v1052
    %v1093 = vmul.f32 %v1001, %v1053
    %v1094 = vmul.f32 %v470, %v1050
    %v1095 = vmul.f32 %v648, %v1051
    %v1096 = vmul.f32 %v826, %v1052
    %v1097 = vmul.f32 %v1004, %v1053
    %v1098 = vmul.f32 %v473, %v1050
    %v1099 = vmul.f32 %v651, %v1051
    %v1100 = vmul.f32 %v829, %v1052
    %v1101 = vmul.f32 %v1007, %v1053
    %v1102 = vmul.f32 %v476, %v1050
    %v1103 = vmul.f32 %v654, %v1051
    %v1104 = vmul.f32 %v832, %v1052
    %v1105 = vmul.f32 %v1010, %v1053
    %v1106 = vmul.f32 %v479, %v1050
    %v1107 = vmul.f32 %v657, %v1051
    %v1108 = vmul.f32 %v835, %v1052
    %v1109 = vmul.f32 %v1013, %v1053
    %v1110 = vmul.f32 %v482, %v1050
    %v1111 = vmul.f32 %v660, %v1051
    %v1112 = vmul.f32 %v838, %v1052
    %v1113 = vmul.f32 %v1016, %v1053
    %v1114 = vmul.f32 %v485, %v1050
    %v1115 = vmul.f32 %v663, %v1051
    %v1116 = vmul.f32 %v841, %v1052
    %v1117 = vmul.f32 %v1019, %v1053
    %v1118 = vmul.f32 %v488, %v1050
    %v1119 = vmul.f32 %v666, %v1051
    %v1120 = vmul.f32 %v844, %v1052
    %v1121 = vmul.f32 %v1022, %v1053
    %v1122 = vmul.f32 %v491, %v1050
    %v1123 = vmul.f32 %v669, %v1051
    %v1124 = vmul.f32 %v847, %v1052
    %v1125 = vmul.f32 %v1025, %v1053
    %v1126 = vmul.f32 %v494, %v1050
    %v1127 = vmul.f32 %v672, %v1051
    %v1128 = vmul.f32 %v850, %v1052
    %v1129 = vmul.f32 %v1028, %v1053
    %v1130 = vmul.f32 %v497, %v1050
    %v1131 = vmul.f32 %v675, %v1051
    %v1132 = vmul.f32 %v853, %v1052
    %v1133 = vmul.f32 %v1031, %v1053
    %v1134 = vmul.f32 %v500, %v1050
    %v1135 = vmul.f32 %v678, %v1051
    %v1136 = vmul.f32 %v856, %v1052
    %v1137 = vmul.f32 %v1034, %v1053
    %v1138 = vmul.f32 %v503, %v1050
    %v1139 = vmul.f32 %v681, %v1051
    %v1140 = vmul.f32 %v859, %v1052
    %v1141 = vmul.f32 %v1037, %v1053
    %v1142 = vmul.f32 %v506, %v1050
    %v1143 = vmul.f32 %v684, %v1051
    %v1144 = vmul.f32 %v862, %v1052
    %v1145 = vmul.f32 %v1040, %v1053
    %v1146 = vmul.f32 %v509, %v1050
    %v1147 = vmul.f32 %v687, %v1051
    %v1148 = vmul.f32 %v865, %v1052
    %v1149 = vmul.f32 %v1043, %v1053
    %v1150 = vmul.f32 %v512, %v1050
    %v1151 = vmul.f32 %v690, %v1051
    %v1152 = vmul.f32 %v868, %v1052
    %v1153 = vmul.f32 %v1046, %v1053
    %v1154 = vld [vmem:[#allocation6] sm:$0xf]
    %v1156 = vperm.slane %v1154, 0
    %v1157 = vperm.slane %v1154, 1
    %v1158 = vperm.slane %v1154, 2
    %v1159 = vperm.slane %v1154, 3
    %v1164 = vadd.f32 %v1058, %v1156
    %v1165 = vadd.f32 %v1059, %v1157
    %v1166 = vadd.f32 %v1060, %v1158
    %v1167 = vadd.f32 %v1061, %v1159
    %v1168 = vadd.f32 %v1062, %v1156
    %v1169 = vadd.f32 %v1063, %v1157
    %v1170 = vadd.f32 %v1064, %v1158
    %v1171 = vadd.f32 %v1065, %v1159
    %v1172 = vadd.f32 %v1066, %v1156
    %v1173 = vadd.f32 %v1067, %v1157
    %v1174 = vadd.f32 %v1068, %v1158
    %v1175 = vadd.f32 %v1069, %v1159
    %v1176 = vadd.f32 %v1070, %v1156
    %v1177 = vadd.f32 %v1071, %v1157
    %v1178 = vadd.f32 %v1072, %v1158
    %v1179 = vadd.f32 %v1073, %v1159
    %v1180 = vadd.f32 %v1074, %v1156
    %v1181 = vadd.f32 %v1075, %v1157
    %v1182 = vadd.f32 %v1076, %v1158
    %v1183 = vadd.f32 %v1077, %v1159
    %v1184 = vadd.f32 %v1078, %v1156
    %v1185 = vadd.f32 %v1079, %v1157
    %v1186 = vadd.f32 %v1080, %v1158
    %v1187 = vadd.f32 %v1081, %v1159
    %v1188 = vadd.f32 %v1082, %v1156
    %v1189 = vadd.f32 %v1083, %v1157
    %v1190 = vadd.f32 %v1084, %v1158
    %v1191 = vadd.f32 %v1085, %v1159
    %v1192 = vadd.f32 %v1086, %v1156
    %v1193 = vadd.f32 %v1087, %v1157
    %v1194 = vadd.f32 %v1088, %v1158
    %v1195 = vadd.f32 %v1089, %v1159
    %v1196 = vadd.f32 %v1090, %v1156
    %v1197 = vadd.f32 %v1091, %v1157
    %v1198 = vadd.f32 %v1092, %v1158
    %v1199 = vadd.f32 %v1093, %v1159
    %v1200 = vadd.f32 %v1094, %v1156
    %v1201 = vadd.f32 %v1095, %v1157
    %v1202 = vadd.f32 %v1096, %v1158
    %v1203 = vadd.f32 %v1097, %v1159
    %v1204 = vadd.f32 %v1098, %v1156
    %v1205 = vadd.f32 %v1099, %v1157
    %v1206 = vadd.f32 %v1100, %v1158
    %v1207 = vadd.f32 %v1101, %v1159
    %v1208 = vadd.f32 %v1102, %v1156
    %v1209 = vadd.f32 %v1103, %v1157
    %v1210 = vadd.f32 %v1104, %v1158
    %v1211 = vadd.f32 %v1105, %v1159
    %v1212 = vadd.f32 %v1106, %v1156
    %v1213 = vadd.f32 %v1107, %v1157
    %v1214 = vadd.f32 %v1108, %v1158
    %v1215 = vadd.f32 %v1109, %v1159
    %v1216 = vadd.f32 %v1110, %v1156
    %v1217 = vadd.f32 %v1111, %v1157
    %v1218 = vadd.f32 %v1112, %v1158
    %v1219 = vadd.f32 %v1113, %v1159
    %v1220 = vadd.f32 %v1114, %v1156
    %v1221 = vadd.f32 %v1115, %v1157
    %v1222 = vadd.f32 %v1116, %v1158
    %v1223 = vadd.f32 %v1117, %v1159
    %v1224 = vadd.f32 %v1118, %v1156
    %v1225 = vadd.f32 %v1119, %v1157
    %v1226 = vadd.f32 %v1120, %v1158
    %v1227 = vadd.f32 %v1121, %v1159
    %v1228 = vadd.f32 %v1122, %v1156
    %v1229 = vadd.f32 %v1123, %v1157
    %v1230 = vadd.f32 %v1124, %v1158
    %v1231 = vadd.f32 %v1125, %v1159
    %v1232 = vadd.f32 %v1126, %v1156
    %v1233 = vadd.f32 %v1127, %v1157
    %v1234 = vadd.f32 %v1128, %v1158
    %v1235 = vadd.f32 %v1129, %v1159
    %v1236 = vadd.f32 %v1130, %v1156
    %v1237 = vadd.f32 %v1131, %v1157
    %v1238 = vadd.f32 %v1132, %v1158
    %v1239 = vadd.f32 %v1133, %v1159
    %v1240 = vadd.f32 %v1134, %v1156
    %v1241 = vadd.f32 %v1135, %v1157
    %v1242 = vadd.f32 %v1136, %v1158
    %v1243 = vadd.f32 %v1137, %v1159
    %v1244 = vadd.f32 %v1138, %v1156
    %v1245 = vadd.f32 %v1139, %v1157
    %v1246 = vadd.f32 %v1140, %v1158
    %v1247 = vadd.f32 %v1141, %v1159
    %v1248 = vadd.f32 %v1142, %v1156
    %v1249 = vadd.f32 %v1143, %v1157
    %v1250 = vadd.f32 %v1144, %v1158
    %v1251 = vadd.f32 %v1145, %v1159
    %v1252 = vadd.f32 %v1146, %v1156
    %v1253 = vadd.f32 %v1147, %v1157
    %v1254 = vadd.f32 %v1148, %v1158
    %v1255 = vadd.f32 %v1149, %v1159
    %v1256 = vadd.f32 %v1150, %v1156
    %v1257 = vadd.f32 %v1151, %v1157
    %v1258 = vadd.f32 %v1152, %v1158
    %v1259 = vadd.f32 %v1153, %v1159
    %v1260 = vmax.f32 %v1164, 0.0
    %v1261 = vmax.f32 %v1165, 0.0
    %v1262 = vmax.f32 %v1166, 0.0
    %v1263 = vmax.f32 %v1167, 0.0
    %v1264 = vmax.f32 %v1168, 0.0
    %v1265 = vmax.f32 %v1169, 0.0
    %v1266 = vmax.f32 %v1170, 0.0
    %v1267 = vmax.f32 %v1171, 0.0
    %v1268 = vmax.f32 %v1172, 0.0
    %v1269 = vmax.f32 %v1173, 0.0
    %v1270 = vmax.f32 %v1174, 0.0
    %v1271 = vmax.f32 %v1175, 0.0
    %v1272 = vmax.f32 %v1176, 0.0
    %v1273 = vmax.f32 %v1177, 0.0
    %v1274 = vmax.f32 %v1178, 0.0
    %v1275 = vmax.f32 %v1179, 0.0
    %v1276 = vmax.f32 %v1180, 0.0
    %v1277 = vmax.f32 %v1181, 0.0
    %v1278 = vmax.f32 %v1182, 0.0
    %v1279 = vmax.f32 %v1183, 0.0
    %v1280 = vmax.f32 %v1184, 0.0
    %v1281 = vmax.f32 %v1185, 0.0
    %v1282 = vmax.f32 %v1186, 0.0
    %v1283 = vmax.f32 %v1187, 0.0
    %v1284 = vmax.f32 %v1188, 0.0
    %v1285 = vmax.f32 %v1189, 0.0
    %v1286 = vmax.f32 %v1190, 0.0
    %v1287 = vmax.f32 %v1191, 0.0
    %v1288 = vmax.f32 %v1192, 0.0
    %v1289 = vmax.f32 %v1193, 0.0
    %v1290 = vmax.f32 %v1194, 0.0
    %v1291 = vmax.f32 %v1195, 0.0
    %v1292 = vmax.f32 %v1196, 0.0
    %v1293 = vmax.f32 %v1197, 0.0
    %v1294 = vmax.f32 %v1198, 0.0
    %v1295 = vmax.f32 %v1199, 0.0
    %v1296 = vmax.f32 %v1200, 0.0
    %v1297 = vmax.f32 %v1201, 0.0
    %v1298 = vmax.f32 %v1202, 0.0
    %v1299 = vmax.f32 %v1203, 0.0
    %v1300 = vmax.f32 %v1204, 0.0
    %v1301 = vmax.f32 %v1205, 0.0
    %v1302 = vmax.f32 %v1206, 0.0
    %v1303 = vmax.f32 %v1207, 0.0
    %v1304 = vmax.f32 %v1208, 0.0
    %v1305 = vmax.f32 %v1209, 0.0
    %v1306 = vmax.f32 %v1210, 0.0
    %v1307 = vmax.f32 %v1211, 0.0
    %v1308 = vmax.f32 %v1212, 0.0
    %v1309 = vmax.f32 %v1213, 0.0
    %v1310 = vmax.f32 %v1214, 0.0
    %v1311 = vmax.f32 %v1215, 0.0
    %v1312 = vmax.f32 %v1216, 0.0
    %v1313 = vmax.f32 %v1217, 0.0
    %v1314 = vmax.f32 %v1218, 0.0
    %v1315 = vmax.f32 %v1219, 0.0
    %v1316 = vmax.f32 %v1220, 0.0
    %v1317 = vmax.f32 %v1221, 0.0
    %v1318 = vmax.f32 %v1222, 0.0
    %v1319 = vmax.f32 %v1223, 0.0
    %v1320 = vmax.f32 %v1224, 0.0
    %v1321 = vmax.f32 %v1225, 0.0
    %v1322 = vmax.f32 %v1226, 0.0
    %v1323 = vmax.f32 %v1227, 0.0
    %v1324 = vmax.f32 %v1228, 0.0
    %v1325 = vmax.f32 %v1229, 0.0
    %v1326 = vmax.f32 %v1230, 0.0
    %v1327 = vmax.f32 %v1231, 0.0
    %v1328 = vmax.f32 %v1232, 0.0
    %v1329 = vmax.f32 %v1233, 0.0
    %v1330 = vmax.f32 %v1234, 0.0
    %v1331 = vmax.f32 %v1235, 0.0
    %v1332 = vmax.f32 %v1236, 0.0
    %v1333 = vmax.f32 %v1237, 0.0
    %v1334 = vmax.f32 %v1238, 0.0
    %v1335 = vmax.f32 %v1239, 0.0
    %v1336 = vmax.f32 %v1240, 0.0
    %v1337 = vmax.f32 %v1241, 0.0
    %v1338 = vmax.f32 %v1242, 0.0
    %v1339 = vmax.f32 %v1243, 0.0
    %v1340 = vmax.f32 %v1244, 0.0
    %v1341 = vmax.f32 %v1245, 0.0
    %v1342 = vmax.f32 %v1246, 0.0
    %v1343 = vmax.f32 %v1247, 0.0
    %v1344 = vmax.f32 %v1248, 0.0
    %v1345 = vmax.f32 %v1249, 0.0
    %v1346 = vmax.f32 %v1250, 0.0
    %v1347 = vmax.f32 %v1251, 0.0
    %v1348 = vmax.f32 %v1252, 0.0
    %v1349 = vmax.f32 %v1253, 0.0
    %v1350 = vmax.f32 %v1254, 0.0
    %v1351 = vmax.f32 %v1255, 0.0
    %v1352 = vmax.f32 %v1256, 0.0
    %v1353 = vmax.f32 %v1257, 0.0
    %v1354 = vmax.f32 %v1258, 0.0
    %v1355 = vmax.f32 %v1259, 0.0
    %v1356 = vmax.f32 %v1260, %v1262
    %v1357 = vmax.f32 %v1261, %v1263
    %v1358 = vmax.f32 %v1264, %v1266
    %v1359 = vmax.f32 %v1265, %v1267
    %v1360 = vmax.f32 %v1268, %v1270
    %v1361 = vmax.f32 %v1269, %v1271
    %v1362 = vmax.f32 %v1272, %v1274
    %v1363 = vmax.f32 %v1273, %v1275
    %v1364 = vmax.f32 %v1276, %v1278
    %v1365 = vmax.f32 %v1277, %v1279
    %v1366 = vmax.f32 %v1280, %v1282
    %v1367 = vmax.f32 %v1281, %v1283
    %v1368 = vmax.f32 %v1284, %v1286
    %v1369 = vmax.f32 %v1285, %v1287
    %v1370 = vmax.f32 %v1288, %v1290
    %v1371 = vmax.f32 %v1289, %v1291
    %v1372 = vmax.f32 %v1292, %v1294
    %v1373 = vmax.f32 %v1293, %v1295
    %v1374 = vmax.f32 %v1296, %v1298
    %v1375 = vmax.f32 %v1297, %v1299
    %v1376 = vmax.f32 %v1300, %v1302
    %v1377 = vmax.f32 %v1301, %v1303
    %v1378 = vmax.f32 %v1304, %v1306
    %v1379 = vmax.f32 %v1305, %v1307
    %v1380 = vmax.f32 %v1308, %v1310
    %v1381 = vmax.f32 %v1309, %v1311
    %v1382 = vmax.f32 %v1312, %v1314
    %v1383 = vmax.f32 %v1313, %v1315
    %v1384 = vmax.f32 %v1316, %v1318
    %v1385 = vmax.f32 %v1317, %v1319
    %v1386 = vmax.f32 %v1320, %v1322
    %v1387 = vmax.f32 %v1321, %v1323
    %v1388 = vmax.f32 %v1324, %v1326
    %v1389 = vmax.f32 %v1325, %v1327
    %v1390 = vmax.f32 %v1328, %v1330
    %v1391 = vmax.f32 %v1329, %v1331
    %v1392 = vmax.f32 %v1332, %v1334
    %v1393 = vmax.f32 %v1333, %v1335
    %v1394 = vmax.f32 %v1336, %v1338
    %v1395 = vmax.f32 %v1337, %v1339
    %v1396 = vmax.f32 %v1340, %v1342
    %v1397 = vmax.f32 %v1341, %v1343
    %v1398 = vmax.f32 %v1344, %v1346
    %v1399 = vmax.f32 %v1345, %v1347
    %v1400 = vmax.f32 %v1348, %v1350
    %v1401 = vmax.f32 %v1349, %v1351
    %v1402 = vmax.f32 %v1352, %v1354
    %v1403 = vmax.f32 %v1353, %v1355
    %v1452 = vrot.slane %v1357, 6
    %v1453 = vrot.slane %v1359, 6
    %v1454 = vrot.slane %v1361, 6
    %v1455 = vrot.slane %v1363, 6
    %v1456 = vrot.slane %v1365, 6
    %v1457 = vrot.slane %v1367, 6
    %v1458 = vrot.slane %v1369, 6
    %v1459 = vrot.slane %v1371, 6
    %v1460 = vrot.slane %v1373, 6
    %v1461 = vrot.slane %v1375, 6
    %v1462 = vrot.slane %v1377, 6
    %v1463 = vrot.slane %v1379, 6
    %v1464 = vrot.slane %v1381, 6
    %v1465 = vrot.slane %v1383, 6
    %v1466 = vrot.slane %v1385, 6
    %v1467 = vrot.slane %v1387, 6
    %v1468 = vrot.slane %v1389, 6
    %v1469 = vrot.slane %v1391, 6
    %v1470 = vrot.slane %v1393, 6
    %v1471 = vrot.slane %v1395, 6
    %v1472 = vrot.slane %v1397, 6
    %v1473 = vrot.slane %v1399, 6
    %v1474 = vrot.slane %v1401, 6
    %v1475 = vrot.slane %v1403, 6
    %vm1476 = vcmask 1041408
    %v1477 = vsel %vm1476, %v1356, %v1452
    %vm1478 = vcmask 1043458
    %v1479 = vsel %vm1478, %v1356, %v1452
    %v1480 = vrot.slane %v1479, 2
    %vm1481 = vcmask 1045508
    %v1482 = vsel %vm1481, %v1356, %v1452
    %v1483 = vrot.slane %v1482, 4
    %vm1484 = vcmask 1045504
    %v1485 = vsel %vm1484, %v1452, %v1356
    %v1486 = vrot.slane %v1485, 6
    %v1487 = vsel %vm1476, %v1358, %v1453
    %v1488 = vsel %vm1478, %v1358, %v1453
    %v1489 = vrot.slane %v1488, 2
    %v1490 = vsel %vm1481, %v1358, %v1453
    %v1491 = vrot.slane %v1490, 4
    %v1492 = vsel %vm1484, %v1453, %v1358
    %v1493 = vrot.slane %v1492, 6
    %v1494 = vsel %vm1476, %v1360, %v1454
    %v1495 = vsel %vm1478, %v1360, %v1454
    %v1496 = vrot.slane %v1495, 2
    %v1497 = vsel %vm1481, %v1360, %v1454
    %v1498 = vrot.slane %v1497, 4
    %v1499 = vsel %vm1484, %v1454, %v1360
    %v1500 = vrot.slane %v1499, 6
    %v1501 = vsel %vm1476, %v1362, %v1455
    %v1502 = vsel %vm1478, %v1362, %v1455
    %v1503 = vrot.slane %v1502, 2
    %v1504 = vsel %vm1481, %v1362, %v1455
    %v1505 = vrot.slane %v1504, 4
    %v1506 = vsel %vm1484, %v1455, %v1362
    %v1507 = vrot.slane %v1506, 6
    %v1508 = vsel %vm1476, %v1364, %v1456
    %v1509 = vsel %vm1478, %v1364, %v1456
    %v1510 = vrot.slane %v1509, 2
    %v1511 = vsel %vm1481, %v1364, %v1456
    %v1512 = vrot.slane %v1511, 4
    %v1513 = vsel %vm1484, %v1456, %v1364
    %v1514 = vrot.slane %v1513, 6
    %v1515 = vsel %vm1476, %v1366, %v1457
    %v1516 = vsel %vm1478, %v1366, %v1457
    %v1517 = vrot.slane %v1516, 2
    %v1518 = vsel %vm1481, %v1366, %v1457
    %v1519 = vrot.slane %v1518, 4
    %v1520 = vsel %vm1484, %v1457, %v1366
    %v1521 = vrot.slane %v1520, 6
    %v1522 = vsel %vm1476, %v1368, %v1458
    %v1523 = vsel %vm1478, %v1368, %v1458
    %v1524 = vrot.slane %v1523, 2
    %v1525 = vsel %vm1481, %v1368, %v1458
    %v1526 = vrot.slane %v1525, 4
    %v1527 = vsel %vm1484, %v1458, %v1368
    %v1528 = vrot.slane %v1527, 6
    %v1529 = vsel %vm1476, %v1370, %v1459
    %v1530 = vsel %vm1478, %v1370, %v1459
    %v1531 = vrot.slane %v1530, 2
    %v1532 = vsel %vm1481, %v1370, %v1459
    %v1533 = vrot.slane %v1532, 4
    %v1534 = vsel %vm1484, %v1459, %v1370
    %v1535 = vrot.slane %v1534, 6
    %v1536 = vsel %vm1476, %v1372, %v1460
    %v1537 = vsel %vm1478, %v1372, %v1460
    %v1538 = vrot.slane %v1537, 2
    %v1539 = vsel %vm1481, %v1372, %v1460
    %v1540 = vrot.slane %v1539, 4
    %v1541 = vsel %vm1484, %v1460, %v1372
    %v1542 = vrot.slane %v1541, 6
    %v1543 = vsel %vm1476, %v1374, %v1461
    %v1544 = vsel %vm1478, %v1374, %v1461
    %v1545 = vrot.slane %v1544, 2
    %v1546 = vsel %vm1481, %v1374, %v1461
    %v1547 = vrot.slane %v1546, 4
    %v1548 = vsel %vm1484, %v1461, %v1374
    %v1549 = vrot.slane %v1548, 6
    %v1550 = vsel %vm1476, %v1376, %v1462
    %v1551 = vsel %vm1478, %v1376, %v1462
    %v1552 = vrot.slane %v1551, 2
    %v1553 = vsel %vm1481, %v1376, %v1462
    %v1554 = vrot.slane %v1553, 4
    %v1555 = vsel %vm1484, %v1462, %v1376
    %v1556 = vrot.slane %v1555, 6
    %v1557 = vsel %vm1476, %v1378, %v1463
    %v1558 = vsel %vm1478, %v1378, %v1463
    %v1559 = vrot.slane %v1558, 2
    %v1560 = vsel %vm1481, %v1378, %v1463
    %v1561 = vrot.slane %v1560, 4
    %v1562 = vsel %vm1484, %v1463, %v1378
    %v1563 = vrot.slane %v1562, 6
    %v1564 = vsel %vm1476, %v1380, %v1464
    %v1565 = vsel %vm1478, %v1380, %v1464
    %v1566 = vrot.slane %v1565, 2
    %v1567 = vsel %vm1481, %v1380, %v1464
    %v1568 = vrot.slane %v1567, 4
    %v1569 = vsel %vm1484, %v1464, %v1380
    %v1570 = vrot.slane %v1569, 6
    %v1571 = vsel %vm1476, %v1382, %v1465
    %v1572 = vsel %vm1478, %v1382, %v1465
    %v1573 = vrot.slane %v1572, 2
    %v1574 = vsel %vm1481, %v1382, %v1465
    %v1575 = vrot.slane %v1574, 4
    %v1576 = vsel %vm1484, %v1465, %v1382
    %v1577 = vrot.slane %v1576, 6
    %v1578 = vsel %vm1476, %v1384, %v1466
    %v1579 = vsel %vm1478, %v1384, %v1466
    %v1580 = vrot.slane %v1579, 2
    %v1581 = vsel %vm1481, %v1384, %v1466
    %v1582 = vrot.slane %v1581, 4
    %v1583 = vsel %vm1484, %v1466, %v1384
    %v1584 = vrot.slane %v1583, 6
    %v1585 = vsel %vm1476, %v1386, %v1467
    %v1586 = vsel %vm1478, %v1386, %v1467
    %v1587 = vrot.slane %v1586, 2
    %v1588 = vsel %vm1481, %v1386, %v1467
    %v1589 = vrot.slane %v1588, 4
    %v1590 = vsel %vm1484, %v1467, %v1386
    %v1591 = vrot.slane %v1590, 6
    %v1592 = vsel %vm1476, %v1388, %v1468
    %v1593 = vsel %vm1478, %v1388, %v1468
    %v1594 = vrot.slane %v1593, 2
    %v1595 = vsel %vm1481, %v1388, %v1468
    %v1596 = vrot.slane %v1595, 4
    %v1597 = vsel %vm1484, %v1468, %v1388
    %v1598 = vrot.slane %v1597, 6
    %v1599 = vsel %vm1476, %v1390, %v1469
    %v1600 = vsel %vm1478, %v1390, %v1469
    %v1601 = vrot.slane %v1600, 2
    %v1602 = vsel %vm1481, %v1390, %v1469
    %v1603 = vrot.slane %v1602, 4
    %v1604 = vsel %vm1484, %v1469, %v1390
    %v1605 = vrot.slane %v1604, 6
    %v1606 = vsel %vm1476, %v1392, %v1470
    %v1607 = vsel %vm1478, %v1392, %v1470
    %v1608 = vrot.slane %v1607, 2
    %v1609 = vsel %vm1481, %v1392, %v1470
    %v1610 = vrot.slane %v1609, 4
    %v1611 = vsel %vm1484, %v1470, %v1392
    %v1612 = vrot.slane %v1611, 6
    %v1613 = vsel %vm1476, %v1394, %v1471
    %v1614 = vsel %vm1478, %v1394, %v1471
    %v1615 = vrot.slane %v1614, 2
    %v1616 = vsel %vm1481, %v1394, %v1471
    %v1617 = vrot.slane %v1616, 4
    %v1618 = vsel %vm1484, %v1471, %v1394
    %v1619 = vrot.slane %v1618, 6
    %v1620 = vsel %vm1476, %v1396, %v1472
    %v1621 = vsel %vm1478, %v1396, %v1472
    %v1622 = vrot.slane %v1621, 2
    %v1623 = vsel %vm1481, %v1396, %v1472
    %v1624 = vrot.slane %v1623, 4
    %v1625 = vsel %vm1484, %v1472, %v1396
    %v1626 = vrot.slane %v1625, 6
    %v1627 = vsel %vm1476, %v1398, %v1473
    %v1628 = vsel %vm1478, %v1398, %v1473
    %v1629 = vrot.slane %v1628, 2
    %v1630 = vsel %vm1481, %v1398, %v1473
    %v1631 = vrot.slane %v1630, 4
    %v1632 = vsel %vm1484, %v1473, %v1398
    %v1633 = vrot.slane %v1632, 6
    %v1634 = vsel %vm1476, %v1400, %v1474
    %v1635 = vsel %vm1478, %v1400, %v1474
    %v1636 = vrot.slane %v1635, 2
    %v1637 = vsel %vm1481, %v1400, %v1474
    %v1638 = vrot.slane %v1637, 4
    %v1639 = vsel %vm1484, %v1474, %v1400
    %v1640 = vrot.slane %v1639, 6
    %v1641 = vsel %vm1476, %v1402, %v1475
    %v1642 = vsel %vm1478, %v1402, %v1475
    %v1643 = vrot.slane %v1642, 2
    %v1644 = vsel %vm1481, %v1402, %v1475
    %v1645 = vrot.slane %v1644, 4
    %v1646 = vsel %vm1484, %v1475, %v1402
    %v1647 = vrot.slane %v1646, 6
    %v1744 = vrot.slane %v1477, 7
    %v1745 = vrot.slane %v1744, 2
    %v1746 = vrot.slane %v1480, 7
    %v1747 = vrot.slane %v1746, 2
    %v1748 = vrot.slane %v1483, 7
    %v1749 = vrot.slane %v1748, 2
    %v1750 = vrot.slane %v1486, 7
    %v1751 = vrot.slane %v1750, 2
    %v1752 = vrot.slane %v1487, 7
    %v1753 = vrot.slane %v1752, 2
    %v1754 = vrot.slane %v1489, 7
    %v1755 = vrot.slane %v1754, 2
    %v1756 = vrot.slane %v1491, 7
    %v1757 = vrot.slane %v1756, 2
    %v1758 = vrot.slane %v1493, 7
    %v1759 = vrot.slane %v1758, 2
    %v1760 = vrot.slane %v1494, 7
    %v1761 = vrot.slane %v1760, 2
    %v1762 = vrot.slane %v1496, 7
    %v1763 = vrot.slane %v1762, 2
    %v1764 = vrot.slane %v1498, 7
    %v1765 = vrot.slane %v1764, 2
    %v1766 = vrot.slane %v1500, 7
    %v1767 = vrot.slane %v1766, 2
    %v1768 = vrot.slane %v1501, 7
    %v1769 = vrot.slane %v1768, 2
    %v1770 = vrot.slane %v1503, 7
    %v1771 = vrot.slane %v1770, 2
    %v1772 = vrot.slane %v1505, 7
    %v1773 = vrot.slane %v1772, 2
    %v1774 = vrot.slane %v1507, 7
    %v1775 = vrot.slane %v1774, 2
    %v1776 = vrot.slane %v1508, 7
    %v1777 = vrot.slane %v1776, 2
    %v1778 = vrot.slane %v1510, 7
    %v1779 = vrot.slane %v1778, 2
    %v1780 = vrot.slane %v1512, 7
    %v1781 = vrot.slane %v1780, 2
    %v1782 = vrot.slane %v1514, 7
    %v1783 = vrot.slane %v1782, 2
    %v1784 = vrot.slane %v1515, 7
    %v1785 = vrot.slane %v1784, 2
    %v1786 = vrot.slane %v1517, 7
    %v1787 = vrot.slane %v1786, 2
    %v1788 = vrot.slane %v1519, 7
    %v1789 = vrot.slane %v1788, 2
    %v1790 = vrot.slane %v1521, 7
    %v1791 = vrot.slane %v1790, 2
    %v1792 = vrot.slane %v1522, 7
    %v1793 = vrot.slane %v1792, 2
    %v1794 = vrot.slane %v1524, 7
    %v1795 = vrot.slane %v1794, 2
    %v1796 = vrot.slane %v1526, 7
    %v1797 = vrot.slane %v1796, 2
    %v1798 = vrot.slane %v1528, 7
    %v1799 = vrot.slane %v1798, 2
    %v1800 = vrot.slane %v1529, 7
    %v1801 = vrot.slane %v1800, 2
    %v1802 = vrot.slane %v1531, 7
    %v1803 = vrot.slane %v1802, 2
    %v1804 = vrot.slane %v1533, 7
    %v1805 = vrot.slane %v1804, 2
    %v1806 = vrot.slane %v1535, 7
    %v1807 = vrot.slane %v1806, 2
    %v1808 = vrot.slane %v1536, 7
    %v1809 = vrot.slane %v1808, 2
    %v1810 = vrot.slane %v1538, 7
    %v1811 = vrot.slane %v1810, 2
    %v1812 = vrot.slane %v1540, 7
    %v1813 = vrot.slane %v1812, 2
    %v1814 = vrot.slane %v1542, 7
    %v1815 = vrot.slane %v1814, 2
    %v1816 = vrot.slane %v1543, 7
    %v1817 = vrot.slane %v1816, 2
    %v1818 = vrot.slane %v1545, 7
    %v1819 = vrot.slane %v1818, 2
    %v1820 = vrot.slane %v1547, 7
    %v1821 = vrot.slane %v1820, 2
    %v1822 = vrot.slane %v1549, 7
    %v1823 = vrot.slane %v1822, 2
    %v1824 = vrot.slane %v1550, 7
    %v1825 = vrot.slane %v1824, 2
    %v1826 = vrot.slane %v1552, 7
    %v1827 = vrot.slane %v1826, 2
    %v1828 = vrot.slane %v1554, 7
    %v1829 = vrot.slane %v1828, 2
    %v1830 = vrot.slane %v1556, 7
    %v1831 = vrot.slane %v1830, 2
    %v1832 = vrot.slane %v1557, 7
    %v1833 = vrot.slane %v1832, 2
    %v1834 = vrot.slane %v1559, 7
    %v1835 = vrot.slane %v1834, 2
    %v1836 = vrot.slane %v1561, 7
    %v1837 = vrot.slane %v1836, 2
    %v1838 = vrot.slane %v1563, 7
    %v1839 = vrot.slane %v1838, 2
    %v1840 = vrot.slane %v1564, 7
    %v1841 = vrot.slane %v1840, 2
    %v1842 = vrot.slane %v1566, 7
    %v1843 = vrot.slane %v1842, 2
    %v1844 = vrot.slane %v1568, 7
    %v1845 = vrot.slane %v1844, 2
    %v1846 = vrot.slane %v1570, 7
    %v1847 = vrot.slane %v1846, 2
    %v1848 = vrot.slane %v1571, 7
    %v1849 = vrot.slane %v1848, 2
    %v1850 = vrot.slane %v1573, 7
    %v1851 = vrot.slane %v1850, 2
    %v1852 = vrot.slane %v1575, 7
    %v1853 = vrot.slane %v1852, 2
    %v1854 = vrot.slane %v1577, 7
    %v1855 = vrot.slane %v1854, 2
    %v1856 = vrot.slane %v1578, 7
    %v1857 = vrot.slane %v1856, 2
    %v1858 = vrot.slane %v1580, 7
    %v1859 = vrot.slane %v1858, 2
    %v1860 = vrot.slane %v1582, 7
    %v1861 = vrot.slane %v1860, 2
    %v1862 = vrot.slane %v1584, 7
    %v1863 = vrot.slane %v1862, 2
    %v1864 = vrot.slane %v1585, 7
    %v1865 = vrot.slane %v1864, 2
    %v1866 = vrot.slane %v1587, 7
    %v1867 = vrot.slane %v1866, 2
    %v1868 = vrot.slane %v1589, 7
    %v1869 = vrot.slane %v1868, 2
    %v1870 = vrot.slane %v1591, 7
    %v1871 = vrot.slane %v1870, 2
    %v1872 = vrot.slane %v1592, 7
    %v1873 = vrot.slane %v1872, 2
    %v1874 = vrot.slane %v1594, 7
    %v1875 = vrot.slane %v1874, 2
    %v1876 = vrot.slane %v1596, 7
    %v1877 = vrot.slane %v1876, 2
    %v1878 = vrot.slane %v1598, 7
    %v1879 = vrot.slane %v1878, 2
    %v1880 = vrot.slane %v1599, 7
    %v1881 = vrot.slane %v1880, 2
    %v1882 = vrot.slane %v1601, 7
    %v1883 = vrot.slane %v1882, 2
    %v1884 = vrot.slane %v1603, 7
    %v1885 = vrot.slane %v1884, 2
    %v1886 = vrot.slane %v1605, 7
    %v1887 = vrot.slane %v1886, 2
    %v1888 = vrot.slane %v1606, 7
    %v1889 = vrot.slane %v1888, 2
    %v1890 = vrot.slane %v1608, 7
    %v1891 = vrot.slane %v1890, 2
    %v1892 = vrot.slane %v1610, 7
    %v1893 = vrot.slane %v1892, 2
    %v1894 = vrot.slane %v1612, 7
    %v1895 = vrot.slane %v1894, 2
    %v1896 = vrot.slane %v1613, 7
    %v1897 = vrot.slane %v1896, 2
    %v1898 = vrot.slane %v1615, 7
    %v1899 = vrot.slane %v1898, 2
    %v1900 = vrot.slane %v1617, 7
    %v1901 = vrot.slane %v1900, 2
    %v1902 = vrot.slane %v1619, 7
    %v1903 = vrot.slane %v1902, 2
    %v1904 = vrot.slane %v1620, 7
    %v1905 = vrot.slane %v1904, 2
    %v1906 = vrot.slane %v1622, 7
    %v1907 = vrot.slane %v1906, 2
    %v1908 = vrot.slane %v1624, 7
    %v1909 = vrot.slane %v1908, 2
    %v1910 = vrot.slane %v1626, 7
    %v1911 = vrot.slane %v1910, 2
    %v1912 = vrot.slane %v1627, 7
    %v1913 = vrot.slane %v1912, 2
    %v1914 = vrot.slane %v1629, 7
    %v1915 = vrot.slane %v1914, 2
    %v1916 = vrot.slane %v1631, 7
    %v1917 = vrot.slane %v1916, 2
    %v1918 = vrot.slane %v1633, 7
    %v1919 = vrot.slane %v1918, 2
    %v1920 = vrot.slane %v1634, 7
    %v1921 = vrot.slane %v1920, 2
    %v1922 = vrot.slane %v1636, 7
    %v1923 = vrot.slane %v1922, 2
    %v1924 = vrot.slane %v1638, 7
    %v1925 = vrot.slane %v1924, 2
    %v1926 = vrot.slane %v1640, 7
    %v1927 = vrot.slane %v1926, 2
    %v1928 = vrot.slane %v1641, 7
    %v1929 = vrot.slane %v1928, 2
    %v1930 = vrot.slane %v1643, 7
    %v1931 = vrot.slane %v1930, 2
    %v1932 = vrot.slane %v1645, 7
    %v1933 = vrot.slane %v1932, 2
    %v1934 = vrot.slane %v1647, 7
    %v1935 = vrot.slane %v1934, 2
    %v2032 = vmax.f32 %v1477, %v1745
    %v2033 = vmax.f32 %v1480, %v1747
    %v2034 = vmax.f32 %v1483, %v1749
    %v2035 = vmax.f32 %v1486, %v1751
    %v2036 = vmax.f32 %v1487, %v1753
    %v2037 = vmax.f32 %v1489, %v1755
    %v2038 = vmax.f32 %v1491, %v1757
    %v2039 = vmax.f32 %v1493, %v1759
    %v2040 = vmax.f32 %v1494, %v1761
    %v2041 = vmax.f32 %v1496, %v1763
    %v2042 = vmax.f32 %v1498, %v1765
    %v2043 = vmax.f32 %v1500, %v1767
    %v2044 = vmax.f32 %v1501, %v1769
    %v2045 = vmax.f32 %v1503, %v1771
    %v2046 = vmax.f32 %v1505, %v1773
    %v2047 = vmax.f32 %v1507, %v1775
    %v2048 = vmax.f32 %v1508, %v1777
    %v2049 = vmax.f32 %v1510, %v1779
    %v2050 = vmax.f32 %v1512, %v1781
    %v2051 = vmax.f32 %v1514, %v1783
    %v2052 = vmax.f32 %v1515, %v1785
    %v2053 = vmax.f32 %v1517, %v1787
    %v2054 = vmax.f32 %v1519, %v1789
    %v2055 = vmax.f32 %v1521, %v1791
    %v2056 = vmax.f32 %v1522, %v1793
    %v2057 = vmax.f32 %v1524, %v1795
    %v2058 = vmax.f32 %v1526, %v1797
    %v2059 = vmax.f32 %v1528, %v1799
    %v2060 = vmax.f32 %v1529, %v1801
    %v2061 = vmax.f32 %v1531, %v1803
    %v2062 = vmax.f32 %v1533, %v1805
    %v2063 = vmax.f32 %v1535, %v1807
    %v2064 = vmax.f32 %v1536, %v1809
    %v2065 = vmax.f32 %v1538, %v1811
    %v2066 = vmax.f32 %v1540, %v1813
    %v2067 = vmax.f32 %v1542, %v1815
    %v2068 = vmax.f32 %v1543, %v1817
    %v2069 = vmax.f32 %v1545, %v1819
    %v2070 = vmax.f32 %v1547, %v1821
    %v2071 = vmax.f32 %v1549, %v1823
    %v2072 = vmax.f32 %v1550, %v1825
    %v2073 = vmax.f32 %v1552, %v1827
    %v2074 = vmax.f32 %v1554, %v1829
    %v2075 = vmax.f32 %v1556, %v1831
    %v2076 = vmax.f32 %v1557, %v1833
    %v2077 = vmax.f32 %v1559, %v1835
    %v2078 = vmax.f32 %v1561, %v1837
    %v2079 = vmax.f32 %v1563, %v1839
    %v2080 = vmax.f32 %v1564, %v1841
    %v2081 = vmax.f32 %v1566, %v1843
    %v2082 = vmax.f32 %v1568, %v1845
    %v2083 = vmax.f32 %v1570, %v1847
    %v2084 = vmax.f32 %v1571, %v1849
    %v2085 = vmax.f32 %v1573, %v1851
    %v2086 = vmax.f32 %v1575, %v1853
    %v2087 = vmax.f32 %v1577, %v1855
    %v2088 = vmax.f32 %v1578, %v1857
    %v2089 = vmax.f32 %v1580, %v1859
    %v2090 = vmax.f32 %v1582, %v1861
    %v2091 = vmax.f32 %v1584, %v1863
    %v2092 = vmax.f32 %v1585, %v1865
    %v2093 = vmax.f32 %v1587, %v1867
    %v2094 = vmax.f32 %v1589, %v1869
    %v2095 = vmax.f32 %v1591, %v1871
    %v2096 = vmax.f32 %v1592, %v1873
    %v2097 = vmax.f32 %v1594, %v1875
    %v2098 = vmax.f32 %v1596, %v1877
    %v2099 = vmax.f32 %v1598, %v1879
    %v2100 = vmax.f32 %v1599, %v1881
    %v2101 = vmax.f32 %v1601, %v1883
    %v2102 = vmax.f32 %v1603, %v1885
    %v2103 = vmax.f32 %v1605, %v1887
    %v2104 = vmax.f32 %v1606, %v1889
    %v2105 = vmax.f32 %v1608, %v1891
    %v2106 = vmax.f32 %v1610, %v1893
    %v2107 = vmax.f32 %v1612, %v1895
    %v2108 = vmax.f32 %v1613, %v1897
    %v2109 = vmax.f32 %v1615, %v1899
    %v2110 = vmax.f32 %v1617, %v1901
    %v2111 = vmax.f32 %v1619, %v1903
    %v2112 = vmax.f32 %v1620, %v1905
    %v2113 = vmax.f32 %v1622, %v1907
    %v2114 = vmax.f32 %v1624, %v1909
    %v2115 = vmax.f32 %v1626, %v1911
    %v2116 = vmax.f32 %v1627, %v1913
    %v2117 = vmax.f32 %v1629, %v1915
    %v2118 = vmax.f32 %v1631, %v1917
    %v2119 = vmax.f32 %v1633, %v1919
    %v2120 = vmax.f32 %v1634, %v1921
    %v2121 = vmax.f32 %v1636, %v1923
    %v2122 = vmax.f32 %v1638, %v1925
    %v2123 = vmax.f32 %v1640, %v1927
    %v2124 = vmax.f32 %v1641, %v1929
    %v2125 = vmax.f32 %v1643, %v1931
    %v2126 = vmax.f32 %v1645, %v1933
    %v2127 = vmax.f32 %v1647, %v1935
    %v2192 = vperm.slane %v2032, 0
    %v2193 = vperm.slane %v2032, 2
    %v2194 = vperm.slane %v2033, 0
    %v2195 = vperm.slane %v2033, 2
    %v2196 = vperm.slane %v2034, 0
    %v2197 = vperm.slane %v2034, 2
    %v2198 = vperm.slane %v2035, 0
    %v2199 = vperm.slane %v2035, 2
    %v2200 = vperm.slane %v2036, 0
    %v2201 = vperm.slane %v2036, 2
    %v2202 = vperm.slane %v2037, 0
    %v2203 = vperm.slane %v2037, 2
    %v2204 = vperm.slane %v2038, 0
    %v2205 = vperm.slane %v2038, 2
    %v2206 = vperm.slane %v2039, 0
    %v2207 = vperm.slane %v2039, 2
    %v2208 = vperm.slane %v2044, 0
    %v2209 = vperm.slane %v2044, 2
    %v2210 = vperm.slane %v2045, 0
    %v2211 = vperm.slane %v2045, 2
    %v2212 = vperm.slane %v2046, 0
    %v2213 = vperm.slane %v2046, 2
    %v2214 = vperm.slane %v2047, 0
    %v2215 = vperm.slane %v2047, 2
    %v2216 = vperm.slane %v2048, 0
    %v2217 = vperm.slane %v2048, 2
    %v2218 = vperm.slane %v2049, 0
    %v2219 = vperm.slane %v2049, 2
    %v2220 = vperm.slane %v2050, 0
    %v2221 = vperm.slane %v2050, 2
    %v2222 = vperm.slane %v2051, 0
    %v2223 = vperm.slane %v2051, 2
    %v2224 = vperm.slane %v2056, 0
    %v2225 = vperm.slane %v2056, 2
    %v2226 = vperm.slane %v2057, 0
    %v2227 = vperm.slane %v2057, 2
    %v2228 = vperm.slane %v2058, 0
    %v2229 = vperm.slane %v2058, 2
    %v2230 = vperm.slane %v2059, 0
    %v2231 = vperm.slane %v2059, 2
    %v2232 = vperm.slane %v2060, 0
    %v2233 = vperm.slane %v2060, 2
    %v2234 = vperm.slane %v2061, 0
    %v2235 = vperm.slane %v2061, 2
    %v2236 = vperm.slane %v2062, 0
    %v2237 = vperm.slane %v2062, 2
    %v2238 = vperm.slane %v2063, 0
    %v2239 = vperm.slane %v2063, 2
    %v2240 = vperm.slane %v2068, 0
    %v2241 = vperm.slane %v2068, 2
    %v2242 = vperm.slane %v2069, 0
    %v2243 = vperm.slane %v2069, 2
    %v2244 = vperm.slane %v2070, 0
    %v2245 = vperm.slane %v2070, 2
    %v2246 = vperm.slane %v2071, 0
    %v2247 = vperm.slane %v2071, 2
    %v2248 = vperm.slane %v2072, 0
    %v2249 = vperm.slane %v2072, 2
    %v2250 = vperm.slane %v2073, 0
    %v2251 = vperm.slane %v2073, 2
    %v2252 = vperm.slane %v2074, 0
    %v2253 = vperm.slane %v2074, 2
    %v2254 = vperm.slane %v2075, 0
    %v2255 = vperm.slane %v2075, 2
    %v2256 = vperm.slane %v2080, 0
    %v2257 = vperm.slane %v2080, 2
    %v2258 = vperm.slane %v2081, 0
    %v2259 = vperm.slane %v2081, 2
    %v2260 = vperm.slane %v2082, 0
    %v2261 = vperm.slane %v2082, 2
    %v2262 = vperm.slane %v2083, 0
    %v2263 = vperm.slane %v2083, 2
    %v2264 = vperm.slane %v2084, 0
    %v2265 = vperm.slane %v2084, 2
    %v2266 = vperm.slane %v2085, 0
    %v2267 = vperm.slane %v2085, 2
    %v2268 = vperm.slane %v2086, 0
    %v2269 = vperm.slane %v2086, 2
    %v2270 = vperm.slane %v2087, 0
    %v2271 = vperm.slane %v2087, 2
    %v2272 = vperm.slane %v2092, 0
    %v2273 = vperm.slane %v2092, 2
    %v2274 = vperm.slane %v2093, 0
    %v2275 = vperm.slane %v2093, 2
    %v2276 = vperm.slane %v2094, 0
    %v2277 = vperm.slane %v2094, 2
    %v2278 = vperm.slane %v2095, 0
    %v2279 = vperm.slane %v2095, 2
    %v2280 = vperm.slane %v2096, 0
    %v2281 = vperm.slane %v2096, 2
    %v2282 = vperm.slane %v2097, 0
    %v2283 = vperm.slane %v2097, 2
    %v2284 = vperm.slane %v2098, 0
    %v2285 = vperm.slane %v2098, 2
    %v2286 = vperm.slane %v2099, 0
    %v2287 = vperm.slane %v2099, 2
    %v2288 = vperm.slane %v2104, 0
    %v2289 = vperm.slane %v2104, 2
    %v2290 = vperm.slane %v2105, 0
    %v2291 = vperm.slane %v2105, 2
    %v2292 = vperm.slane %v2106, 0
    %v2293 = vperm.slane %v2106, 2
    %v2294 = vperm.slane %v2107, 0
    %v2295 = vperm.slane %v2107, 2
    %v2296 = vperm.slane %v2108, 0
    %v2297 = vperm.slane %v2108, 2
    %v2298 = vperm.slane %v2109, 0
    %v2299 = vperm.slane %v2109, 2
    %v2300 = vperm.slane %v2110, 0
    %v2301 = vperm.slane %v2110, 2
    %v2302 = vperm.slane %v2111, 0
    %v2303 = vperm.slane %v2111, 2
    %v2304 = vperm.slane %v2116, 0
    %v2305 = vperm.slane %v2116, 2
    %v2306 = vperm.slane %v2117, 0
    %v2307 = vperm.slane %v2117, 2
    %v2308 = vperm.slane %v2118, 0
    %v2309 = vperm.slane %v2118, 2
    %v2310 = vperm.slane %v2119, 0
    %v2311 = vperm.slane %v2119, 2
    %v2312 = vperm.slane %v2120, 0
    %v2313 = vperm.slane %v2120, 2
    %v2314 = vperm.slane %v2121, 0
    %v2315 = vperm.slane %v2121, 2
    %v2316 = vperm.slane %v2122, 0
    %v2317 = vperm.slane %v2122, 2
    %v2318 = vperm.slane %v2123, 0
    %v2319 = vperm.slane %v2123, 2
    %vm2320 = vcmask 1041409
    %v2321 = vsel %vm2320, %v2194, %v2192
    %vm2322 = vcmask 1042434
    %v2323 = vsel %vm2322, %v2196, %v2321
    %vm2324 = vcmask 1043459
    %v2325 = vsel %vm2324, %v2198, %v2323
    %vm2326 = vcmask 1044484
    %v2327 = vsel %vm2326, %v2200, %v2325
    %vm2328 = vcmask 1045509
    %v2329 = vsel %vm2328, %v2202, %v2327
    %vm2330 = vcmask 1046534
    %v2331 = vsel %vm2330, %v2204, %v2329
    %vm2332 = vcmask 1047559
    %v2333 = vsel %vm2332, %v2206, %v2331
    %v2334 = vsel %vm2320, %v2195, %v2193
    %v2335 = vsel %vm2322, %v2197, %v2334
    %v2336 = vsel %vm2324, %v2199, %v2335
    %v2337 = vsel %vm2326, %v2201, %v2336
    %v2338 = vsel %vm2328, %v2203, %v2337
    %v2339 = vsel %vm2330, %v2205, %v2338
    %v2340 = vsel %vm2332, %v2207, %v2339
    %v2341 = vsel %vm2320, %v2210, %v2208
    %v2342 = vsel %vm2322, %v2212, %v2341
    %v2343 = vsel %vm2324, %v2214, %v2342
    %v2344 = vsel %vm2326, %v2216, %v2343
    %v2345 = vsel %vm2328, %v2218, %v2344
    %v2346 = vsel %vm2330, %v2220, %v2345
    %v2347 = vsel %vm2332, %v2222, %v2346
    %v2348 = vsel %vm2320, %v2211, %v2209
    %v2349 = vsel %vm2322, %v2213, %v2348
    %v2350 = vsel %vm2324, %v2215, %v2349
    %v2351 = vsel %vm2326, %v2217, %v2350
    %v2352 = vsel %vm2328, %v2219, %v2351
    %v2353 = vsel %vm2330, %v2221, %v2352
    %v2354 = vsel %vm2332, %v2223, %v2353
    %v2355 = vsel %vm2320, %v2226, %v2224
    %v2356 = vsel %vm2322, %v2228, %v2355
    %v2357 = vsel %vm2324, %v2230, %v2356
    %v2358 = vsel %vm2326, %v2232, %v2357
    %v2359 = vsel %vm2328, %v2234, %v2358
    %v2360 = vsel %vm2330, %v2236, %v2359
    %v2361 = vsel %vm2332, %v2238, %v2360
    %v2362 = vsel %vm2320, %v2227, %v2225
    %v2363 = vsel %vm2322, %v2229, %v2362
    %v2364 = vsel %vm2324, %v2231, %v2363
    %v2365 = vsel %vm2326, %v2233, %v2364
    %v2366 = vsel %vm2328, %v2235, %v2365
    %v2367 = vsel %vm2330, %v2237, %v2366
    %v2368 = vsel %vm2332, %v2239, %v2367
    %v2369 = vsel %vm2320, %v2242, %v2240
    %v2370 = vsel %vm2322, %v2244, %v2369
    %v2371 = vsel %vm2324, %v2246, %v2370
    %v2372 = vsel %vm2326, %v2248, %v2371
    %v2373 = vsel %vm2328, %v2250, %v2372
    %v2374 = vsel %vm2330, %v2252, %v2373
    %v2375 = vsel %vm2332, %v2254, %v2374
    %v2376 = vsel %vm2320, %v2243, %v2241
    %v2377 = vsel %vm2322, %v2245, %v2376
    %v2378 = vsel %vm2324, %v2247, %v2377
    %v2379 = vsel %vm2326, %v2249, %v2378
    %v2380 = vsel %vm2328, %v2251, %v2379
    %v2381 = vsel %vm2330, %v2253, %v2380
    %v2382 = vsel %vm2332, %v2255, %v2381
    %v2383 = vsel %vm2320, %v2258, %v2256
    %v2384 = vsel %vm2322, %v2260, %v2383
    %v2385 = vsel %vm2324, %v2262, %v2384
    %v2386 = vsel %vm2326, %v2264, %v2385
    %v2387 = vsel %vm2328, %v2266, %v2386
    %v2388 = vsel %vm2330, %v2268, %v2387
    %v2389 = vsel %vm2332, %v2270, %v2388
    %v2390 = vsel %vm2320, %v2259, %v2257
    %v2391 = vsel %vm2322, %v2261, %v2390
    %v2392 = vsel %vm2324, %v2263, %v2391
    %v2393 = vsel %vm2326, %v2265, %v2392
    %v2394 = vsel %vm2328, %v2267, %v2393
    %v2395 = vsel %vm2330, %v2269, %v2394
    %v2396 = vsel %vm2332, %v2271, %v2395
    %v2397 = vsel %vm2320, %v2274, %v2272
    %v2398 = vsel %vm2322, %v2276, %v2397
    %v2399 = vsel %vm2324, %v2278, %v2398
    %v2400 = vsel %vm2326, %v2280, %v2399
    %v2401 = vsel %vm2328, %v2282, %v2400
    %v2402 = vsel %vm2330, %v2284, %v2401
    %v2403 = vsel %vm2332, %v2286, %v2402
    %v2404 = vsel %vm2320, %v2275, %v2273
    %v2405 = vsel %vm2322, %v2277, %v2404
    %v2406 = vsel %vm2324, %v2279, %v2405
    %v2407 = vsel %vm2326, %v2281, %v2406
    %v2408 = vsel %vm2328, %v2283, %v2407
    %v2409 = vsel %vm2330, %v2285, %v2408
    %v2410 = vsel %vm2332, %v2287, %v2409
    %v2411 = vsel %vm2320, %v2290, %v2288
    %v2412 = vsel %vm2322, %v2292, %v2411
    %v2413 = vsel %vm2324, %v2294, %v2412
    %v2414 = vsel %vm2326, %v2296, %v2413
    %v2415 = vsel %vm2328, %v2298, %v2414
    %v2416 = vsel %vm2330, %v2300, %v2415
    %v2417 = vsel %vm2332, %v2302, %v2416
    %v2418 = vsel %vm2320, %v2291, %v2289
    %v2419 = vsel %vm2322, %v2293, %v2418
    %v2420 = vsel %vm2324, %v2295, %v2419
    %v2421 = vsel %vm2326, %v2297, %v2420
    %v2422 = vsel %vm2328, %v2299, %v2421
    %v2423 = vsel %vm2330, %v2301, %v2422
    %v2424 = vsel %vm2332, %v2303, %v2423
    %v2425 = vsel %vm2320, %v2306, %v2304
    %v2426 = vsel %vm2322, %v2308, %v2425
    %v2427 = vsel %vm2324, %v2310, %v2426
    %v2428 = vsel %vm2326, %v2312, %v2427
    %v2429 = vsel %vm2328, %v2314, %v2428
    %v2430 = vsel %vm2330, %v2316, %v2429
    %v2431 = vsel %vm2332, %v2318, %v2430
    %v2432 = vsel %vm2320, %v2307, %v2305
    %v2433 = vsel %vm2322, %v2309, %v2432
    %v2434 = vsel %vm2324, %v2311, %v2433
    %v2435 = vsel %vm2326, %v2313, %v2434
    %v2436 = vsel %vm2328, %v2315, %v2435
    %v2437 = vsel %vm2330, %v2317, %v2436
    %v2438 = vsel %vm2332, %v2319, %v2437
    %v2463 = vperm.slane %v2040, 0
    %v2464 = vperm.slane %v2040, 2
    %v2465 = vperm.slane %v2052, 0
    %v2466 = vperm.slane %v2052, 2
    %v2467 = vperm.slane %v2064, 0
    %v2468 = vperm.slane %v2064, 2
    %v2469 = vperm.slane %v2076, 0
    %v2470 = vperm.slane %v2076, 2
    %v2471 = vperm.slane %v2088, 0
    %v2472 = vperm.slane %v2088, 2
    %v2473 = vperm.slane %v2100, 0
    %v2474 = vperm.slane %v2100, 2
    %v2475 = vperm.slane %v2112, 0
    %v2476 = vperm.slane %v2112, 2
    %v2477 = vperm.slane %v2124, 0
    %v2478 = vperm.slane %v2124, 2
    %v2479 = vsel %vm2320, %v2196, %v2194
    %v2480 = vsel %vm2322, %v2198, %v2479
    %v2481 = vsel %vm2324, %v2200, %v2480
    %v2482 = vsel %vm2326, %v2202, %v2481
    %v2483 = vsel %vm2328, %v2204, %v2482
    %v2484 = vsel %vm2330, %v2206, %v2483
    %v2485 = vsel %vm2332, %v2463, %v2484
    %v2486 = vsel %vm2320, %v2197, %v2195
    %v2487 = vsel %vm2322, %v2199, %v2486
    %v2488 = vsel %vm2324, %v2201, %v2487
    %v2489 = vsel %vm2326, %v2203, %v2488
    %v2490 = vsel %vm2328, %v2205, %v2489
    %v2491 = vsel %vm2330, %v2207, %v2490
    %v2492 = vsel %vm2332, %v2464, %v2491
    %v2493 = vsel %vm2320, %v2212, %v2210
    %v2494 = vsel %vm2322, %v2214, %v2493
    %v2495 = vsel %vm2324, %v2216, %v2494
    %v2496 = vsel %vm2326, %v2218, %v2495
    %v2497 = vsel %vm2328, %v2220, %v2496
    %v2498 = vsel %vm2330, %v2222, %v2497
    %v2499 = vsel %vm2332, %v2465, %v2498
    %v2500 = vsel %vm2320, %v2213, %v2211
    %v2501 = vsel %vm2322, %v2215, %v2500
    %v2502 = vsel %vm2324, %v2217, %v2501
    %v2503 = vsel %vm2326, %v2219, %v2502
    %v2504 = vsel %vm2328, %v2221, %v2503
    %v2505 = vsel %vm2330, %v2223, %v2504
    %v2506 = vsel %vm2332, %v2466, %v2505
    %v2507 = vsel %vm2320, %v2228, %v2226
    %v2508 = vsel %vm2322, %v2230, %v2507
    %v2509 = vsel %vm2324, %v2232, %v2508
    %v2510 = vsel %vm2326, %v2234, %v2509
    %v2511 = vsel %vm2328, %v2236, %v2510
    %v2512 = vsel %vm2330, %v2238, %v2511
    %v2513 = vsel %vm2332, %v2467, %v2512
    %v2514 = vsel %vm2320, %v2229, %v2227
    %v2515 = vsel %vm2322, %v2231, %v2514
    %v2516 = vsel %vm2324, %v2233, %v2515
    %v2517 = vsel %vm2326, %v2235, %v2516
    %v2518 = vsel %vm2328, %v2237, %v2517
    %v2519 = vsel %vm2330, %v2239, %v2518
    %v2520 = vsel %vm2332, %v2468, %v2519
    %v2521 = vsel %vm2320, %v2244, %v2242
    %v2522 = vsel %vm2322, %v2246, %v2521
    %v2523 = vsel %vm2324, %v2248, %v2522
    %v2524 = vsel %vm2326, %v2250, %v2523
    %v2525 = vsel %vm2328, %v2252, %v2524
    %v2526 = vsel %vm2330, %v2254, %v2525
    %v2527 = vsel %vm2332, %v2469, %v2526
    %v2528 = vsel %vm2320, %v2245, %v2243
    %v2529 = vsel %vm2322, %v2247, %v2528
    %v2530 = vsel %vm2324, %v2249, %v2529
    %v2531 = vsel %vm2326, %v2251, %v2530
    %v2532 = vsel %vm2328, %v2253, %v2531
    %v2533 = vsel %vm2330, %v2255, %v2532
    %v2534 = vsel %vm2332, %v2470, %v2533
    %v2535 = vsel %vm2320, %v2260, %v2258
    %v2536 = vsel %vm2322, %v2262, %v2535
    %v2537 = vsel %vm2324, %v2264, %v2536
    %v2538 = vsel %vm2326, %v2266, %v2537
    %v2539 = vsel %vm2328, %v2268, %v2538
    %v2540 = vsel %vm2330, %v2270, %v2539
    %v2541 = vsel %vm2332, %v2471, %v2540
    %v2542 = vsel %vm2320, %v2261, %v2259
    %v2543 = vsel %vm2322, %v2263, %v2542
    %v2544 = vsel %vm2324, %v2265, %v2543
    %v2545 = vsel %vm2326, %v2267, %v2544
    %v2546 = vsel %vm2328, %v2269, %v2545
    %v2547 = vsel %vm2330, %v2271, %v2546
    %v2548 = vsel %vm2332, %v2472, %v2547
    %v2549 = vsel %vm2320, %v2276, %v2274
    %v2550 = vsel %vm2322, %v2278, %v2549
    %v2551 = vsel %vm2324, %v2280, %v2550
    %v2552 = vsel %vm2326, %v2282, %v2551
    %v2553 = vsel %vm2328, %v2284, %v2552
    %v2554 = vsel %vm2330, %v2286, %v2553
    %v2555 = vsel %vm2332, %v2473, %v2554
    %v2556 = vsel %vm2320, %v2277, %v2275
    %v2557 = vsel %vm2322, %v2279, %v2556
    %v2558 = vsel %vm2324, %v2281, %v2557
    %v2559 = vsel %vm2326, %v2283, %v2558
    %v2560 = vsel %vm2328, %v2285, %v2559
    %v2561 = vsel %vm2330, %v2287, %v2560
    %v2562 = vsel %vm2332, %v2474, %v2561
    %v2563 = vsel %vm2320, %v2292, %v2290
    %v2564 = vsel %vm2322, %v2294, %v2563
    %v2565 = vsel %vm2324, %v2296, %v2564
    %v2566 = vsel %vm2326, %v2298, %v2565
    %v2567 = vsel %vm2328, %v2300, %v2566
    %v2568 = vsel %vm2330, %v2302, %v2567
    %v2569 = vsel %vm2332, %v2475, %v2568
    %v2570 = vsel %vm2320, %v2293, %v2291
    %v2571 = vsel %vm2322, %v2295, %v2570
    %v2572 = vsel %vm2324, %v2297, %v2571
    %v2573 = vsel %vm2326, %v2299, %v2572
    %v2574 = vsel %vm2328, %v2301, %v2573
    %v2575 = vsel %vm2330, %v2303, %v2574
    %v2576 = vsel %vm2332, %v2476, %v2575
    %v2577 = vsel %vm2320, %v2308, %v2306
    %v2578 = vsel %vm2322, %v2310, %v2577
    %v2579 = vsel %vm2324, %v2312, %v2578
    %v2580 = vsel %vm2326, %v2314, %v2579
    %v2581 = vsel %vm2328, %v2316, %v2580
    %v2582 = vsel %vm2330, %v2318, %v2581
    %v2583 = vsel %vm2332, %v2477, %v2582
    %v2584 = vsel %vm2320, %v2309, %v2307
    %v2585 = vsel %vm2322, %v2311, %v2584
    %v2586 = vsel %vm2324, %v2313, %v2585
    %v2587 = vsel %vm2326, %v2315, %v2586
    %v2588 = vsel %vm2328, %v2317, %v2587
    %v2589 = vsel %vm2330, %v2319, %v2588
    %v2590 = vsel %vm2332, %v2478, %v2589
    %v2615 = vperm.slane %v2041, 0
    %v2616 = vperm.slane %v2041, 2
    %v2617 = vperm.slane %v2053, 0
    %v2618 = vperm.slane %v2053, 2
    %v2619 = vperm.slane %v2065, 0
    %v2620 = vperm.slane %v2065, 2
    %v2621 = vperm.slane %v2077, 0
    %v2622 = vperm.slane %v2077, 2
    %v2623 = vperm.slane %v2089, 0
    %v2624 = vperm.slane %v2089, 2
    %v2625 = vperm.slane %v2101, 0
    %v2626 = vperm.slane %v2101, 2
    %v2627 = vperm.slane %v2113, 0
    %v2628 = vperm.slane %v2113, 2
    %v2629 = vperm.slane %v2125, 0
    %v2630 = vperm.slane %v2125, 2
    %v2631 = vsel %vm2320, %v2198, %v2196
    %v2632 = vsel %vm2322, %v2200, %v2631
    %v2633 = vsel %vm2324, %v2202, %v2632
    %v2634 = vsel %vm2326, %v2204, %v2633
    %v2635 = vsel %vm2328, %v2206, %v2634
    %v2636 = vsel %vm2330, %v2463, %v2635
    %v2637 = vsel %vm2332, %v2615, %v2636
    %v2638 = vsel %vm2320, %v2199, %v2197
    %v2639 = vsel %vm2322, %v2201, %v2638
    %v2640 = vsel %vm2324, %v2203, %v2639
    %v2641 = vsel %vm2326, %v2205, %v2640
    %v2642 = vsel %vm2328, %v2207, %v2641
    %v2643 = vsel %vm2330, %v2464, %v2642
    %v2644 = vsel %vm2332, %v2616, %v2643
    %v2645 = vsel %vm2320, %v2214, %v2212
    %v2646 = vsel %vm2322, %v2216, %v2645
    %v2647 = vsel %vm2324, %v2218, %v2646
    %v2648 = vsel %vm2326, %v2220, %v2647
    %v2649 = vsel %vm2328, %v2222, %v2648
    %v2650 = vsel %vm2330, %v2465, %v2649
    %v2651 = vsel %vm2332, %v2617, %v2650
    %v2652 = vsel %vm2320, %v2215, %v2213
    %v2653 = vsel %vm2322, %v2217, %v2652
    %v2654 = vsel %vm2324, %v2219, %v2653
    %v2655 = vsel %vm2326, %v2221, %v2654
    %v2656 = vsel %vm2328, %v2223, %v2655
    %v2657 = vsel %vm2330, %v2466, %v2656
    %v2658 = vsel %vm2332, %v2618, %v2657
    %v2659 = vsel %vm2320, %v2230, %v2228
    %v2660 = vsel %vm2322, %v2232, %v2659
    %v2661 = vsel %vm2324, %v2234, %v2660
    %v2662 = vsel %vm2326, %v2236, %v2661
    %v2663 = vsel %vm2328, %v2238, %v2662
    %v2664 = vsel %vm2330, %v2467, %v2663
    %v2665 = vsel %vm2332, %v2619, %v2664
    %v2666 = vsel %vm2320, %v2231, %v2229
    %v2667 = vsel %vm2322, %v2233, %v2666
    %v2668 = vsel %vm2324, %v2235, %v2667
    %v2669 = vsel %vm2326, %v2237, %v2668
    %v2670 = vsel %vm2328, %v2239, %v2669
    %v2671 = vsel %vm2330, %v2468, %v2670
    %v2672 = vsel %vm2332, %v2620, %v2671
    %v2673 = vsel %vm2320, %v2246, %v2244
    %v2674 = vsel %vm2322, %v2248, %v2673
    %v2675 = vsel %vm2324, %v2250, %v2674
    %v2676 = vsel %vm2326, %v2252, %v2675
    %v2677 = vsel %vm2328, %v2254, %v2676
    %v2678 = vsel %vm2330, %v2469, %v2677
    %v2679 = vsel %vm2332, %v2621, %v2678
    %v2680 = vsel %vm2320, %v2247, %v2245
    %v2681 = vsel %vm2322, %v2249, %v2680
    %v2682 = vsel %vm2324, %v2251, %v2681
    %v2683 = vsel %vm2326, %v2253, %v2682
    %v2684 = vsel %vm2328, %v2255, %v2683
    %v2685 = vsel %vm2330, %v2470, %v2684
    %v2686 = vsel %vm2332, %v2622, %v2685
    %v2687 = vsel %vm2320, %v2262, %v2260
    %v2688 = vsel %vm2322, %v2264, %v2687
    %v2689 = vsel %vm2324, %v2266, %v2688
    %v2690 = vsel %vm2326, %v2268, %v2689
    %v2691 = vsel %vm2328, %v2270, %v2690
    %v2692 = vsel %vm2330, %v2471, %v2691
    %v2693 = vsel %vm2332, %v2623, %v2692
    %v2694 = vsel %vm2320, %v2263, %v2261
    %v2695 = vsel %vm2322, %v2265, %v2694
    %v2696 = vsel %vm2324, %v2267, %v2695
    %v2697 = vsel %vm2326, %v2269, %v2696
    %v2698 = vsel %vm2328, %v2271, %v2697
    %v2699 = vsel %vm2330, %v2472, %v2698
    %v2700 = vsel %vm2332, %v2624, %v2699
    %v2701 = vsel %vm2320, %v2278, %v2276
    %v2702 = vsel %vm2322, %v2280, %v2701
    %v2703 = vsel %vm2324, %v2282, %v2702
    %v2704 = vsel %vm2326, %v2284, %v2703
    %v2705 = vsel %vm2328, %v2286, %v2704
    %v2706 = vsel %vm2330, %v2473, %v2705
    %v2707 = vsel %vm2332, %v2625, %v2706
    %v2708 = vsel %vm2320, %v2279, %v2277
    %v2709 = vsel %vm2322, %v2281, %v2708
    %v2710 = vsel %vm2324, %v2283, %v2709
    %v2711 = vsel %vm2326, %v2285, %v2710
    %v2712 = vsel %vm2328, %v2287, %v2711
    %v2713 = vsel %vm2330, %v2474, %v2712
    %v2714 = vsel %vm2332, %v2626, %v2713
    %v2715 = vsel %vm2320, %v2294, %v2292
    %v2716 = vsel %vm2322, %v2296, %v2715
    %v2717 = vsel %vm2324, %v2298, %v2716
    %v2718 = vsel %vm2326, %v2300, %v2717
    %v2719 = vsel %vm2328, %v2302, %v2718
    %v2720 = vsel %vm2330, %v2475, %v2719
    %v2721 = vsel %vm2332, %v2627, %v2720
    %v2722 = vsel %vm2320, %v2295, %v2293
    %v2723 = vsel %vm2322, %v2297, %v2722
    %v2724 = vsel %vm2324, %v2299, %v2723
    %v2725 = vsel %vm2326, %v2301, %v2724
    %v2726 = vsel %vm2328, %v2303, %v2725
    %v2727 = vsel %vm2330, %v2476, %v2726
    %v2728 = vsel %vm2332, %v2628, %v2727
    %v2729 = vsel %vm2320, %v2310, %v2308
    %v2730 = vsel %vm2322, %v2312, %v2729
    %v2731 = vsel %vm2324, %v2314, %v2730
    %v2732 = vsel %vm2326, %v2316, %v2731
    %v2733 = vsel %vm2328, %v2318, %v2732
    %v2734 = vsel %vm2330, %v2477, %v2733
    %v2735 = vsel %vm2332, %v2629, %v2734
    %v2736 = vsel %vm2320, %v2311, %v2309
    %v2737 = vsel %vm2322, %v2313, %v2736
    %v2738 = vsel %vm2324, %v2315, %v2737
    %v2739 = vsel %vm2326, %v2317, %v2738
    %v2740 = vsel %vm2328, %v2319, %v2739
    %v2741 = vsel %vm2330, %v2478, %v2740
    %v2742 = vsel %vm2332, %v2630, %v2741
    %v2767 = vperm.slane %v2042, 0
    %v2768 = vperm.slane %v2042, 2
    %v2769 = vperm.slane %v2054, 0
    %v2770 = vperm.slane %v2054, 2
    %v2771 = vperm.slane %v2066, 0
    %v2772 = vperm.slane %v2066, 2
    %v2773 = vperm.slane %v2078, 0
    %v2774 = vperm.slane %v2078, 2
    %v2775 = vperm.slane %v2090, 0
    %v2776 = vperm.slane %v2090, 2
    %v2777 = vperm.slane %v2102, 0
    %v2778 = vperm.slane %v2102, 2
    %v2779 = vperm.slane %v2114, 0
    %v2780 = vperm.slane %v2114, 2
    %v2781 = vperm.slane %v2126, 0
    %v2782 = vperm.slane %v2126, 2
    %v2783 = vsel %vm2320, %v2200, %v2198
    %v2784 = vsel %vm2322, %v2202, %v2783
    %v2785 = vsel %vm2324, %v2204, %v2784
    %v2786 = vsel %vm2326, %v2206, %v2785
    %v2787 = vsel %vm2328, %v2463, %v2786
    %v2788 = vsel %vm2330, %v2615, %v2787
    %v2789 = vsel %vm2332, %v2767, %v2788
    %v2790 = vsel %vm2320, %v2201, %v2199
    %v2791 = vsel %vm2322, %v2203, %v2790
    %v2792 = vsel %vm2324, %v2205, %v2791
    %v2793 = vsel %vm2326, %v2207, %v2792
    %v2794 = vsel %vm2328, %v2464, %v2793
    %v2795 = vsel %vm2330, %v2616, %v2794
    %v2796 = vsel %vm2332, %v2768, %v2795
    %v2797 = vsel %vm2320, %v2216, %v2214
    %v2798 = vsel %vm2322, %v2218, %v2797
    %v2799 = vsel %vm2324, %v2220, %v2798
    %v2800 = vsel %vm2326, %v2222, %v2799
    %v2801 = vsel %vm2328, %v2465, %v2800
    %v2802 = vsel %vm2330, %v2617, %v2801
    %v2803 = vsel %vm2332, %v2769, %v2802
    %v2804 = vsel %vm2320, %v2217, %v2215
    %v2805 = vsel %vm2322, %v2219, %v2804
    %v2806 = vsel %vm2324, %v2221, %v2805
    %v2807 = vsel %vm2326, %v2223, %v2806
    %v2808 = vsel %vm2328, %v2466, %v2807
    %v2809 = vsel %vm2330, %v2618, %v2808
    %v2810 = vsel %vm2332, %v2770, %v2809
    %v2811 = vsel %vm2320, %v2232, %v2230
    %v2812 = vsel %vm2322, %v2234, %v2811
    %v2813 = vsel %vm2324, %v2236, %v2812
    %v2814 = vsel %vm2326, %v2238, %v2813
    %v2815 = vsel %vm2328, %v2467, %v2814
    %v2816 = vsel %vm2330, %v2619, %v2815
    %v2817 = vsel %vm2332, %v2771, %v2816
    %v2818 = vsel %vm2320, %v2233, %v2231
    %v2819 = vsel %vm2322, %v2235, %v2818
    %v2820 = vsel %vm2324, %v2237, %v2819
    %v2821 = vsel %vm2326, %v2239, %v2820
    %v2822 = vsel %vm2328, %v2468, %v2821
    %v2823 = vsel %vm2330, %v2620, %v2822
    %v2824 = vsel %vm2332, %v2772, %v2823
    %v2825 = vsel %vm2320, %v2248, %v2246
    %v2826 = vsel %vm2322, %v2250, %v2825
    %v2827 = vsel %vm2324, %v2252, %v2826
    %v2828 = vsel %vm2326, %v2254, %v2827
    %v2829 = vsel %vm2328, %v2469, %v2828
    %v2830 = vsel %vm2330, %v2621, %v2829
    %v2831 = vsel %vm2332, %v2773, %v2830
    %v2832 = vsel %vm2320, %v2249, %v2247
    %v2833 = vsel %vm2322, %v2251, %v2832
    %v2834 = vsel %vm2324, %v2253, %v2833
    %v2835 = vsel %vm2326, %v2255, %v2834
    %v2836 = vsel %vm2328, %v2470, %v2835
    %v2837 = vsel %vm2330, %v2622, %v2836
    %v2838 = vsel %vm2332, %v2774, %v2837
    %v2839 = vsel %vm2320, %v2264, %v2262
    %v2840 = vsel %vm2322, %v2266, %v2839
    %v2841 = vsel %vm2324, %v2268, %v2840
    %v2842 = vsel %vm2326, %v2270, %v2841
    %v2843 = vsel %vm2328, %v2471, %v2842
    %v2844 = vsel %vm2330, %v2623, %v2843
    %v2845 = vsel %vm2332, %v2775, %v2844
    %v2846 = vsel %vm2320, %v2265, %v2263
    %v2847 = vsel %vm2322, %v2267, %v2846
    %v2848 = vsel %vm2324, %v2269, %v2847
    %v2849 = vsel %vm2326, %v2271, %v2848
    %v2850 = vsel %vm2328, %v2472, %v2849
    %v2851 = vsel %vm2330, %v2624, %v2850
    %v2852 = vsel %vm2332, %v2776, %v2851
    %v2853 = vsel %vm2320, %v2280, %v2278
    %v2854 = vsel %vm2322, %v2282, %v2853
    %v2855 = vsel %vm2324, %v2284, %v2854
    %v2856 = vsel %vm2326, %v2286, %v2855
    %v2857 = vsel %vm2328, %v2473, %v2856
    %v2858 = vsel %vm2330, %v2625, %v2857
    %v2859 = vsel %vm2332, %v2777, %v2858
    %v2860 = vsel %vm2320, %v2281, %v2279
    %v2861 = vsel %vm2322, %v2283, %v2860
    %v2862 = vsel %vm2324, %v2285, %v2861
    %v2863 = vsel %vm2326, %v2287, %v2862
    %v2864 = vsel %vm2328, %v2474, %v2863
    %v2865 = vsel %vm2330, %v2626, %v2864
    %v2866 = vsel %vm2332, %v2778, %v2865
    %v2867 = vsel %vm2320, %v2296, %v2294
    %v2868 = vsel %vm2322, %v2298, %v2867
    %v2869 = vsel %vm2324, %v2300, %v2868
    %v2870 = vsel %vm2326, %v2302, %v2869
    %v2871 = vsel %vm2328, %v2475, %v2870
    %v2872 = vsel %vm2330, %v2627, %v2871
    %v2873 = vsel %vm2332, %v2779, %v2872
    %v2874 = vsel %vm2320, %v2297, %v2295
    %v2875 = vsel %vm2322, %v2299, %v2874
    %v2876 = vsel %vm2324, %v2301, %v2875
    %v2877 = vsel %vm2326, %v2303, %v2876
    %v2878 = vsel %vm2328, %v2476, %v2877
    %v2879 = vsel %vm2330, %v2628, %v2878
    %v2880 = vsel %vm2332, %v2780, %v2879
    %v2881 = vsel %vm2320, %v2312, %v2310
    %v2882 = vsel %vm2322, %v2314, %v2881
    %v2883 = vsel %vm2324, %v2316, %v2882
    %v2884 = vsel %vm2326, %v2318, %v2883
    %v2885 = vsel %vm2328, %v2477, %v2884
    %v2886 = vsel %vm2330, %v2629, %v2885
    %v2887 = vsel %vm2332, %v2781, %v2886
    %v2888 = vsel %vm2320, %v2313, %v2311
    %v2889 = vsel %vm2322, %v2315, %v2888
    %v2890 = vsel %vm2324, %v2317, %v2889
    %v2891 = vsel %vm2326, %v2319, %v2890
    %v2892 = vsel %vm2328, %v2478, %v2891
    %v2893 = vsel %vm2330, %v2630, %v2892
    %v2894 = vsel %vm2332, %v2782, %v2893
    %v2919 = vperm.slane %v2043, 0
    %v2920 = vperm.slane %v2043, 2
    %v2921 = vperm.slane %v2055, 0
    %v2922 = vperm.slane %v2055, 2
    %v2923 = vperm.slane %v2067, 0
    %v2924 = vperm.slane %v2067, 2
    %v2925 = vperm.slane %v2079, 0
    %v2926 = vperm.slane %v2079, 2
    %v2927 = vperm.slane %v2091, 0
    %v2928 = vperm.slane %v2091, 2
    %v2929 = vperm.slane %v2103, 0
    %v2930 = vperm.slane %v2103, 2
    %v2931 = vperm.slane %v2115, 0
    %v2932 = vperm.slane %v2115, 2
    %v2933 = vperm.slane %v2127, 0
    %v2934 = vperm.slane %v2127, 2
    %v2935 = vsel %vm2320, %v2202, %v2200
    %v2936 = vsel %vm2322, %v2204, %v2935
    %v2937 = vsel %vm2324, %v2206, %v2936
    %v2938 = vsel %vm2326, %v2463, %v2937
    %v2939 = vsel %vm2328, %v2615, %v2938
    %v2940 = vsel %vm2330, %v2767, %v2939
    %v2941 = vsel %vm2332, %v2919, %v2940
    %v2942 = vsel %vm2320, %v2203, %v2201
    %v2943 = vsel %vm2322, %v2205, %v2942
    %v2944 = vsel %vm2324, %v2207, %v2943
    %v2945 = vsel %vm2326, %v2464, %v2944
    %v2946 = vsel %vm2328, %v2616, %v2945
    %v2947 = vsel %vm2330, %v2768, %v2946
    %v2948 = vsel %vm2332, %v2920, %v2947
    %v2949 = vsel %vm2320, %v2218, %v2216
    %v2950 = vsel %vm2322, %v2220, %v2949
    %v2951 = vsel %vm2324, %v2222, %v2950
    %v2952 = vsel %vm2326, %v2465, %v2951
    %v2953 = vsel %vm2328, %v2617, %v2952
    %v2954 = vsel %vm2330, %v2769, %v2953
    %v2955 = vsel %vm2332, %v2921, %v2954
    %v2956 = vsel %vm2320, %v2219, %v2217
    %v2957 = vsel %vm2322, %v2221, %v2956
    %v2958 = vsel %vm2324, %v2223, %v2957
    %v2959 = vsel %vm2326, %v2466, %v2958
    %v2960 = vsel %vm2328, %v2618, %v2959
    %v2961 = vsel %vm2330, %v2770, %v2960
    %v2962 = vsel %vm2332, %v2922, %v2961
    %v2963 = vsel %vm2320, %v2234, %v2232
    %v2964 = vsel %vm2322, %v2236, %v2963
    %v2965 = vsel %vm2324, %v2238, %v2964
    %v2966 = vsel %vm2326, %v2467, %v2965
    %v2967 = vsel %vm2328, %v2619, %v2966
    %v2968 = vsel %vm2330, %v2771, %v2967
    %v2969 = vsel %vm2332, %v2923, %v2968
    %v2970 = vsel %vm2320, %v2235, %v2233
    %v2971 = vsel %vm2322, %v2237, %v2970
    %v2972 = vsel %vm2324, %v2239, %v2971
    %v2973 = vsel %vm2326, %v2468, %v2972
    %v2974 = vsel %vm2328, %v2620, %v2973
    %v2975 = vsel %vm2330, %v2772, %v2974
    %v2976 = vsel %vm2332, %v2924, %v2975
    %v2977 = vsel %vm2320, %v2250, %v2248
    %v2978 = vsel %vm2322, %v2252, %v2977
    %v2979 = vsel %vm2324, %v2254, %v2978
    %v2980 = vsel %vm2326, %v2469, %v2979
    %v2981 = vsel %vm2328, %v2621, %v2980
    %v2982 = vsel %vm2330, %v2773, %v2981
    %v2983 = vsel %vm2332, %v2925, %v2982
    %v2984 = vsel %vm2320, %v2251, %v2249
    %v2985 = vsel %vm2322, %v2253, %v2984
    %v2986 = vsel %vm2324, %v2255, %v2985
    %v2987 = vsel %vm2326, %v2470, %v2986
    %v2988 = vsel %vm2328, %v2622, %v2987
    %v2989 = vsel %vm2330, %v2774, %v2988
    %v2990 = vsel %vm2332, %v2926, %v2989
    %v2991 = vsel %vm2320, %v2266, %v2264
    %v2992 = vsel %vm2322, %v2268, %v2991
    %v2993 = vsel %vm2324, %v2270, %v2992
    %v2994 = vsel %vm2326, %v2471, %v2993
    %v2995 = vsel %vm2328, %v2623, %v2994
    %v2996 = vsel %vm2330, %v2775, %v2995
    %v2997 = vsel %vm2332, %v2927, %v2996
    %v2998 = vsel %vm2320, %v2267, %v2265
    %v2999 = vsel %vm2322, %v2269, %v2998
    %v3000 = vsel %vm2324, %v2271, %v2999
    %v3001 = vsel %vm2326, %v2472, %v3000
    %v3002 = vsel %vm2328, %v2624, %v3001
    %v3003 = vsel %vm2330, %v2776, %v3002
    %v3004 = vsel %vm2332, %v2928, %v3003
    %v3005 = vsel %vm2320, %v2282, %v2280
    %v3006 = vsel %vm2322, %v2284, %v3005
    %v3007 = vsel %vm2324, %v2286, %v3006
    %v3008 = vsel %vm2326, %v2473, %v3007
    %v3009 = vsel %vm2328, %v2625, %v3008
    %v3010 = vsel %vm2330, %v2777, %v3009
    %v3011 = vsel %vm2332, %v2929, %v3010
    %v3012 = vsel %vm2320, %v2283, %v2281
    %v3013 = vsel %vm2322, %v2285, %v3012
    %v3014 = vsel %vm2324, %v2287, %v3013
    %v3015 = vsel %vm2326, %v2474, %v3014
    %v3016 = vsel %vm2328, %v2626, %v3015
    %v3017 = vsel %vm2330, %v2778, %v3016
    %v3018 = vsel %vm2332, %v2930, %v3017
    %v3019 = vsel %vm2320, %v2298, %v2296
    %v3020 = vsel %vm2322, %v2300, %v3019
    %v3021 = vsel %vm2324, %v2302, %v3020
    %v3022 = vsel %vm2326, %v2475, %v3021
    %v3023 = vsel %vm2328, %v2627, %v3022
    %v3024 = vsel %vm2330, %v2779, %v3023
    %v3025 = vsel %vm2332, %v2931, %v3024
    %v3026 = vsel %vm2320, %v2299, %v2297
    %v3027 = vsel %vm2322, %v2301, %v3026
    %v3028 = vsel %vm2324, %v2303, %v3027
    %v3029 = vsel %vm2326, %v2476, %v3028
    %v3030 = vsel %vm2328, %v2628, %v3029
    %v3031 = vsel %vm2330, %v2780, %v3030
    %v3032 = vsel %vm2332, %v2932, %v3031
    %v3033 = vsel %vm2320, %v2314, %v2312
    %v3034 = vsel %vm2322, %v2316, %v3033
    %v3035 = vsel %vm2324, %v2318, %v3034
    %v3036 = vsel %vm2326, %v2477, %v3035
    %v3037 = vsel %vm2328, %v2629, %v3036
    %v3038 = vsel %vm2330, %v2781, %v3037
    %v3039 = vsel %vm2332, %v2933, %v3038
    %v3040 = vsel %vm2320, %v2315, %v2313
    %v3041 = vsel %vm2322, %v2317, %v3040
    %v3042 = vsel %vm2324, %v2319, %v3041
    %v3043 = vsel %vm2326, %v2478, %v3042
    %v3044 = vsel %vm2328, %v2630, %v3043
    %v3045 = vsel %vm2330, %v2782, %v3044
    %v3046 = vsel %vm2332, %v2934, %v3045
    %v3063 = vld [vmem:[#allocation7] sm:$0xff]
    %v3064 = vld [vmem:[#allocation7 + $0x8] sm:$0xff]
    %v3065 = vld [vmem:[#allocation7 + $0x10] sm:$0xff]
    %v3066 = vld [vmem:[#allocation7 + $0x18] sm:$0xff]
    %v3067 = vld [vmem:[#allocation7 + $0x20] sm:$0xff]
    %v3068 = vld [vmem:[#allocation7 + $0x28] sm:$0xff]
    %v3069 = vld [vmem:[#allocation7 + $0x30] sm:$0xff]
    %v3070 = vld [vmem:[#allocation7 + $0x38] sm:$0xff]
    %v3071 = vld [vmem:[#allocation7 + $0x40] sm:$0xff]
    %v3072 = vld [vmem:[#allocation7 + $0x48] sm:$0xff]
    %v3073 = vld [vmem:[#allocation7 + $0x50] sm:$0xff]
    %v3074 = vld [vmem:[#allocation7 + $0x58] sm:$0xff]
    %v3075 = vld [vmem:[#allocation7 + $0x60] sm:$0xff]
    %v3076 = vld [vmem:[#allocation7 + $0x68] sm:$0xff]
    %v3077 = vld [vmem:[#allocation7 + $0x70] sm:$0xff]
    %v3078 = vld [vmem:[#allocation7 + $0x78] sm:$0xff]
    %v3079 = vld [vmem:[#allocation7 + $0x80] sm:$0xff]
    %v3080 = vld [vmem:[#allocation7 + $0x88] sm:$0xff]
    %v3081 = vld [vmem:[#allocation7 + $0x90] sm:$0xff]
    %v3082 = vld [vmem:[#allocation7 + $0x98] sm:$0xff]
    %v3083 = vld [vmem:[#allocation7 + $0xa0] sm:$0xff]
    %v3084 = vld [vmem:[#allocation7 + $0xa8] sm:$0xff]
    %v3085 = vld [vmem:[#allocation7 + $0xb0] sm:$0xff]
    %v3086 = vld [vmem:[#allocation7 + $0xb8] sm:$0xff]
    %v3087 = vld [vmem:[#allocation7 + $0xc0] sm:$0xff]
    %v3088 = vld [vmem:[#allocation7 + $0xc8] sm:$0xff]
    %v3089 = vld [vmem:[#allocation7 + $0xd0] sm:$0xff]
    %v3090 = vld [vmem:[#allocation7 + $0xd8] sm:$0xff]
    %v3091 = vld [vmem:[#allocation7 + $0xe0] sm:$0xff]
    %v3092 = vld [vmem:[#allocation7 + $0xe8] sm:$0xff]
    %v3093 = vld [vmem:[#allocation7 + $0xf0] sm:$0xff]
    %v3094 = vld [vmem:[#allocation7 + $0xf8] sm:$0xff]
    %v3095 = vld [vmem:[#allocation7 + $0x100] sm:$0xff]
    %v3096 = vld [vmem:[#allocation7 + $0x108] sm:$0xff]
    %v3097 = vld [vmem:[#allocation7 + $0x110] sm:$0xff]
    %v3098 = vld [vmem:[#allocation7 + $0x118] sm:$0xff]
    %v3099 = vld [vmem:[#allocation7 + $0x120] sm:$0xff]
    %v3100 = vld [vmem:[#allocation7 + $0x128] sm:$0xff]
    %v3101 = vld [vmem:[#allocation7 + $0x130] sm:$0xff]
    %v3102 = vld [vmem:[#allocation7 + $0x138] sm:$0xff]
    %v3103 = vld [vmem:[#allocation7 + $0x140] sm:$0xff]
    %v3104 = vld [vmem:[#allocation7 + $0x148] sm:$0xff]
    %v3105 = vld [vmem:[#allocation7 + $0x150] sm:$0xff]
    %v3106 = vld [vmem:[#allocation7 + $0x158] sm:$0xff]
    %v3107 = vld [vmem:[#allocation7 + $0x160] sm:$0xff]
    %v3108 = vld [vmem:[#allocation7 + $0x168] sm:$0xff]
    %v3109 = vld [vmem:[#allocation7 + $0x170] sm:$0xff]
    %v3110 = vld [vmem:[#allocation7 + $0x178] sm:$0xff]
    %v3111 = vld [vmem:[#allocation7 + $0x180] sm:$0xff]
    %v3112 = vld [vmem:[#allocation7 + $0x188] sm:$0xff]
    %v3113 = vld [vmem:[#allocation7 + $0x190] sm:$0xff]
    %v3114 = vld [vmem:[#allocation7 + $0x198] sm:$0xff]
    %v3115 = vld [vmem:[#allocation7 + $0x1a0] sm:$0xff]
    %v3116 = vld [vmem:[#allocation7 + $0x1a8] sm:$0xff]
    %v3117 = vld [vmem:[#allocation7 + $0x1b0] sm:$0xff]
    %v3118 = vld [vmem:[#allocation7 + $0x1b8] sm:$0xff]
    %v3119 = vld [vmem:[#allocation7 + $0x1c0] sm:$0xff]
    %v3120 = vld [vmem:[#allocation7 + $0x1c8] sm:$0xff]
    %v3121 = vld [vmem:[#allocation7 + $0x1d0] sm:$0xff]
    %v3122 = vld [vmem:[#allocation7 + $0x1d8] sm:$0xff]
    %v3123 = vld [vmem:[#allocation7 + $0x1e0] sm:$0xff]
    %v3124 = vld [vmem:[#allocation7 + $0x1e8] sm:$0xff]
    %v3125 = vld [vmem:[#allocation7 + $0x1f0] sm:$0xff]
    %v3126 = vld [vmem:[#allocation7 + $0x1f8] sm:$0xff]
    %v3127 = vld [vmem:[#allocation7 + $0x200] sm:$0xff]
    %v3128 = vld [vmem:[#allocation7 + $0x208] sm:$0xff]
    %v3129 = vld [vmem:[#allocation7 + $0x210] sm:$0xff]
    %v3130 = vld [vmem:[#allocation7 + $0x218] sm:$0xff]
    %v3131 = vld [vmem:[#allocation7 + $0x220] sm:$0xff]
    %v3132 = vld [vmem:[#allocation7 + $0x228] sm:$0xff]
    %v3133 = vld [vmem:[#allocation7 + $0x230] sm:$0xff]
    %v3134 = vld [vmem:[#allocation7 + $0x238] sm:$0xff]
    %v3135 = vld [vmem:[#allocation7 + $0x240] sm:$0xff]
    %v3136 = vld [vmem:[#allocation7 + $0x248] sm:$0xff]
    %v3137 = vld [vmem:[#allocation7 + $0x250] sm:$0xff]
    %v3138 = vld [vmem:[#allocation7 + $0x258] sm:$0xff]
    %v3139 = vld [vmem:[#allocation7 + $0x260] sm:$0xff]
    %v3140 = vld [vmem:[#allocation7 + $0x268] sm:$0xff]
    %v3141 = vld [vmem:[#allocation7 + $0x270] sm:$0xff]
    %v3142 = vld [vmem:[#allocation7 + $0x278] sm:$0xff]
    %v3143 = vld [vmem:[#allocation7 + $0x280] sm:$0xff]
    %v3144 = vld [vmem:[#allocation7 + $0x288] sm:$0xff]
    %v3145 = vld [vmem:[#allocation7 + $0x290] sm:$0xff]
    %v3146 = vld [vmem:[#allocation7 + $0x298] sm:$0xff]
    %v3147 = vld [vmem:[#allocation7 + $0x2a0] sm:$0xff]
    %v3148 = vld [vmem:[#allocation7 + $0x2a8] sm:$0xff]
    %v3149 = vld [vmem:[#allocation7 + $0x2b0] sm:$0xff]
    %v3150 = vld [vmem:[#allocation7 + $0x2b8] sm:$0xff]
    %v3151 = vld [vmem:[#allocation7 + $0x2c0] sm:$0xff]
    %v3152 = vld [vmem:[#allocation7 + $0x2c8] sm:$0xff]
    %v3153 = vld [vmem:[#allocation7 + $0x2d0] sm:$0xff]
    %v3154 = vld [vmem:[#allocation7 + $0x2d8] sm:$0xff]
    %v3155 = vld [vmem:[#allocation7 + $0x2e0] sm:$0xff]
    %v3156 = vld [vmem:[#allocation7 + $0x2e8] sm:$0xff]
    %v3157 = vld [vmem:[#allocation7 + $0x2f0] sm:$0xff]
    %v3158 = vld [vmem:[#allocation7 + $0x2f8] sm:$0xff]
    %v3159 = vld [vmem:[#allocation7 + $0x300] sm:$0xff]
    %v3160 = vld [vmem:[#allocation7 + $0x308] sm:$0xff]
    %v3161 = vld [vmem:[#allocation7 + $0x310] sm:$0xff]
    %v3162 = vld [vmem:[#allocation7 + $0x318] sm:$0xff]
    %v3163 = vld [vmem:[#allocation7 + $0x320] sm:$0xff]
    %v3164 = vld [vmem:[#allocation7 + $0x328] sm:$0xff]
    %v3165 = vld [vmem:[#allocation7 + $0x330] sm:$0xff]
    %v3166 = vld [vmem:[#allocation7 + $0x338] sm:$0xff]
    %v3167 = vld [vmem:[#allocation7 + $0x340] sm:$0xff]
    %v3168 = vld [vmem:[#allocation7 + $0x348] sm:$0xff]
    %v3169 = vld [vmem:[#allocation7 + $0x350] sm:$0xff]
    %v3170 = vld [vmem:[#allocation7 + $0x358] sm:$0xff]
    %v3171 = vld [vmem:[#allocation7 + $0x360] sm:$0xff]
    %v3172 = vld [vmem:[#allocation7 + $0x368] sm:$0xff]
    %v3173 = vld [vmem:[#allocation7 + $0x370] sm:$0xff]
    %v3174 = vld [vmem:[#allocation7 + $0x378] sm:$0xff]
    %v3175 = vld [vmem:[#allocation7 + $0x380] sm:$0xff]
    %v3176 = vld [vmem:[#allocation7 + $0x388] sm:$0xff]
    %v3177 = vld [vmem:[#allocation7 + $0x390] sm:$0xff]
    %v3178 = vld [vmem:[#allocation7 + $0x398] sm:$0xff]
    %v3179 = vld [vmem:[#allocation7 + $0x3a0] sm:$0xff]
    %v3180 = vld [vmem:[#allocation7 + $0x3a8] sm:$0xff]
    %v3181 = vld [vmem:[#allocation7 + $0x3b0] sm:$0xff]
    %v3182 = vld [vmem:[#allocation7 + $0x3b8] sm:$0xff]
    %v3183 = vld [vmem:[#allocation7 + $0x3c0] sm:$0xff]
    %v3184 = vld [vmem:[#allocation7 + $0x3c8] sm:$0xff]
    %v3185 = vld [vmem:[#allocation7 + $0x3d0] sm:$0xff]
    %v3186 = vld [vmem:[#allocation7 + $0x3d8] sm:$0xff]
    %v3187 = vld [vmem:[#allocation7 + $0x3e0] sm:$0xff]
    %v3188 = vld [vmem:[#allocation7 + $0x3e8] sm:$0xff]
    %v3189 = vld [vmem:[#allocation7 + $0x3f0] sm:$0xff]
    %v3190 = vld [vmem:[#allocation7 + $0x3f8] sm:$0xff]
    %v3191 = vld [vmem:[#allocation7 + $0x400] sm:$0xff]
    %v3192 = vld [vmem:[#allocation7 + $0x408] sm:$0xff]
    %v3193 = vld [vmem:[#allocation7 + $0x410] sm:$0xff]
    %v3194 = vld [vmem:[#allocation7 + $0x418] sm:$0xff]
    %v3195 = vld [vmem:[#allocation7 + $0x420] sm:$0xff]
    %v3196 = vld [vmem:[#allocation7 + $0x428] sm:$0xff]
    %v3197 = vld [vmem:[#allocation7 + $0x430] sm:$0xff]
    %v3198 = vld [vmem:[#allocation7 + $0x438] sm:$0xff]
    %v3199 = vld [vmem:[#allocation7 + $0x440] sm:$0xff]
    %v3200 = vld [vmem:[#allocation7 + $0x448] sm:$0xff]
    %v3201 = vld [vmem:[#allocation7 + $0x450] sm:$0xff]
    %v3202 = vld [vmem:[#allocation7 + $0x458] sm:$0xff]
    %v3203 = vld [vmem:[#allocation7 + $0x460] sm:$0xff]
    %v3204 = vld [vmem:[#allocation7 + $0x468] sm:$0xff]
    %v3205 = vld [vmem:[#allocation7 + $0x470] sm:$0xff]
    %v3206 = vld [vmem:[#allocation7 + $0x478] sm:$0xff]
    %v3207 = vld [vmem:[#allocation7 + $0x480] sm:$0xff]
    %v3208 = vld [vmem:[#allocation7 + $0x488] sm:$0xff]
    %v3209 = vld [vmem:[#allocation7 + $0x490] sm:$0xff]
    %v3210 = vld [vmem:[#allocation7 + $0x498] sm:$0xff]
    %v3211 = vld [vmem:[#allocation7 + $0x4a0] sm:$0xff]
    %v3212 = vld [vmem:[#allocation7 + $0x4a8] sm:$0xff]
    %v3213 = vld [vmem:[#allocation7 + $0x4b0] sm:$0xff]
    %v3214 = vld [vmem:[#allocation7 + $0x4b8] sm:$0xff]
    %v3215 = vld [vmem:[#allocation7 + $0x4c0] sm:$0xff]
    %v3216 = vld [vmem:[#allocation7 + $0x4c8] sm:$0xff]
    %v3217 = vld [vmem:[#allocation7 + $0x4d0] sm:$0xff]
    %v3218 = vld [vmem:[#allocation7 + $0x4d8] sm:$0xff]
    %v3219 = vld [vmem:[#allocation7 + $0x4e0] sm:$0xff]
    %v3220 = vld [vmem:[#allocation7 + $0x4e8] sm:$0xff]
    %v3221 = vld [vmem:[#allocation7 + $0x4f0] sm:$0xff]
    %v3222 = vld [vmem:[#allocation7 + $0x4f8] sm:$0xff]
    %v3223 = vld [vmem:[#allocation7 + $0x500] sm:$0xff]
    %v3224 = vld [vmem:[#allocation7 + $0x508] sm:$0xff]
    %v3225 = vld [vmem:[#allocation7 + $0x510] sm:$0xff]
    %v3226 = vld [vmem:[#allocation7 + $0x518] sm:$0xff]
    %v3227 = vld [vmem:[#allocation7 + $0x520] sm:$0xff]
    %v3228 = vld [vmem:[#allocation7 + $0x528] sm:$0xff]
    %v3229 = vld [vmem:[#allocation7 + $0x530] sm:$0xff]
    %v3230 = vld [vmem:[#allocation7 + $0x538] sm:$0xff]
    %v3231 = vld [vmem:[#allocation7 + $0x540] sm:$0xff]
    %v3232 = vld [vmem:[#allocation7 + $0x548] sm:$0xff]
    %v3233 = vld [vmem:[#allocation7 + $0x550] sm:$0xff]
    %v3234 = vld [vmem:[#allocation7 + $0x558] sm:$0xff]
    %v3235 = vld [vmem:[#allocation7 + $0x560] sm:$0xff]
    %v3236 = vld [vmem:[#allocation7 + $0x568] sm:$0xff]
    %v3237 = vld [vmem:[#allocation7 + $0x570] sm:$0xff]
    %v3238 = vld [vmem:[#allocation7 + $0x578] sm:$0xff]
    %v3239 = vld [vmem:[#allocation7 + $0x580] sm:$0xff]
    %v3240 = vld [vmem:[#allocation7 + $0x588] sm:$0xff]
    %v3241 = vld [vmem:[#allocation7 + $0x590] sm:$0xff]
    %v3242 = vld [vmem:[#allocation7 + $0x598] sm:$0xff]
    %v3243 = vld [vmem:[#allocation7 + $0x5a0] sm:$0xff]
    %v3244 = vld [vmem:[#allocation7 + $0x5a8] sm:$0xff]
    %v3245 = vld [vmem:[#allocation7 + $0x5b0] sm:$0xff]
    %v3246 = vld [vmem:[#allocation7 + $0x5b8] sm:$0xff]
    %v3247 = vld [vmem:[#allocation7 + $0x5c0] sm:$0xff]
    %v3248 = vld [vmem:[#allocation7 + $0x5c8] sm:$0xff]
    %v3249 = vld [vmem:[#allocation7 + $0x5d0] sm:$0xff]
    %v3250 = vld [vmem:[#allocation7 + $0x5d8] sm:$0xff]
    %v3251 = vld [vmem:[#allocation7 + $0x5e0] sm:$0xff]
    %v3252 = vld [vmem:[#allocation7 + $0x5e8] sm:$0xff]
    %v3253 = vld [vmem:[#allocation7 + $0x5f0] sm:$0xff]
    %v3254 = vld [vmem:[#allocation7 + $0x5f8] sm:$0xff]
    %v3255 = vld [vmem:[#allocation7 + $0x600] sm:$0xff]
    %v3256 = vld [vmem:[#allocation7 + $0x608] sm:$0xff]
    %v3257 = vld [vmem:[#allocation7 + $0x610] sm:$0xff]
    %v3258 = vld [vmem:[#allocation7 + $0x618] sm:$0xff]
    %v3259 = vld [vmem:[#allocation7 + $0x620] sm:$0xff]
    %v3260 = vld [vmem:[#allocation7 + $0x628] sm:$0xff]
    %v3261 = vld [vmem:[#allocation7 + $0x630] sm:$0xff]
    %v3262 = vld [vmem:[#allocation7 + $0x638] sm:$0xff]
    %v3263 = vld [vmem:[#allocation7 + $0x640] sm:$0xff]
    %v3264 = vld [vmem:[#allocation7 + $0x648] sm:$0xff]
    %v3265 = vld [vmem:[#allocation7 + $0x650] sm:$0xff]
    %v3266 = vld [vmem:[#allocation7 + $0x658] sm:$0xff]
    %v3267 = vld [vmem:[#allocation7 + $0x660] sm:$0xff]
    %v3268 = vld [vmem:[#allocation7 + $0x668] sm:$0xff]
    %v3269 = vld [vmem:[#allocation7 + $0x670] sm:$0xff]
    %v3270 = vld [vmem:[#allocation7 + $0x678] sm:$0xff]
    %v3271 = vld [vmem:[#allocation7 + $0x680] sm:$0xff]
    %v3272 = vld [vmem:[#allocation7 + $0x688] sm:$0xff]
    %v3273 = vld [vmem:[#allocation7 + $0x690] sm:$0xff]
    %v3274 = vld [vmem:[#allocation7 + $0x698] sm:$0xff]
    %v3275 = vld [vmem:[#allocation7 + $0x6a0] sm:$0xff]
    %v3276 = vld [vmem:[#allocation7 + $0x6a8] sm:$0xff]
    %v3277 = vld [vmem:[#allocation7 + $0x6b0] sm:$0xff]
    %v3278 = vld [vmem:[#allocation7 + $0x6b8] sm:$0xff]
    %v3279 = vld [vmem:[#allocation7 + $0x6c0] sm:$0xff]
    %v3280 = vld [vmem:[#allocation7 + $0x6c8] sm:$0xff]
    %v3281 = vld [vmem:[#allocation7 + $0x6d0] sm:$0xff]
    %v3282 = vld [vmem:[#allocation7 + $0x6d8] sm:$0xff]
    %v3283 = vld [vmem:[#allocation7 + $0x6e0] sm:$0xff]
    %v3284 = vld [vmem:[#allocation7 + $0x6e8] sm:$0xff]
    %v3285 = vld [vmem:[#allocation7 + $0x6f0] sm:$0xff]
    %v3286 = vld [vmem:[#allocation7 + $0x6f8] sm:$0xff]
    %v3287 = vld [vmem:[#allocation7 + $0x700] sm:$0xff]
    %v3288 = vld [vmem:[#allocation7 + $0x708] sm:$0xff]
    %v3289 = vld [vmem:[#allocation7 + $0x710] sm:$0xff]
    %v3290 = vld [vmem:[#allocation7 + $0x718] sm:$0xff]
    %v3291 = vld [vmem:[#allocation7 + $0x720] sm:$0xff]
    %v3292 = vld [vmem:[#allocation7 + $0x728] sm:$0xff]
    %v3293 = vld [vmem:[#allocation7 + $0x730] sm:$0xff]
    %v3294 = vld [vmem:[#allocation7 + $0x738] sm:$0xff]
    %v3295 = vld [vmem:[#allocation7 + $0x740] sm:$0xff]
    %v3296 = vld [vmem:[#allocation7 + $0x748] sm:$0xff]
    %v3297 = vld [vmem:[#allocation7 + $0x750] sm:$0xff]
    %v3298 = vld [vmem:[#allocation7 + $0x758] sm:$0xff]
    %v3299 = vld [vmem:[#allocation7 + $0x760] sm:$0xff]
    %v3300 = vld [vmem:[#allocation7 + $0x768] sm:$0xff]
    %v3301 = vld [vmem:[#allocation7 + $0x770] sm:$0xff]
    %v3302 = vld [vmem:[#allocation7 + $0x778] sm:$0xff]
    %v3303 = vld [vmem:[#allocation7 + $0x780] sm:$0xff]
    %v3304 = vld [vmem:[#allocation7 + $0x788] sm:$0xff]
    %v3305 = vld [vmem:[#allocation7 + $0x790] sm:$0xff]
    %v3306 = vld [vmem:[#allocation7 + $0x798] sm:$0xff]
    %v3307 = vld [vmem:[#allocation7 + $0x7a0] sm:$0xff]
    %v3308 = vld [vmem:[#allocation7 + $0x7a8] sm:$0xff]
    %v3309 = vld [vmem:[#allocation7 + $0x7b0] sm:$0xff]
    %v3310 = vld [vmem:[#allocation7 + $0x7b8] sm:$0xff]
    %v3311 = vld [vmem:[#allocation7 + $0x7c0] sm:$0xff]
    %v3312 = vld [vmem:[#allocation7 + $0x7c8] sm:$0xff]
    %v3313 = vld [vmem:[#allocation7 + $0x7d0] sm:$0xff]
    %v3314 = vld [vmem:[#allocation7 + $0x7d8] sm:$0xff]
    %v3315 = vld [vmem:[#allocation7 + $0x7e0] sm:$0xff]
    %v3316 = vld [vmem:[#allocation7 + $0x7e8] sm:$0xff]
    %v3317 = vld [vmem:[#allocation7 + $0x7f0] sm:$0xff]
    %v3318 = vld [vmem:[#allocation7 + $0x7f8] sm:$0xff]
    %v3319 = vld [vmem:[#allocation7 + $0x800] sm:$0xff]
    %v3320 = vld [vmem:[#allocation7 + $0x808] sm:$0xff]
    %v3321 = vld [vmem:[#allocation7 + $0x810] sm:$0xff]
    %v3322 = vld [vmem:[#allocation7 + $0x818] sm:$0xff]
    %v3323 = vld [vmem:[#allocation7 + $0x820] sm:$0xff]
    %v3324 = vld [vmem:[#allocation7 + $0x828] sm:$0xff]
    %v3325 = vld [vmem:[#allocation7 + $0x830] sm:$0xff]
    %v3326 = vld [vmem:[#allocation7 + $0x838] sm:$0xff]
    %v3327 = vld [vmem:[#allocation7 + $0x840] sm:$0xff]
    %v3328 = vld [vmem:[#allocation7 + $0x848] sm:$0xff]
    %v3329 = vld [vmem:[#allocation7 + $0x850] sm:$0xff]
    %v3330 = vld [vmem:[#allocation7 + $0x858] sm:$0xff]
    %v3331 = vld [vmem:[#allocation7 + $0x860] sm:$0xff]
    %v3332 = vld [vmem:[#allocation7 + $0x868] sm:$0xff]
    %v3333 = vld [vmem:[#allocation7 + $0x870] sm:$0xff]
    %v3334 = vld [vmem:[#allocation7 + $0x878] sm:$0xff]
    %v3335 = vld [vmem:[#allocation7 + $0x880] sm:$0xff]
    %v3336 = vld [vmem:[#allocation7 + $0x888] sm:$0xff]
    %v3337 = vld [vmem:[#allocation7 + $0x890] sm:$0xff]
    %v3338 = vld [vmem:[#allocation7 + $0x898] sm:$0xff]
    %v3339 = vld [vmem:[#allocation7 + $0x8a0] sm:$0xff]
    %v3340 = vld [vmem:[#allocation7 + $0x8a8] sm:$0xff]
    %v3341 = vld [vmem:[#allocation7 + $0x8b0] sm:$0xff]
    %v3342 = vld [vmem:[#allocation7 + $0x8b8] sm:$0xff]
    %v3343 = vld [vmem:[#allocation7 + $0x8c0] sm:$0xff]
    %v3344 = vld [vmem:[#allocation7 + $0x8c8] sm:$0xff]
    %v3345 = vld [vmem:[#allocation7 + $0x8d0] sm:$0xff]
    %v3346 = vld [vmem:[#allocation7 + $0x8d8] sm:$0xff]
    %v3347 = vld [vmem:[#allocation7 + $0x8e0] sm:$0xff]
    %v3348 = vld [vmem:[#allocation7 + $0x8e8] sm:$0xff]
    %v3349 = vld [vmem:[#allocation7 + $0x8f0] sm:$0xff]
    %v3350 = vld [vmem:[#allocation7 + $0x8f8] sm:$0xff]
    %v3351 = vld [vmem:[#allocation7 + $0x900] sm:$0xff]
    %v3352 = vld [vmem:[#allocation7 + $0x908] sm:$0xff]
    %v3353 = vld [vmem:[#allocation7 + $0x910] sm:$0xff]
    %v3354 = vld [vmem:[#allocation7 + $0x918] sm:$0xff]
    %v3355 = vld [vmem:[#allocation7 + $0x920] sm:$0xff]
    %v3356 = vld [vmem:[#allocation7 + $0x928] sm:$0xff]
    %v3357 = vld [vmem:[#allocation7 + $0x930] sm:$0xff]
    %v3358 = vld [vmem:[#allocation7 + $0x938] sm:$0xff]
    %v3359 = vld [vmem:[#allocation7 + $0x940] sm:$0xff]
    %v3360 = vld [vmem:[#allocation7 + $0x948] sm:$0xff]
    %v3361 = vld [vmem:[#allocation7 + $0x950] sm:$0xff]
    %v3362 = vld [vmem:[#allocation7 + $0x958] sm:$0xff]
    %v3363 = vld [vmem:[#allocation7 + $0x960] sm:$0xff]
    %v3364 = vld [vmem:[#allocation7 + $0x968] sm:$0xff]
    %v3365 = vld [vmem:[#allocation7 + $0x970] sm:$0xff]
    %v3366 = vld [vmem:[#allocation7 + $0x978] sm:$0xff]
    %v3367 = vld [vmem:[#allocation7 + $0x980] sm:$0xff]
    %v3368 = vld [vmem:[#allocation7 + $0x988] sm:$0xff]
    %v3369 = vld [vmem:[#allocation7 + $0x990] sm:$0xff]
    %v3370 = vld [vmem:[#allocation7 + $0x998] sm:$0xff]
    %v3371 = vld [vmem:[#allocation7 + $0x9a0] sm:$0xff]
    %v3372 = vld [vmem:[#allocation7 + $0x9a8] sm:$0xff]
    %v3373 = vld [vmem:[#allocation7 + $0x9b0] sm:$0xff]
    %v3374 = vld [vmem:[#allocation7 + $0x9b8] sm:$0xff]
    %v3375 = vld [vmem:[#allocation7 + $0x9c0] sm:$0xff]
    %v3376 = vld [vmem:[#allocation7 + $0x9c8] sm:$0xff]
    %v3377 = vld [vmem:[#allocation7 + $0x9d0] sm:$0xff]
    %v3378 = vld [vmem:[#allocation7 + $0x9d8] sm:$0xff]
    %v3379 = vld [vmem:[#allocation7 + $0x9e0] sm:$0xff]
    %v3380 = vld [vmem:[#allocation7 + $0x9e8] sm:$0xff]
    %v3381 = vld [vmem:[#allocation7 + $0x9f0] sm:$0xff]
    %v3382 = vld [vmem:[#allocation7 + $0x9f8] sm:$0xff]
    %v3383 = vld [vmem:[#allocation7 + $0xa00] sm:$0xff]
    %v3384 = vld [vmem:[#allocation7 + $0xa08] sm:$0xff]
    %v3385 = vld [vmem:[#allocation7 + $0xa10] sm:$0xff]
    %v3386 = vld [vmem:[#allocation7 + $0xa18] sm:$0xff]
    %v3387 = vld [vmem:[#allocation7 + $0xa20] sm:$0xff]
    %v3388 = vld [vmem:[#allocation7 + $0xa28] sm:$0xff]
    %v3389 = vld [vmem:[#allocation7 + $0xa30] sm:$0xff]
    %v3390 = vld [vmem:[#allocation7 + $0xa38] sm:$0xff]
    %v3391 = vld [vmem:[#allocation7 + $0xa40] sm:$0xff]
    %v3392 = vld [vmem:[#allocation7 + $0xa48] sm:$0xff]
    %v3393 = vld [vmem:[#allocation7 + $0xa50] sm:$0xff]
    %v3394 = vld [vmem:[#allocation7 + $0xa58] sm:$0xff]
    %v3395 = vld [vmem:[#allocation7 + $0xa60] sm:$0xff]
    %v3396 = vld [vmem:[#allocation7 + $0xa68] sm:$0xff]
    %v3397 = vld [vmem:[#allocation7 + $0xa70] sm:$0xff]
    %v3398 = vld [vmem:[#allocation7 + $0xa78] sm:$0xff]
    %v3399 = vld [vmem:[#allocation7 + $0xa80] sm:$0xff]
    %v3400 = vld [vmem:[#allocation7 + $0xa88] sm:$0xff]
    %v3401 = vld [vmem:[#allocation7 + $0xa90] sm:$0xff]
    %v3402 = vld [vmem:[#allocation7 + $0xa98] sm:$0xff]
    %v3403 = vld [vmem:[#allocation7 + $0xaa0] sm:$0xff]
    %v3404 = vld [vmem:[#allocation7 + $0xaa8] sm:$0xff]
    %v3405 = vld [vmem:[#allocation7 + $0xab0] sm:$0xff]
    %v3406 = vld [vmem:[#allocation7 + $0xab8] sm:$0xff]
    %v3407 = vld [vmem:[#allocation7 + $0xac0] sm:$0xff]
    %v3408 = vld [vmem:[#allocation7 + $0xac8] sm:$0xff]
    %v3409 = vld [vmem:[#allocation7 + $0xad0] sm:$0xff]
    %v3410 = vld [vmem:[#allocation7 + $0xad8] sm:$0xff]
    %v3411 = vld [vmem:[#allocation7 + $0xae0] sm:$0xff]
    %v3412 = vld [vmem:[#allocation7 + $0xae8] sm:$0xff]
    %v3413 = vld [vmem:[#allocation7 + $0xaf0] sm:$0xff]
    %v3414 = vld [vmem:[#allocation7 + $0xaf8] sm:$0xff]
    %v3415 = vld [vmem:[#allocation7 + $0xb00] sm:$0xff]
    %v3416 = vld [vmem:[#allocation7 + $0xb08] sm:$0xff]
    %v3417 = vld [vmem:[#allocation7 + $0xb10] sm:$0xff]
    %v3418 = vld [vmem:[#allocation7 + $0xb18] sm:$0xff]
    %v3419 = vld [vmem:[#allocation7 + $0xb20] sm:$0xff]
    %v3420 = vld [vmem:[#allocation7 + $0xb28] sm:$0xff]
    %v3421 = vld [vmem:[#allocation7 + $0xb30] sm:$0xff]
    %v3422 = vld [vmem:[#allocation7 + $0xb38] sm:$0xff]
    %v3423 = vld [vmem:[#allocation7 + $0xb40] sm:$0xff]
    %v3424 = vld [vmem:[#allocation7 + $0xb48] sm:$0xff]
    %v3425 = vld [vmem:[#allocation7 + $0xb50] sm:$0xff]
    %v3426 = vld [vmem:[#allocation7 + $0xb58] sm:$0xff]
    %v3427 = vld [vmem:[#allocation7 + $0xb60] sm:$0xff]
    %v3428 = vld [vmem:[#allocation7 + $0xb68] sm:$0xff]
    %v3429 = vld [vmem:[#allocation7 + $0xb70] sm:$0xff]
    %v3430 = vld [vmem:[#allocation7 + $0xb78] sm:$0xff]
    %v3431 = vld [vmem:[#allocation7 + $0xb80] sm:$0xff]
    %v3432 = vld [vmem:[#allocation7 + $0xb88] sm:$0xff]
    %v3433 = vld [vmem:[#allocation7 + $0xb90] sm:$0xff]
    %v3434 = vld [vmem:[#allocation7 + $0xb98] sm:$0xff]
    %v3435 = vld [vmem:[#allocation7 + $0xba0] sm:$0xff]
    %v3436 = vld [vmem:[#allocation7 + $0xba8] sm:$0xff]
    %v3437 = vld [vmem:[#allocation7 + $0xbb0] sm:$0xff]
    %v3438 = vld [vmem:[#allocation7 + $0xbb8] sm:$0xff]
    %v3439 = vld [vmem:[#allocation7 + $0xbc0] sm:$0xff]
    %v3440 = vld [vmem:[#allocation7 + $0xbc8] sm:$0xff]
    %v3441 = vld [vmem:[#allocation7 + $0xbd0] sm:$0xff]
    %v3442 = vld [vmem:[#allocation7 + $0xbd8] sm:$0xff]
    %v3443 = vld [vmem:[#allocation7 + $0xbe0] sm:$0xff]
    %v3444 = vld [vmem:[#allocation7 + $0xbe8] sm:$0xff]
    %v3445 = vld [vmem:[#allocation7 + $0xbf0] sm:$0xff]
    %v3446 = vld [vmem:[#allocation7 + $0xbf8] sm:$0xff]
    %v3447 = vld [vmem:[#allocation7 + $0xc00] sm:$0xff]
    %v3448 = vld [vmem:[#allocation7 + $0xc08] sm:$0xff]
    %v3449 = vld [vmem:[#allocation7 + $0xc10] sm:$0xff]
    %v3450 = vld [vmem:[#allocation7 + $0xc18] sm:$0xff]
    %v3451 = vld [vmem:[#allocation7 + $0xc20] sm:$0xff]
    %v3452 = vld [vmem:[#allocation7 + $0xc28] sm:$0xff]
    %v3453 = vld [vmem:[#allocation7 + $0xc30] sm:$0xff]
    %v3454 = vld [vmem:[#allocation7 + $0xc38] sm:$0xff]
    %v3455 = vld [vmem:[#allocation7 + $0xc40] sm:$0xff]
    %v3456 = vld [vmem:[#allocation7 + $0xc48] sm:$0xff]
    %v3457 = vld [vmem:[#allocation7 + $0xc50] sm:$0xff]
    %v3458 = vld [vmem:[#allocation7 + $0xc58] sm:$0xff]
    %v3459 = vld [vmem:[#allocation7 + $0xc60] sm:$0xff]
    %v3460 = vld [vmem:[#allocation7 + $0xc68] sm:$0xff]
    %v3461 = vld [vmem:[#allocation7 + $0xc70] sm:$0xff]
    %v3462 = vld [vmem:[#allocation7 + $0xc78] sm:$0xff]
    %v3463 = vld [vmem:[#allocation7 + $0xc80] sm:$0xff]
    %v3464 = vld [vmem:[#allocation7 + $0xc88] sm:$0xff]
    %v3465 = vld [vmem:[#allocation7 + $0xc90] sm:$0xff]
    %v3466 = vld [vmem:[#allocation7 + $0xc98] sm:$0xff]
    %v3467 = vld [vmem:[#allocation7 + $0xca0] sm:$0xff]
    %v3468 = vld [vmem:[#allocation7 + $0xca8] sm:$0xff]
    %v3469 = vld [vmem:[#allocation7 + $0xcb0] sm:$0xff]
    %v3470 = vld [vmem:[#allocation7 + $0xcb8] sm:$0xff]
    %v3471 = vld [vmem:[#allocation7 + $0xcc0] sm:$0xff]
    %v3472 = vld [vmem:[#allocation7 + $0xcc8] sm:$0xff]
    %v3473 = vld [vmem:[#allocation7 + $0xcd0] sm:$0xff]
    %v3474 = vld [vmem:[#allocation7 + $0xcd8] sm:$0xff]
    %v3475 = vld [vmem:[#allocation7 + $0xce0] sm:$0xff]
    %v3476 = vld [vmem:[#allocation7 + $0xce8] sm:$0xff]
    %v3477 = vld [vmem:[#allocation7 + $0xcf0] sm:$0xff]
    %v3478 = vld [vmem:[#allocation7 + $0xcf8] sm:$0xff]
    %v3479 = vld [vmem:[#allocation7 + $0xd00] sm:$0xff]
    %v3480 = vld [vmem:[#allocation7 + $0xd08] sm:$0xff]
    %v3481 = vld [vmem:[#allocation7 + $0xd10] sm:$0xff]
    %v3482 = vld [vmem:[#allocation7 + $0xd18] sm:$0xff]
    %v3483 = vld [vmem:[#allocation7 + $0xd20] sm:$0xff]
    %v3484 = vld [vmem:[#allocation7 + $0xd28] sm:$0xff]
    %v3485 = vld [vmem:[#allocation7 + $0xd30] sm:$0xff]
    %v3486 = vld [vmem:[#allocation7 + $0xd38] sm:$0xff]
    %v3487 = vld [vmem:[#allocation7 + $0xd40] sm:$0xff]
    %v3488 = vld [vmem:[#allocation7 + $0xd48] sm:$0xff]
    %v3489 = vld [vmem:[#allocation7 + $0xd50] sm:$0xff]
    %v3490 = vld [vmem:[#allocation7 + $0xd58] sm:$0xff]
    %v3491 = vld [vmem:[#allocation7 + $0xd60] sm:$0xff]
    %v3492 = vld [vmem:[#allocation7 + $0xd68] sm:$0xff]
    %v3493 = vld [vmem:[#allocation7 + $0xd70] sm:$0xff]
    %v3494 = vld [vmem:[#allocation7 + $0xd78] sm:$0xff]
    %v3495 = vld [vmem:[#allocation7 + $0xd80] sm:$0xff]
    %v3496 = vld [vmem:[#allocation7 + $0xd88] sm:$0xff]
    %v3497 = vld [vmem:[#allocation7 + $0xd90] sm:$0xff]
    %v3498 = vld [vmem:[#allocation7 + $0xd98] sm:$0xff]
    %v3499 = vld [vmem:[#allocation7 + $0xda0] sm:$0xff]
    %v3500 = vld [vmem:[#allocation7 + $0xda8] sm:$0xff]
    %v3501 = vld [vmem:[#allocation7 + $0xdb0] sm:$0xff]
    %v3502 = vld [vmem:[#allocation7 + $0xdb8] sm:$0xff]
    %v3503 = vld [vmem:[#allocation7 + $0xdc0] sm:$0xff]
    %v3504 = vld [vmem:[#allocation7 + $0xdc8] sm:$0xff]
    %v3505 = vld [vmem:[#allocation7 + $0xdd0] sm:$0xff]
    %v3506 = vld [vmem:[#allocation7 + $0xdd8] sm:$0xff]
    %v3507 = vld [vmem:[#allocation7 + $0xde0] sm:$0xff]
    %v3508 = vld [vmem:[#allocation7 + $0xde8] sm:$0xff]
    %v3509 = vld [vmem:[#allocation7 + $0xdf0] sm:$0xff]
    %v3510 = vld [vmem:[#allocation7 + $0xdf8] sm:$0xff]
    %v3511 = vld [vmem:[#allocation7 + $0xe00] sm:$0xff]
    %v3512 = vld [vmem:[#allocation7 + $0xe08] sm:$0xff]
    %v3513 = vld [vmem:[#allocation7 + $0xe10] sm:$0xff]
    %v3514 = vld [vmem:[#allocation7 + $0xe18] sm:$0xff]
    %v3515 = vld [vmem:[#allocation7 + $0xe20] sm:$0xff]
    %v3516 = vld [vmem:[#allocation7 + $0xe28] sm:$0xff]
    %v3517 = vld [vmem:[#allocation7 + $0xe30] sm:$0xff]
    %v3518 = vld [vmem:[#allocation7 + $0xe38] sm:$0xff]
    %v3519 = vld [vmem:[#allocation7 + $0xe40] sm:$0xff]
    %v3520 = vld [vmem:[#allocation7 + $0xe48] sm:$0xff]
    %v3521 = vld [vmem:[#allocation7 + $0xe50] sm:$0xff]
    %v3522 = vld [vmem:[#allocation7 + $0xe58] sm:$0xff]
    %v3523 = vld [vmem:[#allocation7 + $0xe60] sm:$0xff]
    %v3524 = vld [vmem:[#allocation7 + $0xe68] sm:$0xff]
    %v3525 = vld [vmem:[#allocation7 + $0xe70] sm:$0xff]
    %v3526 = vld [vmem:[#allocation7 + $0xe78] sm:$0xff]
    %v3527 = vld [vmem:[#allocation7 + $0xe80] sm:$0xff]
    %v3528 = vld [vmem:[#allocation7 + $0xe88] sm:$0xff]
    %v3529 = vld [vmem:[#allocation7 + $0xe90] sm:$0xff]
    %v3530 = vld [vmem:[#allocation7 + $0xe98] sm:$0xff]
    %v3531 = vld [vmem:[#allocation7 + $0xea0] sm:$0xff]
    %v3532 = vld [vmem:[#allocation7 + $0xea8] sm:$0xff]
    %v3533 = vld [vmem:[#allocation7 + $0xeb0] sm:$0xff]
    %v3534 = vld [vmem:[#allocation7 + $0xeb8] sm:$0xff]
    %v3535 = vld [vmem:[#allocation7 + $0xec0] sm:$0xff]
    %v3536 = vld [vmem:[#allocation7 + $0xec8] sm:$0xff]
    %v3537 = vld [vmem:[#allocation7 + $0xed0] sm:$0xff]
    %v3538 = vld [vmem:[#allocation7 + $0xed8] sm:$0xff]
    %v3539 = vld [vmem:[#allocation7 + $0xee0] sm:$0xff]
    %v3540 = vld [vmem:[#allocation7 + $0xee8] sm:$0xff]
    %v3541 = vld [vmem:[#allocation7 + $0xef0] sm:$0xff]
    %v3542 = vld [vmem:[#allocation7 + $0xef8] sm:$0xff]
    %v3543 = vld [vmem:[#allocation7 + $0xf00] sm:$0xff]
    %v3544 = vld [vmem:[#allocation7 + $0xf08] sm:$0xff]
    %v3545 = vld [vmem:[#allocation7 + $0xf10] sm:$0xff]
    %v3546 = vld [vmem:[#allocation7 + $0xf18] sm:$0xff]
    %v3547 = vld [vmem:[#allocation7 + $0xf20] sm:$0xff]
    %v3548 = vld [vmem:[#allocation7 + $0xf28] sm:$0xff]
    %v3549 = vld [vmem:[#allocation7 + $0xf30] sm:$0xff]
    %v3550 = vld [vmem:[#allocation7 + $0xf38] sm:$0xff]
    %v3551 = vld [vmem:[#allocation7 + $0xf40] sm:$0xff]
    %v3552 = vld [vmem:[#allocation7 + $0xf48] sm:$0xff]
    %v3553 = vld [vmem:[#allocation7 + $0xf50] sm:$0xff]
    %v3554 = vld [vmem:[#allocation7 + $0xf58] sm:$0xff]
    %v3555 = vld [vmem:[#allocation7 + $0xf60] sm:$0xff]
    %v3556 = vld [vmem:[#allocation7 + $0xf68] sm:$0xff]
    %v3557 = vld [vmem:[#allocation7 + $0xf70] sm:$0xff]
    %v3558 = vld [vmem:[#allocation7 + $0xf78] sm:$0xff]
    %v3559 = vld [vmem:[#allocation7 + $0xf80] sm:$0xff]
    %v3560 = vld [vmem:[#allocation7 + $0xf88] sm:$0xff]
    %v3561 = vld [vmem:[#allocation7 + $0xf90] sm:$0xff]
    %v3562 = vld [vmem:[#allocation7 + $0xf98] sm:$0xff]
    %v3563 = vld [vmem:[#allocation7 + $0xfa0] sm:$0xff]
    %v3564 = vld [vmem:[#allocation7 + $0xfa8] sm:$0xff]
    %v3565 = vld [vmem:[#allocation7 + $0xfb0] sm:$0xff]
    %v3566 = vld [vmem:[#allocation7 + $0xfb8] sm:$0xff]
    %v3567 = vld [vmem:[#allocation7 + $0xfc0] sm:$0xff]
    %v3568 = vld [vmem:[#allocation7 + $0xfc8] sm:$0xff]
    %v3569 = vld [vmem:[#allocation7 + $0xfd0] sm:$0xff]
    %v3570 = vld [vmem:[#allocation7 + $0xfd8] sm:$0xff]
    %v3571 = vld [vmem:[#allocation7 + $0xfe0] sm:$0xff]
    %v3572 = vld [vmem:[#allocation7 + $0xfe8] sm:$0xff]
    %v3573 = vld [vmem:[#allocation7 + $0xff0] sm:$0xff]
    %v3574 = vld [vmem:[#allocation7 + $0xff8] sm:$0xff]
    %v3575 = vld [vmem:[#allocation7 + $0x1000] sm:$0xff]
    %v3576 = vld [vmem:[#allocation7 + $0x1008] sm:$0xff]
    %v3577 = vld [vmem:[#allocation7 + $0x1010] sm:$0xff]
    %v3578 = vld [vmem:[#allocation7 + $0x1018] sm:$0xff]
    %v3579 = vld [vmem:[#allocation7 + $0x1020] sm:$0xff]
    %v3580 = vld [vmem:[#allocation7 + $0x1028] sm:$0xff]
    %v3581 = vld [vmem:[#allocation7 + $0x1030] sm:$0xff]
    %v3582 = vld [vmem:[#allocation7 + $0x1038] sm:$0xff]
    %v3583 = vld [vmem:[#allocation7 + $0x1040] sm:$0xff]
    %v3584 = vld [vmem:[#allocation7 + $0x1048] sm:$0xff]
    %v3585 = vld [vmem:[#allocation7 + $0x1050] sm:$0xff]
    %v3586 = vld [vmem:[#allocation7 + $0x1058] sm:$0xff]
    %v3587 = vld [vmem:[#allocation7 + $0x1060] sm:$0xff]
    %v3588 = vld [vmem:[#allocation7 + $0x1068] sm:$0xff]
    %v3589 = vld [vmem:[#allocation7 + $0x1070] sm:$0xff]
    %v3590 = vld [vmem:[#allocation7 + $0x1078] sm:$0xff]
    %v3591 = vld [vmem:[#allocation7 + $0x1080] sm:$0xff]
    %v3592 = vld [vmem:[#allocation7 + $0x1088] sm:$0xff]
    %v3593 = vld [vmem:[#allocation7 + $0x1090] sm:$0xff]
    %v3594 = vld [vmem:[#allocation7 + $0x1098] sm:$0xff]
    %v3595 = vld [vmem:[#allocation7 + $0x10a0] sm:$0xff]
    %v3596 = vld [vmem:[#allocation7 + $0x10a8] sm:$0xff]
    %v3597 = vld [vmem:[#allocation7 + $0x10b0] sm:$0xff]
    %v3598 = vld [vmem:[#allocation7 + $0x10b8] sm:$0xff]
    %v3599 = vld [vmem:[#allocation7 + $0x10c0] sm:$0xff]
    %v3600 = vld [vmem:[#allocation7 + $0x10c8] sm:$0xff]
    %v3601 = vld [vmem:[#allocation7 + $0x10d0] sm:$0xff]
    %v3602 = vld [vmem:[#allocation7 + $0x10d8] sm:$0xff]
    %v3603 = vld [vmem:[#allocation7 + $0x10e0] sm:$0xff]
    %v3604 = vld [vmem:[#allocation7 + $0x10e8] sm:$0xff]
    %v3605 = vld [vmem:[#allocation7 + $0x10f0] sm:$0xff]
    %v3606 = vld [vmem:[#allocation7 + $0x10f8] sm:$0xff]
    %v3607 = vld [vmem:[#allocation7 + $0x1100] sm:$0xff]
    %v3608 = vld [vmem:[#allocation7 + $0x1108] sm:$0xff]
    %v3609 = vld [vmem:[#allocation7 + $0x1110] sm:$0xff]
    %v3610 = vld [vmem:[#allocation7 + $0x1118] sm:$0xff]
    %v3611 = vld [vmem:[#allocation7 + $0x1120] sm:$0xff]
    %v3612 = vld [vmem:[#allocation7 + $0x1128] sm:$0xff]
    %v3613 = vld [vmem:[#allocation7 + $0x1130] sm:$0xff]
    %v3614 = vld [vmem:[#allocation7 + $0x1138] sm:$0xff]
    %v3615 = vld [vmem:[#allocation7 + $0x1140] sm:$0xff]
    %v3616 = vld [vmem:[#allocation7 + $0x1148] sm:$0xff]
    %v3617 = vld [vmem:[#allocation7 + $0x1150] sm:$0xff]
    %v3618 = vld [vmem:[#allocation7 + $0x1158] sm:$0xff]
    %v3619 = vld [vmem:[#allocation7 + $0x1160] sm:$0xff]
    %v3620 = vld [vmem:[#allocation7 + $0x1168] sm:$0xff]
    %v3621 = vld [vmem:[#allocation7 + $0x1170] sm:$0xff]
    %v3622 = vld [vmem:[#allocation7 + $0x1178] sm:$0xff]
    %v3623 = vld [vmem:[#allocation7 + $0x1180] sm:$0xff]
    %v3624 = vld [vmem:[#allocation7 + $0x1188] sm:$0xff]
    %v3625 = vld [vmem:[#allocation7 + $0x1190] sm:$0xff]
    %v3626 = vld [vmem:[#allocation7 + $0x1198] sm:$0xff]
    %v3627 = vld [vmem:[#allocation7 + $0x11a0] sm:$0xff]
    %v3628 = vld [vmem:[#allocation7 + $0x11a8] sm:$0xff]
    %v3629 = vld [vmem:[#allocation7 + $0x11b0] sm:$0xff]
    %v3630 = vld [vmem:[#allocation7 + $0x11b8] sm:$0xff]
    %v3631 = vld [vmem:[#allocation7 + $0x11c0] sm:$0xff]
    %v3632 = vld [vmem:[#allocation7 + $0x11c8] sm:$0xff]
    %v3633 = vld [vmem:[#allocation7 + $0x11d0] sm:$0xff]
    %v3634 = vld [vmem:[#allocation7 + $0x11d8] sm:$0xff]
    %v3635 = vld [vmem:[#allocation7 + $0x11e0] sm:$0xff]
    %v3636 = vld [vmem:[#allocation7 + $0x11e8] sm:$0xff]
    %v3637 = vld [vmem:[#allocation7 + $0x11f0] sm:$0xff]
    %v3638 = vld [vmem:[#allocation7 + $0x11f8] sm:$0xff]
    %v3639 = vld [vmem:[#allocation7 + $0x1200] sm:$0xff]
    %v3640 = vld [vmem:[#allocation7 + $0x1208] sm:$0xff]
    %v3641 = vld [vmem:[#allocation7 + $0x1210] sm:$0xff]
    %v3642 = vld [vmem:[#allocation7 + $0x1218] sm:$0xff]
    %v3643 = vld [vmem:[#allocation7 + $0x1220] sm:$0xff]
    %v3644 = vld [vmem:[#allocation7 + $0x1228] sm:$0xff]
    %v3645 = vld [vmem:[#allocation7 + $0x1230] sm:$0xff]
    %v3646 = vld [vmem:[#allocation7 + $0x1238] sm:$0xff]
    %v3647 = vld [vmem:[#allocation7 + $0x1240] sm:$0xff]
    %v3648 = vld [vmem:[#allocation7 + $0x1248] sm:$0xff]
    %v3649 = vld [vmem:[#allocation7 + $0x1250] sm:$0xff]
    %v3650 = vld [vmem:[#allocation7 + $0x1258] sm:$0xff]
    %v3651 = vld [vmem:[#allocation7 + $0x1260] sm:$0xff]
    %v3652 = vld [vmem:[#allocation7 + $0x1268] sm:$0xff]
    %v3653 = vld [vmem:[#allocation7 + $0x1270] sm:$0xff]
    %v3654 = vld [vmem:[#allocation7 + $0x1278] sm:$0xff]
    %v3655 = vld [vmem:[#allocation7 + $0x1280] sm:$0xff]
    %v3656 = vld [vmem:[#allocation7 + $0x1288] sm:$0xff]
    %v3657 = vld [vmem:[#allocation7 + $0x1290] sm:$0xff]
    %v3658 = vld [vmem:[#allocation7 + $0x1298] sm:$0xff]
    %v3659 = vld [vmem:[#allocation7 + $0x12a0] sm:$0xff]
    %v3660 = vld [vmem:[#allocation7 + $0x12a8] sm:$0xff]
    %v3661 = vld [vmem:[#allocation7 + $0x12b0] sm:$0xff]
    %v3662 = vld [vmem:[#allocation7 + $0x12b8] sm:$0xff]
    %v3663 = vld [vmem:[#allocation7 + $0x12c0] sm:$0xff]
    %v3664 = vld [vmem:[#allocation7 + $0x12c8] sm:$0xff]
    %v3665 = vld [vmem:[#allocation7 + $0x12d0] sm:$0xff]
    %v3666 = vld [vmem:[#allocation7 + $0x12d8] sm:$0xff]
    %v3667 = vld [vmem:[#allocation7 + $0x12e0] sm:$0xff]
    %v3668 = vld [vmem:[#allocation7 + $0x12e8] sm:$0xff]
    %v3669 = vld [vmem:[#allocation7 + $0x12f0] sm:$0xff]
    %v3670 = vld [vmem:[#allocation7 + $0x12f8] sm:$0xff]
    %v3671 = vld [vmem:[#allocation7 + $0x1300] sm:$0xff]
    %v3672 = vld [vmem:[#allocation7 + $0x1308] sm:$0xff]
    %v3673 = vld [vmem:[#allocation7 + $0x1310] sm:$0xff]
    %v3674 = vld [vmem:[#allocation7 + $0x1318] sm:$0xff]
    %v3675 = vld [vmem:[#allocation7 + $0x1320] sm:$0xff]
    %v3676 = vld [vmem:[#allocation7 + $0x1328] sm:$0xff]
    %v3677 = vld [vmem:[#allocation7 + $0x1330] sm:$0xff]
    %v3678 = vld [vmem:[#allocation7 + $0x1338] sm:$0xff]
    %v3679 = vld [vmem:[#allocation7 + $0x1340] sm:$0xff]
    %v3680 = vld [vmem:[#allocation7 + $0x1348] sm:$0xff]
    %v3681 = vld [vmem:[#allocation7 + $0x1350] sm:$0xff]
    %v3682 = vld [vmem:[#allocation7 + $0x1358] sm:$0xff]
    %v3683 = vld [vmem:[#allocation7 + $0x1360] sm:$0xff]
    %v3684 = vld [vmem:[#allocation7 + $0x1368] sm:$0xff]
    %v3685 = vld [vmem:[#allocation7 + $0x1370] sm:$0xff]
    %v3686 = vld [vmem:[#allocation7 + $0x1378] sm:$0xff]
    %v3687 = vld [vmem:[#allocation7 + $0x1380] sm:$0xff]
    %v3688 = vld [vmem:[#allocation7 + $0x1388] sm:$0xff]
    %v3689 = vld [vmem:[#allocation7 + $0x1390] sm:$0xff]
    %v3690 = vld [vmem:[#allocation7 + $0x1398] sm:$0xff]
    %v3691 = vld [vmem:[#allocation7 + $0x13a0] sm:$0xff]
    %v3692 = vld [vmem:[#allocation7 + $0x13a8] sm:$0xff]
    %v3693 = vld [vmem:[#allocation7 + $0x13b0] sm:$0xff]
    %v3694 = vld [vmem:[#allocation7 + $0x13b8] sm:$0xff]
    %v3695 = vld [vmem:[#allocation7 + $0x13c0] sm:$0xff]
    %v3696 = vld [vmem:[#allocation7 + $0x13c8] sm:$0xff]
    %v3697 = vld [vmem:[#allocation7 + $0x13d0] sm:$0xff]
    %v3698 = vld [vmem:[#allocation7 + $0x13d8] sm:$0xff]
    %v3699 = vld [vmem:[#allocation7 + $0x13e0] sm:$0xff]
    %v3700 = vld [vmem:[#allocation7 + $0x13e8] sm:$0xff]
    %v3701 = vld [vmem:[#allocation7 + $0x13f0] sm:$0xff]
    %v3702 = vld [vmem:[#allocation7 + $0x13f8] sm:$0xff]
    %3703 = vmatpush.msra.mxu0 %v3123
    %3704 = vmatpush.msra.mxu0 %v3119
    %3705 = vmatpush.msra.mxu0 %v3115
    %3706 = vmatpush.msra.mxu0 %v3111
    %3707 = vmatpush.msra.mxu0 %v3107
    %3708 = vmatpush.msra.mxu0 %v3103
    %3709 = vmatpush.msra.mxu0 %v3099
    %3710 = vmatpush.msra.mxu0 %v3095
    %3711 = vmatpush.msra.mxu0 %v3091
    %3712 = vmatpush.msra.mxu0 %v3087
    %3713 = vmatpush.msra.mxu0 %v3083
    %3714 = vmatpush.msra.mxu0 %v3079
    %3715 = vmatpush.msra.mxu0 %v3075
    %3716 = vmatpush.msra.mxu0 %v3071
    %3717 = vmatpush.msra.mxu0 %v3067
    %3718 = vmatpush.msra.mxu0 %v3063
    %3719 = vmatmul.f32.gmra.mxu0 %v2333
    %v3720 = vpop.f32.mrf.mxu0
    %v3721 = vadd.f32 0.0, %v3720
    %3722 = vmatmul.f32.gmra.mxu0 %v2347
    %v3723 = vpop.f32.mrf.mxu0
    %v3724 = vadd.f32 0.0, %v3723
    %3725 = vmatmul.f32.gmra.mxu0 %v2361
    %v3726 = vpop.f32.mrf.mxu0
    %v3727 = vadd.f32 0.0, %v3726
    %3728 = vmatmul.f32.gmra.mxu0 %v2375
    %v3729 = vpop.f32.mrf.mxu0
    %v3730 = vadd.f32 0.0, %v3729
    %3731 = vmatmul.f32.gmra.mxu0 %v2389
    %v3732 = vpop.f32.mrf.mxu0
    %v3733 = vadd.f32 0.0, %v3732
    %3734 = vmatmul.f32.gmra.mxu0 %v2403
    %v3735 = vpop.f32.mrf.mxu0
    %v3736 = vadd.f32 0.0, %v3735
    %3737 = vmatmul.f32.gmra.mxu0 %v2417
    %v3738 = vpop.f32.mrf.mxu0
    %v3739 = vadd.f32 0.0, %v3738
    %3740 = vmatmul.f32.gmra.mxu0 %v2431
    %v3741 = vpop.f32.mrf.mxu0
    %v3742 = vadd.f32 0.0, %v3741
    %3743 = vdwg.mxu0
    %3744 = vmatpush.msra.mxu0 %v3187
    %3745 = vmatpush.msra.mxu0 %v3183
    %3746 = vmatpush.msra.mxu0 %v3179
    %3747 = vmatpush.msra.mxu0 %v3175
    %3748 = vmatpush.msra.mxu0 %v3171
    %3749 = vmatpush.msra.mxu0 %v3167
    %3750 = vmatpush.msra.mxu0 %v3163
    %3751 = vmatpush.msra.mxu0 %v3159
    %3752 = vmatpush.msra.mxu0 %v3155
    %3753 = vmatpush.msra.mxu0 %v3151
    %3754 = vmatpush.msra.mxu0 %v3147
    %3755 = vmatpush.msra.mxu0 %v3143
    %3756 = vmatpush.msra.mxu0 %v3139
    %3757 = vmatpush.msra.mxu0 %v3135
    %3758 = vmatpush.msra.mxu0 %v3131
    %3759 = vmatpush.msra.mxu0 %v3127
    %3760 = vmatmul.f32.gmra.mxu0 %v2340
    %v3761 = vpop.f32.mrf.mxu0
    %v3762 = vadd.f32 %v3721, %v3761
    %3763 = vmatmul.f32.gmra.mxu0 %v2354
    %v3764 = vpop.f32.mrf.mxu0
    %v3765 = vadd.f32 %v3724, %v3764
    %3766 = vmatmul.f32.gmra.mxu0 %v2368
    %v3767 = vpop.f32.mrf.mxu0
    %v3768 = vadd.f32 %v3727, %v3767
    %3769 = vmatmul.f32.gmra.mxu0 %v2382
    %v3770 = vpop.f32.mrf.mxu0
    %v3771 = vadd.f32 %v3730, %v3770
    %3772 = vmatmul.f32.gmra.mxu0 %v2396
    %v3773 = vpop.f32.mrf.mxu0
    %v3774 = vadd.f32 %v3733, %v3773
    %3775 = vmatmul.f32.gmra.mxu0 %v2410
    %v3776 = vpop.f32.mrf.mxu0
    %v3777 = vadd.f32 %v3736, %v3776
    %3778 = vmatmul.f32.gmra.mxu0 %v2424
    %v3779 = vpop.f32.mrf.mxu0
    %v3780 = vadd.f32 %v3739, %v3779
    %3781 = vmatmul.f32.gmra.mxu0 %v2438
    %v3782 = vpop.f32.mrf.mxu0
    %v3783 = vadd.f32 %v3742, %v3782
    %3784 = vdwg.mxu0
    %3785 = vmatpush.msra.mxu0 %v3251
    %3786 = vmatpush.msra.mxu0 %v3247
    %3787 = vmatpush.msra.mxu0 %v3243
    %3788 = vmatpush.msra.mxu0 %v3239
    %3789 = vmatpush.msra.mxu0 %v3235
    %3790 = vmatpush.msra.mxu0 %v3231
    %3791 = vmatpush.msra.mxu0 %v3227
    %3792 = vmatpush.msra.mxu0 %v3223
    %3793 = vmatpush.msra.mxu0 %v3219
    %3794 = vmatpush.msra.mxu0 %v3215
    %3795 = vmatpush.msra.mxu0 %v3211
    %3796 = vmatpush.msra.mxu0 %v3207
    %3797 = vmatpush.msra.mxu0 %v3203
    %3798 = vmatpush.msra.mxu0 %v3199
    %3799 = vmatpush.msra.mxu0 %v3195
    %3800 = vmatpush.msra.mxu0 %v3191
    %3801 = vmatmul.f32.gmra.mxu0 %v2485
    %v3802 = vpop.f32.mrf.mxu0
    %v3803 = vadd.f32 %v3762, %v3802
    %3804 = vmatmul.f32.gmra.mxu0 %v2499
    %v3805 = vpop.f32.mrf.mxu0
    %v3806 = vadd.f32 %v3765, %v3805
    %3807 = vmatmul.f32.gmra.mxu0 %v2513
    %v3808 = vpop.f32.mrf.mxu0
    %v3809 = vadd.f32 %v3768, %v3808
    %3810 = vmatmul.f32.gmra.mxu0 %v2527
    %v3811 = vpop.f32.mrf.mxu0
    %v3812 = vadd.f32 %v3771, %v3811
    %3813 = vmatmul.f32.gmra.mxu0 %v2541
    %v3814 = vpop.f32.mrf.mxu0
    %v3815 = vadd.f32 %v3774, %v3814
    %3816 = vmatmul.f32.gmra.mxu0 %v2555
    %v3817 = vpop.f32.mrf.mxu0
    %v3818 = vadd.f32 %v3777, %v3817
    %3819 = vmatmul.f32.gmra.mxu0 %v2569
    %v3820 = vpop.f32.mrf.mxu0
    %v3821 = vadd.f32 %v3780, %v3820
    %3822 = vmatmul.f32.gmra.mxu0 %v2583
    %v3823 = vpop.f32.mrf.mxu0
    %v3824 = vadd.f32 %v3783, %v3823
    %3825 = vdwg.mxu0
    %3826 = vmatpush.msra.mxu0 %v3315
    %3827 = vmatpush.msra.mxu0 %v3311
    %3828 = vmatpush.msra.mxu0 %v3307
    %3829 = vmatpush.msra.mxu0 %v3303
    %3830 = vmatpush.msra.mxu0 %v3299
    %3831 = vmatpush.msra.mxu0 %v3295
    %3832 = vmatpush.msra.mxu0 %v3291
    %3833 = vmatpush.msra.mxu0 %v3287
    %3834 = vmatpush.msra.mxu0 %v3283
    %3835 = vmatpush.msra.mxu0 %v3279
    %3836 = vmatpush.msra.mxu0 %v3275
    %3837 = vmatpush.msra.mxu0 %v3271
    %3838 = vmatpush.msra.mxu0 %v3267
    %3839 = vmatpush.msra.mxu0 %v3263
    %3840 = vmatpush.msra.mxu0 %v3259
    %3841 = vmatpush.msra.mxu0 %v3255
    %3842 = vmatmul.f32.gmra.mxu0 %v2492
    %v3843 = vpop.f32.mrf.mxu0
    %v3844 = vadd.f32 %v3803, %v3843
    %3845 = vmatmul.f32.gmra.mxu0 %v2506
    %v3846 = vpop.f32.mrf.mxu0
    %v3847 = vadd.f32 %v3806, %v3846
    %3848 = vmatmul.f32.gmra.mxu0 %v2520
    %v3849 = vpop.f32.mrf.mxu0
    %v3850 = vadd.f32 %v3809, %v3849
    %3851 = vmatmul.f32.gmra.mxu0 %v2534
    %v3852 = vpop.f32.mrf.mxu0
    %v3853 = vadd.f32 %v3812, %v3852
    %3854 = vmatmul.f32.gmra.mxu0 %v2548
    %v3855 = vpop.f32.mrf.mxu0
    %v3856 = vadd.f32 %v3815, %v3855
    %3857 = vmatmul.f32.gmra.mxu0 %v2562
    %v3858 = vpop.f32.mrf.mxu0
    %v3859 = vadd.f32 %v3818, %v3858
    %3860 = vmatmul.f32.gmra.mxu0 %v2576
    %v3861 = vpop.f32.mrf.mxu0
    %v3862 = vadd.f32 %v3821, %v3861
    %3863 = vmatmul.f32.gmra.mxu0 %v2590
    %v3864 = vpop.f32.mrf.mxu0
    %v3865 = vadd.f32 %v3824, %v3864
    %3866 = vdwg.mxu0
    %3867 = vmatpush.msra.mxu0 %v3379
    %3868 = vmatpush.msra.mxu0 %v3375
    %3869 = vmatpush.msra.mxu0 %v3371
    %3870 = vmatpush.msra.mxu0 %v3367
    %3871 = vmatpush.msra.mxu0 %v3363
    %3872 = vmatpush.msra.mxu0 %v3359
    %3873 = vmatpush.msra.mxu0 %v3355
    %3874 = vmatpush.msra.mxu0 %v3351
    %3875 = vmatpush.msra.mxu0 %v3347
    %3876 = vmatpush.msra.mxu0 %v3343
    %3877 = vmatpush.msra.mxu0 %v3339
    %3878 = vmatpush.msra.mxu0 %v3335
    %3879 = vmatpush.msra.mxu0 %v3331
    %3880 = vmatpush.msra.mxu0 %v3327
    %3881 = vmatpush.msra.mxu0 %v3323
    %3882 = vmatpush.msra.mxu0 %v3319
    %3883 = vmatmul.f32.gmra.mxu0 %v2637
    %v3884 = vpop.f32.mrf.mxu0
    %v3885 = vadd.f32 %v3844, %v3884
    %3886 = vmatmul.f32.gmra.mxu0 %v2651
    %v3887 = vpop.f32.mrf.mxu0
    %v3888 = vadd.f32 %v3847, %v3887
    %3889 = vmatmul.f32.gmra.mxu0 %v2665
    %v3890 = vpop.f32.mrf.mxu0
    %v3891 = vadd.f32 %v3850, %v3890
    %3892 = vmatmul.f32.gmra.mxu0 %v2679
    %v3893 = vpop.f32.mrf.mxu0
    %v3894 = vadd.f32 %v3853, %v3893
    %3895 = vmatmul.f32.gmra.mxu0 %v2693
    %v3896 = vpop.f32.mrf.mxu0
    %v3897 = vadd.f32 %v3856, %v3896
    %3898 = vmatmul.f32.gmra.mxu0 %v2707
    %v3899 = vpop.f32.mrf.mxu0
    %v3900 = vadd.f32 %v3859, %v3899
    %3901 = vmatmul.f32.gmra.mxu0 %v2721
    %v3902 = vpop.f32.mrf.mxu0
    %v3903 = vadd.f32 %v3862, %v3902
    %3904 = vmatmul.f32.gmra.mxu0 %v2735
    %v3905 = vpop.f32.mrf.mxu0
    %v3906 = vadd.f32 %v3865, %v3905
    %3907 = vdwg.mxu0
    %3908 = vmatpush.msra.mxu0 %v3443
    %3909 = vmatpush.msra.mxu0 %v3439
    %3910 = vmatpush.msra.mxu0 %v3435
    %3911 = vmatpush.msra.mxu0 %v3431
    %3912 = vmatpush.msra.mxu0 %v3427
    %3913 = vmatpush.msra.mxu0 %v3423
    %3914 = vmatpush.msra.mxu0 %v3419
    %3915 = vmatpush.msra.mxu0 %v3415
    %3916 = vmatpush.msra.mxu0 %v3411
    %3917 = vmatpush.msra.mxu0 %v3407
    %3918 = vmatpush.msra.mxu0 %v3403
    %3919 = vmatpush.msra.mxu0 %v3399
    %3920 = vmatpush.msra.mxu0 %v3395
    %3921 = vmatpush.msra.mxu0 %v3391
    %3922 = vmatpush.msra.mxu0 %v3387
    %3923 = vmatpush.msra.mxu0 %v3383
    %3924 = vmatmul.f32.gmra.mxu0 %v2644
    %v3925 = vpop.f32.mrf.mxu0
    %v3926 = vadd.f32 %v3885, %v3925
    %3927 = vmatmul.f32.gmra.mxu0 %v2658
    %v3928 = vpop.f32.mrf.mxu0
    %v3929 = vadd.f32 %v3888, %v3928
    %3930 = vmatmul.f32.gmra.mxu0 %v2672
    %v3931 = vpop.f32.mrf.mxu0
    %v3932 = vadd.f32 %v3891, %v3931
    %3933 = vmatmul.f32.gmra.mxu0 %v2686
    %v3934 = vpop.f32.mrf.mxu0
    %v3935 = vadd.f32 %v3894, %v3934
    %3936 = vmatmul.f32.gmra.mxu0 %v2700
    %v3937 = vpop.f32.mrf.mxu0
    %v3938 = vadd.f32 %v3897, %v3937
    %3939 = vmatmul.f32.gmra.mxu0 %v2714
    %v3940 = vpop.f32.mrf.mxu0
    %v3941 = vadd.f32 %v3900, %v3940
    %3942 = vmatmul.f32.gmra.mxu0 %v2728
    %v3943 = vpop.f32.mrf.mxu0
    %v3944 = vadd.f32 %v3903, %v3943
    %3945 = vmatmul.f32.gmra.mxu0 %v2742
    %v3946 = vpop.f32.mrf.mxu0
    %v3947 = vadd.f32 %v3906, %v3946
    %3948 = vdwg.mxu0
    %3949 = vmatpush.msra.mxu0 %v3507
    %3950 = vmatpush.msra.mxu0 %v3503
    %3951 = vmatpush.msra.mxu0 %v3499
    %3952 = vmatpush.msra.mxu0 %v3495
    %3953 = vmatpush.msra.mxu0 %v3491
    %3954 = vmatpush.msra.mxu0 %v3487
    %3955 = vmatpush.msra.mxu0 %v3483
    %3956 = vmatpush.msra.mxu0 %v3479
    %3957 = vmatpush.msra.mxu0 %v3475
    %3958 = vmatpush.msra.mxu0 %v3471
    %3959 = vmatpush.msra.mxu0 %v3467
    %3960 = vmatpush.msra.mxu0 %v3463
    %3961 = vmatpush.msra.mxu0 %v3459
    %3962 = vmatpush.msra.mxu0 %v3455
    %3963 = vmatpush.msra.mxu0 %v3451
    %3964 = vmatpush.msra.mxu0 %v3447
    %3965 = vmatmul.f32.gmra.mxu0 %v2789
    %v3966 = vpop.f32.mrf.mxu0
    %v3967 = vadd.f32 %v3926, %v3966
    %3968 = vmatmul.f32.gmra.mxu0 %v2803
    %v3969 = vpop.f32.mrf.mxu0
    %v3970 = vadd.f32 %v3929, %v3969
    %3971 = vmatmul.f32.gmra.mxu0 %v2817
    %v3972 = vpop.f32.mrf.mxu0
    %v3973 = vadd.f32 %v3932, %v3972
    %3974 = vmatmul.f32.gmra.mxu0 %v2831
    %v3975 = vpop.f32.mrf.mxu0
    %v3976 = vadd.f32 %v3935, %v3975
    %3977 = vmatmul.f32.gmra.mxu0 %v2845
    %v3978 = vpop.f32.mrf.mxu0
    %v3979 = vadd.f32 %v3938, %v3978
    %3980 = vmatmul.f32.gmra.mxu0 %v2859
    %v3981 = vpop.f32.mrf.mxu0
    %v3982 = vadd.f32 %v3941, %v3981
    %3983 = vmatmul.f32.gmra.mxu0 %v2873
    %v3984 = vpop.f32.mrf.mxu0
    %v3985 = vadd.f32 %v3944, %v3984
    %3986 = vmatmul.f32.gmra.mxu0 %v2887
    %v3987 = vpop.f32.mrf.mxu0
    %v3988 = vadd.f32 %v3947, %v3987
    %3989 = vdwg.mxu0
    %3990 = vmatpush.msra.mxu0 %v3571
    %3991 = vmatpush.msra.mxu0 %v3567
    %3992 = vmatpush.msra.mxu0 %v3563
    %3993 = vmatpush.msra.mxu0 %v3559
    %3994 = vmatpush.msra.mxu0 %v3555
    %3995 = vmatpush.msra.mxu0 %v3551
    %3996 = vmatpush.msra.mxu0 %v3547
    %3997 = vmatpush.msra.mxu0 %v3543
    %3998 = vmatpush.msra.mxu0 %v3539
    %3999 = vmatpush.msra.mxu0 %v3535
    %4000 = vmatpush.msra.mxu0 %v3531
    %4001 = vmatpush.msra.mxu0 %v3527
    %4002 = vmatpush.msra.mxu0 %v3523
    %4003 = vmatpush.msra.mxu0 %v3519
    %4004 = vmatpush.msra.mxu0 %v3515
    %4005 = vmatpush.msra.mxu0 %v3511
    %4006 = vmatmul.f32.gmra.mxu0 %v2796
    %v4007 = vpop.f32.mrf.mxu0
    %v4008 = vadd.f32 %v3967, %v4007
    %4009 = vmatmul.f32.gmra.mxu0 %v2810
    %v4010 = vpop.f32.mrf.mxu0
    %v4011 = vadd.f32 %v3970, %v4010
    %4012 = vmatmul.f32.gmra.mxu0 %v2824
    %v4013 = vpop.f32.mrf.mxu0
    %v4014 = vadd.f32 %v3973, %v4013
    %4015 = vmatmul.f32.gmra.mxu0 %v2838
    %v4016 = vpop.f32.mrf.mxu0
    %v4017 = vadd.f32 %v3976, %v4016
    %4018 = vmatmul.f32.gmra.mxu0 %v2852
    %v4019 = vpop.f32.mrf.mxu0
    %v4020 = vadd.f32 %v3979, %v4019
    %4021 = vmatmul.f32.gmra.mxu0 %v2866
    %v4022 = vpop.f32.mrf.mxu0
    %v4023 = vadd.f32 %v3982, %v4022
    %4024 = vmatmul.f32.gmra.mxu0 %v2880
    %v4025 = vpop.f32.mrf.mxu0
    %v4026 = vadd.f32 %v3985, %v4025
    %4027 = vmatmul.f32.gmra.mxu0 %v2894
    %v4028 = vpop.f32.mrf.mxu0
    %v4029 = vadd.f32 %v3988, %v4028
    %4030 = vdwg.mxu0
    %4031 = vmatpush.msra.mxu0 %v3635
    %4032 = vmatpush.msra.mxu0 %v3631
    %4033 = vmatpush.msra.mxu0 %v3627
    %4034 = vmatpush.msra.mxu0 %v3623
    %4035 = vmatpush.msra.mxu0 %v3619
    %4036 = vmatpush.msra.mxu0 %v3615
    %4037 = vmatpush.msra.mxu0 %v3611
    %4038 = vmatpush.msra.mxu0 %v3607
    %4039 = vmatpush.msra.mxu0 %v3603
    %4040 = vmatpush.msra.mxu0 %v3599
    %4041 = vmatpush.msra.mxu0 %v3595
    %4042 = vmatpush.msra.mxu0 %v3591
    %4043 = vmatpush.msra.mxu0 %v3587
    %4044 = vmatpush.msra.mxu0 %v3583
    %4045 = vmatpush.msra.mxu0 %v3579
    %4046 = vmatpush.msra.mxu0 %v3575
    %4047 = vmatmul.f32.gmra.mxu0 %v2941
    %v4048 = vpop.f32.mrf.mxu0
    %v4049 = vadd.f32 %v4008, %v4048
    %4050 = vmatmul.f32.gmra.mxu0 %v2955
    %v4051 = vpop.f32.mrf.mxu0
    %v4052 = vadd.f32 %v4011, %v4051
    %4053 = vmatmul.f32.gmra.mxu0 %v2969
    %v4054 = vpop.f32.mrf.mxu0
    %v4055 = vadd.f32 %v4014, %v4054
    %4056 = vmatmul.f32.gmra.mxu0 %v2983
    %v4057 = vpop.f32.mrf.mxu0
    %v4058 = vadd.f32 %v4017, %v4057
    %4059 = vmatmul.f32.gmra.mxu0 %v2997
    %v4060 = vpop.f32.mrf.mxu0
    %v4061 = vadd.f32 %v4020, %v4060
    %4062 = vmatmul.f32.gmra.mxu0 %v3011
    %v4063 = vpop.f32.mrf.mxu0
    %v4064 = vadd.f32 %v4023, %v4063
    %4065 = vmatmul.f32.gmra.mxu0 %v3025
    %v4066 = vpop.f32.mrf.mxu0
    %v4067 = vadd.f32 %v4026, %v4066
    %4068 = vmatmul.f32.gmra.mxu0 %v3039
    %v4069 = vpop.f32.mrf.mxu0
    %v4070 = vadd.f32 %v4029, %v4069
    %4071 = vdwg.mxu0
    %4072 = vmatpush.msra.mxu0 %v3699
    %4073 = vmatpush.msra.mxu0 %v3695
    %4074 = vmatpush.msra.mxu0 %v3691
    %4075 = vmatpush.msra.mxu0 %v3687
    %4076 = vmatpush.msra.mxu0 %v3683
    %4077 = vmatpush.msra.mxu0 %v3679
    %4078 = vmatpush.msra.mxu0 %v3675
    %4079 = vmatpush.msra.mxu0 %v3671
    %4080 = vmatpush.msra.mxu0 %v3667
    %4081 = vmatpush.msra.mxu0 %v3663
    %4082 = vmatpush.msra.mxu0 %v3659
    %4083 = vmatpush.msra.mxu0 %v3655
    %4084 = vmatpush.msra.mxu0 %v3651
    %4085 = vmatpush.msra.mxu0 %v3647
    %4086 = vmatpush.msra.mxu0 %v3643
    %4087 = vmatpush.msra.mxu0 %v3639
    %4088 = vmatmul.f32.gmra.mxu0 %v2948
    %v4089 = vpop.f32.mrf.mxu0
    %v4090 = vadd.f32 %v4049, %v4089
    %4091 = vmatmul.f32.gmra.mxu0 %v2962
    %v4092 = vpop.f32.mrf.mxu0
    %v4093 = vadd.f32 %v4052, %v4092
    %4094 = vmatmul.f32.gmra.mxu0 %v2976
    %v4095 = vpop.f32.mrf.mxu0
    %v4096 = vadd.f32 %v4055, %v4095
    %4097 = vmatmul.f32.gmra.mxu0 %v2990
    %v4098 = vpop.f32.mrf.mxu0
    %v4099 = vadd.f32 %v4058, %v4098
    %4100 = vmatmul.f32.gmra.mxu0 %v3004
    %v4101 = vpop.f32.mrf.mxu0
    %v4102 = vadd.f32 %v4061, %v4101
    %4103 = vmatmul.f32.gmra.mxu0 %v3018
    %v4104 = vpop.f32.mrf.mxu0
    %v4105 = vadd.f32 %v4064, %v4104
    %4106 = vmatmul.f32.gmra.mxu0 %v3032
    %v4107 = vpop.f32.mrf.mxu0
    %v4108 = vadd.f32 %v4067, %v4107
    %4109 = vmatmul.f32.gmra.mxu0 %v3046
    %v4110 = vpop.f32.mrf.mxu0
    %v4111 = vadd.f32 %v4070, %v4110
    %4112 = vdwg.mxu0
    %4113 = vmatpush.msra.mxu0 %v3124
    %4114 = vmatpush.msra.mxu0 %v3120
    %4115 = vmatpush.msra.mxu0 %v3116
    %4116 = vmatpush.msra.mxu0 %v3112
    %4117 = vmatpush.msra.mxu0 %v3108
    %4118 = vmatpush.msra.mxu0 %v3104
    %4119 = vmatpush.msra.mxu0 %v3100
    %4120 = vmatpush.msra.mxu0 %v3096
    %4121 = vmatpush.msra.mxu0 %v3092
    %4122 = vmatpush.msra.mxu0 %v3088
    %4123 = vmatpush.msra.mxu0 %v3084
    %4124 = vmatpush.msra.mxu0 %v3080
    %4125 = vmatpush.msra.mxu0 %v3076
    %4126 = vmatpush.msra.mxu0 %v3072
    %4127 = vmatpush.msra.mxu0 %v3068
    %4128 = vmatpush.msra.mxu0 %v3064
    %4129 = vmatmul.f32.gmra.mxu0 %v2333
    %v4130 = vpop.f32.mrf.mxu0
    %v4131 = vadd.f32 0.0, %v4130
    %4132 = vmatmul.f32.gmra.mxu0 %v2347
    %v4133 = vpop.f32.mrf.mxu0
    %v4134 = vadd.f32 0.0, %v4133
    %4135 = vmatmul.f32.gmra.mxu0 %v2361
    %v4136 = vpop.f32.mrf.mxu0
    %v4137 = vadd.f32 0.0, %v4136
    %4138 = vmatmul.f32.gmra.mxu0 %v2375
    %v4139 = vpop.f32.mrf.mxu0
    %v4140 = vadd.f32 0.0, %v4139
    %4141 = vmatmul.f32.gmra.mxu0 %v2389
    %v4142 = vpop.f32.mrf.mxu0
    %v4143 = vadd.f32 0.0, %v4142
    %4144 = vmatmul.f32.gmra.mxu0 %v2403
    %v4145 = vpop.f32.mrf.mxu0
    %v4146 = vadd.f32 0.0, %v4145
    %4147 = vmatmul.f32.gmra.mxu0 %v2417
    %v4148 = vpop.f32.mrf.mxu0
    %v4149 = vadd.f32 0.0, %v4148
    %4150 = vmatmul.f32.gmra.mxu0 %v2431
    %v4151 = vpop.f32.mrf.mxu0
    %v4152 = vadd.f32 0.0, %v4151
    %4153 = vdwg.mxu0
    %4154 = vmatpush.msra.mxu0 %v3188
    %4155 = vmatpush.msra.mxu0 %v3184
    %4156 = vmatpush.msra.mxu0 %v3180
    %4157 = vmatpush.msra.mxu0 %v3176
    %4158 = vmatpush.msra.mxu0 %v3172
    %4159 = vmatpush.msra.mxu0 %v3168
    %4160 = vmatpush.msra.mxu0 %v3164
    %4161 = vmatpush.msra.mxu0 %v3160
    %4162 = vmatpush.msra.mxu0 %v3156
    %4163 = vmatpush.msra.mxu0 %v3152
    %4164 = vmatpush.msra.mxu0 %v3148
    %4165 = vmatpush.msra.mxu0 %v3144
    %4166 = vmatpush.msra.mxu0 %v3140
    %4167 = vmatpush.msra.mxu0 %v3136
    %4168 = vmatpush.msra.mxu0 %v3132
    %4169 = vmatpush.msra.mxu0 %v3128
    %4170 = vmatmul.f32.gmra.mxu0 %v2340
    %v4171 = vpop.f32.mrf.mxu0
    %v4172 = vadd.f32 %v4131, %v4171
    %4173 = vmatmul.f32.gmra.mxu0 %v2354
    %v4174 = vpop.f32.mrf.mxu0
    %v4175 = vadd.f32 %v4134, %v4174
    %4176 = vmatmul.f32.gmra.mxu0 %v2368
    %v4177 = vpop.f32.mrf.mxu0
    %v4178 = vadd.f32 %v4137, %v4177
    %4179 = vmatmul.f32.gmra.mxu0 %v2382
    %v4180 = vpop.f32.mrf.mxu0
    %v4181 = vadd.f32 %v4140, %v4180
    %4182 = vmatmul.f32.gmra.mxu0 %v2396
    %v4183 = vpop.f32.mrf.mxu0
    %v4184 = vadd.f32 %v4143, %v4183
    %4185 = vmatmul.f32.gmra.mxu0 %v2410
    %v4186 = vpop.f32.mrf.mxu0
    %v4187 = vadd.f32 %v4146, %v4186
    %4188 = vmatmul.f32.gmra.mxu0 %v2424
    %v4189 = vpop.f32.mrf.mxu0
    %v4190 = vadd.f32 %v4149, %v4189
    %4191 = vmatmul.f32.gmra.mxu0 %v2438
    %v4192 = vpop.f32.mrf.mxu0
    %v4193 = vadd.f32 %v4152, %v4192
    %4194 = vdwg.mxu0
    %4195 = vmatpush.msra.mxu0 %v3252
    %4196 = vmatpush.msra.mxu0 %v3248
    %4197 = vmatpush.msra.mxu0 %v3244
    %4198 = vmatpush.msra.mxu0 %v3240
    %4199 = vmatpush.msra.mxu0 %v3236
    %4200 = vmatpush.msra.mxu0 %v3232
    %4201 = vmatpush.msra.mxu0 %v3228
    %4202 = vmatpush.msra.mxu0 %v3224
    %4203 = vmatpush.msra.mxu0 %v3220
    %4204 = vmatpush.msra.mxu0 %v3216
    %4205 = vmatpush.msra.mxu0 %v3212
    %4206 = vmatpush.msra.mxu0 %v3208
    %4207 = vmatpush.msra.mxu0 %v3204
    %4208 = vmatpush.msra.mxu0 %v3200
    %4209 = vmatpush.msra.mxu0 %v3196
    %4210 = vmatpush.msra.mxu0 %v3192
    %4211 = vmatmul.f32.gmra.mxu0 %v2485
    %v4212 = vpop.f32.mrf.mxu0
    %v4213 = vadd.f32 %v4172, %v4212
    %4214 = vmatmul.f32.gmra.mxu0 %v2499
    %v4215 = vpop.f32.mrf.mxu0
    %v4216 = vadd.f32 %v4175, %v4215
    %4217 = vmatmul.f32.gmra.mxu0 %v2513
    %v4218 = vpop.f32.mrf.mxu0
    %v4219 = vadd.f32 %v4178, %v4218
    %4220 = vmatmul.f32.gmra.mxu0 %v2527
    %v4221 = vpop.f32.mrf.mxu0
    %v4222 = vadd.f32 %v4181, %v4221
    %4223 = vmatmul.f32.gmra.mxu0 %v2541
    %v4224 = vpop.f32.mrf.mxu0
    %v4225 = vadd.f32 %v4184, %v4224
    %4226 = vmatmul.f32.gmra.mxu0 %v2555
    %v4227 = vpop.f32.mrf.mxu0
    %v4228 = vadd.f32 %v4187, %v4227
    %4229 = vmatmul.f32.gmra.mxu0 %v2569
    %v4230 = vpop.f32.mrf.mxu0
    %v4231 = vadd.f32 %v4190, %v4230
    %4232 = vmatmul.f32.gmra.mxu0 %v2583
    %v4233 = vpop.f32.mrf.mxu0
    %v4234 = vadd.f32 %v4193, %v4233
    %4235 = vdwg.mxu0
    %4236 = vmatpush.msra.mxu0 %v3316
    %4237 = vmatpush.msra.mxu0 %v3312
    %4238 = vmatpush.msra.mxu0 %v3308
    %4239 = vmatpush.msra.mxu0 %v3304
    %4240 = vmatpush.msra.mxu0 %v3300
    %4241 = vmatpush.msra.mxu0 %v3296
    %4242 = vmatpush.msra.mxu0 %v3292
    %4243 = vmatpush.msra.mxu0 %v3288
    %4244 = vmatpush.msra.mxu0 %v3284
    %4245 = vmatpush.msra.mxu0 %v3280
    %4246 = vmatpush.msra.mxu0 %v3276
    %4247 = vmatpush.msra.mxu0 %v3272
    %4248 = vmatpush.msra.mxu0 %v3268
    %4249 = vmatpush.msra.mxu0 %v3264
    %4250 = vmatpush.msra.mxu0 %v3260
    %4251 = vmatpush.msra.mxu0 %v3256
    %4252 = vmatmul.f32.gmra.mxu0 %v2492
    %v4253 = vpop.f32.mrf.mxu0
    %v4254 = vadd.f32 %v4213, %v4253
    %4255 = vmatmul.f32.gmra.mxu0 %v2506
    %v4256 = vpop.f32.mrf.mxu0
    %v4257 = vadd.f32 %v4216, %v4256
    %4258 = vmatmul.f32.gmra.mxu0 %v2520
    %v4259 = vpop.f32.mrf.mxu0
    %v4260 = vadd.f32 %v4219, %v4259
    %4261 = vmatmul.f32.gmra.mxu0 %v2534
    %v4262 = vpop.f32.mrf.mxu0
    %v4263 = vadd.f32 %v4222, %v4262
    %4264 = vmatmul.f32.gmra.mxu0 %v2548
    %v4265 = vpop.f32.mrf.mxu0
    %v4266 = vadd.f32 %v4225, %v4265
    %4267 = vmatmul.f32.gmra.mxu0 %v2562
    %v4268 = vpop.f32.mrf.mxu0
    %v4269 = vadd.f32 %v4228, %v4268
    %4270 = vmatmul.f32.gmra.mxu0 %v2576
    %v4271 = vpop.f32.mrf.mxu0
    %v4272 = vadd.f32 %v4231, %v4271
    %4273 = vmatmul.f32.gmra.mxu0 %v2590
    %v4274 = vpop.f32.mrf.mxu0
    %v4275 = vadd.f32 %v4234, %v4274
    %4276 = vdwg.mxu0
    %4277 = vmatpush.msra.mxu0 %v3380
    %4278 = vmatpush.msra.mxu0 %v3376
    %4279 = vmatpush.msra.mxu0 %v3372
    %4280 = vmatpush.msra.mxu0 %v3368
    %4281 = vmatpush.msra.mxu0 %v3364
    %4282 = vmatpush.msra.mxu0 %v3360
    %4283 = vmatpush.msra.mxu0 %v3356
    %4284 = vmatpush.msra.mxu0 %v3352
    %4285 = vmatpush.msra.mxu0 %v3348
    %4286 = vmatpush.msra.mxu0 %v3344
    %4287 = vmatpush.msra.mxu0 %v3340
    %4288 = vmatpush.msra.mxu0 %v3336
    %4289 = vmatpush.msra.mxu0 %v3332
    %4290 = vmatpush.msra.mxu0 %v3328
    %4291 = vmatpush.msra.mxu0 %v3324
    %4292 = vmatpush.msra.mxu0 %v3320
    %4293 = vmatmul.f32.gmra.mxu0 %v2637
    %v4294 = vpop.f32.mrf.mxu0
    %v4295 = vadd.f32 %v4254, %v4294
    %4296 = vmatmul.f32.gmra.mxu0 %v2651
    %v4297 = vpop.f32.mrf.mxu0
    %v4298 = vadd.f32 %v4257, %v4297
    %4299 = vmatmul.f32.gmra.mxu0 %v2665
    %v4300 = vpop.f32.mrf.mxu0
    %v4301 = vadd.f32 %v4260, %v4300
    %4302 = vmatmul.f32.gmra.mxu0 %v2679
    %v4303 = vpop.f32.mrf.mxu0
    %v4304 = vadd.f32 %v4263, %v4303
    %4305 = vmatmul.f32.gmra.mxu0 %v2693
    %v4306 = vpop.f32.mrf.mxu0
    %v4307 = vadd.f32 %v4266, %v4306
    %4308 = vmatmul.f32.gmra.mxu0 %v2707
    %v4309 = vpop.f32.mrf.mxu0
    %v4310 = vadd.f32 %v4269, %v4309
    %4311 = vmatmul.f32.gmra.mxu0 %v2721
    %v4312 = vpop.f32.mrf.mxu0
    %v4313 = vadd.f32 %v4272, %v4312
    %4314 = vmatmul.f32.gmra.mxu0 %v2735
    %v4315 = vpop.f32.mrf.mxu0
    %v4316 = vadd.f32 %v4275, %v4315
    %4317 = vdwg.mxu0
    %4318 = vmatpush.msra.mxu0 %v3444
    %4319 = vmatpush.msra.mxu0 %v3440
    %4320 = vmatpush.msra.mxu0 %v3436
    %4321 = vmatpush.msra.mxu0 %v3432
    %4322 = vmatpush.msra.mxu0 %v3428
    %4323 = vmatpush.msra.mxu0 %v3424
    %4324 = vmatpush.msra.mxu0 %v3420
    %4325 = vmatpush.msra.mxu0 %v3416
    %4326 = vmatpush.msra.mxu0 %v3412
    %4327 = vmatpush.msra.mxu0 %v3408
    %4328 = vmatpush.msra.mxu0 %v3404
    %4329 = vmatpush.msra.mxu0 %v3400
    %4330 = vmatpush.msra.mxu0 %v3396
    %4331 = vmatpush.msra.mxu0 %v3392
    %4332 = vmatpush.msra.mxu0 %v3388
    %4333 = vmatpush.msra.mxu0 %v3384
    %4334 = vmatmul.f32.gmra.mxu0 %v2644
    %v4335 = vpop.f32.mrf.mxu0
    %v4336 = vadd.f32 %v4295, %v4335
    %4337 = vmatmul.f32.gmra.mxu0 %v2658
    %v4338 = vpop.f32.mrf.mxu0
    %v4339 = vadd.f32 %v4298, %v4338
    %4340 = vmatmul.f32.gmra.mxu0 %v2672
    %v4341 = vpop.f32.mrf.mxu0
    %v4342 = vadd.f32 %v4301, %v4341
    %4343 = vmatmul.f32.gmra.mxu0 %v2686
    %v4344 = vpop.f32.mrf.mxu0
    %v4345 = vadd.f32 %v4304, %v4344
    %4346 = vmatmul.f32.gmra.mxu0 %v2700
    %v4347 = vpop.f32.mrf.mxu0
    %v4348 = vadd.f32 %v4307, %v4347
    %4349 = vmatmul.f32.gmra.mxu0 %v2714
    %v4350 = vpop.f32.mrf.mxu0
    %v4351 = vadd.f32 %v4310, %v4350
    %4352 = vmatmul.f32.gmra.mxu0 %v2728
    %v4353 = vpop.f32.mrf.mxu0
    %v4354 = vadd.f32 %v4313, %v4353
    %4355 = vmatmul.f32.gmra.mxu0 %v2742
    %v4356 = vpop.f32.mrf.mxu0
    %v4357 = vadd.f32 %v4316, %v4356
    %4358 = vdwg.mxu0
    %4359 = vmatpush.msra.mxu0 %v3508
    %4360 = vmatpush.msra.mxu0 %v3504
    %4361 = vmatpush.msra.mxu0 %v3500
    %4362 = vmatpush.msra.mxu0 %v3496
    %4363 = vmatpush.msra.mxu0 %v3492
    %4364 = vmatpush.msra.mxu0 %v3488
    %4365 = vmatpush.msra.mxu0 %v3484
    %4366 = vmatpush.msra.mxu0 %v3480
    %4367 = vmatpush.msra.mxu0 %v3476
    %4368 = vmatpush.msra.mxu0 %v3472
    %4369 = vmatpush.msra.mxu0 %v3468
    %4370 = vmatpush.msra.mxu0 %v3464
    %4371 = vmatpush.msra.mxu0 %v3460
    %4372 = vmatpush.msra.mxu0 %v3456
    %4373 = vmatpush.msra.mxu0 %v3452
    %4374 = vmatpush.msra.mxu0 %v3448
    %4375 = vmatmul.f32.gmra.mxu0 %v2789
    %v4376 = vpop.f32.mrf.mxu0
    %v4377 = vadd.f32 %v4336, %v4376
    %4378 = vmatmul.f32.gmra.mxu0 %v2803
    %v4379 = vpop.f32.mrf.mxu0
    %v4380 = vadd.f32 %v4339, %v4379
    %4381 = vmatmul.f32.gmra.mxu0 %v2817
    %v4382 = vpop.f32.mrf.mxu0
    %v4383 = vadd.f32 %v4342, %v4382
    %4384 = vmatmul.f32.gmra.mxu0 %v2831
    %v4385 = vpop.f32.mrf.mxu0
    %v4386 = vadd.f32 %v4345, %v4385
    %4387 = vmatmul.f32.gmra.mxu0 %v2845
    %v4388 = vpop.f32.mrf.mxu0
    %v4389 = vadd.f32 %v4348, %v4388
    %4390 = vmatmul.f32.gmra.mxu0 %v2859
    %v4391 = vpop.f32.mrf.mxu0
    %v4392 = vadd.f32 %v4351, %v4391
    %4393 = vmatmul.f32.gmra.mxu0 %v2873
    %v4394 = vpop.f32.mrf.mxu0
    %v4395 = vadd.f32 %v4354, %v4394
    %4396 = vmatmul.f32.gmra.mxu0 %v2887
    %v4397 = vpop.f32.mrf.mxu0
    %v4398 = vadd.f32 %v4357, %v4397
    %4399 = vdwg.mxu0
    %4400 = vmatpush.msra.mxu0 %v3572
    %4401 = vmatpush.msra.mxu0 %v3568
    %4402 = vmatpush.msra.mxu0 %v3564
    %4403 = vmatpush.msra.mxu0 %v3560
    %4404 = vmatpush.msra.mxu0 %v3556
    %4405 = vmatpush.msra.mxu0 %v3552
    %4406 = vmatpush.msra.mxu0 %v3548
    %4407 = vmatpush.msra.mxu0 %v3544
    %4408 = vmatpush.msra.mxu0 %v3540
    %4409 = vmatpush.msra.mxu0 %v3536
    %4410 = vmatpush.msra.mxu0 %v3532
    %4411 = vmatpush.msra.mxu0 %v3528
    %4412 = vmatpush.msra.mxu0 %v3524
    %4413 = vmatpush.msra.mxu0 %v3520
    %4414 = vmatpush.msra.mxu0 %v3516
    %4415 = vmatpush.msra.mxu0 %v3512
    %4416 = vmatmul.f32.gmra.mxu0 %v2796
    %v4417 = vpop.f32.mrf.mxu0
    %v4418 = vadd.f32 %v4377, %v4417
    %4419 = vmatmul.f32.gmra.mxu0 %v2810
    %v4420 = vpop.f32.mrf.mxu0
    %v4421 = vadd.f32 %v4380, %v4420
    %4422 = vmatmul.f32.gmra.mxu0 %v2824
    %v4423 = vpop.f32.mrf.mxu0
    %v4424 = vadd.f32 %v4383, %v4423
    %4425 = vmatmul.f32.gmra.mxu0 %v2838
    %v4426 = vpop.f32.mrf.mxu0
    %v4427 = vadd.f32 %v4386, %v4426
    %4428 = vmatmul.f32.gmra.mxu0 %v2852
    %v4429 = vpop.f32.mrf.mxu0
    %v4430 = vadd.f32 %v4389, %v4429
    %4431 = vmatmul.f32.gmra.mxu0 %v2866
    %v4432 = vpop.f32.mrf.mxu0
    %v4433 = vadd.f32 %v4392, %v4432
    %4434 = vmatmul.f32.gmra.mxu0 %v2880
    %v4435 = vpop.f32.mrf.mxu0
    %v4436 = vadd.f32 %v4395, %v4435
    %4437 = vmatmul.f32.gmra.mxu0 %v2894
    %v4438 = vpop.f32.mrf.mxu0
    %v4439 = vadd.f32 %v4398, %v4438
    %4440 = vdwg.mxu0
    %4441 = vmatpush.msra.mxu0 %v3636
    %4442 = vmatpush.msra.mxu0 %v3632
    %4443 = vmatpush.msra.mxu0 %v3628
    %4444 = vmatpush.msra.mxu0 %v3624
    %4445 = vmatpush.msra.mxu0 %v3620
    %4446 = vmatpush.msra.mxu0 %v3616
    %4447 = vmatpush.msra.mxu0 %v3612
    %4448 = vmatpush.msra.mxu0 %v3608
    %4449 = vmatpush.msra.mxu0 %v3604
    %4450 = vmatpush.msra.mxu0 %v3600
    %4451 = vmatpush.msra.mxu0 %v3596
    %4452 = vmatpush.msra.mxu0 %v3592
    %4453 = vmatpush.msra.mxu0 %v3588
    %4454 = vmatpush.msra.mxu0 %v3584
    %4455 = vmatpush.msra.mxu0 %v3580
    %4456 = vmatpush.msra.mxu0 %v3576
    %4457 = vmatmul.f32.gmra.mxu0 %v2941
    %v4458 = vpop.f32.mrf.mxu0
    %v4459 = vadd.f32 %v4418, %v4458
    %4460 = vmatmul.f32.gmra.mxu0 %v2955
    %v4461 = vpop.f32.mrf.mxu0
    %v4462 = vadd.f32 %v4421, %v4461
    %4463 = vmatmul.f32.gmra.mxu0 %v2969
    %v4464 = vpop.f32.mrf.mxu0
    %v4465 = vadd.f32 %v4424, %v4464
    %4466 = vmatmul.f32.gmra.mxu0 %v2983
    %v4467 = vpop.f32.mrf.mxu0
    %v4468 = vadd.f32 %v4427, %v4467
    %4469 = vmatmul.f32.gmra.mxu0 %v2997
    %v4470 = vpop.f32.mrf.mxu0
    %v4471 = vadd.f32 %v4430, %v4470
    %4472 = vmatmul.f32.gmra.mxu0 %v3011
    %v4473 = vpop.f32.mrf.mxu0
    %v4474 = vadd.f32 %v4433, %v4473
    %4475 = vmatmul.f32.gmra.mxu0 %v3025
    %v4476 = vpop.f32.mrf.mxu0
    %v4477 = vadd.f32 %v4436, %v4476
    %4478 = vmatmul.f32.gmra.mxu0 %v3039
    %v4479 = vpop.f32.mrf.mxu0
    %v4480 = vadd.f32 %v4439, %v4479
    %4481 = vdwg.mxu0
    %4482 = vmatpush.msra.mxu0 %v3700
    %4483 = vmatpush.msra.mxu0 %v3696
    %4484 = vmatpush.msra.mxu0 %v3692
    %4485 = vmatpush.msra.mxu0 %v3688
    %4486 = vmatpush.msra.mxu0 %v3684
    %4487 = vmatpush.msra.mxu0 %v3680
    %4488 = vmatpush.msra.mxu0 %v3676
    %4489 = vmatpush.msra.mxu0 %v3672
    %4490 = vmatpush.msra.mxu0 %v3668
    %4491 = vmatpush.msra.mxu0 %v3664
    %4492 = vmatpush.msra.mxu0 %v3660
    %4493 = vmatpush.msra.mxu0 %v3656
    %4494 = vmatpush.msra.mxu0 %v3652
    %4495 = vmatpush.msra.mxu0 %v3648
    %4496 = vmatpush.msra.mxu0 %v3644
    %4497 = vmatpush.msra.mxu0 %v3640
    %4498 = vmatmul.f32.gmra.mxu0 %v2948
    %v4499 = vpop.f32.mrf.mxu0
    %v4500 = vadd.f32 %v4459, %v4499
    %4501 = vmatmul.f32.gmra.mxu0 %v2962
    %v4502 = vpop.f32.mrf.mxu0
    %v4503 = vadd.f32 %v4462, %v4502
    %4504 = vmatmul.f32.gmra.mxu0 %v2976
    %v4505 = vpop.f32.mrf.mxu0
    %v4506 = vadd.f32 %v4465, %v4505
    %4507 = vmatmul.f32.gmra.mxu0 %v2990
    %v4508 = vpop.f32.mrf.mxu0
    %v4509 = vadd.f32 %v4468, %v4508
    %4510 = vmatmul.f32.gmra.mxu0 %v3004
    %v4511 = vpop.f32.mrf.mxu0
    %v4512 = vadd.f32 %v4471, %v4511
    %4513 = vmatmul.f32.gmra.mxu0 %v3018
    %v4514 = vpop.f32.mrf.mxu0
    %v4515 = vadd.f32 %v4474, %v4514
    %4516 = vmatmul.f32.gmra.mxu0 %v3032
    %v4517 = vpop.f32.mrf.mxu0
    %v4518 = vadd.f32 %v4477, %v4517
    %4519 = vmatmul.f32.gmra.mxu0 %v3046
    %v4520 = vpop.f32.mrf.mxu0
    %v4521 = vadd.f32 %v4480, %v4520
    %4522 = vdwg.mxu0
    %4523 = vmatpush.msra.mxu0 %v3125
    %4524 = vmatpush.msra.mxu0 %v3121
    %4525 = vmatpush.msra.mxu0 %v3117
    %4526 = vmatpush.msra.mxu0 %v3113
    %4527 = vmatpush.msra.mxu0 %v3109
    %4528 = vmatpush.msra.mxu0 %v3105
    %4529 = vmatpush.msra.mxu0 %v3101
    %4530 = vmatpush.msra.mxu0 %v3097
    %4531 = vmatpush.msra.mxu0 %v3093
    %4532 = vmatpush.msra.mxu0 %v3089
    %4533 = vmatpush.msra.mxu0 %v3085
    %4534 = vmatpush.msra.mxu0 %v3081
    %4535 = vmatpush.msra.mxu0 %v3077
    %4536 = vmatpush.msra.mxu0 %v3073
    %4537 = vmatpush.msra.mxu0 %v3069
    %4538 = vmatpush.msra.mxu0 %v3065
    %4539 = vmatmul.f32.gmra.mxu0 %v2333
    %v4540 = vpop.f32.mrf.mxu0
    %v4541 = vadd.f32 0.0, %v4540
    %4542 = vmatmul.f32.gmra.mxu0 %v2347
    %v4543 = vpop.f32.mrf.mxu0
    %v4544 = vadd.f32 0.0, %v4543
    %4545 = vmatmul.f32.gmra.mxu0 %v2361
    %v4546 = vpop.f32.mrf.mxu0
    %v4547 = vadd.f32 0.0, %v4546
    %4548 = vmatmul.f32.gmra.mxu0 %v2375
    %v4549 = vpop.f32.mrf.mxu0
    %v4550 = vadd.f32 0.0, %v4549
    %4551 = vmatmul.f32.gmra.mxu0 %v2389
    %v4552 = vpop.f32.mrf.mxu0
    %v4553 = vadd.f32 0.0, %v4552
    %4554 = vmatmul.f32.gmra.mxu0 %v2403
    %v4555 = vpop.f32.mrf.mxu0
    %v4556 = vadd.f32 0.0, %v4555
    %4557 = vmatmul.f32.gmra.mxu0 %v2417
    %v4558 = vpop.f32.mrf.mxu0
    %v4559 = vadd.f32 0.0, %v4558
    %4560 = vmatmul.f32.gmra.mxu0 %v2431
    %v4561 = vpop.f32.mrf.mxu0
    %v4562 = vadd.f32 0.0, %v4561
    %4563 = vdwg.mxu0
    %4564 = vmatpush.msra.mxu0 %v3189
    %4565 = vmatpush.msra.mxu0 %v3185
    %4566 = vmatpush.msra.mxu0 %v3181
    %4567 = vmatpush.msra.mxu0 %v3177
    %4568 = vmatpush.msra.mxu0 %v3173
    %4569 = vmatpush.msra.mxu0 %v3169
    %4570 = vmatpush.msra.mxu0 %v3165
    %4571 = vmatpush.msra.mxu0 %v3161
    %4572 = vmatpush.msra.mxu0 %v3157
    %4573 = vmatpush.msra.mxu0 %v3153
    %4574 = vmatpush.msra.mxu0 %v3149
    %4575 = vmatpush.msra.mxu0 %v3145
    %4576 = vmatpush.msra.mxu0 %v3141
    %4577 = vmatpush.msra.mxu0 %v3137
    %4578 = vmatpush.msra.mxu0 %v3133
    %4579 = vmatpush.msra.mxu0 %v3129
    %4580 = vmatmul.f32.gmra.mxu0 %v2340
    %v4581 = vpop.f32.mrf.mxu0
    %v4582 = vadd.f32 %v4541, %v4581
    %4583 = vmatmul.f32.gmra.mxu0 %v2354
    %v4584 = vpop.f32.mrf.mxu0
    %v4585 = vadd.f32 %v4544, %v4584
    %4586 = vmatmul.f32.gmra.mxu0 %v2368
    %v4587 = vpop.f32.mrf.mxu0
    %v4588 = vadd.f32 %v4547, %v4587
    %4589 = vmatmul.f32.gmra.mxu0 %v2382
    %v4590 = vpop.f32.mrf.mxu0
    %v4591 = vadd.f32 %v4550, %v4590
    %4592 = vmatmul.f32.gmra.mxu0 %v2396
    %v4593 = vpop.f32.mrf.mxu0
    %v4594 = vadd.f32 %v4553, %v4593
    %4595 = vmatmul.f32.gmra.mxu0 %v2410
    %v4596 = vpop.f32.mrf.mxu0
    %v4597 = vadd.f32 %v4556, %v4596
    %4598 = vmatmul.f32.gmra.mxu0 %v2424
    %v4599 = vpop.f32.mrf.mxu0
    %v4600 = vadd.f32 %v4559, %v4599
    %4601 = vmatmul.f32.gmra.mxu0 %v2438
    %v4602 = vpop.f32.mrf.mxu0
    %v4603 = vadd.f32 %v4562, %v4602
    %4604 = vdwg.mxu0
    %4605 = vmatpush.msra.mxu0 %v3253
    %4606 = vmatpush.msra.mxu0 %v3249
    %4607 = vmatpush.msra.mxu0 %v3245
    %4608 = vmatpush.msra.mxu0 %v3241
    %4609 = vmatpush.msra.mxu0 %v3237
    %4610 = vmatpush.msra.mxu0 %v3233
    %4611 = vmatpush.msra.mxu0 %v3229
    %4612 = vmatpush.msra.mxu0 %v3225
    %4613 = vmatpush.msra.mxu0 %v3221
    %4614 = vmatpush.msra.mxu0 %v3217
    %4615 = vmatpush.msra.mxu0 %v3213
    %4616 = vmatpush.msra.mxu0 %v3209
    %4617 = vmatpush.msra.mxu0 %v3205
    %4618 = vmatpush.msra.mxu0 %v3201
    %4619 = vmatpush.msra.mxu0 %v3197
    %4620 = vmatpush.msra.mxu0 %v3193
    %4621 = vmatmul.f32.gmra.mxu0 %v2485
    %v4622 = vpop.f32.mrf.mxu0
    %v4623 = vadd.f32 %v4582, %v4622
    %4624 = vmatmul.f32.gmra.mxu0 %v2499
    %v4625 = vpop.f32.mrf.mxu0
    %v4626 = vadd.f32 %v4585, %v4625
    %4627 = vmatmul.f32.gmra.mxu0 %v2513
    %v4628 = vpop.f32.mrf.mxu0
    %v4629 = vadd.f32 %v4588, %v4628
    %4630 = vmatmul.f32.gmra.mxu0 %v2527
    %v4631 = vpop.f32.mrf.mxu0
    %v4632 = vadd.f32 %v4591, %v4631
    %4633 = vmatmul.f32.gmra.mxu0 %v2541
    %v4634 = vpop.f32.mrf.mxu0
    %v4635 = vadd.f32 %v4594, %v4634
    %4636 = vmatmul.f32.gmra.mxu0 %v2555
    %v4637 = vpop.f32.mrf.mxu0
    %v4638 = vadd.f32 %v4597, %v4637
    %4639 = vmatmul.f32.gmra.mxu0 %v2569
    %v4640 = vpop.f32.mrf.mxu0
    %v4641 = vadd.f32 %v4600, %v4640
    %4642 = vmatmul.f32.gmra.mxu0 %v2583
    %v4643 = vpop.f32.mrf.mxu0
    %v4644 = vadd.f32 %v4603, %v4643
    %4645 = vdwg.mxu0
    %4646 = vmatpush.msra.mxu0 %v3317
    %4647 = vmatpush.msra.mxu0 %v3313
    %4648 = vmatpush.msra.mxu0 %v3309
    %4649 = vmatpush.msra.mxu0 %v3305
    %4650 = vmatpush.msra.mxu0 %v3301
    %4651 = vmatpush.msra.mxu0 %v3297
    %4652 = vmatpush.msra.mxu0 %v3293
    %4653 = vmatpush.msra.mxu0 %v3289
    %4654 = vmatpush.msra.mxu0 %v3285
    %4655 = vmatpush.msra.mxu0 %v3281
    %4656 = vmatpush.msra.mxu0 %v3277
    %4657 = vmatpush.msra.mxu0 %v3273
    %4658 = vmatpush.msra.mxu0 %v3269
    %4659 = vmatpush.msra.mxu0 %v3265
    %4660 = vmatpush.msra.mxu0 %v3261
    %4661 = vmatpush.msra.mxu0 %v3257
    %4662 = vmatmul.f32.gmra.mxu0 %v2492
    %v4663 = vpop.f32.mrf.mxu0
    %v4664 = vadd.f32 %v4623, %v4663
    %4665 = vmatmul.f32.gmra.mxu0 %v2506
    %v4666 = vpop.f32.mrf.mxu0
    %v4667 = vadd.f32 %v4626, %v4666
    %4668 = vmatmul.f32.gmra.mxu0 %v2520
    %v4669 = vpop.f32.mrf.mxu0
    %v4670 = vadd.f32 %v4629, %v4669
    %4671 = vmatmul.f32.gmra.mxu0 %v2534
    %v4672 = vpop.f32.mrf.mxu0
    %v4673 = vadd.f32 %v4632, %v4672
    %4674 = vmatmul.f32.gmra.mxu0 %v2548
    %v4675 = vpop.f32.mrf.mxu0
    %v4676 = vadd.f32 %v4635, %v4675
    %4677 = vmatmul.f32.gmra.mxu0 %v2562
    %v4678 = vpop.f32.mrf.mxu0
    %v4679 = vadd.f32 %v4638, %v4678
    %4680 = vmatmul.f32.gmra.mxu0 %v2576
    %v4681 = vpop.f32.mrf.mxu0
    %v4682 = vadd.f32 %v4641, %v4681
    %4683 = vmatmul.f32.gmra.mxu0 %v2590
    %v4684 = vpop.f32.mrf.mxu0
    %v4685 = vadd.f32 %v4644, %v4684
    %4686 = vdwg.mxu0
    %4687 = vmatpush.msra.mxu0 %v3381
    %4688 = vmatpush.msra.mxu0 %v3377
    %4689 = vmatpush.msra.mxu0 %v3373
    %4690 = vmatpush.msra.mxu0 %v3369
    %4691 = vmatpush.msra.mxu0 %v3365
    %4692 = vmatpush.msra.mxu0 %v3361
    %4693 = vmatpush.msra.mxu0 %v3357
    %4694 = vmatpush.msra.mxu0 %v3353
    %4695 = vmatpush.msra.mxu0 %v3349
    %4696 = vmatpush.msra.mxu0 %v3345
    %4697 = vmatpush.msra.mxu0 %v3341
    %4698 = vmatpush.msra.mxu0 %v3337
    %4699 = vmatpush.msra.mxu0 %v3333
    %4700 = vmatpush.msra.mxu0 %v3329
    %4701 = vmatpush.msra.mxu0 %v3325
    %4702 = vmatpush.msra.mxu0 %v3321
    %4703 = vmatmul.f32.gmra.mxu0 %v2637
    %v4704 = vpop.f32.mrf.mxu0
    %v4705 = vadd.f32 %v4664, %v4704
    %4706 = vmatmul.f32.gmra.mxu0 %v2651
    %v4707 = vpop.f32.mrf.mxu0
    %v4708 = vadd.f32 %v4667, %v4707
    %4709 = vmatmul.f32.gmra.mxu0 %v2665
    %v4710 = vpop.f32.mrf.mxu0
    %v4711 = vadd.f32 %v4670, %v4710
    %4712 = vmatmul.f32.gmra.mxu0 %v2679
    %v4713 = vpop.f32.mrf.mxu0
    %v4714 = vadd.f32 %v4673, %v4713
    %4715 = vmatmul.f32.gmra.mxu0 %v2693
    %v4716 = vpop.f32.mrf.mxu0
    %v4717 = vadd.f32 %v4676, %v4716
    %4718 = vmatmul.f32.gmra.mxu0 %v2707
    %v4719 = vpop.f32.mrf.mxu0
    %v4720 = vadd.f32 %v4679, %v4719
    %4721 = vmatmul.f32.gmra.mxu0 %v2721
    %v4722 = vpop.f32.mrf.mxu0
    %v4723 = vadd.f32 %v4682, %v4722
    %4724 = vmatmul.f32.gmra.mxu0 %v2735
    %v4725 = vpop.f32.mrf.mxu0
    %v4726 = vadd.f32 %v4685, %v4725
    %4727 = vdwg.mxu0
    %4728 = vmatpush.msra.mxu0 %v3445
    %4729 = vmatpush.msra.mxu0 %v3441
    %4730 = vmatpush.msra.mxu0 %v3437
    %4731 = vmatpush.msra.mxu0 %v3433
    %4732 = vmatpush.msra.mxu0 %v3429
    %4733 = vmatpush.msra.mxu0 %v3425
    %4734 = vmatpush.msra.mxu0 %v3421
    %4735 = vmatpush.msra.mxu0 %v3417
    %4736 = vmatpush.msra.mxu0 %v3413
    %4737 = vmatpush.msra.mxu0 %v3409
    %4738 = vmatpush.msra.mxu0 %v3405
    %4739 = vmatpush.msra.mxu0 %v3401
    %4740 = vmatpush.msra.mxu0 %v3397
    %4741 = vmatpush.msra.mxu0 %v3393
    %4742 = vmatpush.msra.mxu0 %v3389
    %4743 = vmatpush.msra.mxu0 %v3385
    %4744 = vmatmul.f32.gmra.mxu0 %v2644
    %v4745 = vpop.f32.mrf.mxu0
    %v4746 = vadd.f32 %v4705, %v4745
    %4747 = vmatmul.f32.gmra.mxu0 %v2658
    %v4748 = vpop.f32.mrf.mxu0
    %v4749 = vadd.f32 %v4708, %v4748
    %4750 = vmatmul.f32.gmra.mxu0 %v2672
    %v4751 = vpop.f32.mrf.mxu0
    %v4752 = vadd.f32 %v4711, %v4751
    %4753 = vmatmul.f32.gmra.mxu0 %v2686
    %v4754 = vpop.f32.mrf.mxu0
    %v4755 = vadd.f32 %v4714, %v4754
    %4756 = vmatmul.f32.gmra.mxu0 %v2700
    %v4757 = vpop.f32.mrf.mxu0
    %v4758 = vadd.f32 %v4717, %v4757
    %4759 = vmatmul.f32.gmra.mxu0 %v2714
    %v4760 = vpop.f32.mrf.mxu0
    %v4761 = vadd.f32 %v4720, %v4760
    %4762 = vmatmul.f32.gmra.mxu0 %v2728
    %v4763 = vpop.f32.mrf.mxu0
    %v4764 = vadd.f32 %v4723, %v4763
    %4765 = vmatmul.f32.gmra.mxu0 %v2742
    %v4766 = vpop.f32.mrf.mxu0
    %v4767 = vadd.f32 %v4726, %v4766
    %4768 = vdwg.mxu0
    %4769 = vmatpush.msra.mxu0 %v3509
    %4770 = vmatpush.msra.mxu0 %v3505
    %4771 = vmatpush.msra.mxu0 %v3501
    %4772 = vmatpush.msra.mxu0 %v3497
    %4773 = vmatpush.msra.mxu0 %v3493
    %4774 = vmatpush.msra.mxu0 %v3489
    %4775 = vmatpush.msra.mxu0 %v3485
    %4776 = vmatpush.msra.mxu0 %v3481
    %4777 = vmatpush.msra.mxu0 %v3477
    %4778 = vmatpush.msra.mxu0 %v3473
    %4779 = vmatpush.msra.mxu0 %v3469
    %4780 = vmatpush.msra.mxu0 %v3465
    %4781 = vmatpush.msra.mxu0 %v3461
    %4782 = vmatpush.msra.mxu0 %v3457
    %4783 = vmatpush.msra.mxu0 %v3453
    %4784 = vmatpush.msra.mxu0 %v3449
    %4785 = vmatmul.f32.gmra.mxu0 %v2789
    %v4786 = vpop.f32.mrf.mxu0
    %v4787 = vadd.f32 %v4746, %v4786
    %4788 = vmatmul.f32.gmra.mxu0 %v2803
    %v4789 = vpop.f32.mrf.mxu0
    %v4790 = vadd.f32 %v4749, %v4789
    %4791 = vmatmul.f32.gmra.mxu0 %v2817
    %v4792 = vpop.f32.mrf.mxu0
    %v4793 = vadd.f32 %v4752, %v4792
    %4794 = vmatmul.f32.gmra.mxu0 %v2831
    %v4795 = vpop.f32.mrf.mxu0
    %v4796 = vadd.f32 %v4755, %v4795
    %4797 = vmatmul.f32.gmra.mxu0 %v2845
    %v4798 = vpop.f32.mrf.mxu0
    %v4799 = vadd.f32 %v4758, %v4798
    %4800 = vmatmul.f32.gmra.mxu0 %v2859
    %v4801 = vpop.f32.mrf.mxu0
    %v4802 = vadd.f32 %v4761, %v4801
    %4803 = vmatmul.f32.gmra.mxu0 %v2873
    %v4804 = vpop.f32.mrf.mxu0
    %v4805 = vadd.f32 %v4764, %v4804
    %4806 = vmatmul.f32.gmra.mxu0 %v2887
    %v4807 = vpop.f32.mrf.mxu0
    %v4808 = vadd.f32 %v4767, %v4807
    %4809 = vdwg.mxu0
    %4810 = vmatpush.msra.mxu0 %v3573
    %4811 = vmatpush.msra.mxu0 %v3569
    %4812 = vmatpush.msra.mxu0 %v3565
    %4813 = vmatpush.msra.mxu0 %v3561
    %4814 = vmatpush.msra.mxu0 %v3557
    %4815 = vmatpush.msra.mxu0 %v3553
    %4816 = vmatpush.msra.mxu0 %v3549
    %4817 = vmatpush.msra.mxu0 %v3545
    %4818 = vmatpush.msra.mxu0 %v3541
    %4819 = vmatpush.msra.mxu0 %v3537
    %4820 = vmatpush.msra.mxu0 %v3533
    %4821 = vmatpush.msra.mxu0 %v3529
    %4822 = vmatpush.msra.mxu0 %v3525
    %4823 = vmatpush.msra.mxu0 %v3521
    %4824 = vmatpush.msra.mxu0 %v3517
    %4825 = vmatpush.msra.mxu0 %v3513
    %4826 = vmatmul.f32.gmra.mxu0 %v2796
    %v4827 = vpop.f32.mrf.mxu0
    %v4828 = vadd.f32 %v4787, %v4827
    %4829 = vmatmul.f32.gmra.mxu0 %v2810
    %v4830 = vpop.f32.mrf.mxu0
    %v4831 = vadd.f32 %v4790, %v4830
    %4832 = vmatmul.f32.gmra.mxu0 %v2824
    %v4833 = vpop.f32.mrf.mxu0
    %v4834 = vadd.f32 %v4793, %v4833
    %4835 = vmatmul.f32.gmra.mxu0 %v2838
    %v4836 = vpop.f32.mrf.mxu0
    %v4837 = vadd.f32 %v4796, %v4836
    %4838 = vmatmul.f32.gmra.mxu0 %v2852
    %v4839 = vpop.f32.mrf.mxu0
    %v4840 = vadd.f32 %v4799, %v4839
    %4841 = vmatmul.f32.gmra.mxu0 %v2866
    %v4842 = vpop.f32.mrf.mxu0
    %v4843 = vadd.f32 %v4802, %v4842
    %4844 = vmatmul.f32.gmra.mxu0 %v2880
    %v4845 = vpop.f32.mrf.mxu0
    %v4846 = vadd.f32 %v4805, %v4845
    %4847 = vmatmul.f32.gmra.mxu0 %v2894
    %v4848 = vpop.f32.mrf.mxu0
    %v4849 = vadd.f32 %v4808, %v4848
    %4850 = vdwg.mxu0
    %4851 = vmatpush.msra.mxu0 %v3637
    %4852 = vmatpush.msra.mxu0 %v3633
    %4853 = vmatpush.msra.mxu0 %v3629
    %4854 = vmatpush.msra.mxu0 %v3625
    %4855 = vmatpush.msra.mxu0 %v3621
    %4856 = vmatpush.msra.mxu0 %v3617
    %4857 = vmatpush.msra.mxu0 %v3613
    %4858 = vmatpush.msra.mxu0 %v3609
    %4859 = vmatpush.msra.mxu0 %v3605
    %4860 = vmatpush.msra.mxu0 %v3601
    %4861 = vmatpush.msra.mxu0 %v3597
    %4862 = vmatpush.msra.mxu0 %v3593
    %4863 = vmatpush.msra.mxu0 %v3589
    %4864 = vmatpush.msra.mxu0 %v3585
    %4865 = vmatpush.msra.mxu0 %v3581
    %4866 = vmatpush.msra.mxu0 %v3577
    %4867 = vmatmul.f32.gmra.mxu0 %v2941
    %v4868 = vpop.f32.mrf.mxu0
    %v4869 = vadd.f32 %v4828, %v4868
    %4870 = vmatmul.f32.gmra.mxu0 %v2955
    %v4871 = vpop.f32.mrf.mxu0
    %v4872 = vadd.f32 %v4831, %v4871
    %4873 = vmatmul.f32.gmra.mxu0 %v2969
    %v4874 = vpop.f32.mrf.mxu0
    %v4875 = vadd.f32 %v4834, %v4874
    %4876 = vmatmul.f32.gmra.mxu0 %v2983
    %v4877 = vpop.f32.mrf.mxu0
    %v4878 = vadd.f32 %v4837, %v4877
    %4879 = vmatmul.f32.gmra.mxu0 %v2997
    %v4880 = vpop.f32.mrf.mxu0
    %v4881 = vadd.f32 %v4840, %v4880
    %4882 = vmatmul.f32.gmra.mxu0 %v3011
    %v4883 = vpop.f32.mrf.mxu0
    %v4884 = vadd.f32 %v4843, %v4883
    %4885 = vmatmul.f32.gmra.mxu0 %v3025
    %v4886 = vpop.f32.mrf.mxu0
    %v4887 = vadd.f32 %v4846, %v4886
    %4888 = vmatmul.f32.gmra.mxu0 %v3039
    %v4889 = vpop.f32.mrf.mxu0
    %v4890 = vadd.f32 %v4849, %v4889
    %4891 = vdwg.mxu0
    %4892 = vmatpush.msra.mxu0 %v3701
    %4893 = vmatpush.msra.mxu0 %v3697
    %4894 = vmatpush.msra.mxu0 %v3693
    %4895 = vmatpush.msra.mxu0 %v3689
    %4896 = vmatpush.msra.mxu0 %v3685
    %4897 = vmatpush.msra.mxu0 %v3681
    %4898 = vmatpush.msra.mxu0 %v3677
    %4899 = vmatpush.msra.mxu0 %v3673
    %4900 = vmatpush.msra.mxu0 %v3669
    %4901 = vmatpush.msra.mxu0 %v3665
    %4902 = vmatpush.msra.mxu0 %v3661
    %4903 = vmatpush.msra.mxu0 %v3657
    %4904 = vmatpush.msra.mxu0 %v3653
    %4905 = vmatpush.msra.mxu0 %v3649
    %4906 = vmatpush.msra.mxu0 %v3645
    %4907 = vmatpush.msra.mxu0 %v3641
    %4908 = vmatmul.f32.gmra.mxu0 %v2948
    %v4909 = vpop.f32.mrf.mxu0
    %v4910 = vadd.f32 %v4869, %v4909
    %4911 = vmatmul.f32.gmra.mxu0 %v2962
    %v4912 = vpop.f32.mrf.mxu0
    %v4913 = vadd.f32 %v4872, %v4912
    %4914 = vmatmul.f32.gmra.mxu0 %v2976
    %v4915 = vpop.f32.mrf.mxu0
    %v4916 = vadd.f32 %v4875, %v4915
    %4917 = vmatmul.f32.gmra.mxu0 %v2990
    %v4918 = vpop.f32.mrf.mxu0
    %v4919 = vadd.f32 %v4878, %v4918
    %4920 = vmatmul.f32.gmra.mxu0 %v3004
    %v4921 = vpop.f32.mrf.mxu0
    %v4922 = vadd.f32 %v4881, %v4921
    %4923 = vmatmul.f32.gmra.mxu0 %v3018
    %v4924 = vpop.f32.mrf.mxu0
    %v4925 = vadd.f32 %v4884, %v4924
    %4926 = vmatmul.f32.gmra.mxu0 %v3032
    %v4927 = vpop.f32.mrf.mxu0
    %v4928 = vadd.f32 %v4887, %v4927
    %4929 = vmatmul.f32.gmra.mxu0 %v3046
    %v4930 = vpop.f32.mrf.mxu0
    %v4931 = vadd.f32 %v4890, %v4930
    %4932 = vdwg.mxu0
    %4933 = vmatpush.msra.mxu0 %v3126
    %4934 = vmatpush.msra.mxu0 %v3122
    %4935 = vmatpush.msra.mxu0 %v3118
    %4936 = vmatpush.msra.mxu0 %v3114
    %4937 = vmatpush.msra.mxu0 %v3110
    %4938 = vmatpush.msra.mxu0 %v3106
    %4939 = vmatpush.msra.mxu0 %v3102
    %4940 = vmatpush.msra.mxu0 %v3098
    %4941 = vmatpush.msra.mxu0 %v3094
    %4942 = vmatpush.msra.mxu0 %v3090
    %4943 = vmatpush.msra.mxu0 %v3086
    %4944 = vmatpush.msra.mxu0 %v3082
    %4945 = vmatpush.msra.mxu0 %v3078
    %4946 = vmatpush.msra.mxu0 %v3074
    %4947 = vmatpush.msra.mxu0 %v3070
    %4948 = vmatpush.msra.mxu0 %v3066
    %4949 = vmatmul.f32.gmra.mxu0 %v2333
    %v4950 = vpop.f32.mrf.mxu0
    %v4951 = vadd.f32 0.0, %v4950
    %4952 = vmatmul.f32.gmra.mxu0 %v2347
    %v4953 = vpop.f32.mrf.mxu0
    %v4954 = vadd.f32 0.0, %v4953
    %4955 = vmatmul.f32.gmra.mxu0 %v2361
    %v4956 = vpop.f32.mrf.mxu0
    %v4957 = vadd.f32 0.0, %v4956
    %4958 = vmatmul.f32.gmra.mxu0 %v2375
    %v4959 = vpop.f32.mrf.mxu0
    %v4960 = vadd.f32 0.0, %v4959
    %4961 = vmatmul.f32.gmra.mxu0 %v2389
    %v4962 = vpop.f32.mrf.mxu0
    %v4963 = vadd.f32 0.0, %v4962
    %4964 = vmatmul.f32.gmra.mxu0 %v2403
    %v4965 = vpop.f32.mrf.mxu0
    %v4966 = vadd.f32 0.0, %v4965
    %4967 = vmatmul.f32.gmra.mxu0 %v2417
    %v4968 = vpop.f32.mrf.mxu0
    %v4969 = vadd.f32 0.0, %v4968
    %4970 = vmatmul.f32.gmra.mxu0 %v2431
    %v4971 = vpop.f32.mrf.mxu0
    %v4972 = vadd.f32 0.0, %v4971
    %4973 = vdwg.mxu0
    %4974 = vmatpush.msra.mxu0 %v3190
    %4975 = vmatpush.msra.mxu0 %v3186
    %4976 = vmatpush.msra.mxu0 %v3182
    %4977 = vmatpush.msra.mxu0 %v3178
    %4978 = vmatpush.msra.mxu0 %v3174
    %4979 = vmatpush.msra.mxu0 %v3170
    %4980 = vmatpush.msra.mxu0 %v3166
    %4981 = vmatpush.msra.mxu0 %v3162
    %4982 = vmatpush.msra.mxu0 %v3158
    %4983 = vmatpush.msra.mxu0 %v3154
    %4984 = vmatpush.msra.mxu0 %v3150
    %4985 = vmatpush.msra.mxu0 %v3146
    %4986 = vmatpush.msra.mxu0 %v3142
    %4987 = vmatpush.msra.mxu0 %v3138
    %4988 = vmatpush.msra.mxu0 %v3134
    %4989 = vmatpush.msra.mxu0 %v3130
    %4990 = vmatmul.f32.gmra.mxu0 %v2340
    %v4991 = vpop.f32.mrf.mxu0
    %v4992 = vadd.f32 %v4951, %v4991
    %4993 = vmatmul.f32.gmra.mxu0 %v2354
    %v4994 = vpop.f32.mrf.mxu0
    %v4995 = vadd.f32 %v4954, %v4994
    %4996 = vmatmul.f32.gmra.mxu0 %v2368
    %v4997 = vpop.f32.mrf.mxu0
    %v4998 = vadd.f32 %v4957, %v4997
    %4999 = vmatmul.f32.gmra.mxu0 %v2382
    %v5000 = vpop.f32.mrf.mxu0
    %v5001 = vadd.f32 %v4960, %v5000
    %5002 = vmatmul.f32.gmra.mxu0 %v2396
    %v5003 = vpop.f32.mrf.mxu0
    %v5004 = vadd.f32 %v4963, %v5003
    %5005 = vmatmul.f32.gmra.mxu0 %v2410
    %v5006 = vpop.f32.mrf.mxu0
    %v5007 = vadd.f32 %v4966, %v5006
    %5008 = vmatmul.f32.gmra.mxu0 %v2424
    %v5009 = vpop.f32.mrf.mxu0
    %v5010 = vadd.f32 %v4969, %v5009
    %5011 = vmatmul.f32.gmra.mxu0 %v2438
    %v5012 = vpop.f32.mrf.mxu0
    %v5013 = vadd.f32 %v4972, %v5012
    %5014 = vdwg.mxu0
    %5015 = vmatpush.msra.mxu0 %v3254
    %5016 = vmatpush.msra.mxu0 %v3250
    %5017 = vmatpush.msra.mxu0 %v3246
    %5018 = vmatpush.msra.mxu0 %v3242
    %5019 = vmatpush.msra.mxu0 %v3238
    %5020 = vmatpush.msra.mxu0 %v3234
    %5021 = vmatpush.msra.mxu0 %v3230
    %5022 = vmatpush.msra.mxu0 %v3226
    %5023 = vmatpush.msra.mxu0 %v3222
    %5024 = vmatpush.msra.mxu0 %v3218
    %5025 = vmatpush.msra.mxu0 %v3214
    %5026 = vmatpush.msra.mxu0 %v3210
    %5027 = vmatpush.msra.mxu0 %v3206
    %5028 = vmatpush.msra.mxu0 %v3202
    %5029 = vmatpush.msra.mxu0 %v3198
    %5030 = vmatpush.msra.mxu0 %v3194
    %5031 = vmatmul.f32.gmra.mxu0 %v2485
    %v5032 = vpop.f32.mrf.mxu0
    %v5033 = vadd.f32 %v4992, %v5032
    %5034 = vmatmul.f32.gmra.mxu0 %v2499
    %v5035 = vpop.f32.mrf.mxu0
    %v5036 = vadd.f32 %v4995, %v5035
    %5037 = vmatmul.f32.gmra.mxu0 %v2513
    %v5038 = vpop.f32.mrf.mxu0
    %v5039 = vadd.f32 %v4998, %v5038
    %5040 = vmatmul.f32.gmra.mxu0 %v2527
    %v5041 = vpop.f32.mrf.mxu0
    %v5042 = vadd.f32 %v5001, %v5041
    %5043 = vmatmul.f32.gmra.mxu0 %v2541
    %v5044 = vpop.f32.mrf.mxu0
    %v5045 = vadd.f32 %v5004, %v5044
    %5046 = vmatmul.f32.gmra.mxu0 %v2555
    %v5047 = vpop.f32.mrf.mxu0
    %v5048 = vadd.f32 %v5007, %v5047
    %5049 = vmatmul.f32.gmra.mxu0 %v2569
    %v5050 = vpop.f32.mrf.mxu0
    %v5051 = vadd.f32 %v5010, %v5050
    %5052 = vmatmul.f32.gmra.mxu0 %v2583
    %v5053 = vpop.f32.mrf.mxu0
    %v5054 = vadd.f32 %v5013, %v5053
    %5055 = vdwg.mxu0
    %5056 = vmatpush.msra.mxu0 %v3318
    %5057 = vmatpush.msra.mxu0 %v3314
    %5058 = vmatpush.msra.mxu0 %v3310
    %5059 = vmatpush.msra.mxu0 %v3306
    %5060 = vmatpush.msra.mxu0 %v3302
    %5061 = vmatpush.msra.mxu0 %v3298
    %5062 = vmatpush.msra.mxu0 %v3294
    %5063 = vmatpush.msra.mxu0 %v3290
    %5064 = vmatpush.msra.mxu0 %v3286
    %5065 = vmatpush.msra.mxu0 %v3282
    %5066 = vmatpush.msra.mxu0 %v3278
    %5067 = vmatpush.msra.mxu0 %v3274
    %5068 = vmatpush.msra.mxu0 %v3270
    %5069 = vmatpush.msra.mxu0 %v3266
    %5070 = vmatpush.msra.mxu0 %v3262
    %5071 = vmatpush.msra.mxu0 %v3258
    %5072 = vmatmul.f32.gmra.mxu0 %v2492
    %v5073 = vpop.f32.mrf.mxu0
    %v5074 = vadd.f32 %v5033, %v5073
    %5075 = vmatmul.f32.gmra.mxu0 %v2506
    %v5076 = vpop.f32.mrf.mxu0
    %v5077 = vadd.f32 %v5036, %v5076
    %5078 = vmatmul.f32.gmra.mxu0 %v2520
    %v5079 = vpop.f32.mrf.mxu0
    %v5080 = vadd.f32 %v5039, %v5079
    %5081 = vmatmul.f32.gmra.mxu0 %v2534
    %v5082 = vpop.f32.mrf.mxu0
    %v5083 = vadd.f32 %v5042, %v5082
    %5084 = vmatmul.f32.gmra.mxu0 %v2548
    %v5085 = vpop.f32.mrf.mxu0
    %v5086 = vadd.f32 %v5045, %v5085
    %5087 = vmatmul.f32.gmra.mxu0 %v2562
    %v5088 = vpop.f32.mrf.mxu0
    %v5089 = vadd.f32 %v5048, %v5088
    %5090 = vmatmul.f32.gmra.mxu0 %v2576
    %v5091 = vpop.f32.mrf.mxu0
    %v5092 = vadd.f32 %v5051, %v5091
    %5093 = vmatmul.f32.gmra.mxu0 %v2590
    %v5094 = vpop.f32.mrf.mxu0
    %v5095 = vadd.f32 %v5054, %v5094
    %5096 = vdwg.mxu0
    %5097 = vmatpush.msra.mxu0 %v3382
    %5098 = vmatpush.msra.mxu0 %v3378
    %5099 = vmatpush.msra.mxu0 %v3374
    %5100 = vmatpush.msra.mxu0 %v3370
    %5101 = vmatpush.msra.mxu0 %v3366
    %5102 = vmatpush.msra.mxu0 %v3362
    %5103 = vmatpush.msra.mxu0 %v3358
    %5104 = vmatpush.msra.mxu0 %v3354
    %5105 = vmatpush.msra.mxu0 %v3350
    %5106 = vmatpush.msra.mxu0 %v3346
    %5107 = vmatpush.msra.mxu0 %v3342
    %5108 = vmatpush.msra.mxu0 %v3338
    %5109 = vmatpush.msra.mxu0 %v3334
    %5110 = vmatpush.msra.mxu0 %v3330
    %5111 = vmatpush.msra.mxu0 %v3326
    %5112 = vmatpush.msra.mxu0 %v3322
    %5113 = vmatmul.f32.gmra.mxu0 %v2637
    %v5114 = vpop.f32.mrf.mxu0
    %v5115 = vadd.f32 %v5074, %v5114
    %5116 = vmatmul.f32.gmra.mxu0 %v2651
    %v5117 = vpop.f32.mrf.mxu0
    %v5118 = vadd.f32 %v5077, %v5117
    %5119 = vmatmul.f32.gmra.mxu0 %v2665
    %v5120 = vpop.f32.mrf.mxu0
    %v5121 = vadd.f32 %v5080, %v5120
    %5122 = vmatmul.f32.gmra.mxu0 %v2679
    %v5123 = vpop.f32.mrf.mxu0
    %v5124 = vadd.f32 %v5083, %v5123
    %5125 = vmatmul.f32.gmra.mxu0 %v2693
    %v5126 = vpop.f32.mrf.mxu0
    %v5127 = vadd.f32 %v5086, %v5126
    %5128 = vmatmul.f32.gmra.mxu0 %v2707
    %v5129 = vpop.f32.mrf.mxu0
    %v5130 = vadd.f32 %v5089, %v5129
    %5131 = vmatmul.f32.gmra.mxu0 %v2721
    %v5132 = vpop.f32.mrf.mxu0
    %v5133 = vadd.f32 %v5092, %v5132
    %5134 = vmatmul.f32.gmra.mxu0 %v2735
    %v5135 = vpop.f32.mrf.mxu0
    %v5136 = vadd.f32 %v5095, %v5135
    %5137 = vdwg.mxu0
    %5138 = vmatpush.msra.mxu0 %v3446
    %5139 = vmatpush.msra.mxu0 %v3442
    %5140 = vmatpush.msra.mxu0 %v3438
    %5141 = vmatpush.msra.mxu0 %v3434
    %5142 = vmatpush.msra.mxu0 %v3430
    %5143 = vmatpush.msra.mxu0 %v3426
    %5144 = vmatpush.msra.mxu0 %v3422
    %5145 = vmatpush.msra.mxu0 %v3418
    %5146 = vmatpush.msra.mxu0 %v3414
    %5147 = vmatpush.msra.mxu0 %v3410
    %5148 = vmatpush.msra.mxu0 %v3406
    %5149 = vmatpush.msra.mxu0 %v3402
    %5150 = vmatpush.msra.mxu0 %v3398
    %5151 = vmatpush.msra.mxu0 %v3394
    %5152 = vmatpush.msra.mxu0 %v3390
    %5153 = vmatpush.msra.mxu0 %v3386
    %5154 = vmatmul.f32.gmra.mxu0 %v2644
    %v5155 = vpop.f32.mrf.mxu0
    %v5156 = vadd.f32 %v5115, %v5155
    %5157 = vmatmul.f32.gmra.mxu0 %v2658
    %v5158 = vpop.f32.mrf.mxu0
    %v5159 = vadd.f32 %v5118, %v5158
    %5160 = vmatmul.f32.gmra.mxu0 %v2672
    %v5161 = vpop.f32.mrf.mxu0
    %v5162 = vadd.f32 %v5121, %v5161
    %5163 = vmatmul.f32.gmra.mxu0 %v2686
    %v5164 = vpop.f32.mrf.mxu0
    %v5165 = vadd.f32 %v5124, %v5164
    %5166 = vmatmul.f32.gmra.mxu0 %v2700
    %v5167 = vpop.f32.mrf.mxu0
    %v5168 = vadd.f32 %v5127, %v5167
    %5169 = vmatmul.f32.gmra.mxu0 %v2714
    %v5170 = vpop.f32.mrf.mxu0
    %v5171 = vadd.f32 %v5130, %v5170
    %5172 = vmatmul.f32.gmra.mxu0 %v2728
    %v5173 = vpop.f32.mrf.mxu0
    %v5174 = vadd.f32 %v5133, %v5173
    %5175 = vmatmul.f32.gmra.mxu0 %v2742
    %v5176 = vpop.f32.mrf.mxu0
    %v5177 = vadd.f32 %v5136, %v5176
    %5178 = vdwg.mxu0
    %5179 = vmatpush.msra.mxu0 %v3510
    %5180 = vmatpush.msra.mxu0 %v3506
    %5181 = vmatpush.msra.mxu0 %v3502
    %5182 = vmatpush.msra.mxu0 %v3498
    %5183 = vmatpush.msra.mxu0 %v3494
    %5184 = vmatpush.msra.mxu0 %v3490
    %5185 = vmatpush.msra.mxu0 %v3486
    %5186 = vmatpush.msra.mxu0 %v3482
    %5187 = vmatpush.msra.mxu0 %v3478
    %5188 = vmatpush.msra.mxu0 %v3474
    %5189 = vmatpush.msra.mxu0 %v3470
    %5190 = vmatpush.msra.mxu0 %v3466
    %5191 = vmatpush.msra.mxu0 %v3462
    %5192 = vmatpush.msra.mxu0 %v3458
    %5193 = vmatpush.msra.mxu0 %v3454
    %5194 = vmatpush.msra.mxu0 %v3450
    %5195 = vmatmul.f32.gmra.mxu0 %v2789
    %v5196 = vpop.f32.mrf.mxu0
    %v5197 = vadd.f32 %v5156, %v5196
    %5198 = vmatmul.f32.gmra.mxu0 %v2803
    %v5199 = vpop.f32.mrf.mxu0
    %v5200 = vadd.f32 %v5159, %v5199
    %5201 = vmatmul.f32.gmra.mxu0 %v2817
    %v5202 = vpop.f32.mrf.mxu0
    %v5203 = vadd.f32 %v5162, %v5202
    %5204 = vmatmul.f32.gmra.mxu0 %v2831
    %v5205 = vpop.f32.mrf.mxu0
    %v5206 = vadd.f32 %v5165, %v5205
    %5207 = vmatmul.f32.gmra.mxu0 %v2845
    %v5208 = vpop.f32.mrf.mxu0
    %v5209 = vadd.f32 %v5168, %v5208
    %5210 = vmatmul.f32.gmra.mxu0 %v2859
    %v5211 = vpop.f32.mrf.mxu0
    %v5212 = vadd.f32 %v5171, %v5211
    %5213 = vmatmul.f32.gmra.mxu0 %v2873
    %v5214 = vpop.f32.mrf.mxu0
    %v5215 = vadd.f32 %v5174, %v5214
    %5216 = vmatmul.f32.gmra.mxu0 %v2887
    %v5217 = vpop.f32.mrf.mxu0
    %v5218 = vadd.f32 %v5177, %v5217
    %5219 = vdwg.mxu0
    %5220 = vmatpush.msra.mxu0 %v3574
    %5221 = vmatpush.msra.mxu0 %v3570
    %5222 = vmatpush.msra.mxu0 %v3566
    %5223 = vmatpush.msra.mxu0 %v3562
    %5224 = vmatpush.msra.mxu0 %v3558
    %5225 = vmatpush.msra.mxu0 %v3554
    %5226 = vmatpush.msra.mxu0 %v3550
    %5227 = vmatpush.msra.mxu0 %v3546
    %5228 = vmatpush.msra.mxu0 %v3542
    %5229 = vmatpush.msra.mxu0 %v3538
    %5230 = vmatpush.msra.mxu0 %v3534
    %5231 = vmatpush.msra.mxu0 %v3530
    %5232 = vmatpush.msra.mxu0 %v3526
    %5233 = vmatpush.msra.mxu0 %v3522
    %5234 = vmatpush.msra.mxu0 %v3518
    %5235 = vmatpush.msra.mxu0 %v3514
    %5236 = vmatmul.f32.gmra.mxu0 %v2796
    %v5237 = vpop.f32.mrf.mxu0
    %v5238 = vadd.f32 %v5197, %v5237
    %5239 = vmatmul.f32.gmra.mxu0 %v2810
    %v5240 = vpop.f32.mrf.mxu0
    %v5241 = vadd.f32 %v5200, %v5240
    %5242 = vmatmul.f32.gmra.mxu0 %v2824
    %v5243 = vpop.f32.mrf.mxu0
    %v5244 = vadd.f32 %v5203, %v5243
    %5245 = vmatmul.f32.gmra.mxu0 %v2838
    %v5246 = vpop.f32.mrf.mxu0
    %v5247 = vadd.f32 %v5206, %v5246
    %5248 = vmatmul.f32.gmra.mxu0 %v2852
    %v5249 = vpop.f32.mrf.mxu0
    %v5250 = vadd.f32 %v5209, %v5249
    %5251 = vmatmul.f32.gmra.mxu0 %v2866
    %v5252 = vpop.f32.mrf.mxu0
    %v5253 = vadd.f32 %v5212, %v5252
    %5254 = vmatmul.f32.gmra.mxu0 %v2880
    %v5255 = vpop.f32.mrf.mxu0
    %v5256 = vadd.f32 %v5215, %v5255
    %5257 = vmatmul.f32.gmra.mxu0 %v2894
    %v5258 = vpop.f32.mrf.mxu0
    %v5259 = vadd.f32 %v5218, %v5258
    %5260 = vdwg.mxu0
    %5261 = vmatpush.msra.mxu0 %v3638
    %5262 = vmatpush.msra.mxu0 %v3634
    %5263 = vmatpush.msra.mxu0 %v3630
    %5264 = vmatpush.msra.mxu0 %v3626
    %5265 = vmatpush.msra.mxu0 %v3622
    %5266 = vmatpush.msra.mxu0 %v3618
    %5267 = vmatpush.msra.mxu0 %v3614
    %5268 = vmatpush.msra.mxu0 %v3610
    %5269 = vmatpush.msra.mxu0 %v3606
    %5270 = vmatpush.msra.mxu0 %v3602
    %5271 = vmatpush.msra.mxu0 %v3598
    %5272 = vmatpush.msra.mxu0 %v3594
    %5273 = vmatpush.msra.mxu0 %v3590
    %5274 = vmatpush.msra.mxu0 %v3586
    %5275 = vmatpush.msra.mxu0 %v3582
    %5276 = vmatpush.msra.mxu0 %v3578
    %5277 = vmatmul.f32.gmra.mxu0 %v2941
    %v5278 = vpop.f32.mrf.mxu0
    %v5279 = vadd.f32 %v5238, %v5278
    %5280 = vmatmul.f32.gmra.mxu0 %v2955
    %v5281 = vpop.f32.mrf.mxu0
    %v5282 = vadd.f32 %v5241, %v5281
    %5283 = vmatmul.f32.gmra.mxu0 %v2969
    %v5284 = vpop.f32.mrf.mxu0
    %v5285 = vadd.f32 %v5244, %v5284
    %5286 = vmatmul.f32.gmra.mxu0 %v2983
    %v5287 = vpop.f32.mrf.mxu0
    %v5288 = vadd.f32 %v5247, %v5287
    %5289 = vmatmul.f32.gmra.mxu0 %v2997
    %v5290 = vpop.f32.mrf.mxu0
    %v5291 = vadd.f32 %v5250, %v5290
    %5292 = vmatmul.f32.gmra.mxu0 %v3011
    %v5293 = vpop.f32.mrf.mxu0
    %v5294 = vadd.f32 %v5253, %v5293
    %5295 = vmatmul.f32.gmra.mxu0 %v3025
    %v5296 = vpop.f32.mrf.mxu0
    %v5297 = vadd.f32 %v5256, %v5296
    %5298 = vmatmul.f32.gmra.mxu0 %v3039
    %v5299 = vpop.f32.mrf.mxu0
    %v5300 = vadd.f32 %v5259, %v5299
    %5301 = vdwg.mxu0
    %5302 = vmatpush.msra.mxu0 %v3702
    %5303 = vmatpush.msra.mxu0 %v3698
    %5304 = vmatpush.msra.mxu0 %v3694
    %5305 = vmatpush.msra.mxu0 %v3690
    %5306 = vmatpush.msra.mxu0 %v3686
    %5307 = vmatpush.msra.mxu0 %v3682
    %5308 = vmatpush.msra.mxu0 %v3678
    %5309 = vmatpush.msra.mxu0 %v3674
    %5310 = vmatpush.msra.mxu0 %v3670
    %5311 = vmatpush.msra.mxu0 %v3666
    %5312 = vmatpush.msra.mxu0 %v3662
    %5313 = vmatpush.msra.mxu0 %v3658
    %5314 = vmatpush.msra.mxu0 %v3654
    %5315 = vmatpush.msra.mxu0 %v3650
    %5316 = vmatpush.msra.mxu0 %v3646
    %5317 = vmatpush.msra.mxu0 %v3642
    %5318 = vmatmul.f32.gmra.mxu0 %v2948
    %v5319 = vpop.f32.mrf.mxu0
    %v5320 = vadd.f32 %v5279, %v5319
    %5321 = vmatmul.f32.gmra.mxu0 %v2962
    %v5322 = vpop.f32.mrf.mxu0
    %v5323 = vadd.f32 %v5282, %v5322
    %5324 = vmatmul.f32.gmra.mxu0 %v2976
    %v5325 = vpop.f32.mrf.mxu0
    %v5326 = vadd.f32 %v5285, %v5325
    %5327 = vmatmul.f32.gmra.mxu0 %v2990
    %v5328 = vpop.f32.mrf.mxu0
    %v5329 = vadd.f32 %v5288, %v5328
    %5330 = vmatmul.f32.gmra.mxu0 %v3004
    %v5331 = vpop.f32.mrf.mxu0
    %v5332 = vadd.f32 %v5291, %v5331
    %5333 = vmatmul.f32.gmra.mxu0 %v3018
    %v5334 = vpop.f32.mrf.mxu0
    %v5335 = vadd.f32 %v5294, %v5334
    %5336 = vmatmul.f32.gmra.mxu0 %v3032
    %v5337 = vpop.f32.mrf.mxu0
    %v5338 = vadd.f32 %v5297, %v5337
    %5339 = vmatmul.f32.gmra.mxu0 %v3046
    %v5340 = vpop.f32.mrf.mxu0
    %v5341 = vadd.f32 %v5300, %v5340
    %5342 = vdwg.mxu0
    %v5343 = vld [vmem:[#allocation9] sm:$0xf]
    %v5345 = vperm.slane %v5343, 0
    %v5346 = vperm.slane %v5343, 1
    %v5347 = vperm.slane %v5343, 2
    %v5348 = vperm.slane %v5343, 3
    %v5353 = vmul.f32 %v4090, %v5345
    %v5354 = vmul.f32 %v4500, %v5346
    %v5355 = vmul.f32 %v4910, %v5347
    %v5356 = vmul.f32 %v5320, %v5348
    %v5357 = vmul.f32 %v4093, %v5345
    %v5358 = vmul.f32 %v4503, %v5346
    %v5359 = vmul.f32 %v4913, %v5347
    %v5360 = vmul.f32 %v5323, %v5348
    %v5361 = vmul.f32 %v4096, %v5345
    %v5362 = vmul.f32 %v4506, %v5346
    %v5363 = vmul.f32 %v4916, %v5347
    %v5364 = vmul.f32 %v5326, %v5348
    %v5365 = vmul.f32 %v4099, %v5345
    %v5366 = vmul.f32 %v4509, %v5346
    %v5367 = vmul.f32 %v4919, %v5347
    %v5368 = vmul.f32 %v5329, %v5348
    %v5369 = vmul.f32 %v4102, %v5345
    %v5370 = vmul.f32 %v4512, %v5346
    %v5371 = vmul.f32 %v4922, %v5347
    %v5372 = vmul.f32 %v5332, %v5348
    %v5373 = vmul.f32 %v4105, %v5345
    %v5374 = vmul.f32 %v4515, %v5346
    %v5375 = vmul.f32 %v4925, %v5347
    %v5376 = vmul.f32 %v5335, %v5348
    %v5377 = vmul.f32 %v4108, %v5345
    %v5378 = vmul.f32 %v4518, %v5346
    %v5379 = vmul.f32 %v4928, %v5347
    %v5380 = vmul.f32 %v5338, %v5348
    %v5381 = vmul.f32 %v4111, %v5345
    %v5382 = vmul.f32 %v4521, %v5346
    %v5383 = vmul.f32 %v4931, %v5347
    %v5384 = vmul.f32 %v5341, %v5348
    %v5385 = vld [vmem:[#allocation10] sm:$0xf]
    %v5387 = vperm.slane %v5385, 0
    %v5388 = vperm.slane %v5385, 1
    %v5389 = vperm.slane %v5385, 2
    %v5390 = vperm.slane %v5385, 3
    %v5395 = vadd.f32 %v5353, %v5387
    %v5396 = vadd.f32 %v5354, %v5388
    %v5397 = vadd.f32 %v5355, %v5389
    %v5398 = vadd.f32 %v5356, %v5390
    %v5399 = vadd.f32 %v5357, %v5387
    %v5400 = vadd.f32 %v5358, %v5388
    %v5401 = vadd.f32 %v5359, %v5389
    %v5402 = vadd.f32 %v5360, %v5390
    %v5403 = vadd.f32 %v5361, %v5387
    %v5404 = vadd.f32 %v5362, %v5388
    %v5405 = vadd.f32 %v5363, %v5389
    %v5406 = vadd.f32 %v5364, %v5390
    %v5407 = vadd.f32 %v5365, %v5387
    %v5408 = vadd.f32 %v5366, %v5388
    %v5409 = vadd.f32 %v5367, %v5389
    %v5410 = vadd.f32 %v5368, %v5390
    %v5411 = vadd.f32 %v5369, %v5387
    %v5412 = vadd.f32 %v5370, %v5388
    %v5413 = vadd.f32 %v5371, %v5389
    %v5414 = vadd.f32 %v5372, %v5390
    %v5415 = vadd.f32 %v5373, %v5387
    %v5416 = vadd.f32 %v5374, %v5388
    %v5417 = vadd.f32 %v5375, %v5389
    %v5418 = vadd.f32 %v5376, %v5390
    %v5419 = vadd.f32 %v5377, %v5387
    %v5420 = vadd.f32 %v5378, %v5388
    %v5421 = vadd.f32 %v5379, %v5389
    %v5422 = vadd.f32 %v5380, %v5390
    %v5423 = vadd.f32 %v5381, %v5387
    %v5424 = vadd.f32 %v5382, %v5388
    %v5425 = vadd.f32 %v5383, %v5389
    %v5426 = vadd.f32 %v5384, %v5390
    %v5427 = vmax.f32 %v5395, 0.0
    %v5428 = vmax.f32 %v5396, 0.0
    %v5429 = vmax.f32 %v5397, 0.0
    %v5430 = vmax.f32 %v5398, 0.0
    %v5431 = vmax.f32 %v5399, 0.0
    %v5432 = vmax.f32 %v5400, 0.0
    %v5433 = vmax.f32 %v5401, 0.0
    %v5434 = vmax.f32 %v5402, 0.0
    %v5435 = vmax.f32 %v5403, 0.0
    %v5436 = vmax.f32 %v5404, 0.0
    %v5437 = vmax.f32 %v5405, 0.0
    %v5438 = vmax.f32 %v5406, 0.0
    %v5439 = vmax.f32 %v5407, 0.0
    %v5440 = vmax.f32 %v5408, 0.0
    %v5441 = vmax.f32 %v5409, 0.0
    %v5442 = vmax.f32 %v5410, 0.0
    %v5443 = vmax.f32 %v5411, 0.0
    %v5444 = vmax.f32 %v5412, 0.0
    %v5445 = vmax.f32 %v5413, 0.0
    %v5446 = vmax.f32 %v5414, 0.0
    %v5447 = vmax.f32 %v5415, 0.0
    %v5448 = vmax.f32 %v5416, 0.0
    %v5449 = vmax.f32 %v5417, 0.0
    %v5450 = vmax.f32 %v5418, 0.0
    %v5451 = vmax.f32 %v5419, 0.0
    %v5452 = vmax.f32 %v5420, 0.0
    %v5453 = vmax.f32 %v5421, 0.0
    %v5454 = vmax.f32 %v5422, 0.0
    %v5455 = vmax.f32 %v5423, 0.0
    %v5456 = vmax.f32 %v5424, 0.0
    %v5457 = vmax.f32 %v5425, 0.0
    %v5458 = vmax.f32 %v5426, 0.0
    %v5459 = vmax.f32 %v5427, %v5429
    %v5460 = vmax.f32 %v5428, %v5430
    %v5461 = vmax.f32 %v5431, %v5433
    %v5462 = vmax.f32 %v5432, %v5434
    %v5463 = vmax.f32 %v5435, %v5437
    %v5464 = vmax.f32 %v5436, %v5438
    %v5465 = vmax.f32 %v5439, %v5441
    %v5466 = vmax.f32 %v5440, %v5442
    %v5467 = vmax.f32 %v5443, %v5445
    %v5468 = vmax.f32 %v5444, %v5446
    %v5469 = vmax.f32 %v5447, %v5449
    %v5470 = vmax.f32 %v5448, %v5450
    %v5471 = vmax.f32 %v5451, %v5453
    %v5472 = vmax.f32 %v5452, %v5454
    %v5473 = vmax.f32 %v5455, %v5457
    %v5474 = vmax.f32 %v5456, %v5458
    %v5491 = vrot.slane %v5460, 6
    %v5492 = vrot.slane %v5462, 6
    %v5493 = vrot.slane %v5464, 6
    %v5494 = vrot.slane %v5466, 6
    %v5495 = vrot.slane %v5468, 6
    %v5496 = vrot.slane %v5470, 6
    %v5497 = vrot.slane %v5472, 6
    %v5498 = vrot.slane %v5474, 6
    %v5499 = vsel %vm1476, %v5459, %v5491
    %v5500 = vsel %vm1478, %v5459, %v5491
    %v5501 = vrot.slane %v5500, 2
    %v5502 = vsel %vm1481, %v5459, %v5491
    %v5503 = vrot.slane %v5502, 4
    %v5504 = vsel %vm1484, %v5491, %v5459
    %v5505 = vrot.slane %v5504, 6
    %v5506 = vsel %vm1476, %v5461, %v5492
    %v5507 = vsel %vm1478, %v5461, %v5492
    %v5508 = vrot.slane %v5507, 2
    %v5509 = vsel %vm1481, %v5461, %v5492
    %v5510 = vrot.slane %v5509, 4
    %v5511 = vsel %vm1484, %v5492, %v5461
    %v5512 = vrot.slane %v5511, 6
    %v5513 = vsel %vm1476, %v5463, %v5493
    %v5514 = vsel %vm1478, %v5463, %v5493
    %v5515 = vrot.slane %v5514, 2
    %v5516 = vsel %vm1481, %v5463, %v5493
    %v5517 = vrot.slane %v5516, 4
    %v5518 = vsel %vm1484, %v5493, %v5463
    %v5519 = vrot.slane %v5518, 6
    %v5520 = vsel %vm1476, %v5465, %v5494
    %v5521 = vsel %vm1478, %v5465, %v5494
    %v5522 = vrot.slane %v5521, 2
    %v5523 = vsel %vm1481, %v5465, %v5494
    %v5524 = vrot.slane %v5523, 4
    %v5525 = vsel %vm1484, %v5494, %v5465
    %v5526 = vrot.slane %v5525, 6
    %v5527 = vsel %vm1476, %v5467, %v5495
    %v5528 = vsel %vm1478, %v5467, %v5495
    %v5529 = vrot.slane %v5528, 2
    %v5530 = vsel %vm1481, %v5467, %v5495
    %v5531 = vrot.slane %v5530, 4
    %v5532 = vsel %vm1484, %v5495, %v5467
    %v5533 = vrot.slane %v5532, 6
    %v5534 = vsel %vm1476, %v5469, %v5496
    %v5535 = vsel %vm1478, %v5469, %v5496
    %v5536 = vrot.slane %v5535, 2
    %v5537 = vsel %vm1481, %v5469, %v5496
    %v5538 = vrot.slane %v5537, 4
    %v5539 = vsel %vm1484, %v5496, %v5469
    %v5540 = vrot.slane %v5539, 6
    %v5541 = vsel %vm1476, %v5471, %v5497
    %v5542 = vsel %vm1478, %v5471, %v5497
    %v5543 = vrot.slane %v5542, 2
    %v5544 = vsel %vm1481, %v5471, %v5497
    %v5545 = vrot.slane %v5544, 4
    %v5546 = vsel %vm1484, %v5497, %v5471
    %v5547 = vrot.slane %v5546, 6
    %v5548 = vsel %vm1476, %v5473, %v5498
    %v5549 = vsel %vm1478, %v5473, %v5498
    %v5550 = vrot.slane %v5549, 2
    %v5551 = vsel %vm1481, %v5473, %v5498
    %v5552 = vrot.slane %v5551, 4
    %v5553 = vsel %vm1484, %v5498, %v5473
    %v5554 = vrot.slane %v5553, 6
    %v5587 = vrot.slane %v5499, 7
    %v5588 = vrot.slane %v5587, 2
    %v5589 = vrot.slane %v5501, 7
    %v5590 = vrot.slane %v5589, 2
    %v5591 = vrot.slane %v5503, 7
    %v5592 = vrot.slane %v5591, 2
    %v5593 = vrot.slane %v5505, 7
    %v5594 = vrot.slane %v5593, 2
    %v5595 = vrot.slane %v5506, 7
    %v5596 = vrot.slane %v5595, 2
    %v5597 = vrot.slane %v5508, 7
    %v5598 = vrot.slane %v5597, 2
    %v5599 = vrot.slane %v5510, 7
    %v5600 = vrot.slane %v5599, 2
    %v5601 = vrot.slane %v5512, 7
    %v5602 = vrot.slane %v5601, 2
    %v5603 = vrot.slane %v5513, 7
    %v5604 = vrot.slane %v5603, 2
    %v5605 = vrot.slane %v5515, 7
    %v5606 = vrot.slane %v5605, 2
    %v5607 = vrot.slane %v5517, 7
    %v5608 = vrot.slane %v5607, 2
    %v5609 = vrot.slane %v5519, 7
    %v5610 = vrot.slane %v5609, 2
    %v5611 = vrot.slane %v5520, 7
    %v5612 = vrot.slane %v5611, 2
    %v5613 = vrot.slane %v5522, 7
    %v5614 = vrot.slane %v5613, 2
    %v5615 = vrot.slane %v5524, 7
    %v5616 = vrot.slane %v5615, 2
    %v5617 = vrot.slane %v5526, 7
    %v5618 = vrot.slane %v5617, 2
    %v5619 = vrot.slane %v5527, 7
    %v5620 = vrot.slane %v5619, 2
    %v5621 = vrot.slane %v5529, 7
    %v5622 = vrot.slane %v5621, 2
    %v5623 = vrot.slane %v5531, 7
    %v5624 = vrot.slane %v5623, 2
    %v5625 = vrot.slane %v5533, 7
    %v5626 = vrot.slane %v5625, 2
    %v5627 = vrot.slane %v5534, 7
    %v5628 = vrot.slane %v5627, 2
    %v5629 = vrot.slane %v5536, 7
    %v5630 = vrot.slane %v5629, 2
    %v5631 = vrot.slane %v5538, 7
    %v5632 = vrot.slane %v5631, 2
    %v5633 = vrot.slane %v5540, 7
    %v5634 = vrot.slane %v5633, 2
    %v5635 = vrot.slane %v5541, 7
    %v5636 = vrot.slane %v5635, 2
    %v5637 = vrot.slane %v5543, 7
    %v5638 = vrot.slane %v5637, 2
    %v5639 = vrot.slane %v5545, 7
    %v5640 = vrot.slane %v5639, 2
    %v5641 = vrot.slane %v5547, 7
    %v5642 = vrot.slane %v5641, 2
    %v5643 = vrot.slane %v5548, 7
    %v5644 = vrot.slane %v5643, 2
    %v5645 = vrot.slane %v5550, 7
    %v5646 = vrot.slane %v5645, 2
    %v5647 = vrot.slane %v5552, 7
    %v5648 = vrot.slane %v5647, 2
    %v5649 = vrot.slane %v5554, 7
    %v5650 = vrot.slane %v5649, 2
    %v5683 = vmax.f32 %v5499, %v5588
    %v5684 = vmax.f32 %v5501, %v5590
    %v5685 = vmax.f32 %v5503, %v5592
    %v5686 = vmax.f32 %v5505, %v5594
    %v5687 = vmax.f32 %v5506, %v5596
    %v5688 = vmax.f32 %v5508, %v5598
    %v5689 = vmax.f32 %v5510, %v5600
    %v5690 = vmax.f32 %v5512, %v5602
    %v5691 = vmax.f32 %v5513, %v5604
    %v5692 = vmax.f32 %v5515, %v5606
    %v5693 = vmax.f32 %v5517, %v5608
    %v5694 = vmax.f32 %v5519, %v5610
    %v5695 = vmax.f32 %v5520, %v5612
    %v5696 = vmax.f32 %v5522, %v5614
    %v5697 = vmax.f32 %v5524, %v5616
    %v5698 = vmax.f32 %v5526, %v5618
    %v5699 = vmax.f32 %v5527, %v5620
    %v5700 = vmax.f32 %v5529, %v5622
    %v5701 = vmax.f32 %v5531, %v5624
    %v5702 = vmax.f32 %v5533, %v5626
    %v5703 = vmax.f32 %v5534, %v5628
    %v5704 = vmax.f32 %v5536, %v5630
    %v5705 = vmax.f32 %v5538, %v5632
    %v5706 = vmax.f32 %v5540, %v5634
    %v5707 = vmax.f32 %v5541, %v5636
    %v5708 = vmax.f32 %v5543, %v5638
    %v5709 = vmax.f32 %v5545, %v5640
    %v5710 = vmax.f32 %v5547, %v5642
    %v5711 = vmax.f32 %v5548, %v5644
    %v5712 = vmax.f32 %v5550, %v5646
    %v5713 = vmax.f32 %v5552, %v5648
    %v5714 = vmax.f32 %v5554, %v5650
    %v5723 = vperm.slane %v5683, 0
    %v5724 = vperm.slane %v5683, 2
    %v5725 = vperm.slane %v5687, 0
    %v5726 = vperm.slane %v5687, 2
    %v5727 = vperm.slane %v5691, 0
    %v5728 = vperm.slane %v5691, 2
    %v5729 = vperm.slane %v5695, 0
    %v5730 = vperm.slane %v5695, 2
    %v5731 = vperm.slane %v5699, 0
    %v5732 = vperm.slane %v5699, 2
    %v5733 = vperm.slane %v5703, 0
    %v5734 = vperm.slane %v5703, 2
    %v5735 = vperm.slane %v5707, 0
    %v5736 = vperm.slane %v5707, 2
    %v5737 = vperm.slane %v5711, 0
    %v5738 = vperm.slane %v5711, 2
    %v5739 = vsel %vm2320, %v5725, %v5723
    %v5740 = vsel %vm2322, %v5727, %v5739
    %v5741 = vsel %vm2324, %v5729, %v5740
    %v5742 = vsel %vm2326, %v5731, %v5741
    %v5743 = vsel %vm2328, %v5733, %v5742
    %v5744 = vsel %vm2330, %v5735, %v5743
    %v5745 = vsel %vm2332, %v5737, %v5744
    %v5746 = vsel %vm2320, %v5726, %v5724
    %v5747 = vsel %vm2322, %v5728, %v5746
    %v5748 = vsel %vm2324, %v5730, %v5747
    %v5749 = vsel %vm2326, %v5732, %v5748
    %v5750 = vsel %vm2328, %v5734, %v5749
    %v5751 = vsel %vm2330, %v5736, %v5750
    %v5752 = vsel %vm2332, %v5738, %v5751
    %v5763 = vperm.slane %v5684, 0
    %v5764 = vperm.slane %v5684, 2
    %v5765 = vperm.slane %v5688, 0
    %v5766 = vperm.slane %v5688, 2
    %v5767 = vperm.slane %v5692, 0
    %v5768 = vperm.slane %v5692, 2
    %v5769 = vperm.slane %v5696, 0
    %v5770 = vperm.slane %v5696, 2
    %v5771 = vperm.slane %v5700, 0
    %v5772 = vperm.slane %v5700, 2
    %v5773 = vperm.slane %v5704, 0
    %v5774 = vperm.slane %v5704, 2
    %v5775 = vperm.slane %v5708, 0
    %v5776 = vperm.slane %v5708, 2
    %v5777 = vperm.slane %v5712, 0
    %v5778 = vperm.slane %v5712, 2
    %v5779 = vsel %vm2320, %v5765, %v5763
    %v5780 = vsel %vm2322, %v5767, %v5779
    %v5781 = vsel %vm2324, %v5769, %v5780
    %v5782 = vsel %vm2326, %v5771, %v5781
    %v5783 = vsel %vm2328, %v5773, %v5782
    %v5784 = vsel %vm2330, %v5775, %v5783
    %v5785 = vsel %vm2332, %v5777, %v5784
    %v5786 = vsel %vm2320, %v5766, %v5764
    %v5787 = vsel %vm2322, %v5768, %v5786
    %v5788 = vsel %vm2324, %v5770, %v5787
    %v5789 = vsel %vm2326, %v5772, %v5788
    %v5790 = vsel %vm2328, %v5774, %v5789
    %v5791 = vsel %vm2330, %v5776, %v5790
    %v5792 = vsel %vm2332, %v5778, %v5791
    %v5803 = vperm.slane %v5685, 0
    %v5804 = vperm.slane %v5685, 2
    %v5805 = vperm.slane %v5689, 0
    %v5806 = vperm.slane %v5689, 2
    %v5807 = vperm.slane %v5693, 0
    %v5808 = vperm.slane %v5693, 2
    %v5809 = vperm.slane %v5697, 0
    %v5810 = vperm.slane %v5697, 2
    %v5811 = vperm.slane %v5701, 0
    %v5812 = vperm.slane %v5701, 2
    %v5813 = vperm.slane %v5705, 0
    %v5814 = vperm.slane %v5705, 2
    %v5815 = vperm.slane %v5709, 0
    %v5816 = vperm.slane %v5709, 2
    %v5817 = vperm.slane %v5713, 0
    %v5818 = vperm.slane %v5713, 2
    %v5819 = vsel %vm2320, %v5805, %v5803
    %v5820 = vsel %vm2322, %v5807, %v5819
    %v5821 = vsel %vm2324, %v5809, %v5820
    %v5822 = vsel %vm2326, %v5811, %v5821
    %v5823 = vsel %vm2328, %v5813, %v5822
    %v5824 = vsel %vm2330, %v5815, %v5823
    %v5825 = vsel %vm2332, %v5817, %v5824
    %v5826 = vsel %vm2320, %v5806, %v5804
    %v5827 = vsel %vm2322, %v5808, %v5826
    %v5828 = vsel %vm2324, %v5810, %v5827
    %v5829 = vsel %vm2326, %v5812, %v5828
    %v5830 = vsel %vm2328, %v5814, %v5829
    %v5831 = vsel %vm2330, %v5816, %v5830
    %v5832 = vsel %vm2332, %v5818, %v5831
    %v5843 = vperm.slane %v5686, 0
    %v5844 = vperm.slane %v5686, 2
    %v5845 = vperm.slane %v5690, 0
    %v5846 = vperm.slane %v5690, 2
    %v5847 = vperm.slane %v5694, 0
    %v5848 = vperm.slane %v5694, 2
    %v5849 = vperm.slane %v5698, 0
    %v5850 = vperm.slane %v5698, 2
    %v5851 = vperm.slane %v5702, 0
    %v5852 = vperm.slane %v5702, 2
    %v5853 = vperm.slane %v5706, 0
    %v5854 = vperm.slane %v5706, 2
    %v5855 = vperm.slane %v5710, 0
    %v5856 = vperm.slane %v5710, 2
    %v5857 = vperm.slane %v5714, 0
    %v5858 = vperm.slane %v5714, 2
    %v5859 = vsel %vm2320, %v5845, %v5843
    %v5860 = vsel %vm2322, %v5847, %v5859
    %v5861 = vsel %vm2324, %v5849, %v5860
    %v5862 = vsel %vm2326, %v5851, %v5861
    %v5863 = vsel %vm2328, %v5853, %v5862
    %v5864 = vsel %vm2330, %v5855, %v5863
    %v5865 = vsel %vm2332, %v5857, %v5864
    %v5866 = vsel %vm2320, %v5846, %v5844
    %v5867 = vsel %vm2322, %v5848, %v5866
    %v5868 = vsel %vm2324, %v5850, %v5867
    %v5869 = vsel %vm2326, %v5852, %v5868
    %v5870 = vsel %vm2328, %v5854, %v5869
    %v5871 = vsel %vm2330, %v5856, %v5870
    %v5872 = vsel %vm2332, %v5858, %v5871
    %v5875 = vld [vmem:[#allocation12] sm:$0xff]
    %v5876 = vld [vmem:[#allocation12 + $0x8] sm:$0xff]
    %v5877 = vld [vmem:[#allocation12 + $0x10] sm:$0xff]
    %v5878 = vld [vmem:[#allocation12 + $0x18] sm:$0xff]
    %v5879 = vld [vmem:[#allocation12 + $0x20] sm:$0xff]
    %v5880 = vld [vmem:[#allocation12 + $0x28] sm:$0xff]
    %v5881 = vld [vmem:[#allocation12 + $0x30] sm:$0xff]
    %v5882 = vld [vmem:[#allocation12 + $0x38] sm:$0xff]
    %v5883 = vld [vmem:[#allocation12 + $0x40] sm:$0xff]
    %v5884 = vld [vmem:[#allocation12 + $0x48] sm:$0xff]
    %v5885 = vld [vmem:[#allocation12 + $0x50] sm:$0xff]
    %v5886 = vld [vmem:[#allocation12 + $0x58] sm:$0xff]
    %v5887 = vld [vmem:[#allocation12 + $0x60] sm:$0xff]
    %v5888 = vld [vmem:[#allocation12 + $0x68] sm:$0xff]
    %v5889 = vld [vmem:[#allocation12 + $0x70] sm:$0xff]
    %v5890 = vld [vmem:[#allocation12 + $0x78] sm:$0xff]
    %v5891 = vld [vmem:[#allocation12 + $0x80] sm:$0xff]
    %v5892 = vld [vmem:[#allocation12 + $0x88] sm:$0xff]
    %v5893 = vld [vmem:[#allocation12 + $0x90] sm:$0xff]
    %v5894 = vld [vmem:[#allocation12 + $0x98] sm:$0xff]
    %v5895 = vld [vmem:[#allocation12 + $0xa0] sm:$0xff]
    %v5896 = vld [vmem:[#allocation12 + $0xa8] sm:$0xff]
    %v5897 = vld [vmem:[#allocation12 + $0xb0] sm:$0xff]
    %v5898 = vld [vmem:[#allocation12 + $0xb8] sm:$0xff]
    %v5899 = vld [vmem:[#allocation12 + $0xc0] sm:$0xff]
    %v5900 = vld [vmem:[#allocation12 + $0xc8] sm:$0xff]
    %v5901 = vld [vmem:[#allocation12 + $0xd0] sm:$0xff]
    %v5902 = vld [vmem:[#allocation12 + $0xd8] sm:$0xff]
    %v5903 = vld [vmem:[#allocation12 + $0xe0] sm:$0xff]
    %v5904 = vld [vmem:[#allocation12 + $0xe8] sm:$0xff]
    %v5905 = vld [vmem:[#allocation12 + $0xf0] sm:$0xff]
    %v5906 = vld [vmem:[#allocation12 + $0xf8] sm:$0xff]
    %v5907 = vld [vmem:[#allocation12 + $0x100] sm:$0xff]
    %v5908 = vld [vmem:[#allocation12 + $0x108] sm:$0xff]
    %v5909 = vld [vmem:[#allocation12 + $0x110] sm:$0xff]
    %v5910 = vld [vmem:[#allocation12 + $0x118] sm:$0xff]
    %v5911 = vld [vmem:[#allocation12 + $0x120] sm:$0xff]
    %v5912 = vld [vmem:[#allocation12 + $0x128] sm:$0xff]
    %v5913 = vld [vmem:[#allocation12 + $0x130] sm:$0xff]
    %v5914 = vld [vmem:[#allocation12 + $0x138] sm:$0xff]
    %v5915 = vld [vmem:[#allocation12 + $0x140] sm:$0xff]
    %v5916 = vld [vmem:[#allocation12 + $0x148] sm:$0xff]
    %v5917 = vld [vmem:[#allocation12 + $0x150] sm:$0xff]
    %v5918 = vld [vmem:[#allocation12 + $0x158] sm:$0xff]
    %v5919 = vld [vmem:[#allocation12 + $0x160] sm:$0xff]
    %v5920 = vld [vmem:[#allocation12 + $0x168] sm:$0xff]
    %v5921 = vld [vmem:[#allocation12 + $0x170] sm:$0xff]
    %v5922 = vld [vmem:[#allocation12 + $0x178] sm:$0xff]
    %v5923 = vld [vmem:[#allocation12 + $0x180] sm:$0xff]
    %v5924 = vld [vmem:[#allocation12 + $0x188] sm:$0xff]
    %v5925 = vld [vmem:[#allocation12 + $0x190] sm:$0xff]
    %v5926 = vld [vmem:[#allocation12 + $0x198] sm:$0xff]
    %v5927 = vld [vmem:[#allocation12 + $0x1a0] sm:$0xff]
    %v5928 = vld [vmem:[#allocation12 + $0x1a8] sm:$0xff]
    %v5929 = vld [vmem:[#allocation12 + $0x1b0] sm:$0xff]
    %v5930 = vld [vmem:[#allocation12 + $0x1b8] sm:$0xff]
    %v5931 = vld [vmem:[#allocation12 + $0x1c0] sm:$0xff]
    %v5932 = vld [vmem:[#allocation12 + $0x1c8] sm:$0xff]
    %v5933 = vld [vmem:[#allocation12 + $0x1d0] sm:$0xff]
    %v5934 = vld [vmem:[#allocation12 + $0x1d8] sm:$0xff]
    %v5935 = vld [vmem:[#allocation12 + $0x1e0] sm:$0xff]
    %v5936 = vld [vmem:[#allocation12 + $0x1e8] sm:$0xff]
    %v5937 = vld [vmem:[#allocation12 + $0x1f0] sm:$0xff]
    %v5938 = vld [vmem:[#allocation12 + $0x1f8] sm:$0xff]
    %v5939 = vld [vmem:[#allocation12 + $0x200] sm:$0xff]
    %v5940 = vld [vmem:[#allocation12 + $0x208] sm:$0xff]
    %v5941 = vld [vmem:[#allocation12 + $0x210] sm:$0xff]
    %v5942 = vld [vmem:[#allocation12 + $0x218] sm:$0xff]
    %v5943 = vld [vmem:[#allocation12 + $0x220] sm:$0xff]
    %v5944 = vld [vmem:[#allocation12 + $0x228] sm:$0xff]
    %v5945 = vld [vmem:[#allocation12 + $0x230] sm:$0xff]
    %v5946 = vld [vmem:[#allocation12 + $0x238] sm:$0xff]
    %v5947 = vld [vmem:[#allocation12 + $0x240] sm:$0xff]
    %v5948 = vld [vmem:[#allocation12 + $0x248] sm:$0xff]
    %v5949 = vld [vmem:[#allocation12 + $0x250] sm:$0xff]
    %v5950 = vld [vmem:[#allocation12 + $0x258] sm:$0xff]
    %v5951 = vld [vmem:[#allocation12 + $0x260] sm:$0xff]
    %v5952 = vld [vmem:[#allocation12 + $0x268] sm:$0xff]
    %v5953 = vld [vmem:[#allocation12 + $0x270] sm:$0xff]
    %v5954 = vld [vmem:[#allocation12 + $0x278] sm:$0xff]
    %v5955 = vld [vmem:[#allocation12 + $0x280] sm:$0xff]
    %v5956 = vld [vmem:[#allocation12 + $0x288] sm:$0xff]
    %v5957 = vld [vmem:[#allocation12 + $0x290] sm:$0xff]
    %v5958 = vld [vmem:[#allocation12 + $0x298] sm:$0xff]
    %v5959 = vld [vmem:[#allocation12 + $0x2a0] sm:$0xff]
    %v5960 = vld [vmem:[#allocation12 + $0x2a8] sm:$0xff]
    %v5961 = vld [vmem:[#allocation12 + $0x2b0] sm:$0xff]
    %v5962 = vld [vmem:[#allocation12 + $0x2b8] sm:$0xff]
    %v5963 = vld [vmem:[#allocation12 + $0x2c0] sm:$0xff]
    %v5964 = vld [vmem:[#allocation12 + $0x2c8] sm:$0xff]
    %v5965 = vld [vmem:[#allocation12 + $0x2d0] sm:$0xff]
    %v5966 = vld [vmem:[#allocation12 + $0x2d8] sm:$0xff]
    %v5967 = vld [vmem:[#allocation12 + $0x2e0] sm:$0xff]
    %v5968 = vld [vmem:[#allocation12 + $0x2e8] sm:$0xff]
    %v5969 = vld [vmem:[#allocation12 + $0x2f0] sm:$0xff]
    %v5970 = vld [vmem:[#allocation12 + $0x2f8] sm:$0xff]
    %v5971 = vld [vmem:[#allocation12 + $0x300] sm:$0xff]
    %v5972 = vld [vmem:[#allocation12 + $0x308] sm:$0xff]
    %v5973 = vld [vmem:[#allocation12 + $0x310] sm:$0xff]
    %v5974 = vld [vmem:[#allocation12 + $0x318] sm:$0xff]
    %v5975 = vld [vmem:[#allocation12 + $0x320] sm:$0xff]
    %v5976 = vld [vmem:[#allocation12 + $0x328] sm:$0xff]
    %v5977 = vld [vmem:[#allocation12 + $0x330] sm:$0xff]
    %v5978 = vld [vmem:[#allocation12 + $0x338] sm:$0xff]
    %v5979 = vld [vmem:[#allocation12 + $0x340] sm:$0xff]
    %v5980 = vld [vmem:[#allocation12 + $0x348] sm:$0xff]
    %v5981 = vld [vmem:[#allocation12 + $0x350] sm:$0xff]
    %v5982 = vld [vmem:[#allocation12 + $0x358] sm:$0xff]
    %v5983 = vld [vmem:[#allocation12 + $0x360] sm:$0xff]
    %v5984 = vld [vmem:[#allocation12 + $0x368] sm:$0xff]
    %v5985 = vld [vmem:[#allocation12 + $0x370] sm:$0xff]
    %v5986 = vld [vmem:[#allocation12 + $0x378] sm:$0xff]
    %v5987 = vld [vmem:[#allocation12 + $0x380] sm:$0xff]
    %v5988 = vld [vmem:[#allocation12 + $0x388] sm:$0xff]
    %v5989 = vld [vmem:[#allocation12 + $0x390] sm:$0xff]
    %v5990 = vld [vmem:[#allocation12 + $0x398] sm:$0xff]
    %v5991 = vld [vmem:[#allocation12 + $0x3a0] sm:$0xff]
    %v5992 = vld [vmem:[#allocation12 + $0x3a8] sm:$0xff]
    %v5993 = vld [vmem:[#allocation12 + $0x3b0] sm:$0xff]
    %v5994 = vld [vmem:[#allocation12 + $0x3b8] sm:$0xff]
    %v5995 = vld [vmem:[#allocation12 + $0x3c0] sm:$0xff]
    %v5996 = vld [vmem:[#allocation12 + $0x3c8] sm:$0xff]
    %v5997 = vld [vmem:[#allocation12 + $0x3d0] sm:$0xff]
    %v5998 = vld [vmem:[#allocation12 + $0x3d8] sm:$0xff]
    %v5999 = vld [vmem:[#allocation12 + $0x3e0] sm:$0xff]
    %v6000 = vld [vmem:[#allocation12 + $0x3e8] sm:$0xff]
    %v6001 = vld [vmem:[#allocation12 + $0x3f0] sm:$0xff]
    %v6002 = vld [vmem:[#allocation12 + $0x3f8] sm:$0xff]
    %v6003 = vld [vmem:[#allocation12 + $0x400] sm:$0xff]
    %v6004 = vld [vmem:[#allocation12 + $0x408] sm:$0xff]
    %v6005 = vld [vmem:[#allocation12 + $0x410] sm:$0xff]
    %v6006 = vld [vmem:[#allocation12 + $0x418] sm:$0xff]
    %v6007 = vld [vmem:[#allocation12 + $0x420] sm:$0xff]
    %v6008 = vld [vmem:[#allocation12 + $0x428] sm:$0xff]
    %v6009 = vld [vmem:[#allocation12 + $0x430] sm:$0xff]
    %v6010 = vld [vmem:[#allocation12 + $0x438] sm:$0xff]
    %v6011 = vld [vmem:[#allocation12 + $0x440] sm:$0xff]
    %v6012 = vld [vmem:[#allocation12 + $0x448] sm:$0xff]
    %v6013 = vld [vmem:[#allocation12 + $0x450] sm:$0xff]
    %v6014 = vld [vmem:[#allocation12 + $0x458] sm:$0xff]
    %v6015 = vld [vmem:[#allocation12 + $0x460] sm:$0xff]
    %v6016 = vld [vmem:[#allocation12 + $0x468] sm:$0xff]
    %v6017 = vld [vmem:[#allocation12 + $0x470] sm:$0xff]
    %v6018 = vld [vmem:[#allocation12 + $0x478] sm:$0xff]
    %v6019 = vld [vmem:[#allocation12 + $0x480] sm:$0xff]
    %v6020 = vld [vmem:[#allocation12 + $0x488] sm:$0xff]
    %v6021 = vld [vmem:[#allocation12 + $0x490] sm:$0xff]
    %v6022 = vld [vmem:[#allocation12 + $0x498] sm:$0xff]
    %v6023 = vld [vmem:[#allocation12 + $0x4a0] sm:$0xff]
    %v6024 = vld [vmem:[#allocation12 + $0x4a8] sm:$0xff]
    %v6025 = vld [vmem:[#allocation12 + $0x4b0] sm:$0xff]
    %v6026 = vld [vmem:[#allocation12 + $0x4b8] sm:$0xff]
    %v6027 = vld [vmem:[#allocation12 + $0x4c0] sm:$0xff]
    %v6028 = vld [vmem:[#allocation12 + $0x4c8] sm:$0xff]
    %v6029 = vld [vmem:[#allocation12 + $0x4d0] sm:$0xff]
    %v6030 = vld [vmem:[#allocation12 + $0x4d8] sm:$0xff]
    %v6031 = vld [vmem:[#allocation12 + $0x4e0] sm:$0xff]
    %v6032 = vld [vmem:[#allocation12 + $0x4e8] sm:$0xff]
    %v6033 = vld [vmem:[#allocation12 + $0x4f0] sm:$0xff]
    %v6034 = vld [vmem:[#allocation12 + $0x4f8] sm:$0xff]
    %v6035 = vld [vmem:[#allocation12 + $0x500] sm:$0xff]
    %v6036 = vld [vmem:[#allocation12 + $0x508] sm:$0xff]
    %v6037 = vld [vmem:[#allocation12 + $0x510] sm:$0xff]
    %v6038 = vld [vmem:[#allocation12 + $0x518] sm:$0xff]
    %v6039 = vld [vmem:[#allocation12 + $0x520] sm:$0xff]
    %v6040 = vld [vmem:[#allocation12 + $0x528] sm:$0xff]
    %v6041 = vld [vmem:[#allocation12 + $0x530] sm:$0xff]
    %v6042 = vld [vmem:[#allocation12 + $0x538] sm:$0xff]
    %v6043 = vld [vmem:[#allocation12 + $0x540] sm:$0xff]
    %v6044 = vld [vmem:[#allocation12 + $0x548] sm:$0xff]
    %v6045 = vld [vmem:[#allocation12 + $0x550] sm:$0xff]
    %v6046 = vld [vmem:[#allocation12 + $0x558] sm:$0xff]
    %v6047 = vld [vmem:[#allocation12 + $0x560] sm:$0xff]
    %v6048 = vld [vmem:[#allocation12 + $0x568] sm:$0xff]
    %v6049 = vld [vmem:[#allocation12 + $0x570] sm:$0xff]
    %v6050 = vld [vmem:[#allocation12 + $0x578] sm:$0xff]
    %v6051 = vld [vmem:[#allocation12 + $0x580] sm:$0xff]
    %v6052 = vld [vmem:[#allocation12 + $0x588] sm:$0xff]
    %v6053 = vld [vmem:[#allocation12 + $0x590] sm:$0xff]
    %v6054 = vld [vmem:[#allocation12 + $0x598] sm:$0xff]
    %v6055 = vld [vmem:[#allocation12 + $0x5a0] sm:$0xff]
    %v6056 = vld [vmem:[#allocation12 + $0x5a8] sm:$0xff]
    %v6057 = vld [vmem:[#allocation12 + $0x5b0] sm:$0xff]
    %v6058 = vld [vmem:[#allocation12 + $0x5b8] sm:$0xff]
    %v6059 = vld [vmem:[#allocation12 + $0x5c0] sm:$0xff]
    %v6060 = vld [vmem:[#allocation12 + $0x5c8] sm:$0xff]
    %v6061 = vld [vmem:[#allocation12 + $0x5d0] sm:$0xff]
    %v6062 = vld [vmem:[#allocation12 + $0x5d8] sm:$0xff]
    %v6063 = vld [vmem:[#allocation12 + $0x5e0] sm:$0xff]
    %v6064 = vld [vmem:[#allocation12 + $0x5e8] sm:$0xff]
    %v6065 = vld [vmem:[#allocation12 + $0x5f0] sm:$0xff]
    %v6066 = vld [vmem:[#allocation12 + $0x5f8] sm:$0xff]
    %v6067 = vld [vmem:[#allocation12 + $0x600] sm:$0xff]
    %v6068 = vld [vmem:[#allocation12 + $0x608] sm:$0xff]
    %v6069 = vld [vmem:[#allocation12 + $0x610] sm:$0xff]
    %v6070 = vld [vmem:[#allocation12 + $0x618] sm:$0xff]
    %v6071 = vld [vmem:[#allocation12 + $0x620] sm:$0xff]
    %v6072 = vld [vmem:[#allocation12 + $0x628] sm:$0xff]
    %v6073 = vld [vmem:[#allocation12 + $0x630] sm:$0xff]
    %v6074 = vld [vmem:[#allocation12 + $0x638] sm:$0xff]
    %v6075 = vld [vmem:[#allocation12 + $0x640] sm:$0xff]
    %v6076 = vld [vmem:[#allocation12 + $0x648] sm:$0xff]
    %v6077 = vld [vmem:[#allocation12 + $0x650] sm:$0xff]
    %v6078 = vld [vmem:[#allocation12 + $0x658] sm:$0xff]
    %v6079 = vld [vmem:[#allocation12 + $0x660] sm:$0xff]
    %v6080 = vld [vmem:[#allocation12 + $0x668] sm:$0xff]
    %v6081 = vld [vmem:[#allocation12 + $0x670] sm:$0xff]
    %v6082 = vld [vmem:[#allocation12 + $0x678] sm:$0xff]
    %v6083 = vld [vmem:[#allocation12 + $0x680] sm:$0xff]
    %v6084 = vld [vmem:[#allocation12 + $0x688] sm:$0xff]
    %v6085 = vld [vmem:[#allocation12 + $0x690] sm:$0xff]
    %v6086 = vld [vmem:[#allocation12 + $0x698] sm:$0xff]
    %v6087 = vld [vmem:[#allocation12 + $0x6a0] sm:$0xff]
    %v6088 = vld [vmem:[#allocation12 + $0x6a8] sm:$0xff]
    %v6089 = vld [vmem:[#allocation12 + $0x6b0] sm:$0xff]
    %v6090 = vld [vmem:[#allocation12 + $0x6b8] sm:$0xff]
    %v6091 = vld [vmem:[#allocation12 + $0x6c0] sm:$0xff]
    %v6092 = vld [vmem:[#allocation12 + $0x6c8] sm:$0xff]
    %v6093 = vld [vmem:[#allocation12 + $0x6d0] sm:$0xff]
    %v6094 = vld [vmem:[#allocation12 + $0x6d8] sm:$0xff]
    %v6095 = vld [vmem:[#allocation12 + $0x6e0] sm:$0xff]
    %v6096 = vld [vmem:[#allocation12 + $0x6e8] sm:$0xff]
    %v6097 = vld [vmem:[#allocation12 + $0x6f0] sm:$0xff]
    %v6098 = vld [vmem:[#allocation12 + $0x6f8] sm:$0xff]
    %v6099 = vld [vmem:[#allocation12 + $0x700] sm:$0xff]
    %v6100 = vld [vmem:[#allocation12 + $0x708] sm:$0xff]
    %v6101 = vld [vmem:[#allocation12 + $0x710] sm:$0xff]
    %v6102 = vld [vmem:[#allocation12 + $0x718] sm:$0xff]
    %v6103 = vld [vmem:[#allocation12 + $0x720] sm:$0xff]
    %v6104 = vld [vmem:[#allocation12 + $0x728] sm:$0xff]
    %v6105 = vld [vmem:[#allocation12 + $0x730] sm:$0xff]
    %v6106 = vld [vmem:[#allocation12 + $0x738] sm:$0xff]
    %v6107 = vld [vmem:[#allocation12 + $0x740] sm:$0xff]
    %v6108 = vld [vmem:[#allocation12 + $0x748] sm:$0xff]
    %v6109 = vld [vmem:[#allocation12 + $0x750] sm:$0xff]
    %v6110 = vld [vmem:[#allocation12 + $0x758] sm:$0xff]
    %v6111 = vld [vmem:[#allocation12 + $0x760] sm:$0xff]
    %v6112 = vld [vmem:[#allocation12 + $0x768] sm:$0xff]
    %v6113 = vld [vmem:[#allocation12 + $0x770] sm:$0xff]
    %v6114 = vld [vmem:[#allocation12 + $0x778] sm:$0xff]
    %v6115 = vld [vmem:[#allocation12 + $0x780] sm:$0xff]
    %v6116 = vld [vmem:[#allocation12 + $0x788] sm:$0xff]
    %v6117 = vld [vmem:[#allocation12 + $0x790] sm:$0xff]
    %v6118 = vld [vmem:[#allocation12 + $0x798] sm:$0xff]
    %v6119 = vld [vmem:[#allocation12 + $0x7a0] sm:$0xff]
    %v6120 = vld [vmem:[#allocation12 + $0x7a8] sm:$0xff]
    %v6121 = vld [vmem:[#allocation12 + $0x7b0] sm:$0xff]
    %v6122 = vld [vmem:[#allocation12 + $0x7b8] sm:$0xff]
    %v6123 = vld [vmem:[#allocation12 + $0x7c0] sm:$0xff]
    %v6124 = vld [vmem:[#allocation12 + $0x7c8] sm:$0xff]
    %v6125 = vld [vmem:[#allocation12 + $0x7d0] sm:$0xff]
    %v6126 = vld [vmem:[#allocation12 + $0x7d8] sm:$0xff]
    %v6127 = vld [vmem:[#allocation12 + $0x7e0] sm:$0xff]
    %v6128 = vld [vmem:[#allocation12 + $0x7e8] sm:$0xff]
    %v6129 = vld [vmem:[#allocation12 + $0x7f0] sm:$0xff]
    %v6130 = vld [vmem:[#allocation12 + $0x7f8] sm:$0xff]
    %v6131 = vld [vmem:[#allocation12 + $0x800] sm:$0xff]
    %v6132 = vld [vmem:[#allocation12 + $0x808] sm:$0xff]
    %v6133 = vld [vmem:[#allocation12 + $0x810] sm:$0xff]
    %v6134 = vld [vmem:[#allocation12 + $0x818] sm:$0xff]
    %v6135 = vld [vmem:[#allocation12 + $0x820] sm:$0xff]
    %v6136 = vld [vmem:[#allocation12 + $0x828] sm:$0xff]
    %v6137 = vld [vmem:[#allocation12 + $0x830] sm:$0xff]
    %v6138 = vld [vmem:[#allocation12 + $0x838] sm:$0xff]
    %v6139 = vld [vmem:[#allocation12 + $0x840] sm:$0xff]
    %v6140 = vld [vmem:[#allocation12 + $0x848] sm:$0xff]
    %v6141 = vld [vmem:[#allocation12 + $0x850] sm:$0xff]
    %v6142 = vld [vmem:[#allocation12 + $0x858] sm:$0xff]
    %v6143 = vld [vmem:[#allocation12 + $0x860] sm:$0xff]
    %v6144 = vld [vmem:[#allocation12 + $0x868] sm:$0xff]
    %v6145 = vld [vmem:[#allocation12 + $0x870] sm:$0xff]
    %v6146 = vld [vmem:[#allocation12 + $0x878] sm:$0xff]
    %v6147 = vld [vmem:[#allocation12 + $0x880] sm:$0xff]
    %v6148 = vld [vmem:[#allocation12 + $0x888] sm:$0xff]
    %v6149 = vld [vmem:[#allocation12 + $0x890] sm:$0xff]
    %v6150 = vld [vmem:[#allocation12 + $0x898] sm:$0xff]
    %v6151 = vld [vmem:[#allocation12 + $0x8a0] sm:$0xff]
    %v6152 = vld [vmem:[#allocation12 + $0x8a8] sm:$0xff]
    %v6153 = vld [vmem:[#allocation12 + $0x8b0] sm:$0xff]
    %v6154 = vld [vmem:[#allocation12 + $0x8b8] sm:$0xff]
    %v6155 = vld [vmem:[#allocation12 + $0x8c0] sm:$0xff]
    %v6156 = vld [vmem:[#allocation12 + $0x8c8] sm:$0xff]
    %v6157 = vld [vmem:[#allocation12 + $0x8d0] sm:$0xff]
    %v6158 = vld [vmem:[#allocation12 + $0x8d8] sm:$0xff]
    %v6159 = vld [vmem:[#allocation12 + $0x8e0] sm:$0xff]
    %v6160 = vld [vmem:[#allocation12 + $0x8e8] sm:$0xff]
    %v6161 = vld [vmem:[#allocation12 + $0x8f0] sm:$0xff]
    %v6162 = vld [vmem:[#allocation12 + $0x8f8] sm:$0xff]
    %v6163 = vld [vmem:[#allocation12 + $0x900] sm:$0xff]
    %v6164 = vld [vmem:[#allocation12 + $0x908] sm:$0xff]
    %v6165 = vld [vmem:[#allocation12 + $0x910] sm:$0xff]
    %v6166 = vld [vmem:[#allocation12 + $0x918] sm:$0xff]
    %v6167 = vld [vmem:[#allocation12 + $0x920] sm:$0xff]
    %v6168 = vld [vmem:[#allocation12 + $0x928] sm:$0xff]
    %v6169 = vld [vmem:[#allocation12 + $0x930] sm:$0xff]
    %v6170 = vld [vmem:[#allocation12 + $0x938] sm:$0xff]
    %v6171 = vld [vmem:[#allocation12 + $0x940] sm:$0xff]
    %v6172 = vld [vmem:[#allocation12 + $0x948] sm:$0xff]
    %v6173 = vld [vmem:[#allocation12 + $0x950] sm:$0xff]
    %v6174 = vld [vmem:[#allocation12 + $0x958] sm:$0xff]
    %v6175 = vld [vmem:[#allocation12 + $0x960] sm:$0xff]
    %v6176 = vld [vmem:[#allocation12 + $0x968] sm:$0xff]
    %v6177 = vld [vmem:[#allocation12 + $0x970] sm:$0xff]
    %v6178 = vld [vmem:[#allocation12 + $0x978] sm:$0xff]
    %v6179 = vld [vmem:[#allocation12 + $0x980] sm:$0xff]
    %v6180 = vld [vmem:[#allocation12 + $0x988] sm:$0xff]
    %v6181 = vld [vmem:[#allocation12 + $0x990] sm:$0xff]
    %v6182 = vld [vmem:[#allocation12 + $0x998] sm:$0xff]
    %v6183 = vld [vmem:[#allocation12 + $0x9a0] sm:$0xff]
    %v6184 = vld [vmem:[#allocation12 + $0x9a8] sm:$0xff]
    %v6185 = vld [vmem:[#allocation12 + $0x9b0] sm:$0xff]
    %v6186 = vld [vmem:[#allocation12 + $0x9b8] sm:$0xff]
    %v6187 = vld [vmem:[#allocation12 + $0x9c0] sm:$0xff]
    %v6188 = vld [vmem:[#allocation12 + $0x9c8] sm:$0xff]
    %v6189 = vld [vmem:[#allocation12 + $0x9d0] sm:$0xff]
    %v6190 = vld [vmem:[#allocation12 + $0x9d8] sm:$0xff]
    %v6191 = vld [vmem:[#allocation12 + $0x9e0] sm:$0xff]
    %v6192 = vld [vmem:[#allocation12 + $0x9e8] sm:$0xff]
    %v6193 = vld [vmem:[#allocation12 + $0x9f0] sm:$0xff]
    %v6194 = vld [vmem:[#allocation12 + $0x9f8] sm:$0xff]
    %v6195 = vld [vmem:[#allocation12 + $0xa00] sm:$0xff]
    %v6196 = vld [vmem:[#allocation12 + $0xa08] sm:$0xff]
    %v6197 = vld [vmem:[#allocation12 + $0xa10] sm:$0xff]
    %v6198 = vld [vmem:[#allocation12 + $0xa18] sm:$0xff]
    %v6199 = vld [vmem:[#allocation12 + $0xa20] sm:$0xff]
    %v6200 = vld [vmem:[#allocation12 + $0xa28] sm:$0xff]
    %v6201 = vld [vmem:[#allocation12 + $0xa30] sm:$0xff]
    %v6202 = vld [vmem:[#allocation12 + $0xa38] sm:$0xff]
    %v6203 = vld [vmem:[#allocation12 + $0xa40] sm:$0xff]
    %v6204 = vld [vmem:[#allocation12 + $0xa48] sm:$0xff]
    %v6205 = vld [vmem:[#allocation12 + $0xa50] sm:$0xff]
    %v6206 = vld [vmem:[#allocation12 + $0xa58] sm:$0xff]
    %v6207 = vld [vmem:[#allocation12 + $0xa60] sm:$0xff]
    %v6208 = vld [vmem:[#allocation12 + $0xa68] sm:$0xff]
    %v6209 = vld [vmem:[#allocation12 + $0xa70] sm:$0xff]
    %v6210 = vld [vmem:[#allocation12 + $0xa78] sm:$0xff]
    %v6211 = vld [vmem:[#allocation12 + $0xa80] sm:$0xff]
    %v6212 = vld [vmem:[#allocation12 + $0xa88] sm:$0xff]
    %v6213 = vld [vmem:[#allocation12 + $0xa90] sm:$0xff]
    %v6214 = vld [vmem:[#allocation12 + $0xa98] sm:$0xff]
    %v6215 = vld [vmem:[#allocation12 + $0xaa0] sm:$0xff]
    %v6216 = vld [vmem:[#allocation12 + $0xaa8] sm:$0xff]
    %v6217 = vld [vmem:[#allocation12 + $0xab0] sm:$0xff]
    %v6218 = vld [vmem:[#allocation12 + $0xab8] sm:$0xff]
    %v6219 = vld [vmem:[#allocation12 + $0xac0] sm:$0xff]
    %v6220 = vld [vmem:[#allocation12 + $0xac8] sm:$0xff]
    %v6221 = vld [vmem:[#allocation12 + $0xad0] sm:$0xff]
    %v6222 = vld [vmem:[#allocation12 + $0xad8] sm:$0xff]
    %v6223 = vld [vmem:[#allocation12 + $0xae0] sm:$0xff]
    %v6224 = vld [vmem:[#allocation12 + $0xae8] sm:$0xff]
    %v6225 = vld [vmem:[#allocation12 + $0xaf0] sm:$0xff]
    %v6226 = vld [vmem:[#allocation12 + $0xaf8] sm:$0xff]
    %v6227 = vld [vmem:[#allocation12 + $0xb00] sm:$0xff]
    %v6228 = vld [vmem:[#allocation12 + $0xb08] sm:$0xff]
    %v6229 = vld [vmem:[#allocation12 + $0xb10] sm:$0xff]
    %v6230 = vld [vmem:[#allocation12 + $0xb18] sm:$0xff]
    %v6231 = vld [vmem:[#allocation12 + $0xb20] sm:$0xff]
    %v6232 = vld [vmem:[#allocation12 + $0xb28] sm:$0xff]
    %v6233 = vld [vmem:[#allocation12 + $0xb30] sm:$0xff]
    %v6234 = vld [vmem:[#allocation12 + $0xb38] sm:$0xff]
    %v6235 = vld [vmem:[#allocation12 + $0xb40] sm:$0xff]
    %v6236 = vld [vmem:[#allocation12 + $0xb48] sm:$0xff]
    %v6237 = vld [vmem:[#allocation12 + $0xb50] sm:$0xff]
    %v6238 = vld [vmem:[#allocation12 + $0xb58] sm:$0xff]
    %v6239 = vld [vmem:[#allocation12 + $0xb60] sm:$0xff]
    %v6240 = vld [vmem:[#allocation12 + $0xb68] sm:$0xff]
    %v6241 = vld [vmem:[#allocation12 + $0xb70] sm:$0xff]
    %v6242 = vld [vmem:[#allocation12 + $0xb78] sm:$0xff]
    %v6243 = vld [vmem:[#allocation12 + $0xb80] sm:$0xff]
    %v6244 = vld [vmem:[#allocation12 + $0xb88] sm:$0xff]
    %v6245 = vld [vmem:[#allocation12 + $0xb90] sm:$0xff]
    %v6246 = vld [vmem:[#allocation12 + $0xb98] sm:$0xff]
    %v6247 = vld [vmem:[#allocation12 + $0xba0] sm:$0xff]
    %v6248 = vld [vmem:[#allocation12 + $0xba8] sm:$0xff]
    %v6249 = vld [vmem:[#allocation12 + $0xbb0] sm:$0xff]
    %v6250 = vld [vmem:[#allocation12 + $0xbb8] sm:$0xff]
    %v6251 = vld [vmem:[#allocation12 + $0xbc0] sm:$0xff]
    %v6252 = vld [vmem:[#allocation12 + $0xbc8] sm:$0xff]
    %v6253 = vld [vmem:[#allocation12 + $0xbd0] sm:$0xff]
    %v6254 = vld [vmem:[#allocation12 + $0xbd8] sm:$0xff]
    %v6255 = vld [vmem:[#allocation12 + $0xbe0] sm:$0xff]
    %v6256 = vld [vmem:[#allocation12 + $0xbe8] sm:$0xff]
    %v6257 = vld [vmem:[#allocation12 + $0xbf0] sm:$0xff]
    %v6258 = vld [vmem:[#allocation12 + $0xbf8] sm:$0xff]
    %v6259 = vld [vmem:[#allocation12 + $0xc00] sm:$0xff]
    %v6260 = vld [vmem:[#allocation12 + $0xc08] sm:$0xff]
    %v6261 = vld [vmem:[#allocation12 + $0xc10] sm:$0xff]
    %v6262 = vld [vmem:[#allocation12 + $0xc18] sm:$0xff]
    %v6263 = vld [vmem:[#allocation12 + $0xc20] sm:$0xff]
    %v6264 = vld [vmem:[#allocation12 + $0xc28] sm:$0xff]
    %v6265 = vld [vmem:[#allocation12 + $0xc30] sm:$0xff]
    %v6266 = vld [vmem:[#allocation12 + $0xc38] sm:$0xff]
    %v6267 = vld [vmem:[#allocation12 + $0xc40] sm:$0xff]
    %v6268 = vld [vmem:[#allocation12 + $0xc48] sm:$0xff]
    %v6269 = vld [vmem:[#allocation12 + $0xc50] sm:$0xff]
    %v6270 = vld [vmem:[#allocation12 + $0xc58] sm:$0xff]
    %v6271 = vld [vmem:[#allocation12 + $0xc60] sm:$0xff]
    %v6272 = vld [vmem:[#allocation12 + $0xc68] sm:$0xff]
    %v6273 = vld [vmem:[#allocation12 + $0xc70] sm:$0xff]
    %v6274 = vld [vmem:[#allocation12 + $0xc78] sm:$0xff]
    %v6275 = vld [vmem:[#allocation12 + $0xc80] sm:$0xff]
    %v6276 = vld [vmem:[#allocation12 + $0xc88] sm:$0xff]
    %v6277 = vld [vmem:[#allocation12 + $0xc90] sm:$0xff]
    %v6278 = vld [vmem:[#allocation12 + $0xc98] sm:$0xff]
    %v6279 = vld [vmem:[#allocation12 + $0xca0] sm:$0xff]
    %v6280 = vld [vmem:[#allocation12 + $0xca8] sm:$0xff]
    %v6281 = vld [vmem:[#allocation12 + $0xcb0] sm:$0xff]
    %v6282 = vld [vmem:[#allocation12 + $0xcb8] sm:$0xff]
    %v6283 = vld [vmem:[#allocation12 + $0xcc0] sm:$0xff]
    %v6284 = vld [vmem:[#allocation12 + $0xcc8] sm:$0xff]
    %v6285 = vld [vmem:[#allocation12 + $0xcd0] sm:$0xff]
    %v6286 = vld [vmem:[#allocation12 + $0xcd8] sm:$0xff]
    %v6287 = vld [vmem:[#allocation12 + $0xce0] sm:$0xff]
    %v6288 = vld [vmem:[#allocation12 + $0xce8] sm:$0xff]
    %v6289 = vld [vmem:[#allocation12 + $0xcf0] sm:$0xff]
    %v6290 = vld [vmem:[#allocation12 + $0xcf8] sm:$0xff]
    %v6291 = vld [vmem:[#allocation12 + $0xd00] sm:$0xff]
    %v6292 = vld [vmem:[#allocation12 + $0xd08] sm:$0xff]
    %v6293 = vld [vmem:[#allocation12 + $0xd10] sm:$0xff]
    %v6294 = vld [vmem:[#allocation12 + $0xd18] sm:$0xff]
    %v6295 = vld [vmem:[#allocation12 + $0xd20] sm:$0xff]
    %v6296 = vld [vmem:[#allocation12 + $0xd28] sm:$0xff]
    %v6297 = vld [vmem:[#allocation12 + $0xd30] sm:$0xff]
    %v6298 = vld [vmem:[#allocation12 + $0xd38] sm:$0xff]
    %v6299 = vld [vmem:[#allocation12 + $0xd40] sm:$0xff]
    %v6300 = vld [vmem:[#allocation12 + $0xd48] sm:$0xff]
    %v6301 = vld [vmem:[#allocation12 + $0xd50] sm:$0xff]
    %v6302 = vld [vmem:[#allocation12 + $0xd58] sm:$0xff]
    %v6303 = vld [vmem:[#allocation12 + $0xd60] sm:$0xff]
    %v6304 = vld [vmem:[#allocation12 + $0xd68] sm:$0xff]
    %v6305 = vld [vmem:[#allocation12 + $0xd70] sm:$0xff]
    %v6306 = vld [vmem:[#allocation12 + $0xd78] sm:$0xff]
    %v6307 = vld [vmem:[#allocation12 + $0xd80] sm:$0xff]
    %v6308 = vld [vmem:[#allocation12 + $0xd88] sm:$0xff]
    %v6309 = vld [vmem:[#allocation12 + $0xd90] sm:$0xff]
    %v6310 = vld [vmem:[#allocation12 + $0xd98] sm:$0xff]
    %v6311 = vld [vmem:[#allocation12 + $0xda0] sm:$0xff]
    %v6312 = vld [vmem:[#allocation12 + $0xda8] sm:$0xff]
    %v6313 = vld [vmem:[#allocation12 + $0xdb0] sm:$0xff]
    %v6314 = vld [vmem:[#allocation12 + $0xdb8] sm:$0xff]
    %v6315 = vld [vmem:[#allocation12 + $0xdc0] sm:$0xff]
    %v6316 = vld [vmem:[#allocation12 + $0xdc8] sm:$0xff]
    %v6317 = vld [vmem:[#allocation12 + $0xdd0] sm:$0xff]
    %v6318 = vld [vmem:[#allocation12 + $0xdd8] sm:$0xff]
    %v6319 = vld [vmem:[#allocation12 + $0xde0] sm:$0xff]
    %v6320 = vld [vmem:[#allocation12 + $0xde8] sm:$0xff]
    %v6321 = vld [vmem:[#allocation12 + $0xdf0] sm:$0xff]
    %v6322 = vld [vmem:[#allocation12 + $0xdf8] sm:$0xff]
    %v6323 = vld [vmem:[#allocation12 + $0xe00] sm:$0xff]
    %v6324 = vld [vmem:[#allocation12 + $0xe08] sm:$0xff]
    %v6325 = vld [vmem:[#allocation12 + $0xe10] sm:$0xff]
    %v6326 = vld [vmem:[#allocation12 + $0xe18] sm:$0xff]
    %v6327 = vld [vmem:[#allocation12 + $0xe20] sm:$0xff]
    %v6328 = vld [vmem:[#allocation12 + $0xe28] sm:$0xff]
    %v6329 = vld [vmem:[#allocation12 + $0xe30] sm:$0xff]
    %v6330 = vld [vmem:[#allocation12 + $0xe38] sm:$0xff]
    %v6331 = vld [vmem:[#allocation12 + $0xe40] sm:$0xff]
    %v6332 = vld [vmem:[#allocation12 + $0xe48] sm:$0xff]
    %v6333 = vld [vmem:[#allocation12 + $0xe50] sm:$0xff]
    %v6334 = vld [vmem:[#allocation12 + $0xe58] sm:$0xff]
    %v6335 = vld [vmem:[#allocation12 + $0xe60] sm:$0xff]
    %v6336 = vld [vmem:[#allocation12 + $0xe68] sm:$0xff]
    %v6337 = vld [vmem:[#allocation12 + $0xe70] sm:$0xff]
    %v6338 = vld [vmem:[#allocation12 + $0xe78] sm:$0xff]
    %v6339 = vld [vmem:[#allocation12 + $0xe80] sm:$0xff]
    %v6340 = vld [vmem:[#allocation12 + $0xe88] sm:$0xff]
    %v6341 = vld [vmem:[#allocation12 + $0xe90] sm:$0xff]
    %v6342 = vld [vmem:[#allocation12 + $0xe98] sm:$0xff]
    %v6343 = vld [vmem:[#allocation12 + $0xea0] sm:$0xff]
    %v6344 = vld [vmem:[#allocation12 + $0xea8] sm:$0xff]
    %v6345 = vld [vmem:[#allocation12 + $0xeb0] sm:$0xff]
    %v6346 = vld [vmem:[#allocation12 + $0xeb8] sm:$0xff]
    %v6347 = vld [vmem:[#allocation12 + $0xec0] sm:$0xff]
    %v6348 = vld [vmem:[#allocation12 + $0xec8] sm:$0xff]
    %v6349 = vld [vmem:[#allocation12 + $0xed0] sm:$0xff]
    %v6350 = vld [vmem:[#allocation12 + $0xed8] sm:$0xff]
    %v6351 = vld [vmem:[#allocation12 + $0xee0] sm:$0xff]
    %v6352 = vld [vmem:[#allocation12 + $0xee8] sm:$0xff]
    %v6353 = vld [vmem:[#allocation12 + $0xef0] sm:$0xff]
    %v6354 = vld [vmem:[#allocation12 + $0xef8] sm:$0xff]
    %v6355 = vld [vmem:[#allocation12 + $0xf00] sm:$0xff]
    %v6356 = vld [vmem:[#allocation12 + $0xf08] sm:$0xff]
    %v6357 = vld [vmem:[#allocation12 + $0xf10] sm:$0xff]
    %v6358 = vld [vmem:[#allocation12 + $0xf18] sm:$0xff]
    %v6359 = vld [vmem:[#allocation12 + $0xf20] sm:$0xff]
    %v6360 = vld [vmem:[#allocation12 + $0xf28] sm:$0xff]
    %v6361 = vld [vmem:[#allocation12 + $0xf30] sm:$0xff]
    %v6362 = vld [vmem:[#allocation12 + $0xf38] sm:$0xff]
    %v6363 = vld [vmem:[#allocation12 + $0xf40] sm:$0xff]
    %v6364 = vld [vmem:[#allocation12 + $0xf48] sm:$0xff]
    %v6365 = vld [vmem:[#allocation12 + $0xf50] sm:$0xff]
    %v6366 = vld [vmem:[#allocation12 + $0xf58] sm:$0xff]
    %v6367 = vld [vmem:[#allocation12 + $0xf60] sm:$0xff]
    %v6368 = vld [vmem:[#allocation12 + $0xf68] sm:$0xff]
    %v6369 = vld [vmem:[#allocation12 + $0xf70] sm:$0xff]
    %v6370 = vld [vmem:[#allocation12 + $0xf78] sm:$0xff]
    %v6371 = vld [vmem:[#allocation12 + $0xf80] sm:$0xff]
    %v6372 = vld [vmem:[#allocation12 + $0xf88] sm:$0xff]
    %v6373 = vld [vmem:[#allocation12 + $0xf90] sm:$0xff]
    %v6374 = vld [vmem:[#allocation12 + $0xf98] sm:$0xff]
    %v6375 = vld [vmem:[#allocation12 + $0xfa0] sm:$0xff]
    %v6376 = vld [vmem:[#allocation12 + $0xfa8] sm:$0xff]
    %v6377 = vld [vmem:[#allocation12 + $0xfb0] sm:$0xff]
    %v6378 = vld [vmem:[#allocation12 + $0xfb8] sm:$0xff]
    %v6379 = vld [vmem:[#allocation12 + $0xfc0] sm:$0xff]
    %v6380 = vld [vmem:[#allocation12 + $0xfc8] sm:$0xff]
    %v6381 = vld [vmem:[#allocation12 + $0xfd0] sm:$0xff]
    %v6382 = vld [vmem:[#allocation12 + $0xfd8] sm:$0xff]
    %v6383 = vld [vmem:[#allocation12 + $0xfe0] sm:$0xff]
    %v6384 = vld [vmem:[#allocation12 + $0xfe8] sm:$0xff]
    %v6385 = vld [vmem:[#allocation12 + $0xff0] sm:$0xff]
    %v6386 = vld [vmem:[#allocation12 + $0xff8] sm:$0xff]
    %v6387 = vld [vmem:[#allocation12 + $0x1000] sm:$0xff]
    %v6388 = vld [vmem:[#allocation12 + $0x1008] sm:$0xff]
    %v6389 = vld [vmem:[#allocation12 + $0x1010] sm:$0xff]
    %v6390 = vld [vmem:[#allocation12 + $0x1018] sm:$0xff]
    %v6391 = vld [vmem:[#allocation12 + $0x1020] sm:$0xff]
    %v6392 = vld [vmem:[#allocation12 + $0x1028] sm:$0xff]
    %v6393 = vld [vmem:[#allocation12 + $0x1030] sm:$0xff]
    %v6394 = vld [vmem:[#allocation12 + $0x1038] sm:$0xff]
    %v6395 = vld [vmem:[#allocation12 + $0x1040] sm:$0xff]
    %v6396 = vld [vmem:[#allocation12 + $0x1048] sm:$0xff]
    %v6397 = vld [vmem:[#allocation12 + $0x1050] sm:$0xff]
    %v6398 = vld [vmem:[#allocation12 + $0x1058] sm:$0xff]
    %v6399 = vld [vmem:[#allocation12 + $0x1060] sm:$0xff]
    %v6400 = vld [vmem:[#allocation12 + $0x1068] sm:$0xff]
    %v6401 = vld [vmem:[#allocation12 + $0x1070] sm:$0xff]
    %v6402 = vld [vmem:[#allocation12 + $0x1078] sm:$0xff]
    %v6403 = vld [vmem:[#allocation12 + $0x1080] sm:$0xff]
    %v6404 = vld [vmem:[#allocation12 + $0x1088] sm:$0xff]
    %v6405 = vld [vmem:[#allocation12 + $0x1090] sm:$0xff]
    %v6406 = vld [vmem:[#allocation12 + $0x1098] sm:$0xff]
    %v6407 = vld [vmem:[#allocation12 + $0x10a0] sm:$0xff]
    %v6408 = vld [vmem:[#allocation12 + $0x10a8] sm:$0xff]
    %v6409 = vld [vmem:[#allocation12 + $0x10b0] sm:$0xff]
    %v6410 = vld [vmem:[#allocation12 + $0x10b8] sm:$0xff]
    %v6411 = vld [vmem:[#allocation12 + $0x10c0] sm:$0xff]
    %v6412 = vld [vmem:[#allocation12 + $0x10c8] sm:$0xff]
    %v6413 = vld [vmem:[#allocation12 + $0x10d0] sm:$0xff]
    %v6414 = vld [vmem:[#allocation12 + $0x10d8] sm:$0xff]
    %v6415 = vld [vmem:[#allocation12 + $0x10e0] sm:$0xff]
    %v6416 = vld [vmem:[#allocation12 + $0x10e8] sm:$0xff]
    %v6417 = vld [vmem:[#allocation12 + $0x10f0] sm:$0xff]
    %v6418 = vld [vmem:[#allocation12 + $0x10f8] sm:$0xff]
    %v6419 = vld [vmem:[#allocation12 + $0x1100] sm:$0xff]
    %v6420 = vld [vmem:[#allocation12 + $0x1108] sm:$0xff]
    %v6421 = vld [vmem:[#allocation12 + $0x1110] sm:$0xff]
    %v6422 = vld [vmem:[#allocation12 + $0x1118] sm:$0xff]
    %v6423 = vld [vmem:[#allocation12 + $0x1120] sm:$0xff]
    %v6424 = vld [vmem:[#allocation12 + $0x1128] sm:$0xff]
    %v6425 = vld [vmem:[#allocation12 + $0x1130] sm:$0xff]
    %v6426 = vld [vmem:[#allocation12 + $0x1138] sm:$0xff]
    %v6427 = vld [vmem:[#allocation12 + $0x1140] sm:$0xff]
    %v6428 = vld [vmem:[#allocation12 + $0x1148] sm:$0xff]
    %v6429 = vld [vmem:[#allocation12 + $0x1150] sm:$0xff]
    %v6430 = vld [vmem:[#allocation12 + $0x1158] sm:$0xff]
    %v6431 = vld [vmem:[#allocation12 + $0x1160] sm:$0xff]
    %v6432 = vld [vmem:[#allocation12 + $0x1168] sm:$0xff]
    %v6433 = vld [vmem:[#allocation12 + $0x1170] sm:$0xff]
    %v6434 = vld [vmem:[#allocation12 + $0x1178] sm:$0xff]
    %v6435 = vld [vmem:[#allocation12 + $0x1180] sm:$0xff]
    %v6436 = vld [vmem:[#allocation12 + $0x1188] sm:$0xff]
    %v6437 = vld [vmem:[#allocation12 + $0x1190] sm:$0xff]
    %v6438 = vld [vmem:[#allocation12 + $0x1198] sm:$0xff]
    %v6439 = vld [vmem:[#allocation12 + $0x11a0] sm:$0xff]
    %v6440 = vld [vmem:[#allocation12 + $0x11a8] sm:$0xff]
    %v6441 = vld [vmem:[#allocation12 + $0x11b0] sm:$0xff]
    %v6442 = vld [vmem:[#allocation12 + $0x11b8] sm:$0xff]
    %v6443 = vld [vmem:[#allocation12 + $0x11c0] sm:$0xff]
    %v6444 = vld [vmem:[#allocation12 + $0x11c8] sm:$0xff]
    %v6445 = vld [vmem:[#allocation12 + $0x11d0] sm:$0xff]
    %v6446 = vld [vmem:[#allocation12 + $0x11d8] sm:$0xff]
    %v6447 = vld [vmem:[#allocation12 + $0x11e0] sm:$0xff]
    %v6448 = vld [vmem:[#allocation12 + $0x11e8] sm:$0xff]
    %v6449 = vld [vmem:[#allocation12 + $0x11f0] sm:$0xff]
    %v6450 = vld [vmem:[#allocation12 + $0x11f8] sm:$0xff]
    %v6451 = vld [vmem:[#allocation12 + $0x1200] sm:$0xff]
    %v6452 = vld [vmem:[#allocation12 + $0x1208] sm:$0xff]
    %v6453 = vld [vmem:[#allocation12 + $0x1210] sm:$0xff]
    %v6454 = vld [vmem:[#allocation12 + $0x1218] sm:$0xff]
    %v6455 = vld [vmem:[#allocation12 + $0x1220] sm:$0xff]
    %v6456 = vld [vmem:[#allocation12 + $0x1228] sm:$0xff]
    %v6457 = vld [vmem:[#allocation12 + $0x1230] sm:$0xff]
    %v6458 = vld [vmem:[#allocation12 + $0x1238] sm:$0xff]
    %v6459 = vld [vmem:[#allocation12 + $0x1240] sm:$0xff]
    %v6460 = vld [vmem:[#allocation12 + $0x1248] sm:$0xff]
    %v6461 = vld [vmem:[#allocation12 + $0x1250] sm:$0xff]
    %v6462 = vld [vmem:[#allocation12 + $0x1258] sm:$0xff]
    %v6463 = vld [vmem:[#allocation12 + $0x1260] sm:$0xff]
    %v6464 = vld [vmem:[#allocation12 + $0x1268] sm:$0xff]
    %v6465 = vld [vmem:[#allocation12 + $0x1270] sm:$0xff]
    %v6466 = vld [vmem:[#allocation12 + $0x1278] sm:$0xff]
    %v6467 = vld [vmem:[#allocation12 + $0x1280] sm:$0xff]
    %v6468 = vld [vmem:[#allocation12 + $0x1288] sm:$0xff]
    %v6469 = vld [vmem:[#allocation12 + $0x1290] sm:$0xff]
    %v6470 = vld [vmem:[#allocation12 + $0x1298] sm:$0xff]
    %v6471 = vld [vmem:[#allocation12 + $0x12a0] sm:$0xff]
    %v6472 = vld [vmem:[#allocation12 + $0x12a8] sm:$0xff]
    %v6473 = vld [vmem:[#allocation12 + $0x12b0] sm:$0xff]
    %v6474 = vld [vmem:[#allocation12 + $0x12b8] sm:$0xff]
    %v6475 = vld [vmem:[#allocation12 + $0x12c0] sm:$0xff]
    %v6476 = vld [vmem:[#allocation12 + $0x12c8] sm:$0xff]
    %v6477 = vld [vmem:[#allocation12 + $0x12d0] sm:$0xff]
    %v6478 = vld [vmem:[#allocation12 + $0x12d8] sm:$0xff]
    %v6479 = vld [vmem:[#allocation12 + $0x12e0] sm:$0xff]
    %v6480 = vld [vmem:[#allocation12 + $0x12e8] sm:$0xff]
    %v6481 = vld [vmem:[#allocation12 + $0x12f0] sm:$0xff]
    %v6482 = vld [vmem:[#allocation12 + $0x12f8] sm:$0xff]
    %v6483 = vld [vmem:[#allocation12 + $0x1300] sm:$0xff]
    %v6484 = vld [vmem:[#allocation12 + $0x1308] sm:$0xff]
    %v6485 = vld [vmem:[#allocation12 + $0x1310] sm:$0xff]
    %v6486 = vld [vmem:[#allocation12 + $0x1318] sm:$0xff]
    %v6487 = vld [vmem:[#allocation12 + $0x1320] sm:$0xff]
    %v6488 = vld [vmem:[#allocation12 + $0x1328] sm:$0xff]
    %v6489 = vld [vmem:[#allocation12 + $0x1330] sm:$0xff]
    %v6490 = vld [vmem:[#allocation12 + $0x1338] sm:$0xff]
    %v6491 = vld [vmem:[#allocation12 + $0x1340] sm:$0xff]
    %v6492 = vld [vmem:[#allocation12 + $0x1348] sm:$0xff]
    %v6493 = vld [vmem:[#allocation12 + $0x1350] sm:$0xff]
    %v6494 = vld [vmem:[#allocation12 + $0x1358] sm:$0xff]
    %v6495 = vld [vmem:[#allocation12 + $0x1360] sm:$0xff]
    %v6496 = vld [vmem:[#allocation12 + $0x1368] sm:$0xff]
    %v6497 = vld [vmem:[#allocation12 + $0x1370] sm:$0xff]
    %v6498 = vld [vmem:[#allocation12 + $0x1378] sm:$0xff]
    %v6499 = vld [vmem:[#allocation12 + $0x1380] sm:$0xff]
    %v6500 = vld [vmem:[#allocation12 + $0x1388] sm:$0xff]
    %v6501 = vld [vmem:[#allocation12 + $0x1390] sm:$0xff]
    %v6502 = vld [vmem:[#allocation12 + $0x1398] sm:$0xff]
    %v6503 = vld [vmem:[#allocation12 + $0x13a0] sm:$0xff]
    %v6504 = vld [vmem:[#allocation12 + $0x13a8] sm:$0xff]
    %v6505 = vld [vmem:[#allocation12 + $0x13b0] sm:$0xff]
    %v6506 = vld [vmem:[#allocation12 + $0x13b8] sm:$0xff]
    %v6507 = vld [vmem:[#allocation12 + $0x13c0] sm:$0xff]
    %v6508 = vld [vmem:[#allocation12 + $0x13c8] sm:$0xff]
    %v6509 = vld [vmem:[#allocation12 + $0x13d0] sm:$0xff]
    %v6510 = vld [vmem:[#allocation12 + $0x13d8] sm:$0xff]
    %v6511 = vld [vmem:[#allocation12 + $0x13e0] sm:$0xff]
    %v6512 = vld [vmem:[#allocation12 + $0x13e8] sm:$0xff]
    %v6513 = vld [vmem:[#allocation12 + $0x13f0] sm:$0xff]
    %v6514 = vld [vmem:[#allocation12 + $0x13f8] sm:$0xff]
    %v6515 = vld [vmem:[#allocation12 + $0x1400] sm:$0xff]
    %v6516 = vld [vmem:[#allocation12 + $0x1408] sm:$0xff]
    %v6517 = vld [vmem:[#allocation12 + $0x1410] sm:$0xff]
    %v6518 = vld [vmem:[#allocation12 + $0x1418] sm:$0xff]
    %v6519 = vld [vmem:[#allocation12 + $0x1420] sm:$0xff]
    %v6520 = vld [vmem:[#allocation12 + $0x1428] sm:$0xff]
    %v6521 = vld [vmem:[#allocation12 + $0x1430] sm:$0xff]
    %v6522 = vld [vmem:[#allocation12 + $0x1438] sm:$0xff]
    %v6523 = vld [vmem:[#allocation12 + $0x1440] sm:$0xff]
    %v6524 = vld [vmem:[#allocation12 + $0x1448] sm:$0xff]
    %v6525 = vld [vmem:[#allocation12 + $0x1450] sm:$0xff]
    %v6526 = vld [vmem:[#allocation12 + $0x1458] sm:$0xff]
    %v6527 = vld [vmem:[#allocation12 + $0x1460] sm:$0xff]
    %v6528 = vld [vmem:[#allocation12 + $0x1468] sm:$0xff]
    %v6529 = vld [vmem:[#allocation12 + $0x1470] sm:$0xff]
    %v6530 = vld [vmem:[#allocation12 + $0x1478] sm:$0xff]
    %v6531 = vld [vmem:[#allocation12 + $0x1480] sm:$0xff]
    %v6532 = vld [vmem:[#allocation12 + $0x1488] sm:$0xff]
    %v6533 = vld [vmem:[#allocation12 + $0x1490] sm:$0xff]
    %v6534 = vld [vmem:[#allocation12 + $0x1498] sm:$0xff]
    %v6535 = vld [vmem:[#allocation12 + $0x14a0] sm:$0xff]
    %v6536 = vld [vmem:[#allocation12 + $0x14a8] sm:$0xff]
    %v6537 = vld [vmem:[#allocation12 + $0x14b0] sm:$0xff]
    %v6538 = vld [vmem:[#allocation12 + $0x14b8] sm:$0xff]
    %v6539 = vld [vmem:[#allocation12 + $0x14c0] sm:$0xff]
    %v6540 = vld [vmem:[#allocation12 + $0x14c8] sm:$0xff]
    %v6541 = vld [vmem:[#allocation12 + $0x14d0] sm:$0xff]
    %v6542 = vld [vmem:[#allocation12 + $0x14d8] sm:$0xff]
    %v6543 = vld [vmem:[#allocation12 + $0x14e0] sm:$0xff]
    %v6544 = vld [vmem:[#allocation12 + $0x14e8] sm:$0xff]
    %v6545 = vld [vmem:[#allocation12 + $0x14f0] sm:$0xff]
    %v6546 = vld [vmem:[#allocation12 + $0x14f8] sm:$0xff]
    %v6547 = vld [vmem:[#allocation12 + $0x1500] sm:$0xff]
    %v6548 = vld [vmem:[#allocation12 + $0x1508] sm:$0xff]
    %v6549 = vld [vmem:[#allocation12 + $0x1510] sm:$0xff]
    %v6550 = vld [vmem:[#allocation12 + $0x1518] sm:$0xff]
    %v6551 = vld [vmem:[#allocation12 + $0x1520] sm:$0xff]
    %v6552 = vld [vmem:[#allocation12 + $0x1528] sm:$0xff]
    %v6553 = vld [vmem:[#allocation12 + $0x1530] sm:$0xff]
    %v6554 = vld [vmem:[#allocation12 + $0x1538] sm:$0xff]
    %v6555 = vld [vmem:[#allocation12 + $0x1540] sm:$0xff]
    %v6556 = vld [vmem:[#allocation12 + $0x1548] sm:$0xff]
    %v6557 = vld [vmem:[#allocation12 + $0x1550] sm:$0xff]
    %v6558 = vld [vmem:[#allocation12 + $0x1558] sm:$0xff]
    %v6559 = vld [vmem:[#allocation12 + $0x1560] sm:$0xff]
    %v6560 = vld [vmem:[#allocation12 + $0x1568] sm:$0xff]
    %v6561 = vld [vmem:[#allocation12 + $0x1570] sm:$0xff]
    %v6562 = vld [vmem:[#allocation12 + $0x1578] sm:$0xff]
    %v6563 = vld [vmem:[#allocation12 + $0x1580] sm:$0xff]
    %v6564 = vld [vmem:[#allocation12 + $0x1588] sm:$0xff]
    %v6565 = vld [vmem:[#allocation12 + $0x1590] sm:$0xff]
    %v6566 = vld [vmem:[#allocation12 + $0x1598] sm:$0xff]
    %v6567 = vld [vmem:[#allocation12 + $0x15a0] sm:$0xff]
    %v6568 = vld [vmem:[#allocation12 + $0x15a8] sm:$0xff]
    %v6569 = vld [vmem:[#allocation12 + $0x15b0] sm:$0xff]
    %v6570 = vld [vmem:[#allocation12 + $0x15b8] sm:$0xff]
    %v6571 = vld [vmem:[#allocation12 + $0x15c0] sm:$0xff]
    %v6572 = vld [vmem:[#allocation12 + $0x15c8] sm:$0xff]
    %v6573 = vld [vmem:[#allocation12 + $0x15d0] sm:$0xff]
    %v6574 = vld [vmem:[#allocation12 + $0x15d8] sm:$0xff]
    %v6575 = vld [vmem:[#allocation12 + $0x15e0] sm:$0xff]
    %v6576 = vld [vmem:[#allocation12 + $0x15e8] sm:$0xff]
    %v6577 = vld [vmem:[#allocation12 + $0x15f0] sm:$0xff]
    %v6578 = vld [vmem:[#allocation12 + $0x15f8] sm:$0xff]
    %v6579 = vld [vmem:[#allocation12 + $0x1600] sm:$0xff]
    %v6580 = vld [vmem:[#allocation12 + $0x1608] sm:$0xff]
    %v6581 = vld [vmem:[#allocation12 + $0x1610] sm:$0xff]
    %v6582 = vld [vmem:[#allocation12 + $0x1618] sm:$0xff]
    %v6583 = vld [vmem:[#allocation12 + $0x1620] sm:$0xff]
    %v6584 = vld [vmem:[#allocation12 + $0x1628] sm:$0xff]
    %v6585 = vld [vmem:[#allocation12 + $0x1630] sm:$0xff]
    %v6586 = vld [vmem:[#allocation12 + $0x1638] sm:$0xff]
    %v6587 = vld [vmem:[#allocation12 + $0x1640] sm:$0xff]
    %v6588 = vld [vmem:[#allocation12 + $0x1648] sm:$0xff]
    %v6589 = vld [vmem:[#allocation12 + $0x1650] sm:$0xff]
    %v6590 = vld [vmem:[#allocation12 + $0x1658] sm:$0xff]
    %v6591 = vld [vmem:[#allocation12 + $0x1660] sm:$0xff]
    %v6592 = vld [vmem:[#allocation12 + $0x1668] sm:$0xff]
    %v6593 = vld [vmem:[#allocation12 + $0x1670] sm:$0xff]
    %v6594 = vld [vmem:[#allocation12 + $0x1678] sm:$0xff]
    %v6595 = vld [vmem:[#allocation12 + $0x1680] sm:$0xff]
    %v6596 = vld [vmem:[#allocation12 + $0x1688] sm:$0xff]
    %v6597 = vld [vmem:[#allocation12 + $0x1690] sm:$0xff]
    %v6598 = vld [vmem:[#allocation12 + $0x1698] sm:$0xff]
    %v6599 = vld [vmem:[#allocation12 + $0x16a0] sm:$0xff]
    %v6600 = vld [vmem:[#allocation12 + $0x16a8] sm:$0xff]
    %v6601 = vld [vmem:[#allocation12 + $0x16b0] sm:$0xff]
    %v6602 = vld [vmem:[#allocation12 + $0x16b8] sm:$0xff]
    %v6603 = vld [vmem:[#allocation12 + $0x16c0] sm:$0xff]
    %v6604 = vld [vmem:[#allocation12 + $0x16c8] sm:$0xff]
    %v6605 = vld [vmem:[#allocation12 + $0x16d0] sm:$0xff]
    %v6606 = vld [vmem:[#allocation12 + $0x16d8] sm:$0xff]
    %v6607 = vld [vmem:[#allocation12 + $0x16e0] sm:$0xff]
    %v6608 = vld [vmem:[#allocation12 + $0x16e8] sm:$0xff]
    %v6609 = vld [vmem:[#allocation12 + $0x16f0] sm:$0xff]
    %v6610 = vld [vmem:[#allocation12 + $0x16f8] sm:$0xff]
    %v6611 = vld [vmem:[#allocation12 + $0x1700] sm:$0xff]
    %v6612 = vld [vmem:[#allocation12 + $0x1708] sm:$0xff]
    %v6613 = vld [vmem:[#allocation12 + $0x1710] sm:$0xff]
    %v6614 = vld [vmem:[#allocation12 + $0x1718] sm:$0xff]
    %v6615 = vld [vmem:[#allocation12 + $0x1720] sm:$0xff]
    %v6616 = vld [vmem:[#allocation12 + $0x1728] sm:$0xff]
    %v6617 = vld [vmem:[#allocation12 + $0x1730] sm:$0xff]
    %v6618 = vld [vmem:[#allocation12 + $0x1738] sm:$0xff]
    %v6619 = vld [vmem:[#allocation12 + $0x1740] sm:$0xff]
    %v6620 = vld [vmem:[#allocation12 + $0x1748] sm:$0xff]
    %v6621 = vld [vmem:[#allocation12 + $0x1750] sm:$0xff]
    %v6622 = vld [vmem:[#allocation12 + $0x1758] sm:$0xff]
    %v6623 = vld [vmem:[#allocation12 + $0x1760] sm:$0xff]
    %v6624 = vld [vmem:[#allocation12 + $0x1768] sm:$0xff]
    %v6625 = vld [vmem:[#allocation12 + $0x1770] sm:$0xff]
    %v6626 = vld [vmem:[#allocation12 + $0x1778] sm:$0xff]
    %v6627 = vld [vmem:[#allocation12 + $0x1780] sm:$0xff]
    %v6628 = vld [vmem:[#allocation12 + $0x1788] sm:$0xff]
    %v6629 = vld [vmem:[#allocation12 + $0x1790] sm:$0xff]
    %v6630 = vld [vmem:[#allocation12 + $0x1798] sm:$0xff]
    %v6631 = vld [vmem:[#allocation12 + $0x17a0] sm:$0xff]
    %v6632 = vld [vmem:[#allocation12 + $0x17a8] sm:$0xff]
    %v6633 = vld [vmem:[#allocation12 + $0x17b0] sm:$0xff]
    %v6634 = vld [vmem:[#allocation12 + $0x17b8] sm:$0xff]
    %v6635 = vld [vmem:[#allocation12 + $0x17c0] sm:$0xff]
    %v6636 = vld [vmem:[#allocation12 + $0x17c8] sm:$0xff]
    %v6637 = vld [vmem:[#allocation12 + $0x17d0] sm:$0xff]
    %v6638 = vld [vmem:[#allocation12 + $0x17d8] sm:$0xff]
    %v6639 = vld [vmem:[#allocation12 + $0x17e0] sm:$0xff]
    %v6640 = vld [vmem:[#allocation12 + $0x17e8] sm:$0xff]
    %v6641 = vld [vmem:[#allocation12 + $0x17f0] sm:$0xff]
    %v6642 = vld [vmem:[#allocation12 + $0x17f8] sm:$0xff]
    %v6643 = vld [vmem:[#allocation12 + $0x1800] sm:$0xff]
    %v6644 = vld [vmem:[#allocation12 + $0x1808] sm:$0xff]
    %v6645 = vld [vmem:[#allocation12 + $0x1810] sm:$0xff]
    %v6646 = vld [vmem:[#allocation12 + $0x1818] sm:$0xff]
    %v6647 = vld [vmem:[#allocation12 + $0x1820] sm:$0xff]
    %v6648 = vld [vmem:[#allocation12 + $0x1828] sm:$0xff]
    %v6649 = vld [vmem:[#allocation12 + $0x1830] sm:$0xff]
    %v6650 = vld [vmem:[#allocation12 + $0x1838] sm:$0xff]
    %v6651 = vld [vmem:[#allocation12 + $0x1840] sm:$0xff]
    %v6652 = vld [vmem:[#allocation12 + $0x1848] sm:$0xff]
    %v6653 = vld [vmem:[#allocation12 + $0x1850] sm:$0xff]
    %v6654 = vld [vmem:[#allocation12 + $0x1858] sm:$0xff]
    %v6655 = vld [vmem:[#allocation12 + $0x1860] sm:$0xff]
    %v6656 = vld [vmem:[#allocation12 + $0x1868] sm:$0xff]
    %v6657 = vld [vmem:[#allocation12 + $0x1870] sm:$0xff]
    %v6658 = vld [vmem:[#allocation12 + $0x1878] sm:$0xff]
    %v6659 = vld [vmem:[#allocation12 + $0x1880] sm:$0xff]
    %v6660 = vld [vmem:[#allocation12 + $0x1888] sm:$0xff]
    %v6661 = vld [vmem:[#allocation12 + $0x1890] sm:$0xff]
    %v6662 = vld [vmem:[#allocation12 + $0x1898] sm:$0xff]
    %v6663 = vld [vmem:[#allocation12 + $0x18a0] sm:$0xff]
    %v6664 = vld [vmem:[#allocation12 + $0x18a8] sm:$0xff]
    %v6665 = vld [vmem:[#allocation12 + $0x18b0] sm:$0xff]
    %v6666 = vld [vmem:[#allocation12 + $0x18b8] sm:$0xff]
    %v6667 = vld [vmem:[#allocation12 + $0x18c0] sm:$0xff]
    %v6668 = vld [vmem:[#allocation12 + $0x18c8] sm:$0xff]
    %v6669 = vld [vmem:[#allocation12 + $0x18d0] sm:$0xff]
    %v6670 = vld [vmem:[#allocation12 + $0x18d8] sm:$0xff]
    %v6671 = vld [vmem:[#allocation12 + $0x18e0] sm:$0xff]
    %v6672 = vld [vmem:[#allocation12 + $0x18e8] sm:$0xff]
    %v6673 = vld [vmem:[#allocation12 + $0x18f0] sm:$0xff]
    %v6674 = vld [vmem:[#allocation12 + $0x18f8] sm:$0xff]
    %v6675 = vld [vmem:[#allocation12 + $0x1900] sm:$0xff]
    %v6676 = vld [vmem:[#allocation12 + $0x1908] sm:$0xff]
    %v6677 = vld [vmem:[#allocation12 + $0x1910] sm:$0xff]
    %v6678 = vld [vmem:[#allocation12 + $0x1918] sm:$0xff]
    %v6679 = vld [vmem:[#allocation12 + $0x1920] sm:$0xff]
    %v6680 = vld [vmem:[#allocation12 + $0x1928] sm:$0xff]
    %v6681 = vld [vmem:[#allocation12 + $0x1930] sm:$0xff]
    %v6682 = vld [vmem:[#allocation12 + $0x1938] sm:$0xff]
    %v6683 = vld [vmem:[#allocation12 + $0x1940] sm:$0xff]
    %v6684 = vld [vmem:[#allocation12 + $0x1948] sm:$0xff]
    %v6685 = vld [vmem:[#allocation12 + $0x1950] sm:$0xff]
    %v6686 = vld [vmem:[#allocation12 + $0x1958] sm:$0xff]
    %v6687 = vld [vmem:[#allocation12 + $0x1960] sm:$0xff]
    %v6688 = vld [vmem:[#allocation12 + $0x1968] sm:$0xff]
    %v6689 = vld [vmem:[#allocation12 + $0x1970] sm:$0xff]
    %v6690 = vld [vmem:[#allocation12 + $0x1978] sm:$0xff]
    %v6691 = vld [vmem:[#allocation12 + $0x1980] sm:$0xff]
    %v6692 = vld [vmem:[#allocation12 + $0x1988] sm:$0xff]
    %v6693 = vld [vmem:[#allocation12 + $0x1990] sm:$0xff]
    %v6694 = vld [vmem:[#allocation12 + $0x1998] sm:$0xff]
    %v6695 = vld [vmem:[#allocation12 + $0x19a0] sm:$0xff]
    %v6696 = vld [vmem:[#allocation12 + $0x19a8] sm:$0xff]
    %v6697 = vld [vmem:[#allocation12 + $0x19b0] sm:$0xff]
    %v6698 = vld [vmem:[#allocation12 + $0x19b8] sm:$0xff]
    %v6699 = vld [vmem:[#allocation12 + $0x19c0] sm:$0xff]
    %v6700 = vld [vmem:[#allocation12 + $0x19c8] sm:$0xff]
    %v6701 = vld [vmem:[#allocation12 + $0x19d0] sm:$0xff]
    %v6702 = vld [vmem:[#allocation12 + $0x19d8] sm:$0xff]
    %v6703 = vld [vmem:[#allocation12 + $0x19e0] sm:$0xff]
    %v6704 = vld [vmem:[#allocation12 + $0x19e8] sm:$0xff]
    %v6705 = vld [vmem:[#allocation12 + $0x19f0] sm:$0xff]
    %v6706 = vld [vmem:[#allocation12 + $0x19f8] sm:$0xff]
    %v6707 = vld [vmem:[#allocation12 + $0x1a00] sm:$0xff]
    %v6708 = vld [vmem:[#allocation12 + $0x1a08] sm:$0xff]
    %v6709 = vld [vmem:[#allocation12 + $0x1a10] sm:$0xff]
    %v6710 = vld [vmem:[#allocation12 + $0x1a18] sm:$0xff]
    %v6711 = vld [vmem:[#allocation12 + $0x1a20] sm:$0xff]
    %v6712 = vld [vmem:[#allocation12 + $0x1a28] sm:$0xff]
    %v6713 = vld [vmem:[#allocation12 + $0x1a30] sm:$0xff]
    %v6714 = vld [vmem:[#allocation12 + $0x1a38] sm:$0xff]
    %v6715 = vld [vmem:[#allocation12 + $0x1a40] sm:$0xff]
    %v6716 = vld [vmem:[#allocation12 + $0x1a48] sm:$0xff]
    %v6717 = vld [vmem:[#allocation12 + $0x1a50] sm:$0xff]
    %v6718 = vld [vmem:[#allocation12 + $0x1a58] sm:$0xff]
    %v6719 = vld [vmem:[#allocation12 + $0x1a60] sm:$0xff]
    %v6720 = vld [vmem:[#allocation12 + $0x1a68] sm:$0xff]
    %v6721 = vld [vmem:[#allocation12 + $0x1a70] sm:$0xff]
    %v6722 = vld [vmem:[#allocation12 + $0x1a78] sm:$0xff]
    %v6723 = vld [vmem:[#allocation12 + $0x1a80] sm:$0xff]
    %v6724 = vld [vmem:[#allocation12 + $0x1a88] sm:$0xff]
    %v6725 = vld [vmem:[#allocation12 + $0x1a90] sm:$0xff]
    %v6726 = vld [vmem:[#allocation12 + $0x1a98] sm:$0xff]
    %v6727 = vld [vmem:[#allocation12 + $0x1aa0] sm:$0xff]
    %v6728 = vld [vmem:[#allocation12 + $0x1aa8] sm:$0xff]
    %v6729 = vld [vmem:[#allocation12 + $0x1ab0] sm:$0xff]
    %v6730 = vld [vmem:[#allocation12 + $0x1ab8] sm:$0xff]
    %v6731 = vld [vmem:[#allocation12 + $0x1ac0] sm:$0xff]
    %v6732 = vld [vmem:[#allocation12 + $0x1ac8] sm:$0xff]
    %v6733 = vld [vmem:[#allocation12 + $0x1ad0] sm:$0xff]
    %v6734 = vld [vmem:[#allocation12 + $0x1ad8] sm:$0xff]
    %v6735 = vld [vmem:[#allocation12 + $0x1ae0] sm:$0xff]
    %v6736 = vld [vmem:[#allocation12 + $0x1ae8] sm:$0xff]
    %v6737 = vld [vmem:[#allocation12 + $0x1af0] sm:$0xff]
    %v6738 = vld [vmem:[#allocation12 + $0x1af8] sm:$0xff]
    %v6739 = vld [vmem:[#allocation12 + $0x1b00] sm:$0xff]
    %v6740 = vld [vmem:[#allocation12 + $0x1b08] sm:$0xff]
    %v6741 = vld [vmem:[#allocation12 + $0x1b10] sm:$0xff]
    %v6742 = vld [vmem:[#allocation12 + $0x1b18] sm:$0xff]
    %v6743 = vld [vmem:[#allocation12 + $0x1b20] sm:$0xff]
    %v6744 = vld [vmem:[#allocation12 + $0x1b28] sm:$0xff]
    %v6745 = vld [vmem:[#allocation12 + $0x1b30] sm:$0xff]
    %v6746 = vld [vmem:[#allocation12 + $0x1b38] sm:$0xff]
    %v6747 = vld [vmem:[#allocation12 + $0x1b40] sm:$0xff]
    %v6748 = vld [vmem:[#allocation12 + $0x1b48] sm:$0xff]
    %v6749 = vld [vmem:[#allocation12 + $0x1b50] sm:$0xff]
    %v6750 = vld [vmem:[#allocation12 + $0x1b58] sm:$0xff]
    %v6751 = vld [vmem:[#allocation12 + $0x1b60] sm:$0xff]
    %v6752 = vld [vmem:[#allocation12 + $0x1b68] sm:$0xff]
    %v6753 = vld [vmem:[#allocation12 + $0x1b70] sm:$0xff]
    %v6754 = vld [vmem:[#allocation12 + $0x1b78] sm:$0xff]
    %v6755 = vld [vmem:[#allocation12 + $0x1b80] sm:$0xff]
    %v6756 = vld [vmem:[#allocation12 + $0x1b88] sm:$0xff]
    %v6757 = vld [vmem:[#allocation12 + $0x1b90] sm:$0xff]
    %v6758 = vld [vmem:[#allocation12 + $0x1b98] sm:$0xff]
    %v6759 = vld [vmem:[#allocation12 + $0x1ba0] sm:$0xff]
    %v6760 = vld [vmem:[#allocation12 + $0x1ba8] sm:$0xff]
    %v6761 = vld [vmem:[#allocation12 + $0x1bb0] sm:$0xff]
    %v6762 = vld [vmem:[#allocation12 + $0x1bb8] sm:$0xff]
    %v6763 = vld [vmem:[#allocation12 + $0x1bc0] sm:$0xff]
    %v6764 = vld [vmem:[#allocation12 + $0x1bc8] sm:$0xff]
    %v6765 = vld [vmem:[#allocation12 + $0x1bd0] sm:$0xff]
    %v6766 = vld [vmem:[#allocation12 + $0x1bd8] sm:$0xff]
    %v6767 = vld [vmem:[#allocation12 + $0x1be0] sm:$0xff]
    %v6768 = vld [vmem:[#allocation12 + $0x1be8] sm:$0xff]
    %v6769 = vld [vmem:[#allocation12 + $0x1bf0] sm:$0xff]
    %v6770 = vld [vmem:[#allocation12 + $0x1bf8] sm:$0xff]
    %6771 = vmatpush.msra.mxu0 %v5980
    %6772 = vmatpush.msra.mxu0 %v5973
    %6773 = vmatpush.msra.mxu0 %v5966
    %6774 = vmatpush.msra.mxu0 %v5959
    %6775 = vmatpush.msra.mxu0 %v5952
    %6776 = vmatpush.msra.mxu0 %v5945
    %6777 = vmatpush.msra.mxu0 %v5938
    %6778 = vmatpush.msra.mxu0 %v5931
    %6779 = vmatpush.msra.mxu0 %v5924
    %6780 = vmatpush.msra.mxu0 %v5917
    %6781 = vmatpush.msra.mxu0 %v5910
    %6782 = vmatpush.msra.mxu0 %v5903
    %6783 = vmatpush.msra.mxu0 %v5896
    %6784 = vmatpush.msra.mxu0 %v5889
    %6785 = vmatpush.msra.mxu0 %v5882
    %6786 = vmatpush.msra.mxu0 %v5875
    %6787 = vmatmul.f32.gmra.mxu0 %v5745
    %v6788 = vpop.f32.mrf.mxu0
    %v6789 = vadd.f32 0.0, %v6788
    %6790 = vdwg.mxu0
    %6791 = vmatpush.msra.mxu0 %v6092
    %6792 = vmatpush.msra.mxu0 %v6085
    %6793 = vmatpush.msra.mxu0 %v6078
    %6794 = vmatpush.msra.mxu0 %v6071
    %6795 = vmatpush.msra.mxu0 %v6064
    %6796 = vmatpush.msra.mxu0 %v6057
    %6797 = vmatpush.msra.mxu0 %v6050
    %6798 = vmatpush.msra.mxu0 %v6043
    %6799 = vmatpush.msra.mxu0 %v6036
    %6800 = vmatpush.msra.mxu0 %v6029
    %6801 = vmatpush.msra.mxu0 %v6022
    %6802 = vmatpush.msra.mxu0 %v6015
    %6803 = vmatpush.msra.mxu0 %v6008
    %6804 = vmatpush.msra.mxu0 %v6001
    %6805 = vmatpush.msra.mxu0 %v5994
    %6806 = vmatpush.msra.mxu0 %v5987
    %6807 = vmatmul.f32.gmra.mxu0 %v5752
    %v6808 = vpop.f32.mrf.mxu0
    %v6809 = vadd.f32 %v6789, %v6808
    %6810 = vdwg.mxu0
    %6811 = vmatpush.msra.mxu0 %v6204
    %6812 = vmatpush.msra.mxu0 %v6197
    %6813 = vmatpush.msra.mxu0 %v6190
    %6814 = vmatpush.msra.mxu0 %v6183
    %6815 = vmatpush.msra.mxu0 %v6176
    %6816 = vmatpush.msra.mxu0 %v6169
    %6817 = vmatpush.msra.mxu0 %v6162
    %6818 = vmatpush.msra.mxu0 %v6155
    %6819 = vmatpush.msra.mxu0 %v6148
    %6820 = vmatpush.msra.mxu0 %v6141
    %6821 = vmatpush.msra.mxu0 %v6134
    %6822 = vmatpush.msra.mxu0 %v6127
    %6823 = vmatpush.msra.mxu0 %v6120
    %6824 = vmatpush.msra.mxu0 %v6113
    %6825 = vmatpush.msra.mxu0 %v6106
    %6826 = vmatpush.msra.mxu0 %v6099
    %6827 = vmatmul.f32.gmra.mxu0 %v5785
    %v6828 = vpop.f32.mrf.mxu0
    %v6829 = vadd.f32 %v6809, %v6828
    %6830 = vdwg.mxu0
    %6831 = vmatpush.msra.mxu0 %v6316
    %6832 = vmatpush.msra.mxu0 %v6309
    %6833 = vmatpush.msra.mxu0 %v6302
    %6834 = vmatpush.msra.mxu0 %v6295
    %6835 = vmatpush.msra.mxu0 %v6288
    %6836 = vmatpush.msra.mxu0 %v6281
    %6837 = vmatpush.msra.mxu0 %v6274
    %6838 = vmatpush.msra.mxu0 %v6267
    %6839 = vmatpush.msra.mxu0 %v6260
    %6840 = vmatpush.msra.mxu0 %v6253
    %6841 = vmatpush.msra.mxu0 %v6246
    %6842 = vmatpush.msra.mxu0 %v6239
    %6843 = vmatpush.msra.mxu0 %v6232
    %6844 = vmatpush.msra.mxu0 %v6225
    %6845 = vmatpush.msra.mxu0 %v6218
    %6846 = vmatpush.msra.mxu0 %v6211
    %6847 = vmatmul.f32.gmra.mxu0 %v5792
    %v6848 = vpop.f32.mrf.mxu0
    %v6849 = vadd.f32 %v6829, %v6848
    %6850 = vdwg.mxu0
    %6851 = vmatpush.msra.mxu0 %v6428
    %6852 = vmatpush.msra.mxu0 %v6421
    %6853 = vmatpush.msra.mxu0 %v6414
    %6854 = vmatpush.msra.mxu0 %v6407
    %6855 = vmatpush.msra.mxu0 %v6400
    %6856 = vmatpush.msra.mxu0 %v6393
    %6857 = vmatpush.msra.mxu0 %v6386
    %6858 = vmatpush.msra.mxu0 %v6379
    %6859 = vmatpush.msra.mxu0 %v6372
    %6860 = vmatpush.msra.mxu0 %v6365
    %6861 = vmatpush.msra.mxu0 %v6358
    %6862 = vmatpush.msra.mxu0 %v6351
    %6863 = vmatpush.msra.mxu0 %v6344
    %6864 = vmatpush.msra.mxu0 %v6337
    %6865 = vmatpush.msra.mxu0 %v6330
    %6866 = vmatpush.msra.mxu0 %v6323
    %6867 = vmatmul.f32.gmra.mxu0 %v5825
    %v6868 = vpop.f32.mrf.mxu0
    %v6869 = vadd.f32 %v6849, %v6868
    %6870 = vdwg.mxu0
    %6871 = vmatpush.msra.mxu0 %v6540
    %6872 = vmatpush.msra.mxu0 %v6533
    %6873 = vmatpush.msra.mxu0 %v6526
    %6874 = vmatpush.msra.mxu0 %v6519
    %6875 = vmatpush.msra.mxu0 %v6512
    %6876 = vmatpush.msra.mxu0 %v6505
    %6877 = vmatpush.msra.mxu0 %v6498
    %6878 = vmatpush.msra.mxu0 %v6491
    %6879 = vmatpush.msra.mxu0 %v6484
    %6880 = vmatpush.msra.mxu0 %v6477
    %6881 = vmatpush.msra.mxu0 %v6470
    %6882 = vmatpush.msra.mxu0 %v6463
    %6883 = vmatpush.msra.mxu0 %v6456
    %6884 = vmatpush.msra.mxu0 %v6449
    %6885 = vmatpush.msra.mxu0 %v6442
    %6886 = vmatpush.msra.mxu0 %v6435
    %6887 = vmatmul.f32.gmra.mxu0 %v5832
    %v6888 = vpop.f32.mrf.mxu0
    %v6889 = vadd.f32 %v6869, %v6888
    %6890 = vdwg.mxu0
    %6891 = vmatpush.msra.mxu0 %v6652
    %6892 = vmatpush.msra.mxu0 %v6645
    %6893 = vmatpush.msra.mxu0 %v6638
    %6894 = vmatpush.msra.mxu0 %v6631
    %6895 = vmatpush.msra.mxu0 %v6624
    %6896 = vmatpush.msra.mxu0 %v6617
    %6897 = vmatpush.msra.mxu0 %v6610
    %6898 = vmatpush.msra.mxu0 %v6603
    %6899 = vmatpush.msra.mxu0 %v6596
    %6900 = vmatpush.msra.mxu0 %v6589
    %6901 = vmatpush.msra.mxu0 %v6582
    %6902 = vmatpush.msra.mxu0 %v6575
    %6903 = vmatpush.msra.mxu0 %v6568
    %6904 = vmatpush.msra.mxu0 %v6561
    %6905 = vmatpush.msra.mxu0 %v6554
    %6906 = vmatpush.msra.mxu0 %v6547
    %6907 = vmatmul.f32.gmra.mxu0 %v5865
    %v6908 = vpop.f32.mrf.mxu0
    %v6909 = vadd.f32 %v6889, %v6908
    %6910 = vdwg.mxu0
    %6911 = vmatpush.msra.mxu0 %v6764
    %6912 = vmatpush.msra.mxu0 %v6757
    %6913 = vmatpush.msra.mxu0 %v6750
    %6914 = vmatpush.msra.mxu0 %v6743
    %6915 = vmatpush.msra.mxu0 %v6736
    %6916 = vmatpush.msra.mxu0 %v6729
    %6917 = vmatpush.msra.mxu0 %v6722
    %6918 = vmatpush.msra.mxu0 %v6715
    %6919 = vmatpush.msra.mxu0 %v6708
    %6920 = vmatpush.msra.mxu0 %v6701
    %6921 = vmatpush.msra.mxu0 %v6694
    %6922 = vmatpush.msra.mxu0 %v6687
    %6923 = vmatpush.msra.mxu0 %v6680
    %6924 = vmatpush.msra.mxu0 %v6673
    %6925 = vmatpush.msra.mxu0 %v6666
    %6926 = vmatpush.msra.mxu0 %v6659
    %6927 = vmatmul.f32.gmra.mxu0 %v5872
    %v6928 = vpop.f32.mrf.mxu0
    %v6929 = vadd.f32 %v6909, %v6928
    %6930 = vdwg.mxu0
    %6931 = vmatpush.msra.mxu0 %v5981
    %6932 = vmatpush.msra.mxu0 %v5974
    %6933 = vmatpush.msra.mxu0 %v5967
    %6934 = vmatpush.msra.mxu0 %v5960
    %6935 = vmatpush.msra.mxu0 %v5953
    %6936 = vmatpush.msra.mxu0 %v5946
    %6937 = vmatpush.msra.mxu0 %v5939
    %6938 = vmatpush.msra.mxu0 %v5932
    %6939 = vmatpush.msra.mxu0 %v5925
    %6940 = vmatpush.msra.mxu0 %v5918
    %6941 = vmatpush.msra.mxu0 %v5911
    %6942 = vmatpush.msra.mxu0 %v5904
    %6943 = vmatpush.msra.mxu0 %v5897
    %6944 = vmatpush.msra.mxu0 %v5890
    %6945 = vmatpush.msra.mxu0 %v5883
    %6946 = vmatpush.msra.mxu0 %v5876
    %6947 = vmatmul.f32.gmra.mxu0 %v5745
    %v6948 = vpop.f32.mrf.mxu0
    %v6949 = vadd.f32 0.0, %v6948
    %6950 = vdwg.mxu0
    %6951 = vmatpush.msra.mxu0 %v6093
    %6952 = vmatpush.msra.mxu0 %v6086
    %6953 = vmatpush.msra.mxu0 %v6079
    %6954 = vmatpush.msra.mxu0 %v6072
    %6955 = vmatpush.msra.mxu0 %v6065
    %6956 = vmatpush.msra.mxu0 %v6058
    %6957 = vmatpush.msra.mxu0 %v6051
    %6958 = vmatpush.msra.mxu0 %v6044
    %6959 = vmatpush.msra.mxu0 %v6037
    %6960 = vmatpush.msra.mxu0 %v6030
    %6961 = vmatpush.msra.mxu0 %v6023
    %6962 = vmatpush.msra.mxu0 %v6016
    %6963 = vmatpush.msra.mxu0 %v6009
    %6964 = vmatpush.msra.mxu0 %v6002
    %6965 = vmatpush.msra.mxu0 %v5995
    %6966 = vmatpush.msra.mxu0 %v5988
    %6967 = vmatmul.f32.gmra.mxu0 %v5752
    %v6968 = vpop.f32.mrf.mxu0
    %v6969 = vadd.f32 %v6949, %v6968
    %6970 = vdwg.mxu0
    %6971 = vmatpush.msra.mxu0 %v6205
    %6972 = vmatpush.msra.mxu0 %v6198
    %6973 = vmatpush.msra.mxu0 %v6191
    %6974 = vmatpush.msra.mxu0 %v6184
    %6975 = vmatpush.msra.mxu0 %v6177
    %6976 = vmatpush.msra.mxu0 %v6170
    %6977 = vmatpush.msra.mxu0 %v6163
    %6978 = vmatpush.msra.mxu0 %v6156
    %6979 = vmatpush.msra.mxu0 %v6149
    %6980 = vmatpush.msra.mxu0 %v6142
    %6981 = vmatpush.msra.mxu0 %v6135
    %6982 = vmatpush.msra.mxu0 %v6128
    %6983 = vmatpush.msra.mxu0 %v6121
    %6984 = vmatpush.msra.mxu0 %v6114
    %6985 = vmatpush.msra.mxu0 %v6107
    %6986 = vmatpush.msra.mxu0 %v6100
    %6987 = vmatmul.f32.gmra.mxu0 %v5785
    %v6988 = vpop.f32.mrf.mxu0
    %v6989 = vadd.f32 %v6969, %v6988
    %6990 = vdwg.mxu0
    %6991 = vmatpush.msra.mxu0 %v6317
    %6992 = vmatpush.msra.mxu0 %v6310
    %6993 = vmatpush.msra.mxu0 %v6303
    %6994 = vmatpush.msra.mxu0 %v6296
    %6995 = vmatpush.msra.mxu0 %v6289
    %6996 = vmatpush.msra.mxu0 %v6282
    %6997 = vmatpush.msra.mxu0 %v6275
    %6998 = vmatpush.msra.mxu0 %v6268
    %6999 = vmatpush.msra.mxu0 %v6261
    %7000 = vmatpush.msra.mxu0 %v6254
    %7001 = vmatpush.msra.mxu0 %v6247
    %7002 = vmatpush.msra.mxu0 %v6240
    %7003 = vmatpush.msra.mxu0 %v6233
    %7004 = vmatpush.msra.mxu0 %v6226
    %7005 = vmatpush.msra.mxu0 %v6219
    %7006 = vmatpush.msra.mxu0 %v6212
    %7007 = vmatmul.f32.gmra.mxu0 %v5792
    %v7008 = vpop.f32.mrf.mxu0
    %v7009 = vadd.f32 %v6989, %v7008
    %7010 = vdwg.mxu0
    %7011 = vmatpush.msra.mxu0 %v6429
    %7012 = vmatpush.msra.mxu0 %v6422
    %7013 = vmatpush.msra.mxu0 %v6415
    %7014 = vmatpush.msra.mxu0 %v6408
    %7015 = vmatpush.msra.mxu0 %v6401
    %7016 = vmatpush.msra.mxu0 %v6394
    %7017 = vmatpush.msra.mxu0 %v6387
    %7018 = vmatpush.msra.mxu0 %v6380
    %7019 = vmatpush.msra.mxu0 %v6373
    %7020 = vmatpush.msra.mxu0 %v6366
    %7021 = vmatpush.msra.mxu0 %v6359
    %7022 = vmatpush.msra.mxu0 %v6352
    %7023 = vmatpush.msra.mxu0 %v6345
    %7024 = vmatpush.msra.mxu0 %v6338
    %7025 = vmatpush.msra.mxu0 %v6331
    %7026 = vmatpush.msra.mxu0 %v6324
    %7027 = vmatmul.f32.gmra.mxu0 %v5825
    %v7028 = vpop.f32.mrf.mxu0
    %v7029 = vadd.f32 %v7009, %v7028
    %7030 = vdwg.mxu0
    %7031 = vmatpush.msra.mxu0 %v6541
    %7032 = vmatpush.msra.mxu0 %v6534
    %7033 = vmatpush.msra.mxu0 %v6527
    %7034 = vmatpush.msra.mxu0 %v6520
    %7035 = vmatpush.msra.mxu0 %v6513
    %7036 = vmatpush.msra.mxu0 %v6506
    %7037 = vmatpush.msra.mxu0 %v6499
    %7038 = vmatpush.msra.mxu0 %v6492
    %7039 = vmatpush.msra.mxu0 %v6485
    %7040 = vmatpush.msra.mxu0 %v6478
    %7041 = vmatpush.msra.mxu0 %v6471
    %7042 = vmatpush.msra.mxu0 %v6464
    %7043 = vmatpush.msra.mxu0 %v6457
    %7044 = vmatpush.msra.mxu0 %v6450
    %7045 = vmatpush.msra.mxu0 %v6443
    %7046 = vmatpush.msra.mxu0 %v6436
    %7047 = vmatmul.f32.gmra.mxu0 %v5832
    %v7048 = vpop.f32.mrf.mxu0
    %v7049 = vadd.f32 %v7029, %v7048
    %7050 = vdwg.mxu0
    %7051 = vmatpush.msra.mxu0 %v6653
    %7052 = vmatpush.msra.mxu0 %v6646
    %7053 = vmatpush.msra.mxu0 %v6639
    %7054 = vmatpush.msra.mxu0 %v6632
    %7055 = vmatpush.msra.mxu0 %v6625
    %7056 = vmatpush.msra.mxu0 %v6618
    %7057 = vmatpush.msra.mxu0 %v6611
    %7058 = vmatpush.msra.mxu0 %v6604
    %7059 = vmatpush.msra.mxu0 %v6597
    %7060 = vmatpush.msra.mxu0 %v6590
    %7061 = vmatpush.msra.mxu0 %v6583
    %7062 = vmatpush.msra.mxu0 %v6576
    %7063 = vmatpush.msra.mxu0 %v6569
    %7064 = vmatpush.msra.mxu0 %v6562
    %7065 = vmatpush.msra.mxu0 %v6555
    %7066 = vmatpush.msra.mxu0 %v6548
    %7067 = vmatmul.f32.gmra.mxu0 %v5865
    %v7068 = vpop.f32.mrf.mxu0
    %v7069 = vadd.f32 %v7049, %v7068
    %7070 = vdwg.mxu0
    %7071 = vmatpush.msra.mxu0 %v6765
    %7072 = vmatpush.msra.mxu0 %v6758
    %7073 = vmatpush.msra.mxu0 %v6751
    %7074 = vmatpush.msra.mxu0 %v6744
    %7075 = vmatpush.msra.mxu0 %v6737
    %7076 = vmatpush.msra.mxu0 %v6730
    %7077 = vmatpush.msra.mxu0 %v6723
    %7078 = vmatpush.msra.mxu0 %v6716
    %7079 = vmatpush.msra.mxu0 %v6709
    %7080 = vmatpush.msra.mxu0 %v6702
    %7081 = vmatpush.msra.mxu0 %v6695
    %7082 = vmatpush.msra.mxu0 %v6688
    %7083 = vmatpush.msra.mxu0 %v6681
    %7084 = vmatpush.msra.mxu0 %v6674
    %7085 = vmatpush.msra.mxu0 %v6667
    %7086 = vmatpush.msra.mxu0 %v6660
    %7087 = vmatmul.f32.gmra.mxu0 %v5872
    %v7088 = vpop.f32.mrf.mxu0
    %v7089 = vadd.f32 %v7069, %v7088
    %7090 = vdwg.mxu0
    %7091 = vmatpush.msra.mxu0 %v5982
    %7092 = vmatpush.msra.mxu0 %v5975
    %7093 = vmatpush.msra.mxu0 %v5968
    %7094 = vmatpush.msra.mxu0 %v5961
    %7095 = vmatpush.msra.mxu0 %v5954
    %7096 = vmatpush.msra.mxu0 %v5947
    %7097 = vmatpush.msra.mxu0 %v5940
    %7098 = vmatpush.msra.mxu0 %v5933
    %7099 = vmatpush.msra.mxu0 %v5926
    %7100 = vmatpush.msra.mxu0 %v5919
    %7101 = vmatpush.msra.mxu0 %v5912
    %7102 = vmatpush.msra.mxu0 %v5905
    %7103 = vmatpush.msra.mxu0 %v5898
    %7104 = vmatpush.msra.mxu0 %v5891
    %7105 = vmatpush.msra.mxu0 %v5884
    %7106 = vmatpush.msra.mxu0 %v5877
    %7107 = vmatmul.f32.gmra.mxu0 %v5745
    %v7108 = vpop.f32.mrf.mxu0
    %v7109 = vadd.f32 0.0, %v7108
    %7110 = vdwg.mxu0
    %7111 = vmatpush.msra.mxu0 %v6094
    %7112 = vmatpush.msra.mxu0 %v6087
    %7113 = vmatpush.msra.mxu0 %v6080
    %7114 = vmatpush.msra.mxu0 %v6073
    %7115 = vmatpush.msra.mxu0 %v6066
    %7116 = vmatpush.msra.mxu0 %v6059
    %7117 = vmatpush.msra.mxu0 %v6052
    %7118 = vmatpush.msra.mxu0 %v6045
    %7119 = vmatpush.msra.mxu0 %v6038
    %7120 = vmatpush.msra.mxu0 %v6031
    %7121 = vmatpush.msra.mxu0 %v6024
    %7122 = vmatpush.msra.mxu0 %v6017
    %7123 = vmatpush.msra.mxu0 %v6010
    %7124 = vmatpush.msra.mxu0 %v6003
    %7125 = vmatpush.msra.mxu0 %v5996
    %7126 = vmatpush.msra.mxu0 %v5989
    %7127 = vmatmul.f32.gmra.mxu0 %v5752
    %v7128 = vpop.f32.mrf.mxu0
    %v7129 = vadd.f32 %v7109, %v7128
    %7130 = vdwg.mxu0
    %7131 = vmatpush.msra.mxu0 %v6206
    %7132 = vmatpush.msra.mxu0 %v6199
    %7133 = vmatpush.msra.mxu0 %v6192
    %7134 = vmatpush.msra.mxu0 %v6185
    %7135 = vmatpush.msra.mxu0 %v6178
    %7136 = vmatpush.msra.mxu0 %v6171
    %7137 = vmatpush.msra.mxu0 %v6164
    %7138 = vmatpush.msra.mxu0 %v6157
    %7139 = vmatpush.msra.mxu0 %v6150
    %7140 = vmatpush.msra.mxu0 %v6143
    %7141 = vmatpush.msra.mxu0 %v6136
    %7142 = vmatpush.msra.mxu0 %v6129
    %7143 = vmatpush.msra.mxu0 %v6122
    %7144 = vmatpush.msra.mxu0 %v6115
    %7145 = vmatpush.msra.mxu0 %v6108
    %7146 = vmatpush.msra.mxu0 %v6101
    %7147 = vmatmul.f32.gmra.mxu0 %v5785
    %v7148 = vpop.f32.mrf.mxu0
    %v7149 = vadd.f32 %v7129, %v7148
    %7150 = vdwg.mxu0
    %7151 = vmatpush.msra.mxu0 %v6318
    %7152 = vmatpush.msra.mxu0 %v6311
    %7153 = vmatpush.msra.mxu0 %v6304
    %7154 = vmatpush.msra.mxu0 %v6297
    %7155 = vmatpush.msra.mxu0 %v6290
    %7156 = vmatpush.msra.mxu0 %v6283
    %7157 = vmatpush.msra.mxu0 %v6276
    %7158 = vmatpush.msra.mxu0 %v6269
    %7159 = vmatpush.msra.mxu0 %v6262
    %7160 = vmatpush.msra.mxu0 %v6255
    %7161 = vmatpush.msra.mxu0 %v6248
    %7162 = vmatpush.msra.mxu0 %v6241
    %7163 = vmatpush.msra.mxu0 %v6234
    %7164 = vmatpush.msra.mxu0 %v6227
    %7165 = vmatpush.msra.mxu0 %v6220
    %7166 = vmatpush.msra.mxu0 %v6213
    %7167 = vmatmul.f32.gmra.mxu0 %v5792
    %v7168 = vpop.f32.mrf.mxu0
    %v7169 = vadd.f32 %v7149, %v7168
    %7170 = vdwg.mxu0
    %7171 = vmatpush.msra.mxu0 %v6430
    %7172 = vmatpush.msra.mxu0 %v6423
    %7173 = vmatpush.msra.mxu0 %v6416
    %7174 = vmatpush.msra.mxu0 %v6409
    %7175 = vmatpush.msra.mxu0 %v6402
    %7176 = vmatpush.msra.mxu0 %v6395
    %7177 = vmatpush.msra.mxu0 %v6388
    %7178 = vmatpush.msra.mxu0 %v6381
    %7179 = vmatpush.msra.mxu0 %v6374
    %7180 = vmatpush.msra.mxu0 %v6367
    %7181 = vmatpush.msra.mxu0 %v6360
    %7182 = vmatpush.msra.mxu0 %v6353
    %7183 = vmatpush.msra.mxu0 %v6346
    %7184 = vmatpush.msra.mxu0 %v6339
    %7185 = vmatpush.msra.mxu0 %v6332
    %7186 = vmatpush.msra.mxu0 %v6325
    %7187 = vmatmul.f32.gmra.mxu0 %v5825
    %v7188 = vpop.f32.mrf.mxu0
    %v7189 = vadd.f32 %v7169, %v7188
    %7190 = vdwg.mxu0
    %7191 = vmatpush.msra.mxu0 %v6542
    %7192 = vmatpush.msra.mxu0 %v6535
    %7193 = vmatpush.msra.mxu0 %v6528
    %7194 = vmatpush.msra.mxu0 %v6521
    %7195 = vmatpush.msra.mxu0 %v6514
    %7196 = vmatpush.msra.mxu0 %v6507
    %7197 = vmatpush.msra.mxu0 %v6500
    %7198 = vmatpush.msra.mxu0 %v6493
    %7199 = vmatpush.msra.mxu0 %v6486
    %7200 = vmatpush.msra.mxu0 %v6479
    %7201 = vmatpush.msra.mxu0 %v6472
    %7202 = vmatpush.msra.mxu0 %v6465
    %7203 = vmatpush.msra.mxu0 %v6458
    %7204 = vmatpush.msra.mxu0 %v6451
    %7205 = vmatpush.msra.mxu0 %v6444
    %7206 = vmatpush.msra.mxu0 %v6437
    %7207 = vmatmul.f32.gmra.mxu0 %v5832
    %v7208 = vpop.f32.mrf.mxu0
    %v7209 = vadd.f32 %v7189, %v7208
    %7210 = vdwg.mxu0
    %7211 = vmatpush.msra.mxu0 %v6654
    %7212 = vmatpush.msra.mxu0 %v6647
    %7213 = vmatpush.msra.mxu0 %v6640
    %7214 = vmatpush.msra.mxu0 %v6633
    %7215 = vmatpush.msra.mxu0 %v6626
    %7216 = vmatpush.msra.mxu0 %v6619
    %7217 = vmatpush.msra.mxu0 %v6612
    %7218 = vmatpush.msra.mxu0 %v6605
    %7219 = vmatpush.msra.mxu0 %v6598
    %7220 = vmatpush.msra.mxu0 %v6591
    %7221 = vmatpush.msra.mxu0 %v6584
    %7222 = vmatpush.msra.mxu0 %v6577
    %7223 = vmatpush.msra.mxu0 %v6570
    %7224 = vmatpush.msra.mxu0 %v6563
    %7225 = vmatpush.msra.mxu0 %v6556
    %7226 = vmatpush.msra.mxu0 %v6549
    %7227 = vmatmul.f32.gmra.mxu0 %v5865
    %v7228 = vpop.f32.mrf.mxu0
    %v7229 = vadd.f32 %v7209, %v7228
    %7230 = vdwg.mxu0
    %7231 = vmatpush.msra.mxu0 %v6766
    %7232 = vmatpush.msra.mxu0 %v6759
    %7233 = vmatpush.msra.mxu0 %v6752
    %7234 = vmatpush.msra.mxu0 %v6745
    %7235 = vmatpush.msra.mxu0 %v6738
    %7236 = vmatpush.msra.mxu0 %v6731
    %7237 = vmatpush.msra.mxu0 %v6724
    %7238 = vmatpush.msra.mxu0 %v6717
    %7239 = vmatpush.msra.mxu0 %v6710
    %7240 = vmatpush.msra.mxu0 %v6703
    %7241 = vmatpush.msra.mxu0 %v6696
    %7242 = vmatpush.msra.mxu0 %v6689
    %7243 = vmatpush.msra.mxu0 %v6682
    %7244 = vmatpush.msra.mxu0 %v6675
    %7245 = vmatpush.msra.mxu0 %v6668
    %7246 = vmatpush.msra.mxu0 %v6661
    %7247 = vmatmul.f32.gmra.mxu0 %v5872
    %v7248 = vpop.f32.mrf.mxu0
    %v7249 = vadd.f32 %v7229, %v7248
    %7250 = vdwg.mxu0
    %7251 = vmatpush.msra.mxu0 %v5983
    %7252 = vmatpush.msra.mxu0 %v5976
    %7253 = vmatpush.msra.mxu0 %v5969
    %7254 = vmatpush.msra.mxu0 %v5962
    %7255 = vmatpush.msra.mxu0 %v5955
    %7256 = vmatpush.msra.mxu0 %v5948
    %7257 = vmatpush.msra.mxu0 %v5941
    %7258 = vmatpush.msra.mxu0 %v5934
    %7259 = vmatpush.msra.mxu0 %v5927
    %7260 = vmatpush.msra.mxu0 %v5920
    %7261 = vmatpush.msra.mxu0 %v5913
    %7262 = vmatpush.msra.mxu0 %v5906
    %7263 = vmatpush.msra.mxu0 %v5899
    %7264 = vmatpush.msra.mxu0 %v5892
    %7265 = vmatpush.msra.mxu0 %v5885
    %7266 = vmatpush.msra.mxu0 %v5878
    %7267 = vmatmul.f32.gmra.mxu0 %v5745
    %v7268 = vpop.f32.mrf.mxu0
    %v7269 = vadd.f32 0.0, %v7268
    %7270 = vdwg.mxu0
    %7271 = vmatpush.msra.mxu0 %v6095
    %7272 = vmatpush.msra.mxu0 %v6088
    %7273 = vmatpush.msra.mxu0 %v6081
    %7274 = vmatpush.msra.mxu0 %v6074
    %7275 = vmatpush.msra.mxu0 %v6067
    %7276 = vmatpush.msra.mxu0 %v6060
    %7277 = vmatpush.msra.mxu0 %v6053
    %7278 = vmatpush.msra.mxu0 %v6046
    %7279 = vmatpush.msra.mxu0 %v6039
    %7280 = vmatpush.msra.mxu0 %v6032
    %7281 = vmatpush.msra.mxu0 %v6025
    %7282 = vmatpush.msra.mxu0 %v6018
    %7283 = vmatpush.msra.mxu0 %v6011
    %7284 = vmatpush.msra.mxu0 %v6004
    %7285 = vmatpush.msra.mxu0 %v5997
    %7286 = vmatpush.msra.mxu0 %v5990
    %7287 = vmatmul.f32.gmra.mxu0 %v5752
    %v7288 = vpop.f32.mrf.mxu0
    %v7289 = vadd.f32 %v7269, %v7288
    %7290 = vdwg.mxu0
    %7291 = vmatpush.msra.mxu0 %v6207
    %7292 = vmatpush.msra.mxu0 %v6200
    %7293 = vmatpush.msra.mxu0 %v6193
    %7294 = vmatpush.msra.mxu0 %v6186
    %7295 = vmatpush.msra.mxu0 %v6179
    %7296 = vmatpush.msra.mxu0 %v6172
    %7297 = vmatpush.msra.mxu0 %v6165
    %7298 = vmatpush.msra.mxu0 %v6158
    %7299 = vmatpush.msra.mxu0 %v6151
    %7300 = vmatpush.msra.mxu0 %v6144
    %7301 = vmatpush.msra.mxu0 %v6137
    %7302 = vmatpush.msra.mxu0 %v6130
    %7303 = vmatpush.msra.mxu0 %v6123
    %7304 = vmatpush.msra.mxu0 %v6116
    %7305 = vmatpush.msra.mxu0 %v6109
    %7306 = vmatpush.msra.mxu0 %v6102
    %7307 = vmatmul.f32.gmra.mxu0 %v5785
    %v7308 = vpop.f32.mrf.mxu0
    %v7309 = vadd.f32 %v7289, %v7308
    %7310 = vdwg.mxu0
    %7311 = vmatpush.msra.mxu0 %v6319
    %7312 = vmatpush.msra.mxu0 %v6312
    %7313 = vmatpush.msra.mxu0 %v6305
    %7314 = vmatpush.msra.mxu0 %v6298
    %7315 = vmatpush.msra.mxu0 %v6291
    %7316 = vmatpush.msra.mxu0 %v6284
    %7317 = vmatpush.msra.mxu0 %v6277
    %7318 = vmatpush.msra.mxu0 %v6270
    %7319 = vmatpush.msra.mxu0 %v6263
    %7320 = vmatpush.msra.mxu0 %v6256
    %7321 = vmatpush.msra.mxu0 %v6249
    %7322 = vmatpush.msra.mxu0 %v6242
    %7323 = vmatpush.msra.mxu0 %v6235
    %7324 = vmatpush.msra.mxu0 %v6228
    %7325 = vmatpush.msra.mxu0 %v6221
    %7326 = vmatpush.msra.mxu0 %v6214
    %7327 = vmatmul.f32.gmra.mxu0 %v5792
    %v7328 = vpop.f32.mrf.mxu0
    %v7329 = vadd.f32 %v7309, %v7328
    %7330 = vdwg.mxu0
    %7331 = vmatpush.msra.mxu0 %v6431
    %7332 = vmatpush.msra.mxu0 %v6424
    %7333 = vmatpush.msra.mxu0 %v6417
    %7334 = vmatpush.msra.mxu0 %v6410
    %7335 = vmatpush.msra.mxu0 %v6403
    %7336 = vmatpush.msra.mxu0 %v6396
    %7337 = vmatpush.msra.mxu0 %v6389
    %7338 = vmatpush.msra.mxu0 %v6382
    %7339 = vmatpush.msra.mxu0 %v6375
    %7340 = vmatpush.msra.mxu0 %v6368
    %7341 = vmatpush.msra.mxu0 %v6361
    %7342 = vmatpush.msra.mxu0 %v6354
    %7343 = vmatpush.msra.mxu0 %v6347
    %7344 = vmatpush.msra.mxu0 %v6340
    %7345 = vmatpush.msra.mxu0 %v6333
    %7346 = vmatpush.msra.mxu0 %v6326
    %7347 = vmatmul.f32.gmra.mxu0 %v5825
    %v7348 = vpop.f32.mrf.mxu0
    %v7349 = vadd.f32 %v7329, %v7348
    %7350 = vdwg.mxu0
    %7351 = vmatpush.msra.mxu0 %v6543
    %7352 = vmatpush.msra.mxu0 %v6536
    %7353 = vmatpush.msra.mxu0 %v6529
    %7354 = vmatpush.msra.mxu0 %v6522
    %7355 = vmatpush.msra.mxu0 %v6515
    %7356 = vmatpush.msra.mxu0 %v6508
    %7357 = vmatpush.msra.mxu0 %v6501
    %7358 = vmatpush.msra.mxu0 %v6494
    %7359 = vmatpush.msra.mxu0 %v6487
    %7360 = vmatpush.msra.mxu0 %v6480
    %7361 = vmatpush.msra.mxu0 %v6473
    %7362 = vmatpush.msra.mxu0 %v6466
    %7363 = vmatpush.msra.mxu0 %v6459
    %7364 = vmatpush.msra.mxu0 %v6452
    %7365 = vmatpush.msra.mxu0 %v6445
    %7366 = vmatpush.msra.mxu0 %v6438
    %7367 = vmatmul.f32.gmra.mxu0 %v5832
    %v7368 = vpop.f32.mrf.mxu0
    %v7369 = vadd.f32 %v7349, %v7368
    %7370 = vdwg.mxu0
    %7371 = vmatpush.msra.mxu0 %v6655
    %7372 = vmatpush.msra.mxu0 %v6648
    %7373 = vmatpush.msra.mxu0 %v6641
    %7374 = vmatpush.msra.mxu0 %v6634
    %7375 = vmatpush.msra.mxu0 %v6627
    %7376 = vmatpush.msra.mxu0 %v6620
    %7377 = vmatpush.msra.mxu0 %v6613
    %7378 = vmatpush.msra.mxu0 %v6606
    %7379 = vmatpush.msra.mxu0 %v6599
    %7380 = vmatpush.msra.mxu0 %v6592
    %7381 = vmatpush.msra.mxu0 %v6585
    %7382 = vmatpush.msra.mxu0 %v6578
    %7383 = vmatpush.msra.mxu0 %v6571
    %7384 = vmatpush.msra.mxu0 %v6564
    %7385 = vmatpush.msra.mxu0 %v6557
    %7386 = vmatpush.msra.mxu0 %v6550
    %7387 = vmatmul.f32.gmra.mxu0 %v5865
    %v7388 = vpop.f32.mrf.mxu0
    %v7389 = vadd.f32 %v7369, %v7388
    %7390 = vdwg.mxu0
    %7391 = vmatpush.msra.mxu0 %v6767
    %7392 = vmatpush.msra.mxu0 %v6760
    %7393 = vmatpush.msra.mxu0 %v6753
    %7394 = vmatpush.msra.mxu0 %v6746
    %7395 = vmatpush.msra.mxu0 %v6739
    %7396 = vmatpush.msra.mxu0 %v6732
    %7397 = vmatpush.msra.mxu0 %v6725
    %7398 = vmatpush.msra.mxu0 %v6718
    %7399 = vmatpush.msra.mxu0 %v6711
    %7400 = vmatpush.msra.mxu0 %v6704
    %7401 = vmatpush.msra.mxu0 %v6697
    %7402 = vmatpush.msra.mxu0 %v6690
    %7403 = vmatpush.msra.mxu0 %v6683
    %7404 = vmatpush.msra.mxu0 %v6676
    %7405 = vmatpush.msra.mxu0 %v6669
    %7406 = vmatpush.msra.mxu0 %v6662
    %7407 = vmatmul.f32.gmra.mxu0 %v5872
    %v7408 = vpop.f32.mrf.mxu0
    %v7409 = vadd.f32 %v7389, %v7408
    %7410 = vdwg.mxu0
    %7411 = vmatpush.msra.mxu0 %v5984
    %7412 = vmatpush.msra.mxu0 %v5977
    %7413 = vmatpush.msra.mxu0 %v5970
    %7414 = vmatpush.msra.mxu0 %v5963
    %7415 = vmatpush.msra.mxu0 %v5956
    %7416 = vmatpush.msra.mxu0 %v5949
    %7417 = vmatpush.msra.mxu0 %v5942
    %7418 = vmatpush.msra.mxu0 %v5935
    %7419 = vmatpush.msra.mxu0 %v5928
    %7420 = vmatpush.msra.mxu0 %v5921
    %7421 = vmatpush.msra.mxu0 %v5914
    %7422 = vmatpush.msra.mxu0 %v5907
    %7423 = vmatpush.msra.mxu0 %v5900
    %7424 = vmatpush.msra.mxu0 %v5893
    %7425 = vmatpush.msra.mxu0 %v5886
    %7426 = vmatpush.msra.mxu0 %v5879
    %7427 = vmatmul.f32.gmra.mxu0 %v5745
    %v7428 = vpop.f32.mrf.mxu0
    %v7429 = vadd.f32 0.0, %v7428
    %7430 = vdwg.mxu0
    %7431 = vmatpush.msra.mxu0 %v6096
    %7432 = vmatpush.msra.mxu0 %v6089
    %7433 = vmatpush.msra.mxu0 %v6082
    %7434 = vmatpush.msra.mxu0 %v6075
    %7435 = vmatpush.msra.mxu0 %v6068
    %7436 = vmatpush.msra.mxu0 %v6061
    %7437 = vmatpush.msra.mxu0 %v6054
    %7438 = vmatpush.msra.mxu0 %v6047
    %7439 = vmatpush.msra.mxu0 %v6040
    %7440 = vmatpush.msra.mxu0 %v6033
    %7441 = vmatpush.msra.mxu0 %v6026
    %7442 = vmatpush.msra.mxu0 %v6019
    %7443 = vmatpush.msra.mxu0 %v6012
    %7444 = vmatpush.msra.mxu0 %v6005
    %7445 = vmatpush.msra.mxu0 %v5998
    %7446 = vmatpush.msra.mxu0 %v5991
    %7447 = vmatmul.f32.gmra.mxu0 %v5752
    %v7448 = vpop.f32.mrf.mxu0
    %v7449 = vadd.f32 %v7429, %v7448
    %7450 = vdwg.mxu0
    %7451 = vmatpush.msra.mxu0 %v6208
    %7452 = vmatpush.msra.mxu0 %v6201
    %7453 = vmatpush.msra.mxu0 %v6194
    %7454 = vmatpush.msra.mxu0 %v6187
    %7455 = vmatpush.msra.mxu0 %v6180
    %7456 = vmatpush.msra.mxu0 %v6173
    %7457 = vmatpush.msra.mxu0 %v6166
    %7458 = vmatpush.msra.mxu0 %v6159
    %7459 = vmatpush.msra.mxu0 %v6152
    %7460 = vmatpush.msra.mxu0 %v6145
    %7461 = vmatpush.msra.mxu0 %v6138
    %7462 = vmatpush.msra.mxu0 %v6131
    %7463 = vmatpush.msra.mxu0 %v6124
    %7464 = vmatpush.msra.mxu0 %v6117
    %7465 = vmatpush.msra.mxu0 %v6110
    %7466 = vmatpush.msra.mxu0 %v6103
    %7467 = vmatmul.f32.gmra.mxu0 %v5785
    %v7468 = vpop.f32.mrf.mxu0
    %v7469 = vadd.f32 %v7449, %v7468
    %7470 = vdwg.mxu0
    %7471 = vmatpush.msra.mxu0 %v6320
    %7472 = vmatpush.msra.mxu0 %v6313
    %7473 = vmatpush.msra.mxu0 %v6306
    %7474 = vmatpush.msra.mxu0 %v6299
    %7475 = vmatpush.msra.mxu0 %v6292
    %7476 = vmatpush.msra.mxu0 %v6285
    %7477 = vmatpush.msra.mxu0 %v6278
    %7478 = vmatpush.msra.mxu0 %v6271
    %7479 = vmatpush.msra.mxu0 %v6264
    %7480 = vmatpush.msra.mxu0 %v6257
    %7481 = vmatpush.msra.mxu0 %v6250
    %7482 = vmatpush.msra.mxu0 %v6243
    %7483 = vmatpush.msra.mxu0 %v6236
    %7484 = vmatpush.msra.mxu0 %v6229
    %7485 = vmatpush.msra.mxu0 %v6222
    %7486 = vmatpush.msra.mxu0 %v6215
    %7487 = vmatmul.f32.gmra.mxu0 %v5792
    %v7488 = vpop.f32.mrf.mxu0
    %v7489 = vadd.f32 %v7469, %v7488
    %7490 = vdwg.mxu0
    %7491 = vmatpush.msra.mxu0 %v6432
    %7492 = vmatpush.msra.mxu0 %v6425
    %7493 = vmatpush.msra.mxu0 %v6418
    %7494 = vmatpush.msra.mxu0 %v6411
    %7495 = vmatpush.msra.mxu0 %v6404
    %7496 = vmatpush.msra.mxu0 %v6397
    %7497 = vmatpush.msra.mxu0 %v6390
    %7498 = vmatpush.msra.mxu0 %v6383
    %7499 = vmatpush.msra.mxu0 %v6376
    %7500 = vmatpush.msra.mxu0 %v6369
    %7501 = vmatpush.msra.mxu0 %v6362
    %7502 = vmatpush.msra.mxu0 %v6355
    %7503 = vmatpush.msra.mxu0 %v6348
    %7504 = vmatpush.msra.mxu0 %v6341
    %7505 = vmatpush.msra.mxu0 %v6334
    %7506 = vmatpush.msra.mxu0 %v6327
    %7507 = vmatmul.f32.gmra.mxu0 %v5825
    %v7508 = vpop.f32.mrf.mxu0
    %v7509 = vadd.f32 %v7489, %v7508
    %7510 = vdwg.mxu0
    %7511 = vmatpush.msra.mxu0 %v6544
    %7512 = vmatpush.msra.mxu0 %v6537
    %7513 = vmatpush.msra.mxu0 %v6530
    %7514 = vmatpush.msra.mxu0 %v6523
    %7515 = vmatpush.msra.mxu0 %v6516
    %7516 = vmatpush.msra.mxu0 %v6509
    %7517 = vmatpush.msra.mxu0 %v6502
    %7518 = vmatpush.msra.mxu0 %v6495
    %7519 = vmatpush.msra.mxu0 %v6488
    %7520 = vmatpush.msra.mxu0 %v6481
    %7521 = vmatpush.msra.mxu0 %v6474
    %7522 = vmatpush.msra.mxu0 %v6467
    %7523 = vmatpush.msra.mxu0 %v6460
    %7524 = vmatpush.msra.mxu0 %v6453
    %7525 = vmatpush.msra.mxu0 %v6446
    %7526 = vmatpush.msra.mxu0 %v6439
    %7527 = vmatmul.f32.gmra.mxu0 %v5832
    %v7528 = vpop.f32.mrf.mxu0
    %v7529 = vadd.f32 %v7509, %v7528
    %7530 = vdwg.mxu0
    %7531 = vmatpush.msra.mxu0 %v6656
    %7532 = vmatpush.msra.mxu0 %v6649
    %7533 = vmatpush.msra.mxu0 %v6642
    %7534 = vmatpush.msra.mxu0 %v6635
    %7535 = vmatpush.msra.mxu0 %v6628
    %7536 = vmatpush.msra.mxu0 %v6621
    %7537 = vmatpush.msra.mxu0 %v6614
    %7538 = vmatpush.msra.mxu0 %v6607
    %7539 = vmatpush.msra.mxu0 %v6600
    %7540 = vmatpush.msra.mxu0 %v6593
    %7541 = vmatpush.msra.mxu0 %v6586
    %7542 = vmatpush.msra.mxu0 %v6579
    %7543 = vmatpush.msra.mxu0 %v6572
    %7544 = vmatpush.msra.mxu0 %v6565
    %7545 = vmatpush.msra.mxu0 %v6558
    %7546 = vmatpush.msra.mxu0 %v6551
    %7547 = vmatmul.f32.gmra.mxu0 %v5865
    %v7548 = vpop.f32.mrf.mxu0
    %v7549 = vadd.f32 %v7529, %v7548
    %7550 = vdwg.mxu0
    %7551 = vmatpush.msra.mxu0 %v6768
    %7552 = vmatpush.msra.mxu0 %v6761
    %7553 = vmatpush.msra.mxu0 %v6754
    %7554 = vmatpush.msra.mxu0 %v6747
    %7555 = vmatpush.msra.mxu0 %v6740
    %7556 = vmatpush.msra.mxu0 %v6733
    %7557 = vmatpush.msra.mxu0 %v6726
    %7558 = vmatpush.msra.mxu0 %v6719
    %7559 = vmatpush.msra.mxu0 %v6712
    %7560 = vmatpush.msra.mxu0 %v6705
    %7561 = vmatpush.msra.mxu0 %v6698
    %7562 = vmatpush.msra.mxu0 %v6691
    %7563 = vmatpush.msra.mxu0 %v6684
    %7564 = vmatpush.msra.mxu0 %v6677
    %7565 = vmatpush.msra.mxu0 %v6670
    %7566 = vmatpush.msra.mxu0 %v6663
    %7567 = vmatmul.f32.gmra.mxu0 %v5872
    %v7568 = vpop.f32.mrf.mxu0
    %v7569 = vadd.f32 %v7549, %v7568
    %7570 = vdwg.mxu0
    %7571 = vmatpush.msra.mxu0 %v5985
    %7572 = vmatpush.msra.mxu0 %v5978
    %7573 = vmatpush.msra.mxu0 %v5971
    %7574 = vmatpush.msra.mxu0 %v5964
    %7575 = vmatpush.msra.mxu0 %v5957
    %7576 = vmatpush.msra.mxu0 %v5950
    %7577 = vmatpush.msra.mxu0 %v5943
    %7578 = vmatpush.msra.mxu0 %v5936
    %7579 = vmatpush.msra.mxu0 %v5929
    %7580 = vmatpush.msra.mxu0 %v5922
    %7581 = vmatpush.msra.mxu0 %v5915
    %7582 = vmatpush.msra.mxu0 %v5908
    %7583 = vmatpush.msra.mxu0 %v5901
    %7584 = vmatpush.msra.mxu0 %v5894
    %7585 = vmatpush.msra.mxu0 %v5887
    %7586 = vmatpush.msra.mxu0 %v5880
    %7587 = vmatmul.f32.gmra.mxu0 %v5745
    %v7588 = vpop.f32.mrf.mxu0
    %v7589 = vadd.f32 0.0, %v7588
    %7590 = vdwg.mxu0
    %7591 = vmatpush.msra.mxu0 %v6097
    %7592 = vmatpush.msra.mxu0 %v6090
    %7593 = vmatpush.msra.mxu0 %v6083
    %7594 = vmatpush.msra.mxu0 %v6076
    %7595 = vmatpush.msra.mxu0 %v6069
    %7596 = vmatpush.msra.mxu0 %v6062
    %7597 = vmatpush.msra.mxu0 %v6055
    %7598 = vmatpush.msra.mxu0 %v6048
    %7599 = vmatpush.msra.mxu0 %v6041
    %7600 = vmatpush.msra.mxu0 %v6034
    %7601 = vmatpush.msra.mxu0 %v6027
    %7602 = vmatpush.msra.mxu0 %v6020
    %7603 = vmatpush.msra.mxu0 %v6013
    %7604 = vmatpush.msra.mxu0 %v6006
    %7605 = vmatpush.msra.mxu0 %v5999
    %7606 = vmatpush.msra.mxu0 %v5992
    %7607 = vmatmul.f32.gmra.mxu0 %v5752
    %v7608 = vpop.f32.mrf.mxu0
    %v7609 = vadd.f32 %v7589, %v7608
    %7610 = vdwg.mxu0
    %7611 = vmatpush.msra.mxu0 %v6209
    %7612 = vmatpush.msra.mxu0 %v6202
    %7613 = vmatpush.msra.mxu0 %v6195
    %7614 = vmatpush.msra.mxu0 %v6188
    %7615 = vmatpush.msra.mxu0 %v6181
    %7616 = vmatpush.msra.mxu0 %v6174
    %7617 = vmatpush.msra.mxu0 %v6167
    %7618 = vmatpush.msra.mxu0 %v6160
    %7619 = vmatpush.msra.mxu0 %v6153
    %7620 = vmatpush.msra.mxu0 %v6146
    %7621 = vmatpush.msra.mxu0 %v6139
    %7622 = vmatpush.msra.mxu0 %v6132
    %7623 = vmatpush.msra.mxu0 %v6125
    %7624 = vmatpush.msra.mxu0 %v6118
    %7625 = vmatpush.msra.mxu0 %v6111
    %7626 = vmatpush.msra.mxu0 %v6104
    %7627 = vmatmul.f32.gmra.mxu0 %v5785
    %v7628 = vpop.f32.mrf.mxu0
    %v7629 = vadd.f32 %v7609, %v7628
    %7630 = vdwg.mxu0
    %7631 = vmatpush.msra.mxu0 %v6321
    %7632 = vmatpush.msra.mxu0 %v6314
    %7633 = vmatpush.msra.mxu0 %v6307
    %7634 = vmatpush.msra.mxu0 %v6300
    %7635 = vmatpush.msra.mxu0 %v6293
    %7636 = vmatpush.msra.mxu0 %v6286
    %7637 = vmatpush.msra.mxu0 %v6279
    %7638 = vmatpush.msra.mxu0 %v6272
    %7639 = vmatpush.msra.mxu0 %v6265
    %7640 = vmatpush.msra.mxu0 %v6258
    %7641 = vmatpush.msra.mxu0 %v6251
    %7642 = vmatpush.msra.mxu0 %v6244
    %7643 = vmatpush.msra.mxu0 %v6237
    %7644 = vmatpush.msra.mxu0 %v6230
    %7645 = vmatpush.msra.mxu0 %v6223
    %7646 = vmatpush.msra.mxu0 %v6216
    %7647 = vmatmul.f32.gmra.mxu0 %v5792
    %v7648 = vpop.f32.mrf.mxu0
    %v7649 = vadd.f32 %v7629, %v7648
    %7650 = vdwg.mxu0
    %7651 = vmatpush.msra.mxu0 %v6433
    %7652 = vmatpush.msra.mxu0 %v6426
    %7653 = vmatpush.msra.mxu0 %v6419
    %7654 = vmatpush.msra.mxu0 %v6412
    %7655 = vmatpush.msra.mxu0 %v6405
    %7656 = vmatpush.msra.mxu0 %v6398
    %7657 = vmatpush.msra.mxu0 %v6391
    %7658 = vmatpush.msra.mxu0 %v6384
    %7659 = vmatpush.msra.mxu0 %v6377
    %7660 = vmatpush.msra.mxu0 %v6370
    %7661 = vmatpush.msra.mxu0 %v6363
    %7662 = vmatpush.msra.mxu0 %v6356
    %7663 = vmatpush.msra.mxu0 %v6349
    %7664 = vmatpush.msra.mxu0 %v6342
    %7665 = vmatpush.msra.mxu0 %v6335
    %7666 = vmatpush.msra.mxu0 %v6328
    %7667 = vmatmul.f32.gmra.mxu0 %v5825
    %v7668 = vpop.f32.mrf.mxu0
    %v7669 = vadd.f32 %v7649, %v7668
    %7670 = vdwg.mxu0
    %7671 = vmatpush.msra.mxu0 %v6545
    %7672 = vmatpush.msra.mxu0 %v6538
    %7673 = vmatpush.msra.mxu0 %v6531
    %7674 = vmatpush.msra.mxu0 %v6524
    %7675 = vmatpush.msra.mxu0 %v6517
    %7676 = vmatpush.msra.mxu0 %v6510
    %7677 = vmatpush.msra.mxu0 %v6503
    %7678 = vmatpush.msra.mxu0 %v6496
    %7679 = vmatpush.msra.mxu0 %v6489
    %7680 = vmatpush.msra.mxu0 %v6482
    %7681 = vmatpush.msra.mxu0 %v6475
    %7682 = vmatpush.msra.mxu0 %v6468
    %7683 = vmatpush.msra.mxu0 %v6461
    %7684 = vmatpush.msra.mxu0 %v6454
    %7685 = vmatpush.msra.mxu0 %v6447
    %7686 = vmatpush.msra.mxu0 %v6440
    %7687 = vmatmul.f32.gmra.mxu0 %v5832
    %v7688 = vpop.f32.mrf.mxu0
    %v7689 = vadd.f32 %v7669, %v7688
    %7690 = vdwg.mxu0
    %7691 = vmatpush.msra.mxu0 %v6657
    %7692 = vmatpush.msra.mxu0 %v6650
    %7693 = vmatpush.msra.mxu0 %v6643
    %7694 = vmatpush.msra.mxu0 %v6636
    %7695 = vmatpush.msra.mxu0 %v6629
    %7696 = vmatpush.msra.mxu0 %v6622
    %7697 = vmatpush.msra.mxu0 %v6615
    %7698 = vmatpush.msra.mxu0 %v6608
    %7699 = vmatpush.msra.mxu0 %v6601
    %7700 = vmatpush.msra.mxu0 %v6594
    %7701 = vmatpush.msra.mxu0 %v6587
    %7702 = vmatpush.msra.mxu0 %v6580
    %7703 = vmatpush.msra.mxu0 %v6573
    %7704 = vmatpush.msra.mxu0 %v6566
    %7705 = vmatpush.msra.mxu0 %v6559
    %7706 = vmatpush.msra.mxu0 %v6552
    %7707 = vmatmul.f32.gmra.mxu0 %v5865
    %v7708 = vpop.f32.mrf.mxu0
    %v7709 = vadd.f32 %v7689, %v7708
    %7710 = vdwg.mxu0
    %7711 = vmatpush.msra.mxu0 %v6769
    %7712 = vmatpush.msra.mxu0 %v6762
    %7713 = vmatpush.msra.mxu0 %v6755
    %7714 = vmatpush.msra.mxu0 %v6748
    %7715 = vmatpush.msra.mxu0 %v6741
    %7716 = vmatpush.msra.mxu0 %v6734
    %7717 = vmatpush.msra.mxu0 %v6727
    %7718 = vmatpush.msra.mxu0 %v6720
    %7719 = vmatpush.msra.mxu0 %v6713
    %7720 = vmatpush.msra.mxu0 %v6706
    %7721 = vmatpush.msra.mxu0 %v6699
    %7722 = vmatpush.msra.mxu0 %v6692
    %7723 = vmatpush.msra.mxu0 %v6685
    %7724 = vmatpush.msra.mxu0 %v6678
    %7725 = vmatpush.msra.mxu0 %v6671
    %7726 = vmatpush.msra.mxu0 %v6664
    %7727 = vmatmul.f32.gmra.mxu0 %v5872
    %v7728 = vpop.f32.mrf.mxu0
    %v7729 = vadd.f32 %v7709, %v7728
    %7730 = vdwg.mxu0
    %7731 = vmatpush.msra.mxu0 %v5986
    %7732 = vmatpush.msra.mxu0 %v5979
    %7733 = vmatpush.msra.mxu0 %v5972
    %7734 = vmatpush.msra.mxu0 %v5965
    %7735 = vmatpush.msra.mxu0 %v5958
    %7736 = vmatpush.msra.mxu0 %v5951
    %7737 = vmatpush.msra.mxu0 %v5944
    %7738 = vmatpush.msra.mxu0 %v5937
    %7739 = vmatpush.msra.mxu0 %v5930
    %7740 = vmatpush.msra.mxu0 %v5923
    %7741 = vmatpush.msra.mxu0 %v5916
    %7742 = vmatpush.msra.mxu0 %v5909
    %7743 = vmatpush.msra.mxu0 %v5902
    %7744 = vmatpush.msra.mxu0 %v5895
    %7745 = vmatpush.msra.mxu0 %v5888
    %7746 = vmatpush.msra.mxu0 %v5881
    %7747 = vmatmul.f32.gmra.mxu0 %v5745
    %v7748 = vpop.f32.mrf.mxu0
    %v7749 = vadd.f32 0.0, %v7748
    %7750 = vdwg.mxu0
    %7751 = vmatpush.msra.mxu0 %v6098
    %7752 = vmatpush.msra.mxu0 %v6091
    %7753 = vmatpush.msra.mxu0 %v6084
    %7754 = vmatpush.msra.mxu0 %v6077
    %7755 = vmatpush.msra.mxu0 %v6070
    %7756 = vmatpush.msra.mxu0 %v6063
    %7757 = vmatpush.msra.mxu0 %v6056
    %7758 = vmatpush.msra.mxu0 %v6049
    %7759 = vmatpush.msra.mxu0 %v6042
    %7760 = vmatpush.msra.mxu0 %v6035
    %7761 = vmatpush.msra.mxu0 %v6028
    %7762 = vmatpush.msra.mxu0 %v6021
    %7763 = vmatpush.msra.mxu0 %v6014
    %7764 = vmatpush.msra.mxu0 %v6007
    %7765 = vmatpush.msra.mxu0 %v6000
    %7766 = vmatpush.msra.mxu0 %v5993
    %7767 = vmatmul.f32.gmra.mxu0 %v5752
    %v7768 = vpop.f32.mrf.mxu0
    %v7769 = vadd.f32 %v7749, %v7768
    %7770 = vdwg.mxu0
    %7771 = vmatpush.msra.mxu0 %v6210
    %7772 = vmatpush.msra.mxu0 %v6203
    %7773 = vmatpush.msra.mxu0 %v6196
    %7774 = vmatpush.msra.mxu0 %v6189
    %7775 = vmatpush.msra.mxu0 %v6182
    %7776 = vmatpush.msra.mxu0 %v6175
    %7777 = vmatpush.msra.mxu0 %v6168
    %7778 = vmatpush.msra.mxu0 %v6161
    %7779 = vmatpush.msra.mxu0 %v6154
    %7780 = vmatpush.msra.mxu0 %v6147
    %7781 = vmatpush.msra.mxu0 %v6140
    %7782 = vmatpush.msra.mxu0 %v6133
    %7783 = vmatpush.msra.mxu0 %v6126
    %7784 = vmatpush.msra.mxu0 %v6119
    %7785 = vmatpush.msra.mxu0 %v6112
    %7786 = vmatpush.msra.mxu0 %v6105
    %7787 = vmatmul.f32.gmra.mxu0 %v5785
    %v7788 = vpop.f32.mrf.mxu0
    %v7789 = vadd.f32 %v7769, %v7788
    %7790 = vdwg.mxu0
    %7791 = vmatpush.msra.mxu0 %v6322
    %7792 = vmatpush.msra.mxu0 %v6315
    %7793 = vmatpush.msra.mxu0 %v6308
    %7794 = vmatpush.msra.mxu0 %v6301
    %7795 = vmatpush.msra.mxu0 %v6294
    %7796 = vmatpush.msra.mxu0 %v6287
    %7797 = vmatpush.msra.mxu0 %v6280
    %7798 = vmatpush.msra.mxu0 %v6273
    %7799 = vmatpush.msra.mxu0 %v6266
    %7800 = vmatpush.msra.mxu0 %v6259
    %7801 = vmatpush.msra.mxu0 %v6252
    %7802 = vmatpush.msra.mxu0 %v6245
    %7803 = vmatpush.msra.mxu0 %v6238
    %7804 = vmatpush.msra.mxu0 %v6231
    %7805 = vmatpush.msra.mxu0 %v6224
    %7806 = vmatpush.msra.mxu0 %v6217
    %7807 = vmatmul.f32.gmra.mxu0 %v5792
    %v7808 = vpop.f32.mrf.mxu0
    %v7809 = vadd.f32 %v7789, %v7808
    %7810 = vdwg.mxu0
    %7811 = vmatpush.msra.mxu0 %v6434
    %7812 = vmatpush.msra.mxu0 %v6427
    %7813 = vmatpush.msra.mxu0 %v6420
    %7814 = vmatpush.msra.mxu0 %v6413
    %7815 = vmatpush.msra.mxu0 %v6406
    %7816 = vmatpush.msra.mxu0 %v6399
    %7817 = vmatpush.msra.mxu0 %v6392
    %7818 = vmatpush.msra.mxu0 %v6385
    %7819 = vmatpush.msra.mxu0 %v6378
    %7820 = vmatpush.msra.mxu0 %v6371
    %7821 = vmatpush.msra.mxu0 %v6364
    %7822 = vmatpush.msra.mxu0 %v6357
    %7823 = vmatpush.msra.mxu0 %v6350
    %7824 = vmatpush.msra.mxu0 %v6343
    %7825 = vmatpush.msra.mxu0 %v6336
    %7826 = vmatpush.msra.mxu0 %v6329
    %7827 = vmatmul.f32.gmra.mxu0 %v5825
    %v7828 = vpop.f32.mrf.mxu0
    %v7829 = vadd.f32 %v7809, %v7828
    %7830 = vdwg.mxu0
    %7831 = vmatpush.msra.mxu0 %v6546
    %7832 = vmatpush.msra.mxu0 %v6539
    %7833 = vmatpush.msra.mxu0 %v6532
    %7834 = vmatpush.msra.mxu0 %v6525
    %7835 = vmatpush.msra.mxu0 %v6518
    %7836 = vmatpush.msra.mxu0 %v6511
    %7837 = vmatpush.msra.mxu0 %v6504
    %7838 = vmatpush.msra.mxu0 %v6497
    %7839 = vmatpush.msra.mxu0 %v6490
    %7840 = vmatpush.msra.mxu0 %v6483
    %7841 = vmatpush.msra.mxu0 %v6476
    %7842 = vmatpush.msra.mxu0 %v6469
    %7843 = vmatpush.msra.mxu0 %v6462
    %7844 = vmatpush.msra.mxu0 %v6455
    %7845 = vmatpush.msra.mxu0 %v6448
    %7846 = vmatpush.msra.mxu0 %v6441
    %7847 = vmatmul.f32.gmra.mxu0 %v5832
    %v7848 = vpop.f32.mrf.mxu0
    %v7849 = vadd.f32 %v7829, %v7848
    %7850 = vdwg.mxu0
    %7851 = vmatpush.msra.mxu0 %v6658
    %7852 = vmatpush.msra.mxu0 %v6651
    %7853 = vmatpush.msra.mxu0 %v6644
    %7854 = vmatpush.msra.mxu0 %v6637
    %7855 = vmatpush.msra.mxu0 %v6630
    %7856 = vmatpush.msra.mxu0 %v6623
    %7857 = vmatpush.msra.mxu0 %v6616
    %7858 = vmatpush.msra.mxu0 %v6609
    %7859 = vmatpush.msra.mxu0 %v6602
    %7860 = vmatpush.msra.mxu0 %v6595
    %7861 = vmatpush.msra.mxu0 %v6588
    %7862 = vmatpush.msra.mxu0 %v6581
    %7863 = vmatpush.msra.mxu0 %v6574
    %7864 = vmatpush.msra.mxu0 %v6567
    %7865 = vmatpush.msra.mxu0 %v6560
    %7866 = vmatpush.msra.mxu0 %v6553
    %7867 = vmatmul.f32.gmra.mxu0 %v5865
    %v7868 = vpop.f32.mrf.mxu0
    %v7869 = vadd.f32 %v7849, %v7868
    %7870 = vdwg.mxu0
    %7871 = vmatpush.msra.mxu0 %v6770
    %7872 = vmatpush.msra.mxu0 %v6763
    %7873 = vmatpush.msra.mxu0 %v6756
    %7874 = vmatpush.msra.mxu0 %v6749
    %7875 = vmatpush.msra.mxu0 %v6742
    %7876 = vmatpush.msra.mxu0 %v6735
    %7877 = vmatpush.msra.mxu0 %v6728
    %7878 = vmatpush.msra.mxu0 %v6721
    %7879 = vmatpush.msra.mxu0 %v6714
    %7880 = vmatpush.msra.mxu0 %v6707
    %7881 = vmatpush.msra.mxu0 %v6700
    %7882 = vmatpush.msra.mxu0 %v6693
    %7883 = vmatpush.msra.mxu0 %v6686
    %7884 = vmatpush.msra.mxu0 %v6679
    %7885 = vmatpush.msra.mxu0 %v6672
    %7886 = vmatpush.msra.mxu0 %v6665
    %7887 = vmatmul.f32.gmra.mxu0 %v5872
    %v7888 = vpop.f32.mrf.mxu0
    %v7889 = vadd.f32 %v7869, %v7888
    %7890 = vdwg.mxu0
    %7891 = vst [vmem:[%s8] sm:$0xff] %v6929
    %7892 = vst [vmem:[%s8 + $0x8] sm:$0xff] %v7089
    %7893 = vst [vmem:[%s8 + $0x10] sm:$0xff] %v7249
    %7894 = vst [vmem:[%s8 + $0x18] sm:$0xff] %v7409
    %7895 = vst [vmem:[%s8 + $0x20] sm:$0xff] %v7569
    %7896 = vst [vmem:[%s8 + $0x28] sm:$0xff] %v7729
    %7897 = vst [vmem:[%s8 + $0x30] sm:$0xff] %v7889
    // Predicated region
    $region62: #{feature_forward.1} parent=1 // pred_check
      _
    $region63: #{feature_forward.1} parent=1 // pred_check_branch
      %7899 = sbr.rel (0) target = $region65
    $region64: #{feature_forward.1} parent=1 // pred_region
      _
    $region65: #{feature_forward.1} parent=1 // pred_fallthru
      _
    // Predicated region
    $region66: #{feature_forward.1} parent=1 // pred_check
      _
    $region67: #{feature_forward.1} parent=1 // pred_check_branch
      %7901 = sbr.rel (0) target = $region69
    $region68: #{feature_forward.1} parent=1 // pred_region
      _
    $region69: #{feature_forward.1} parent=1 // pred_fallthru
      _
    %7902 = vsyncpa [#allocation3], 1
    %7903 = vsyncpa [#allocation5], 1
    %7904 = vsyncpa [#allocation8], 1
    %7905 = vsyncpa [#allocation11], 1

</llo_original>
